<compile_context>
chip_gen: v6e
topology: v6e:2x2x1
jax: 0.10.0
libtpu: 0.0.40
codegen_flags: <defaults>
</compile_context>

<pallas_src>
import numpy as np
import jax
import jax.numpy as jnp
from jax.experimental import pallas as pl
from jax.experimental.pallas import tpu as pltpu


def _pad128(n: int) -> int:
    return ((n + 127) // 128) * 128


# ---------------------- capability probe: single-buffering -------------------- #
_SINGLE_BUFFER_SUPPORTED = None


def _single_buffer_supported():
    """Probe whether pipeline_mode=pl.Buffered(1) is supported; fall back if not."""
    global _SINGLE_BUFFER_SUPPORTED
    if _SINGLE_BUFFER_SUPPORTED is not None:
        return _SINGLE_BUFFER_SUPPORTED
    try:
        def k(x_ref, o_ref):
            o_ref[...] = x_ref[...] + 1.0

        f = pl.pallas_call(
            k,
            out_shape=jax.ShapeDtypeStruct((16, 128), jnp.float32),
            grid=(2,),
            in_specs=[pl.BlockSpec((8, 128), lambda i: (0, 0),
                                   pipeline_mode=pl.Buffered(1))],
            out_specs=pl.BlockSpec((8, 128), lambda i: (i, 0)),
        )
        jax.block_until_ready(f(jnp.zeros((8, 128), jnp.float32)))
        _SINGLE_BUFFER_SUPPORTED = True
    except Exception:
        _SINGLE_BUFFER_SUPPORTED = False
    return _SINGLE_BUFFER_SUPPORTED


# ----------------------------- Pallas kernel ---------------------------------- #
def _make_fused_kernel(num_layers, bm, h0, hf, layer_dims, act_dtype):
    """Fused (ReLU + 3x3 VALID conv) x num_layers kernel.

    Refs (in order): x, w_0..w_{L-1}, b_0..b_{L-1}, out.
      x:    (bm, h0, kp0)        input images, channels minor, lane-padded, act_dtype
      w_l:  (3, kp_in, np_out)   block-Toeplitz weight, one slab per vertical tap dy
      b_l:  (1, np_out)          bias tiled over output width, lane-padded, f32
      out:  (bm, hf, np_last)    final feature maps, channels minor, f32
    Images are stacked along the row (sublane) axis at stride h0; rows that straddle
    image boundaries produce garbage that is never read by any extracted output row.
    """
    kp0 = layer_dims[0][0]

    def kernel(*refs):
        x_ref = refs[0]
        w_refs = refs[1:1 + num_layers]
        b_refs = refs[1 + num_layers:1 + 2 * num_layers]
        o_ref = refs[1 + 2 * num_layers]

        # (bm, h0, kp0) -> (bm*h0, kp0): fold images into the MXU M dimension.
        cur = x_ref[...].reshape(bm * h0, kp0)
        rows = bm * h0
        for l in range(num_layers):
            _, np_out = layer_dims[l]
            r = rows - 2
            x_act = jnp.maximum(cur, 0)                       # ReLU (act_dtype)
            # 3 accumulating MXU dots, one per vertical tap (no concat LHS).
            acc = jnp.dot(x_act[0:r, :], w_refs[l][0],
                          preferred_element_type=jnp.float32)
            acc = acc + jnp.dot(x_act[1:1 + r, :], w_refs[l][1],
                                preferred_element_type=jnp.float32)
            acc = acc + jnp.dot(x_act[2:2 + r, :], w_refs[l][2],
                                preferred_element_type=jnp.float32)
            cur = acc + b_refs[l][...]                        # bias add (f32)
            if l + 1 < num_layers:
                cur = cur.astype(act_dtype)                   # keep activation narrow
            rows = r
        # Per-image extraction: image i lives at rows [i*h0, i*h0 + hf).
        for i in range(bm):
            o_ref[i, :, :] = cur[i * h0:i * h0 + hf, :].astype(o_ref.dtype)

    return kernel


# ------------------------------ parameters ------------------------------------ #
def make_conv_params(key, num_layers, num_filters):
    """Replicates weight_init: conv weight is 0 except the center tap (orthogonal *
    gain('relu')); bias is 0."""
    gain = float(np.sqrt(2.0))
    weights_pt, biases = [], []
    for layer in range(num_layers):
        k = jax.random.fold_in(key, layer)
        orth = jax.random.orthogonal(k, num_filters).astype(jnp.float32) * gain
        w = jnp.zeros((num_filters, num_filters, 3, 3), jnp.float32)
        w = w.at[:, :, 1, 1].set(orth)                     # PyTorch OIHW layout
        weights_pt.append(w)
        biases.append(jnp.zeros((num_filters,), jnp.float32))
    return weights_pt, biases


def make_dense_conv_params(key, num_layers, num_filters):
    """Dense random weights/bias — exercises every (dy, dx) tap (validation only)."""
    scale = 1.0 / np.sqrt(9.0 * num_filters)
    ws, bs = [], []
    for layer in range(num_layers):
        k = jax.random.fold_in(key, 1000 + layer)
        kw_, kb_ = jax.random.split(k)
        ws.append(jax.random.normal(kw_, (num_filters, num_filters, 3, 3),
                                    jnp.float32) * scale)
        bs.append(jax.random.normal(kb_, (num_filters,), jnp.float32) * 0.1)
    return ws, bs


def expand_weight_toeplitz(w_pt, kp_in, w_out, np_out):
    """(O, I, 3, 3) OIHW conv weight -> (3, kp_in, np_out) block-Toeplitz slabs, one
    per vertical tap dy; padded rows/cols are exactly zero."""
    c_out, c_in, kh, kw = w_pt.shape
    assert kh == 3 and kw == 3
    w_khw = np.transpose(np.asarray(w_pt, np.float32), (2, 3, 1, 0))  # (ky, kx, ci, co)
    big = np.zeros((3, kp_in, np_out), np.float32)
    for dx in range(3):
        for wo in range(w_out):
            wi = wo + dx
            big[:, wi * c_in:(wi + 1) * c_in, wo * c_out:(wo + 1) * c_out] = w_khw[:, dx]
    return big


# ------------------------------ blocking choice -------------------------------- #
def _pick_images_per_block(n, h, target_rows=256):
    """Largest divisor bm of n with bm*h around target_rows and >= 2 grid steps
    (so both v7x TensorCores get work; v5e's 128-wide MXU target is a subset)."""
    cap = max(1, -(-target_rows // h))
    best = 1
    for bm in range(1, n + 1):
        if n % bm == 0 and bm <= cap and (n // bm >= 2 or n == 1):
            best = bm
    return best


# ------------------------------ forward wrapper -------------------------------- #
def head_cnn_forward(x_nchw, weights_pt, biases, *, images_per_block=None,
                     use_bf16=True):
    """Pallas implementation of HeadCNN.forward (ReLU+Conv per layer, then Flatten)."""
    n, c, h, w = x_nchw.shape
    num_layers = len(weights_pt)
    assert num_layers >= 1
    assert h > 2 * num_layers and w > 2 * num_layers
    operand_dtype = jnp.bfloat16 if use_bf16 else jnp.float32
    # TODO(synk): on v5e (no bf16 VPU) keep activations in f32 even when feeding bf16
    # operands to the MXU; here the activation dtype simply follows the operand dtype.

    bm = (int(images_per_block) if images_per_block is not None
          else _pick_images_per_block(n, h))
    assert n % bm == 0, "batch must be divisible by images_per_block"

    # ---- static geometry (lane widths padded to multiples of 128) -------------
    kp0 = _pad128(w * c)
    layer_dims, widths, kp_in = [], [w], kp0
    for _ in range(num_layers):
        w_out = widths[-1] - 2
        np_out = _pad128(w_out * c)
        layer_dims.append((kp_in, np_out))
        widths.append(w_out)
        kp_in = np_out
    hf = h - 2 * num_layers
    wf = widths[-1]
    np_last = layer_dims[-1][1]

    # ---- parameters: per-dy block-Toeplitz slabs, lane padded ------------------
    w_bigs, b_pads = [], []
    for l in range(num_layers):
        kp_l, np_l = layer_dims[l]
        w_big = expand_weight_toeplitz(weights_pt[l], kp_l, widths[l + 1], np_l)
        w_bigs.append(jnp.asarray(w_big, operand_dtype))          # (3, kp_l, np_l)
        b_pad = np.zeros((1, np_l), np.float32)
        b_pad[0, :widths[l + 1] * c] = np.tile(np.asarray(biases[l], np.float32),
                                               widths[l + 1])
        b_pads.append(jnp.asarray(b_pad))

    # ---- input: NCHW -> (N, H, W*C) channels minor, lane padded, operand dtype --
    x = jnp.transpose(x_nchw, (0, 2, 3, 1)).reshape(n, h, w * c)
    if kp0 != w * c:
        x = jnp.pad(x, ((0, 0), (0, 0), (0, kp0 - w * c)))
    x = x.astype(operand_dtype)
    # TODO(synk): accept NHWC input / return the channels-minor flatten directly (and
    # permute the downstream dense layer's weights offline) to drop the two
    # wrapper-side layout round trips when the consumer allows it.

    # ---- explicit VMEM budget (sized for v7x's 64 MiB physical VMEM) -----------
    opb = 2 if use_bf16 else 4
    single_buf = _single_buffer_supported()
    wt_bufs = 1 if single_buf else 2
    wt_bytes = sum(3 * kp * npo * opb for kp, npo in layer_dims) * wt_bufs
    bias_bytes = sum(npo * 4 for _, npo in layer_dims) * wt_bufs
    in_blk = bm * h * kp0 * opb * 2                 # double-buffered input block
    out_blk = bm * hf * np_last * 4 * 2             # double-buffered output block
    max_np = max(max(kp, npo) for kp, npo in layer_dims)
    act_work = 4 * bm * h * max_np * 4              # cur / relu / shifted copies / acc
    est = wt_bytes + bias_bytes + in_blk + out_blk + act_work
    if est > (60 << 20):
        raise ValueError(
            f"estimated VMEM {est / 2**20:.1f} MiB exceeds the v7x budget; reduce "
            f"images_per_block (bm={bm}) or switch to the shifted-slice formulation")
    vmem_limit = min(64 << 20, max(32 << 20, int(1.3 * est) + (4 << 20)))

    # ---- fused pallas call ------------------------------------------------------
    kernel = _make_fused_kernel(num_layers, bm, h, hf, layer_dims, operand_dtype)

    flops = 0
    for l in range(num_layers):
        kp_l, np_l = layer_dims[l]
        flops += 2 * n * (h - 2 * (l + 1)) * 3 * kp_l * np_l
    bytes_accessed = int(x.size * x.dtype.itemsize
                         + sum(wb.size * wb.dtype.itemsize for wb in w_bigs)
                         + sum(bp.size * bp.dtype.itemsize for bp in b_pads)
                         + n * hf * np_last * 4)

    const_kw = dict(pipeline_mode=pl.Buffered(1)) if single_buf else {}
    in_specs = [pl.BlockSpec((bm, h, kp0), lambda i: (i, 0, 0))]
    for kp_l, np_l in layer_dims:
        # Grid-invariant weights: resident across grid steps, single-buffered.
        in_specs.append(pl.BlockSpec((3, kp_l, np_l), lambda i: (0, 0, 0), **const_kw))
    for _, np_l in layer_dims:
        in_specs.append(pl.BlockSpec((1, np_l), lambda i: (0, 0), **const_kw))

    out = pl.pallas_call(
        kernel,
        out_shape=jax.ShapeDtypeStruct((n, hf, np_last), jnp.float32),
        grid=(n // bm,),
        in_specs=in_specs,
        out_specs=pl.BlockSpec((bm, hf, np_last), lambda i: (i, 0, 0)),
        compiler_params=pltpu.CompilerParams(
            dimension_semantics=("parallel",),
            vmem_limit_bytes=vmem_limit),
        cost_estimate=pl.CostEstimate(flops=flops, transcendentals=0,
                                      bytes_accessed=bytes_accessed),
    )(x, *w_bigs, *b_pads)

    # ---- final Flatten in PyTorch NCHW order ------------------------------------
    out = out[:, :, :wf * c].reshape(n, hf, wf, c)
    out = jnp.transpose(out, (0, 3, 1, 2))
    return out.reshape(n, -1)


# --------------------------------- reference ----------------------------------- #
def head_cnn_reference(x_nchw, weights_pt, biases, operand_dtype=jnp.float32):
    out = x_nchw
    for w_pt, b in zip(weights_pt, biases):
        out = jnp.maximum(out, 0.0)
        out = jax.lax.conv_general_dilated(
            out.astype(operand_dtype), w_pt.astype(operand_dtype),
            window_strides=(1, 1), padding="VALID",
            dimension_numbers=("NCHW", "OIHW", "NCHW"),
            preferred_element_type=jnp.float32)
        out = out + b[None, :, None, None].astype(jnp.float32)
    return out.reshape(out.shape[0], -1)


# ----------------------------------- main --------------------------------------- #
if __name__ == "__main__":
    batch = 32            # auto blocking -> bm=16, grid=(2,): M=256 MXU rows per step
    num_filters = 32      # Conv2d(num_filters, num_filters, 3): in channels == filters
    spatial = 16
    num_layers = 2

    key = jax.random.PRNGKey(0)
    k_x, k_w = jax.random.split(key)
    x = jax.random.normal(k_x, (batch, num_filters, spatial, spatial), jnp.float32)
    expected_shape = (batch, num_filters * (spatial - 2 * num_layers) ** 2)

    # --- 1) The module's weight_init (orthogonal center tap, zero bias) ----------
    weights_pt, biases = make_conv_params(k_w, num_layers, num_filters)
    ref_f32 = jax.block_until_ready(head_cnn_reference(x, weights_pt, biases))
    assert ref_f32.shape == expected_shape

    # bf16 fast path, auto images_per_block (bm=16 -> M=256 and 2 parallel grid steps).
    out_bf16 = jax.block_until_ready(
        head_cnn_forward(x, weights_pt, biases, use_bf16=True))
    assert out_bf16.shape == expected_shape
    ref_bf16 = jax.block_until_ready(
        head_cnn_reference(x, weights_pt, biases, operand_dtype=jnp.bfloat16))
    np.testing.assert_allclose(np.asarray(out_bf16), np.asarray(ref_bf16),
                               rtol=1e-2, atol=1e-2)
    max_err = float(np.max(np.abs(np.asarray(out_bf16) - np.asarray(ref_f32))))
    assert max_err < 0.25, max_err   # bf16 operand rounding only (f32 accumulation)

    # f32-operand path (TPU default MXU precision, same as the XLA reference),
    # different blocking: bm=8 -> grid=(4,).
    out_f32 = jax.block_until_ready(
        head_cnn_forward(x, weights_pt, biases, images_per_block=8, use_bf16=False))
    assert out_f32.shape == expected_shape
    np.testing.assert_allclose(np.asarray(out_f32), np.asarray(ref_f32),
                               rtol=1e-2, atol=1e-2)

    # --- 2) Dense random 3x3 weights + non-zero bias: validates every (dy, dx) tap
    #        of the block-Toeplitz routing against lax.conv (matched bf16 precision).
    weights_d, biases_d = make_dense_conv_params(k_w, num_layers, num_filters)
    out_d = jax.block_until_ready(
        head_cnn_forward(x, weights_d, biases_d, use_bf16=True))
    ref_d = jax.block_until_ready(
        head_cnn_reference(x, weights_d, biases_d, operand_dtype=jnp.bfloat16))
    np.testing.assert_allclose(np.asarray(out_d), np.asarray(ref_d),
                               rtol=2e-2, atol=2e-2)

    print("KERNEL_OK")
</pallas_src>

<mosaic_0001>
module attributes {stable_mosaic.version = 11 : i64} {
  func.func @k(%arg0: i32, %arg1: memref<8x128xf32, #tpu.memory_space<vmem>>, %arg2: memref<8x128xf32, #tpu.memory_space<vmem>>) attributes {dimension_semantics = [#tpu.dimension_semantics<arbitrary>], iteration_bounds = array<i64: 2>, scalar_prefetch = 0 : i64, scratch_operands = 0 : i64, tpu.core_type = #tpu.core_type<tc>, window_params = [{pipeline_mode = #tpu.pipeline_mode<synchronous>, transform_indices = @transform_0, window_bounds = array<i64: 8, 128>}, {transform_indices = @transform_1, window_bounds = array<i64: 8, 128>}]} {
    %c0 = arith.constant 0 : index
    %c0_0 = arith.constant 0 : index
    %0 = vector.load %arg1[%c0, %c0_0] : memref<8x128xf32, #tpu.memory_space<vmem>>, vector<8x128xf32>
    %cst = arith.constant 1.000000e+00 : f32
    %1 = vector.broadcast %cst : f32 to vector<8x128xf32>
    %2 = arith.addf %0, %1 : vector<8x128xf32>
    %c0_1 = arith.constant 0 : index
    %c0_2 = arith.constant 0 : index
    %3 = vector.load %arg2[%c0_1, %c0_2] : memref<8x128xf32, #tpu.memory_space<vmem>>, vector<8x128xf32>
    tpu.vector_store %arg2[%c0_1, %c0_2], %2 {strides = array<i32>} : memref<8x128xf32, #tpu.memory_space<vmem>>, vector<8x128xf32>,
    return
  }
  func.func @transform_0(%arg0: i32) -> (i32, i32) {
    %c0_i32 = arith.constant 0 : i32
    %c0_i32_0 = arith.constant 0 : i32
    %c0_i32_1 = arith.constant 0 : i32
    return %c0_i32, %c0_i32_0 : i32, i32
  }
  func.func @transform_1(%arg0: i32) -> (i32, i32) {
    %c0_i32 = arith.constant 0 : i32
    %c0_i32_0 = arith.constant 0 : i32
    return %arg0, %c0_i32 : i32, i32
  }
}

module attributes {stable_mosaic.version = 11 : i64} {
  func.func @kernel(%arg0: i32, %arg1: memref<16x16x512xbf16, #tpu.memory_space<vmem>>, %arg2: memref<3x512x512xbf16, #tpu.memory_space<vmem>>, %arg3: memref<3x512x384xbf16, #tpu.memory_space<vmem>>, %arg4: memref<1x512xf32, #tpu.memory_space<vmem>>, %arg5: memref<1x384xf32, #tpu.memory_space<vmem>>, %arg6: memref<16x12x384xf32, #tpu.memory_space<vmem>>) attributes {dimension_semantics = [#tpu.dimension_semantics<parallel>], iteration_bounds = array<i64: 2>, scalar_prefetch = 0 : i64, scratch_operands = 0 : i64, tpu.core_type = #tpu.core_type<tc>, window_params = [{transform_indices = @transform_0, window_bounds = array<i64: 16, 16, 512>}, {pipeline_mode = #tpu.pipeline_mode<synchronous>, transform_indices = @transform_1, window_bounds = array<i64: 3, 512, 512>}, {pipeline_mode = #tpu.pipeline_mode<synchronous>, transform_indices = @transform_2, window_bounds = array<i64: 3, 512, 384>}, {pipeline_mode = #tpu.pipeline_mode<synchronous>, transform_indices = @transform_3, window_bounds = array<i64: 1, 512>}, {pipeline_mode = #tpu.pipeline_mode<synchronous>, transform_indices = @transform_4, window_bounds = array<i64: 1, 384>}, {transform_indices = @transform_5, window_bounds = array<i64: 16, 12, 384>}]} {
    %c0 = arith.constant 0 : index
    %c0_0 = arith.constant 0 : index
    %c0_1 = arith.constant 0 : index
    %0 = vector.load %arg1[%c0, %c0_0, %c0_1] : memref<16x16x512xbf16, #tpu.memory_space<vmem>>, vector<16x16x512xbf16>
    %1 = vector.shape_cast %0 : vector<16x16x512xbf16> to vector<256x512xbf16>
    %cst = arith.constant 0.000000e+00 : bf16
    %2 = vector.broadcast %cst : bf16 to vector<256x512xbf16>
    %3 = arith.maximumf %1, %2 : vector<256x512xbf16>
    %4 = vector.extract_strided_slice %3 {offsets = [0, 0], sizes = [254, 512], strides = [1, 1]} : vector<256x512xbf16> to vector<254x512xbf16>
    %c0_2 = arith.constant 0 : index
    %c0_3 = arith.constant 0 : index
    %c0_4 = arith.constant 0 : index
    %5 = vector.load %arg2[%c0_2, %c0_3, %c0_4] : memref<3x512x512xbf16, #tpu.memory_space<vmem>>, vector<1x512x512xbf16>
    %6 = vector.shape_cast %5 : vector<1x512x512xbf16> to vector<512x512xbf16>
    %cst_5 = arith.constant dense<0.000000e+00> : vector<254x512xf32>
    %7 = tpu.matmul %4, %6, %cst_5 {dimension_numbers = #tpu.dot_dimension_numbers<[1], [0], [0], [1], [0, 0, 1, 1], [], []>} : vector<254x512xbf16>, vector<512x512xbf16>, vector<254x512xf32> -> vector<254x512xf32>
    %8 = vector.extract_strided_slice %3 {offsets = [1, 0], sizes = [254, 512], strides = [1, 1]} : vector<256x512xbf16> to vector<254x512xbf16>
    %c1 = arith.constant 1 : index
    %c0_6 = arith.constant 0 : index
    %c0_7 = arith.constant 0 : index
    %9 = vector.load %arg2[%c1, %c0_6, %c0_7] : memref<3x512x512xbf16, #tpu.memory_space<vmem>>, vector<1x512x512xbf16>
    %10 = vector.shape_cast %9 : vector<1x512x512xbf16> to vector<512x512xbf16>
    %cst_8 = arith.constant dense<0.000000e+00> : vector<254x512xf32>
    %11 = tpu.matmul %8, %10, %cst_8 {dimension_numbers = #tpu.dot_dimension_numbers<[1], [0], [0], [1], [0, 0, 1, 1], [], []>} : vector<254x512xbf16>, vector<512x512xbf16>, vector<254x512xf32> -> vector<254x512xf32>
    %12 = arith.addf %7, %11 : vector<254x512xf32>
    %13 = vector.extract_strided_slice %3 {offsets = [2, 0], sizes = [254, 512], strides = [1, 1]} : vector<256x512xbf16> to vector<254x512xbf16>
    %c2 = arith.constant 2 : index
    %c0_9 = arith.constant 0 : index
    %c0_10 = arith.constant 0 : index
    %14 = vector.load %arg2[%c2, %c0_9, %c0_10] : memref<3x512x512xbf16, #tpu.memory_space<vmem>>, vector<1x512x512xbf16>
    %15 = vector.shape_cast %14 : vector<1x512x512xbf16> to vector<512x512xbf16>
    %cst_11 = arith.constant dense<0.000000e+00> : vector<254x512xf32>
    %16 = tpu.matmul %13, %15, %cst_11 {dimension_numbers = #tpu.dot_dimension_numbers<[1], [0], [0], [1], [0, 0, 1, 1], [], []>} : vector<254x512xbf16>, vector<512x512xbf16>, vector<254x512xf32> -> vector<254x512xf32>
    %17 = arith.addf %12, %16 : vector<254x512xf32>
    %c0_12 = arith.constant 0 : index
    %c0_13 = arith.constant 0 : index
    %18 = vector.load %arg4[%c0_12, %c0_13] : memref<1x512xf32, #tpu.memory_space<vmem>>, vector<1x512xf32>
    %19 = vector.broadcast %18 : vector<1x512xf32> to vector<254x512xf32>
    %20 = arith.addf %17, %19 : vector<254x512xf32>
    %21 = arith.truncf %20 : vector<254x512xf32> to vector<254x512xbf16>
    %cst_14 = arith.constant 0.000000e+00 : bf16
    %22 = vector.broadcast %cst_14 : bf16 to vector<254x512xbf16>
    %23 = arith.maximumf %21, %22 : vector<254x512xbf16>
    %24 = vector.extract_strided_slice %23 {offsets = [0, 0], sizes = [252, 512], strides = [1, 1]} : vector<254x512xbf16> to vector<252x512xbf16>
    %c0_15 = arith.constant 0 : index
    %c0_16 = arith.constant 0 : index
    %c0_17 = arith.constant 0 : index
    %25 = vector.load %arg3[%c0_15, %c0_16, %c0_17] : memref<3x512x384xbf16, #tpu.memory_space<vmem>>, vector<1x512x384xbf16>
    %26 = vector.shape_cast %25 : vector<1x512x384xbf16> to vector<512x384xbf16>
    %cst_18 = arith.constant dense<0.000000e+00> : vector<252x384xf32>
    %27 = tpu.matmul %24, %26, %cst_18 {dimension_numbers = #tpu.dot_dimension_numbers<[1], [0], [0], [1], [0, 0, 1, 1], [], []>} : vector<252x512xbf16>, vector<512x384xbf16>, vector<252x384xf32> -> vector<252x384xf32>
    %28 = vector.extract_strided_slice %23 {offsets = [1, 0], sizes = [252, 512], strides = [1, 1]} : vector<254x512xbf16> to vector<252x512xbf16>
    %c1_19 = arith.constant 1 : index
    %c0_20 = arith.constant 0 : index
    %c0_21 = arith.constant 0 : index
    %29 = vector.load %arg3[%c1_19, %c0_20, %c0_21] : memref<3x512x384xbf16, #tpu.memory_space<vmem>>, vector<1x512x384xbf16>
    %30 = vector.shape_cast %29 : vector<1x512x384xbf16> to vector<512x384xbf16>
    %cst_22 = arith.constant dense<0.000000e+00> : vector<252x384xf32>
    %31 = tpu.matmul %28, %30, %cst_22 {dimension_numbers = #tpu.dot_dimension_numbers<[1], [0], [0], [1], [0, 0, 1, 1], [], []>} : vector<252x512xbf16>, vector<512x384xbf16>, vector<252x384xf32> -> vector<252x384xf32>
    %32 = arith.addf %27, %31 : vector<252x384xf32>
    %33 = vector.extract_strided_slice %23 {offsets = [2, 0], sizes = [252, 512], strides = [1, 1]} : vector<254x512xbf16> to vector<252x512xbf16>
    %c2_23 = arith.constant 2 : index
    %c0_24 = arith.constant 0 : index
    %c0_25 = arith.constant 0 : index
    %34 = vector.load %arg3[%c2_23, %c0_24, %c0_25] : memref<3x512x384xbf16, #tpu.memory_space<vmem>>, vector<1x512x384xbf16>
    %35 = vector.shape_cast %34 : vector<1x512x384xbf16> to vector<512x384xbf16>
    %cst_26 = arith.constant dense<0.000000e+00> : vector<252x384xf32>
    %36 = tpu.matmul %33, %35, %cst_26 {dimension_numbers = #tpu.dot_dimension_numbers<[1], [0], [0], [1], [0, 0, 1, 1], [], []>} : vector<252x512xbf16>, vector<512x384xbf16>, vector<252x384xf32> -> vector<252x384xf32>
    %37 = arith.addf %32, %36 : vector<252x384xf32>
    %c0_27 = arith.constant 0 : index
    %c0_28 = arith.constant 0 : index
    %38 = vector.load %arg5[%c0_27, %c0_28] : memref<1x384xf32, #tpu.memory_space<vmem>>, vector<1x384xf32>
    %39 = vector.broadcast %38 : vector<1x384xf32> to vector<252x384xf32>
    %40 = arith.addf %37, %39 : vector<252x384xf32>
    %41 = vector.extract_strided_slice %40 {offsets = [0, 0], sizes = [12, 384], strides = [1, 1]} : vector<252x384xf32> to vector<12x384xf32>
    %c0_29 = arith.constant 0 : index
    %c0_30 = arith.constant 0 : index
    %c0_31 = arith.constant 0 : index
    %42 = vector.load %arg6[%c0_29, %c0_30, %c0_31] : memref<16x12x384xf32, #tpu.memory_space<vmem>>, vector<1x12x384xf32>
    %43 = vector.shape_cast %42 : vector<1x12x384xf32> to vector<12x384xf32>
    %44 = vector.shape_cast %41 : vector<12x384xf32> to vector<1x12x384xf32>
    tpu.vector_store %arg6[%c0_29, %c0_30, %c0_31], %44 {strides = array<i32>} : memref<16x12x384xf32, #tpu.memory_space<vmem>>, vector<1x12x384xf32>,
    %45 = vector.extract_strided_slice %40 {offsets = [16, 0], sizes = [12, 384], strides = [1, 1]} : vector<252x384xf32> to vector<12x384xf32>
    %c1_32 = arith.constant 1 : index
    %c0_33 = arith.constant 0 : index
    %c0_34 = arith.constant 0 : index
    %46 = vector.load %arg6[%c1_32, %c0_33, %c0_34] : memref<16x12x384xf32, #tpu.memory_space<vmem>>, vector<1x12x384xf32>
    %47 = vector.shape_cast %46 : vector<1x12x384xf32> to vector<12x384xf32>
    %48 = vector.shape_cast %45 : vector<12x384xf32> to vector<1x12x384xf32>
    tpu.vector_store %arg6[%c1_32, %c0_33, %c0_34], %48 {strides = array<i32>} : memref<16x12x384xf32, #tpu.memory_space<vmem>>, vector<1x12x384xf32>,
    %49 = vector.extract_strided_slice %40 {offsets = [32, 0], sizes = [12, 384], strides = [1, 1]} : vector<252x384xf32> to vector<12x384xf32>
    %c2_35 = arith.constant 2 : index
    %c0_36 = arith.constant 0 : index
    %c0_37 = arith.constant 0 : index
    %50 = vector.load %arg6[%c2_35, %c0_36, %c0_37] : memref<16x12x384xf32, #tpu.memory_space<vmem>>, vector<1x12x384xf32>
    %51 = vector.shape_cast %50 : vector<1x12x384xf32> to vector<12x384xf32>
    %52 = vector.shape_cast %49 : vector<12x384xf32> to vector<1x12x384xf32>
    tpu.vector_store %arg6[%c2_35, %c0_36, %c0_37], %52 {strides = array<i32>} : memref<16x12x384xf32, #tpu.memory_space<vmem>>, vector<1x12x384xf32>,
    %53 = vector.extract_strided_slice %40 {offsets = [48, 0], sizes = [12, 384], strides = [1, 1]} : vector<252x384xf32> to vector<12x384xf32>
    %c3 = arith.constant 3 : index
    %c0_38 = arith.constant 0 : index
    %c0_39 = arith.constant 0 : index
    %54 = vector.load %arg6[%c3, %c0_38, %c0_39] : memref<16x12x384xf32, #tpu.memory_space<vmem>>, vector<1x12x384xf32>
    %55 = vector.shape_cast %54 : vector<1x12x384xf32> to vector<12x384xf32>
    %56 = vector.shape_cast %53 : vector<12x384xf32> to vector<1x12x384xf32>
    tpu.vector_store %arg6[%c3, %c0_38, %c0_39], %56 {strides = array<i32>} : memref<16x12x384xf32, #tpu.memory_space<vmem>>, vector<1x12x384xf32>,
    %57 = vector.extract_strided_slice %40 {offsets = [64, 0], sizes = [12, 384], strides = [1, 1]} : vector<252x384xf32> to vector<12x384xf32>
    %c4 = arith.constant 4 : index
    %c0_40 = arith.constant 0 : index
    %c0_41 = arith.constant 0 : index
    %58 = vector.load %arg6[%c4, %c0_40, %c0_41] : memref<16x12x384xf32, #tpu.memory_space<vmem>>, vector<1x12x384xf32>
    %59 = vector.shape_cast %58 : vector<1x12x384xf32> to vector<12x384xf32>
    %60 = vector.shape_cast %57 : vector<12x384xf32> to vector<1x12x384xf32>
    tpu.vector_store %arg6[%c4, %c0_40, %c0_41], %60 {strides = array<i32>} : memref<16x12x384xf32, #tpu.memory_space<vmem>>, vector<1x12x384xf32>,
    %61 = vector.extract_strided_slice %40 {offsets = [80, 0], sizes = [12, 384], strides = [1, 1]} : vector<252x384xf32> to vector<12x384xf32>
    %c5 = arith.constant 5 : index
    %c0_42 = arith.constant 0 : index
    %c0_43 = arith.constant 0 : index
    %62 = vector.load %arg6[%c5, %c0_42, %c0_43] : memref<16x12x384xf32, #tpu.memory_space<vmem>>, vector<1x12x384xf32>
    %63 = vector.shape_cast %62 : vector<1x12x384xf32> to vector<12x384xf32>
    %64 = vector.shape_cast %61 : vector<12x384xf32> to vector<1x12x384xf32>
    tpu.vector_store %arg6[%c5, %c0_42, %c0_43], %64 {strides = array<i32>} : memref<16x12x384xf32, #tpu.memory_space<vmem>>, vector<1x12x384xf32>,
    %65 = vector.extract_strided_slice %40 {offsets = [96, 0], sizes = [12, 384], strides = [1, 1]} : vector<252x384xf32> to vector<12x384xf32>
    %c6 = arith.constant 6 : index
    %c0_44 = arith.constant 0 : index
    %c0_45 = arith.constant 0 : index
    %66 = vector.load %arg6[%c6, %c0_44, %c0_45] : memref<16x12x384xf32, #tpu.memory_space<vmem>>, vector<1x12x384xf32>
    %67 = vector.shape_cast %66 : vector<1x12x384xf32> to vector<12x384xf32>
    %68 = vector.shape_cast %65 : vector<12x384xf32> to vector<1x12x384xf32>
    tpu.vector_store %arg6[%c6, %c0_44, %c0_45], %68 {strides = array<i32>} : memref<16x12x384xf32, #tpu.memory_space<vmem>>, vector<1x12x384xf32>,
    %69 = vector.extract_strided_slice %40 {offsets = [112, 0], sizes = [12, 384], strides = [1, 1]} : vector<252x384xf32> to vector<12x384xf32>
    %c7 = arith.constant 7 : index
    %c0_46 = arith.constant 0 : index
    %c0_47 = arith.constant 0 : index
    %70 = vector.load %arg6[%c7, %c0_46, %c0_47] : memref<16x12x384xf32, #tpu.memory_space<vmem>>, vector<1x12x384xf32>
    %71 = vector.shape_cast %70 : vector<1x12x384xf32> to vector<12x384xf32>
    %72 = vector.shape_cast %69 : vector<12x384xf32> to vector<1x12x384xf32>
    tpu.vector_store %arg6[%c7, %c0_46, %c0_47], %72 {strides = array<i32>} : memref<16x12x384xf32, #tpu.memory_space<vmem>>, vector<1x12x384xf32>,
    %73 = vector.extract_strided_slice %40 {offsets = [128, 0], sizes = [12, 384], strides = [1, 1]} : vector<252x384xf32> to vector<12x384xf32>
    %c8 = arith.constant 8 : index
    %c0_48 = arith.constant 0 : index
    %c0_49 = arith.constant 0 : index
    %74 = vector.load %arg6[%c8, %c0_48, %c0_49] : memref<16x12x384xf32, #tpu.memory_space<vmem>>, vector<1x12x384xf32>
    %75 = vector.shape_cast %74 : vector<1x12x384xf32> to vector<12x384xf32>
    %76 = vector.shape_cast %73 : vector<12x384xf32> to vector<1x12x384xf32>
    tpu.vector_store %arg6[%c8, %c0_48, %c0_49], %76 {strides = array<i32>} : memref<16x12x384xf32, #tpu.memory_space<vmem>>, vector<1x12x384xf32>,
    %77 = vector.extract_strided_slice %40 {offsets = [144, 0], sizes = [12, 384], strides = [1, 1]} : vector<252x384xf32> to vector<12x384xf32>
    %c9 = arith.constant 9 : index
    %c0_50 = arith.constant 0 : index
    %c0_51 = arith.constant 0 : index
    %78 = vector.load %arg6[%c9, %c0_50, %c0_51] : memref<16x12x384xf32, #tpu.memory_space<vmem>>, vector<1x12x384xf32>
    %79 = vector.shape_cast %78 : vector<1x12x384xf32> to vector<12x384xf32>
    %80 = vector.shape_cast %77 : vector<12x384xf32> to vector<1x12x384xf32>
    tpu.vector_store %arg6[%c9, %c0_50, %c0_51], %80 {strides = array<i32>} : memref<16x12x384xf32, #tpu.memory_space<vmem>>, vector<1x12x384xf32>,
    %81 = vector.extract_strided_slice %40 {offsets = [160, 0], sizes = [12, 384], strides = [1, 1]} : vector<252x384xf32> to vector<12x384xf32>
    %c10 = arith.constant 10 : index
    %c0_52 = arith.constant 0 : index
    %c0_53 = arith.constant 0 : index
    %82 = vector.load %arg6[%c10, %c0_52, %c0_53] : memref<16x12x384xf32, #tpu.memory_space<vmem>>, vector<1x12x384xf32>
    %83 = vector.shape_cast %82 : vector<1x12x384xf32> to vector<12x384xf32>
    %84 = vector.shape_cast %81 : vector<12x384xf32> to vector<1x12x384xf32>
    tpu.vector_store %arg6[%c10, %c0_52, %c0_53], %84 {strides = array<i32>} : memref<16x12x384xf32, #tpu.memory_space<vmem>>, vector<1x12x384xf32>,
    %85 = vector.extract_strided_slice %40 {offsets = [176, 0], sizes = [12, 384], strides = [1, 1]} : vector<252x384xf32> to vector<12x384xf32>
    %c11 = arith.constant 11 : index
    %c0_54 = arith.constant 0 : index
    %c0_55 = arith.constant 0 : index
    %86 = vector.load %arg6[%c11, %c0_54, %c0_55] : memref<16x12x384xf32, #tpu.memory_space<vmem>>, vector<1x12x384xf32>
    %87 = vector.shape_cast %86 : vector<1x12x384xf32> to vector<12x384xf32>
    %88 = vector.shape_cast %85 : vector<12x384xf32> to vector<1x12x384xf32>
    tpu.vector_store %arg6[%c11, %c0_54, %c0_55], %88 {strides = array<i32>} : memref<16x12x384xf32, #tpu.memory_space<vmem>>, vector<1x12x384xf32>,
    %89 = vector.extract_strided_slice %40 {offsets = [192, 0], sizes = [12, 384], strides = [1, 1]} : vector<252x384xf32> to vector<12x384xf32>
    %c12 = arith.constant 12 : index
    %c0_56 = arith.constant 0 : index
    %c0_57 = arith.constant 0 : index
    %90 = vector.load %arg6[%c12, %c0_56, %c0_57] : memref<16x12x384xf32, #tpu.memory_space<vmem>>, vector<1x12x384xf32>
    %91 = vector.shape_cast %90 : vector<1x12x384xf32> to vector<12x384xf32>
    %92 = vector.shape_cast %89 : vector<12x384xf32> to vector<1x12x384xf32>
    tpu.vector_store %arg6[%c12, %c0_56, %c0_57], %92 {strides = array<i32>} : memref<16x12x384xf32, #tpu.memory_space<vmem>>, vector<1x12x384xf32>,
    %93 = vector.extract_strided_slice %40 {offsets = [208, 0], sizes = [12, 384], strides = [1, 1]} : vector<252x384xf32> to vector<12x384xf32>
    %c13 = arith.constant 13 : index
    %c0_58 = arith.constant 0 : index
    %c0_59 = arith.constant 0 : index
    %94 = vector.load %arg6[%c13, %c0_58, %c0_59] : memref<16x12x384xf32, #tpu.memory_space<vmem>>, vector<1x12x384xf32>
    %95 = vector.shape_cast %94 : vector<1x12x384xf32> to vector<12x384xf32>
    %96 = vector.shape_cast %93 : vector<12x384xf32> to vector<1x12x384xf32>
    tpu.vector_store %arg6[%c13, %c0_58, %c0_59], %96 {strides = array<i32>} : memref<16x12x384xf32, #tpu.memory_space<vmem>>, vector<1x12x384xf32>,
    %97 = vector.extract_strided_slice %40 {offsets = [224, 0], sizes = [12, 384], strides = [1, 1]} : vector<252x384xf32> to vector<12x384xf32>
    %c14 = arith.constant 14 : index
    %c0_60 = arith.constant 0 : index
    %c0_61 = arith.constant 0 : index
    %98 = vector.load %arg6[%c14, %c0_60, %c0_61] : memref<16x12x384xf32, #tpu.memory_space<vmem>>, vector<1x12x384xf32>
    %99 = vector.shape_cast %98 : vector<1x12x384xf32> to vector<12x384xf32>
    %100 = vector.shape_cast %97 : vector<12x384xf32> to vector<1x12x384xf32>
    tpu.vector_store %arg6[%c14, %c0_60, %c0_61], %100 {strides = array<i32>} : memref<16x12x384xf32, #tpu.memory_space<vmem>>, vector<1x12x384xf32>,
    %101 = vector.extract_strided_slice %40 {offsets = [240, 0], sizes = [12, 384], strides = [1, 1]} : vector<252x384xf32> to vector<12x384xf32>
    %c15 = arith.constant 15 : index
    %c0_62 = arith.constant 0 : index
    %c0_63 = arith.constant 0 : index
    %102 = vector.load %arg6[%c15, %c0_62, %c0_63] : memref<16x12x384xf32, #tpu.memory_space<vmem>>, vector<1x12x384xf32>
    %103 = vector.shape_cast %102 : vector<1x12x384xf32> to vector<12x384xf32>
    %104 = vector.shape_cast %101 : vector<12x384xf32> to vector<1x12x384xf32>
    tpu.vector_store %arg6[%c15, %c0_62, %c0_63], %104 {strides = array<i32>} : memref<16x12x384xf32, #tpu.memory_space<vmem>>, vector<1x12x384xf32>,
    return
  }
  func.func @transform_0(%arg0: i32) -> (i32, i32, i32) {
    %c0_i32 = arith.constant 0 : i32
    %c0_i32_0 = arith.constant 0 : i32
    %c0_i32_1 = arith.constant 0 : i32
    return %arg0, %c0_i32, %c0_i32_0 : i32, i32, i32
  }
  func.func @transform_1(%arg0: i32) -> (i32, i32, i32) {
    %c0_i32 = arith.constant 0 : i32
    %c0_i32_0 = arith.constant 0 : i32
    %c0_i32_1 = arith.constant 0 : i32
    %c0_i32_2 = arith.constant 0 : i32
    return %c0_i32, %c0_i32_0, %c0_i32_1 : i32, i32, i32
  }
  func.func @transform_2(%arg0: i32) -> (i32, i32, i32) {
    %c0_i32 = arith.constant 0 : i32
    %c0_i32_0 = arith.constant 0 : i32
    %c0_i32_1 = arith.constant 0 : i32
    %c0_i32_2 = arith.constant 0 : i32
    return %c0_i32, %c0_i32_0, %c0_i32_1 : i32, i32, i32
  }
  func.func @transform_3(%arg0: i32) -> (i32, i32) {
    %c0_i32 = arith.constant 0 : i32
    %c0_i32_0 = arith.constant 0 : i32
    %c0_i32_1 = arith.constant 0 : i32
    return %c0_i32, %c0_i32_0 : i32, i32
  }
  func.func @transform_4(%arg0: i32) -> (i32, i32) {
    %c0_i32 = arith.constant 0 : i32
    %c0_i32_0 = arith.constant 0 : i32
    %c0_i32_1 = arith.constant 0 : i32
    return %c0_i32, %c0_i32_0 : i32, i32
  }
  func.func @transform_5(%arg0: i32) -> (i32, i32, i32) {
    %c0_i32 = arith.constant 0 : i32
    %c0_i32_0 = arith.constant 0 : i32
    %c0_i32_1 = arith.constant 0 : i32
    return %arg0, %c0_i32, %c0_i32_0 : i32, i32, i32
  }
}

</mosaic_0001>

<llo_original>
// kernel: tpu_custom_call.1
$region0: #{tpu_custom_call.1}
  #allocation0 [shape = 'u32[]', space=smem, size = 0x4, offset = 0x4, fixed_abs, tag = 'smem constant byte address 0x4 - core index']
  #allocation1 [shape = 'u32[144,128]{1,0:T(1,128)}', space=vmem, size = 0x12000, scoped, tag = 'internal scratch']
  %s0 = inlined_call_operand.hbm [shape: f32[8,128], index: 0, kind: input, shape index: {}]
  %s1 = inlined_call_operand.hbm [shape: f32[16,128], index: 1, kind: output, shape index: {}]
  %s2 = sld [smem:[#allocation0]]
  $region41: #{tpu_custom_call.1} parent=0
    _
  %s4 = ssub.s32 1, %s2
  %s5 = scalar_select 0, %s4, %s2
  $region1: #{tpu_custom_call.1} parent=0
    #allocation2 [shape = 'u8[4096]{0}', space=vmem, size = 0x1000, scoped, tag = 'input window, operand 0, single buffered']
    #allocation3 [shape = 's32[2]{0}', space=sflag, size = 0x8, scoped, tag = 'scoped memory for tpu_custom_call.1']
    #allocation4 [shape = 's32[2]{0}', space=sflag, size = 0x8, scoped, tag = 'scoped memory for tpu_custom_call.1']
    #allocation5 [shape = 'u8[8192]{0}', space=vmem, size = 0x2000, scoped, tag = 'output window, operand 0']
    %6 = vsyncpa [#allocation3], 0
    %7 = vsyncpa [#allocation4], 0
    %s8 = scalar_lea.sflag [#allocation4], 1
    %9 = vsyncpa %s8, 0
    loop: start=0, step=1, limit=4
    $region2: #{tpu_custom_call.1} parent=1 // loop_pre_header
      _
    $region3: #{tpu_custom_call.1} parent=1 // loop_header
      %s11 = sphi 0, %s15
      %p12 = scmp.ge.s32.totalorder %s11, 4
      %s19 = sphi 0, %s19
      %s21 = sphi 0, %s19
      %s22 = sphi 0, %s21
      %s36 = sphi 0, %s22
      %s42 = sphi 0, %s44
      %s45 = sphi 0, %s42
      %s46 = sphi 0, %s45
      %s62 = sphi 0, %s46
    $region4: #{tpu_custom_call.1} parent=1 // loop_header_branch
      %14 = sbr.rel (%p12) target = $region8
    $region5: #{tpu_custom_call.1} parent=1 // loop_body
      %s16 = ssub.s32 %s11, 1
      %s17 = ssub.s32 %s11, 2
      %s18 = sadd.s32 %s11, 1
      %s20 = sadd.s32 %s19, 1
      %p23 = scmp.eq.s32.totalorder %s11, 1
      %p24 = scmp.ne.s32.totalorder %s19, %s21
      %p25 = scmp.eq.s32.totalorder %s11, 0
      %p26 = por %p24, %p25
      %p27 = scmp.ne.s32.totalorder %s19, %s21
      %p28 = scmp.eq.s32.totalorder %s16, 1
      %p29 = por %p27, %p28
      %p30 = scmp.ne.s32.totalorder %s21, %s22
      %p31 = scmp.eq.s32.totalorder %s16, 0
      %p32 = por %p30, %p31
      %p33 = scmp.ne.s32.totalorder %s21, %s22
      %p34 = scmp.eq.s32.totalorder %s17, 1
      %p35 = por %p33, %p34
      %p37 = scmp.ne.s32.totalorder %s22, %s36
      %p38 = scmp.eq.s32.totalorder %s17, 0
      %p39 = por %p37, %p38
      %s40 = ssub.s32 %s11, %s18
      %p41 = scmp.eq.s32.totalorder %s40, 0
      %s43 = sadd.s32 %s42, 1
      %s44 = scalar_select %p41, %s42, %s43
      %p47 = pneg %p41
      %p48 = scmp.eq.s32.totalorder %s11, 1
      %p49 = por %p47, %p48
      %p50 = scmp.ne.s32.totalorder %s42, %s45
      %p51 = scmp.eq.s32.totalorder %s11, 0
      %p52 = por %p50, %p51
      %p53 = scmp.ne.s32.totalorder %s42, %s45
      %p54 = scmp.eq.s32.totalorder %s16, 1
      %p55 = por %p53, %p54
      %p56 = scmp.ne.s32.totalorder %s45, %s46
      %p57 = scmp.eq.s32.totalorder %s16, 0
      %p58 = por %p56, %p57
      %p59 = scmp.ne.s32.totalorder %s45, %s46
      %p60 = scmp.eq.s32.totalorder %s17, 1
      %p61 = por %p59, %p60
      %p63 = scmp.ne.s32.totalorder %s46, %s62
      %p64 = scmp.eq.s32.totalorder %s17, 0
      %p65 = por %p63, %p64
      %p66 = scmp.le.s32.totalorder 1, %s11
      %p67 = scmp.lt.s32.totalorder %s11, 3
      %p68 = pnand %p66, %p67
      %p69 = pneg %p68
      // Predicated region
      $region9: #{tpu_custom_call.1} parent=5 // pred_check
        _
      $region10: #{tpu_custom_call.1} parent=5 // pred_check_branch
        %71 = sbr.rel (%p68) target = $region12
      $region11: #{tpu_custom_call.1} parent=5 // pred_region
        %s72 = ssub.s32 %s11, 1
        // Predicated region
        $region13: #{tpu_custom_call.1} parent=11 // pred_check
          %p73 = pneg %p32
        $region14: #{tpu_custom_call.1} parent=11 // pred_check_branch
          %75 = sbr.rel (%p73) target = $region16
        $region15: #{tpu_custom_call.1} parent=11 // pred_region
          %s77 = ssub.s32 128, 128
          %78 = vsyncadd [#allocation3], %s77
          %s80 = sshll.u32 [#allocation2], 4
          %s81 = int_to_ptr.vmem [resolvable:$true] %s80
          %83 = dma.hbm_to_vmem [thread:$0]  %s0, 128, %s81, [#allocation3]
        $region16: #{tpu_custom_call.1} parent=11 // pred_fallthru
          _
      $region12: #{tpu_custom_call.1} parent=5 // pred_fallthru
        _
      %p84 = scmp.lt.s32.totalorder %s11, 2
      // Predicated region
      $region17: #{tpu_custom_call.1} parent=5 // pred_check
        %p85 = pneg %p84
      $region18: #{tpu_custom_call.1} parent=5 // pred_check_branch
        %87 = sbr.rel (%p85) target = $region20
      $region19: #{tpu_custom_call.1} parent=5 // pred_region
        _
      $region20: #{tpu_custom_call.1} parent=5 // pred_fallthru
        _
      %p88 = scmp.le.s32.totalorder 1, %s11
      %p89 = scmp.lt.s32.totalorder %s11, 3
      %p90 = pnand %p88, %p89
      %p91 = pneg %p90
      // Predicated region
      $region21: #{tpu_custom_call.1} parent=5 // pred_check
        _
      $region22: #{tpu_custom_call.1} parent=5 // pred_check_branch
        %93 = sbr.rel (%p90) target = $region24
      $region23: #{tpu_custom_call.1} parent=5 // pred_region
        %s94 = ssub.s32 %s11, 1
        // Predicated region
        $region25: #{tpu_custom_call.1} parent=23 // pred_check
          %p95 = pneg %p32
        $region26: #{tpu_custom_call.1} parent=23 // pred_check_branch
          %97 = sbr.rel (%p95) target = $region28
        $region27: #{tpu_custom_call.1} parent=23 // pred_region
          %98 = dma.done [#allocation3], 128
        $region28: #{tpu_custom_call.1} parent=23 // pred_fallthru
          _
        %p99 = pneg %p32
        %p100 = pneg %p29
        %p101 = pneg %p58
        %p102 = pneg %p55
        %s103 = sand.u32 %s45, 1
        %s104 = scalar_lea.sflag [#allocation4], %s103
        %s105 = sand.u32 %s45, 1
        %s106 = smul.addr %s105, 8
        %s107 = scalar_lea.vmem [#allocation5], %s106
        %v108 = vld [vmem:[#allocation2] sm:$0xff]
        %v109 = vadd.f32 %v108, 1.0
        %110 = vst [vmem:[%s107] sm:$0xff] %v109
        %s111 = sand.u32 %s45, 1
        %s112 = scalar_lea.sflag [#allocation4], %s111
        %s113 = sand.u32 %s45, 1
        %s114 = smul.addr %s113, 8
        %s115 = scalar_lea.vmem [#allocation5], %s114
        // Predicated region
        $region29: #{tpu_custom_call.1} parent=23 // pred_check
          %p116 = pneg %p55
        $region30: #{tpu_custom_call.1} parent=23 // pred_check_branch
          %118 = sbr.rel (%p116) target = $region32
        $region31: #{tpu_custom_call.1} parent=23 // pred_region
          %s120 = ssub.s32 128, 128
          %121 = vsyncadd %s112, %s120
          %s122 = smul.addr %s16, 128
          %s123 = scalar_lea.hbm %s1, %s122
          %s125 = sshll.u32 %s115, 4
          %s126 = int_to_ptr.vmem [resolvable:$true] %s125
          %128 = dma.vmem_to_hbm [thread:$0]  %s126, 128, %s123, %s112
        $region32: #{tpu_custom_call.1} parent=23 // pred_fallthru
          _
      $region24: #{tpu_custom_call.1} parent=5 // pred_fallthru
        _
      %p129 = scmp.le.s32.totalorder 2, %s11
      // Predicated region
      $region33: #{tpu_custom_call.1} parent=5 // pred_check
        %p130 = pneg %p129
      $region34: #{tpu_custom_call.1} parent=5 // pred_check_branch
        %132 = sbr.rel (%p130) target = $region36
      $region35: #{tpu_custom_call.1} parent=5 // pred_region
        %s133 = ssub.s32 %s11, 2
        // Predicated region
        $region37: #{tpu_custom_call.1} parent=35 // pred_check
          %p134 = pneg %p61
        $region38: #{tpu_custom_call.1} parent=35 // pred_check_branch
          %136 = sbr.rel (%p134) target = $region40
        $region39: #{tpu_custom_call.1} parent=35 // pred_region
          %s137 = sand.u32 %s46, 1
          %s138 = scalar_lea.sflag [#allocation4], %s137
          %s139 = sand.u32 %s46, 1
          %s140 = smul.addr %s139, 8
          %s141 = scalar_lea.vmem [#allocation5], %s140
          %142 = dma.done %s138, 128
        $region40: #{tpu_custom_call.1} parent=35 // pred_fallthru
          _
      $region36: #{tpu_custom_call.1} parent=5 // pred_fallthru
        _
    $region6: #{tpu_custom_call.1} parent=1 // loop_footer
      %s15 = sadd.s32 1, %s11
    $region7: #{tpu_custom_call.1} parent=1 // loop_footer_branch
      %10 = sbr.rel target = $region3
    $region8: #{tpu_custom_call.1} parent=1 // loop_exit
      _
    %143 = vsyncpa [#allocation3], 1
    %s144 = scalar_lea.sflag [#allocation3], 1
    %145 = vsyncpa %s144, 1
    %146 = vsyncpa [#allocation4], 1
    %s147 = scalar_lea.sflag [#allocation4], 1
    %148 = vsyncpa %s147, 1

// kernel: tpu_custom_call.1
$region0: #{tpu_custom_call.1}
  #allocation0 [shape = 'u32[]', space=smem, size = 0x4, offset = 0x4, fixed_abs, tag = 'smem constant byte address 0x4 - core index']
  #allocation1 [shape = 'u32[144,128]{1,0:T(1,128)}', space=vmem, size = 0x12000, scoped, tag = 'internal scratch']
  %s0 = inlined_call_operand.hbm [shape: bf16[32,16,512], index: 0, kind: input, shape index: {}]
  %s1 = inlined_call_operand.hbm [shape: bf16[3,512,512], index: 1, kind: input, shape index: {}]
  %s2 = inlined_call_operand.hbm [shape: bf16[3,512,384], index: 2, kind: input, shape index: {}]
  %s3 = inlined_call_operand.hbm [shape: f32[1,512], index: 3, kind: input, shape index: {}]
  %s4 = inlined_call_operand.hbm [shape: f32[1,384], index: 4, kind: input, shape index: {}]
  %s5 = inlined_call_operand.vmem [shape: f32[32,12,384], index: 5, kind: output, shape index: {}]
  %s6 = sld [smem:[#allocation0]]
  $region73: #{tpu_custom_call.1} parent=0
    _
  %s8 = ssub.s32 1, %s6
  %s9 = scalar_select 0, %s8, %s6
  $region1: #{tpu_custom_call.1} parent=0
    #allocation2 [shape = 'u8[524288]{0}', space=vmem, size = 0x80000, scoped, tag = 'input window, operand 0']
    #allocation3 [shape = 's32[2]{0}', space=sflag, size = 0x8, scoped, tag = 'scoped memory for tpu_custom_call.1']
    #allocation4 [shape = 'u8[1572864]{0}', space=vmem, size = 0x180000, scoped, tag = 'input window, operand 1, single buffered']
    #allocation5 [shape = 's32[1]{0}', space=sflag, size = 0x4, scoped, tag = 'scoped memory for tpu_custom_call.1']
    #allocation6 [shape = 'u8[1179648]{0}', space=vmem, size = 0x120000, scoped, tag = 'input window, operand 2, single buffered']
    #allocation7 [shape = 'u8[2048]{0}', space=vmem, size = 0x800, scoped, tag = 'input window, operand 3, single buffered']
    #allocation8 [shape = 's32[1]{0}', space=sflag, size = 0x4, scoped, tag = 'scoped memory for tpu_custom_call.1']
    #allocation9 [shape = 'u8[1536]{0}', space=vmem, size = 0x800, scoped, tag = 'input window, operand 4, single buffered']
    %10 = vsyncpa [#allocation3], 0
    %s11 = scalar_lea.sflag [#allocation3], 1
    %12 = vsyncpa %s11, 0
    %13 = vsyncpa [#allocation5], 0
    %14 = vsyncpa [#allocation8], 0
    loop: start=0, step=1, limit=4
    $region2: #{tpu_custom_call.1} parent=1 // loop_pre_header
      _
    $region3: #{tpu_custom_call.1} parent=1 // loop_header
      %s16 = sphi 0, %s20
      %p17 = scmp.ge.s32.totalorder %s16, 4
      %s26 = sphi 0, %s28
      %s29 = sphi 0, %s26
      %s30 = sphi 0, %s29
      %s46 = sphi 0, %s30
      %s50 = sphi 0, %s50
      %s52 = sphi 0, %s50
      %s53 = sphi 0, %s52
      %s67 = sphi 0, %s53
      %s71 = sphi 0, %s71
      %s73 = sphi 0, %s71
      %s74 = sphi 0, %s73
      %s88 = sphi 0, %s74
      %s92 = sphi 0, %s92
      %s94 = sphi 0, %s92
      %s95 = sphi 0, %s94
      %s109 = sphi 0, %s95
      %s113 = sphi 0, %s113
      %s115 = sphi 0, %s113
      %s116 = sphi 0, %s115
      %s130 = sphi 0, %s116
      %s136 = sphi 0, %s138
      %s139 = sphi 0, %s136
      %s140 = sphi 0, %s139
      %s156 = sphi 0, %s140
    $region4: #{tpu_custom_call.1} parent=1 // loop_header_branch
      %19 = sbr.rel (%p17) target = $region8
    $region5: #{tpu_custom_call.1} parent=1 // loop_body
      %s21 = ssub.s32 %s16, 1
      %s22 = ssub.s32 %s16, 2
      %s23 = sadd.s32 %s16, 1
      %s24 = ssub.s32 %s16, %s23
      %p25 = scmp.eq.s32.totalorder %s24, 0
      %s27 = sadd.s32 %s26, 1
      %s28 = scalar_select %p25, %s26, %s27
      %p31 = pneg %p25
      %p32 = scmp.eq.s32.totalorder %s16, 1
      %p33 = por %p31, %p32
      %p34 = scmp.ne.s32.totalorder %s26, %s29
      %p35 = scmp.eq.s32.totalorder %s16, 0
      %p36 = por %p34, %p35
      %p37 = scmp.ne.s32.totalorder %s26, %s29
      %p38 = scmp.eq.s32.totalorder %s21, 1
      %p39 = por %p37, %p38
      %p40 = scmp.ne.s32.totalorder %s29, %s30
      %p41 = scmp.eq.s32.totalorder %s21, 0
      %p42 = por %p40, %p41
      %p43 = scmp.ne.s32.totalorder %s29, %s30
      %p44 = scmp.eq.s32.totalorder %s22, 1
      %p45 = por %p43, %p44
      %p47 = scmp.ne.s32.totalorder %s30, %s46
      %p48 = scmp.eq.s32.totalorder %s22, 0
      %p49 = por %p47, %p48
      %s51 = sadd.s32 %s50, 1
      %p54 = scmp.eq.s32.totalorder %s16, 1
      %p55 = scmp.ne.s32.totalorder %s50, %s52
      %p56 = scmp.eq.s32.totalorder %s16, 0
      %p57 = por %p55, %p56
      %p58 = scmp.ne.s32.totalorder %s50, %s52
      %p59 = scmp.eq.s32.totalorder %s21, 1
      %p60 = por %p58, %p59
      %p61 = scmp.ne.s32.totalorder %s52, %s53
      %p62 = scmp.eq.s32.totalorder %s21, 0
      %p63 = por %p61, %p62
      %p64 = scmp.ne.s32.totalorder %s52, %s53
      %p65 = scmp.eq.s32.totalorder %s22, 1
      %p66 = por %p64, %p65
      %p68 = scmp.ne.s32.totalorder %s53, %s67
      %p69 = scmp.eq.s32.totalorder %s22, 0
      %p70 = por %p68, %p69
      %s72 = sadd.s32 %s71, 1
      %p75 = scmp.eq.s32.totalorder %s16, 1
      %p76 = scmp.ne.s32.totalorder %s71, %s73
      %p77 = scmp.eq.s32.totalorder %s16, 0
      %p78 = por %p76, %p77
      %p79 = scmp.ne.s32.totalorder %s71, %s73
      %p80 = scmp.eq.s32.totalorder %s21, 1
      %p81 = por %p79, %p80
      %p82 = scmp.ne.s32.totalorder %s73, %s74
      %p83 = scmp.eq.s32.totalorder %s21, 0
      %p84 = por %p82, %p83
      %p85 = scmp.ne.s32.totalorder %s73, %s74
      %p86 = scmp.eq.s32.totalorder %s22, 1
      %p87 = por %p85, %p86
      %p89 = scmp.ne.s32.totalorder %s74, %s88
      %p90 = scmp.eq.s32.totalorder %s22, 0
      %p91 = por %p89, %p90
      %s93 = sadd.s32 %s92, 1
      %p96 = scmp.eq.s32.totalorder %s16, 1
      %p97 = scmp.ne.s32.totalorder %s92, %s94
      %p98 = scmp.eq.s32.totalorder %s16, 0
      %p99 = por %p97, %p98
      %p100 = scmp.ne.s32.totalorder %s92, %s94
      %p101 = scmp.eq.s32.totalorder %s21, 1
      %p102 = por %p100, %p101
      %p103 = scmp.ne.s32.totalorder %s94, %s95
      %p104 = scmp.eq.s32.totalorder %s21, 0
      %p105 = por %p103, %p104
      %p106 = scmp.ne.s32.totalorder %s94, %s95
      %p107 = scmp.eq.s32.totalorder %s22, 1
      %p108 = por %p106, %p107
      %p110 = scmp.ne.s32.totalorder %s95, %s109
      %p111 = scmp.eq.s32.totalorder %s22, 0
      %p112 = por %p110, %p111
      %s114 = sadd.s32 %s113, 1
      %p117 = scmp.eq.s32.totalorder %s16, 1
      %p118 = scmp.ne.s32.totalorder %s113, %s115
      %p119 = scmp.eq.s32.totalorder %s16, 0
      %p120 = por %p118, %p119
      %p121 = scmp.ne.s32.totalorder %s113, %s115
      %p122 = scmp.eq.s32.totalorder %s21, 1
      %p123 = por %p121, %p122
      %p124 = scmp.ne.s32.totalorder %s115, %s116
      %p125 = scmp.eq.s32.totalorder %s21, 0
      %p126 = por %p124, %p125
      %p127 = scmp.ne.s32.totalorder %s115, %s116
      %p128 = scmp.eq.s32.totalorder %s22, 1
      %p129 = por %p127, %p128
      %p131 = scmp.ne.s32.totalorder %s116, %s130
      %p132 = scmp.eq.s32.totalorder %s22, 0
      %p133 = por %p131, %p132
      %s134 = ssub.s32 %s16, %s23
      %p135 = scmp.eq.s32.totalorder %s134, 0
      %s137 = sadd.s32 %s136, 1
      %s138 = scalar_select %p135, %s136, %s137
      %p141 = pneg %p135
      %p142 = scmp.eq.s32.totalorder %s16, 1
      %p143 = por %p141, %p142
      %p144 = scmp.ne.s32.totalorder %s136, %s139
      %p145 = scmp.eq.s32.totalorder %s16, 0
      %p146 = por %p144, %p145
      %p147 = scmp.ne.s32.totalorder %s136, %s139
      %p148 = scmp.eq.s32.totalorder %s21, 1
      %p149 = por %p147, %p148
      %p150 = scmp.ne.s32.totalorder %s139, %s140
      %p151 = scmp.eq.s32.totalorder %s21, 0
      %p152 = por %p150, %p151
      %p153 = scmp.ne.s32.totalorder %s139, %s140
      %p154 = scmp.eq.s32.totalorder %s22, 1
      %p155 = por %p153, %p154
      %p157 = scmp.ne.s32.totalorder %s140, %s156
      %p158 = scmp.eq.s32.totalorder %s22, 0
      %p159 = por %p157, %p158
      %p160 = scmp.le.s32.totalorder 1, %s16
      %p161 = scmp.lt.s32.totalorder %s16, 3
      %p162 = pnand %p160, %p161
      %p163 = pneg %p162
      // Predicated region
      $region9: #{tpu_custom_call.1} parent=5 // pred_check
        _
      $region10: #{tpu_custom_call.1} parent=5 // pred_check_branch
        %165 = sbr.rel (%p162) target = $region12
      $region11: #{tpu_custom_call.1} parent=5 // pred_region
        %s166 = ssub.s32 %s16, 1
        // Predicated region
        $region13: #{tpu_custom_call.1} parent=11 // pred_check
          %p167 = pneg %p63
        $region14: #{tpu_custom_call.1} parent=11 // pred_check_branch
          %169 = sbr.rel (%p167) target = $region16
        $region15: #{tpu_custom_call.1} parent=11 // pred_region
          %s171 = ssub.s32 49152, 49152
          %172 = vsyncadd [#allocation5], %s171
          %s173 = sshll.u32 [#allocation4], 4
          %s174 = int_to_ptr.vmem [resolvable:$true] %s173
          %179 = dma.hbm_to_vmem [thread:$0]  %s1, 49152, %s174, [#allocation5], 256, 256, 16
        $region16: #{tpu_custom_call.1} parent=11 // pred_fallthru
          _
        // Predicated region
        $region17: #{tpu_custom_call.1} parent=11 // pred_check
          %p180 = pneg %p84
        $region18: #{tpu_custom_call.1} parent=11 // pred_check_branch
          %182 = sbr.rel (%p180) target = $region20
        $region19: #{tpu_custom_call.1} parent=11 // pred_region
          %s184 = ssub.s32 36864, 36864
          %185 = vsyncadd [#allocation5], %s184
          %s186 = sshll.u32 [#allocation6], 4
          %s187 = int_to_ptr.vmem [resolvable:$true] %s186
          %192 = dma.hbm_to_vmem [thread:$0]  %s2, 36864, %s187, [#allocation5], 192, 192, 12
        $region20: #{tpu_custom_call.1} parent=11 // pred_fallthru
          _
        // Predicated region
        $region21: #{tpu_custom_call.1} parent=11 // pred_check
          %p193 = pneg %p105
        $region22: #{tpu_custom_call.1} parent=11 // pred_check_branch
          %195 = sbr.rel (%p193) target = $region24
        $region23: #{tpu_custom_call.1} parent=11 // pred_region
          %s197 = ssub.s32 64, 64
          %198 = vsyncadd [#allocation8], %s197
          %s200 = sshll.u32 [#allocation7], 4
          %s201 = int_to_ptr.vmem [resolvable:$true] %s200
          %203 = dma.hbm_to_vmem [thread:$0]  %s3, 64, %s201, [#allocation8]
        $region24: #{tpu_custom_call.1} parent=11 // pred_fallthru
          _
        // Predicated region
        $region25: #{tpu_custom_call.1} parent=11 // pred_check
          %p204 = pneg %p126
        $region26: #{tpu_custom_call.1} parent=11 // pred_check_branch
          %206 = sbr.rel (%p204) target = $region28
        $region27: #{tpu_custom_call.1} parent=11 // pred_region
          %s208 = ssub.s32 48, 48
          %209 = vsyncadd [#allocation8], %s208
          %s211 = sshll.u32 [#allocation9], 4
          %s212 = int_to_ptr.vmem [resolvable:$true] %s211
          %214 = dma.hbm_to_vmem [thread:$0]  %s4, 48, %s212, [#allocation8]
        $region28: #{tpu_custom_call.1} parent=11 // pred_fallthru
          _
      $region12: #{tpu_custom_call.1} parent=5 // pred_fallthru
        _
      %p215 = scmp.lt.s32.totalorder %s16, 2
      // Predicated region
      $region29: #{tpu_custom_call.1} parent=5 // pred_check
        %p216 = pneg %p215
      $region30: #{tpu_custom_call.1} parent=5 // pred_check_branch
        %218 = sbr.rel (%p216) target = $region32
      $region31: #{tpu_custom_call.1} parent=5 // pred_region
        // Predicated region
        $region33: #{tpu_custom_call.1} parent=31 // pred_check
          %p219 = pneg %p36
        $region34: #{tpu_custom_call.1} parent=31 // pred_check_branch
          %221 = sbr.rel (%p219) target = $region36
        $region35: #{tpu_custom_call.1} parent=31 // pred_region
          %s222 = sand.u32 %s26, 1
          %s223 = scalar_lea.sflag [#allocation3], %s222
          %s224 = sand.u32 %s26, 1
          %s225 = smul.addr %s224, 512
          %s226 = scalar_lea.vmem [#allocation2], %s225
          %s227 = smul.u32 16, %s16
          %s229 = ssub.s32 8192, 8192
          %230 = vsyncadd %s223, %s229
          %s231 = smul.addr %s227, 8
          %s232 = smul.addr %s231, 64
          %s233 = scalar_lea.hbm %s0, %s232
          %s234 = sshll.u32 %s226, 4
          %s235 = int_to_ptr.vmem [resolvable:$true] %s234
          %240 = dma.hbm_to_vmem [thread:$0]  %s233, 8192, %s235, %s223, 256, 256, 16
        $region36: #{tpu_custom_call.1} parent=31 // pred_fallthru
          _
      $region32: #{tpu_custom_call.1} parent=5 // pred_fallthru
        _
      %p241 = scmp.le.s32.totalorder 1, %s16
      %p242 = scmp.lt.s32.totalorder %s16, 3
      %p243 = pnand %p241, %p242
      %p244 = pneg %p243
      // Predicated region
      $region37: #{tpu_custom_call.1} parent=5 // pred_check
        _
      $region38: #{tpu_custom_call.1} parent=5 // pred_check_branch
        %246 = sbr.rel (%p243) target = $region40
      $region39: #{tpu_custom_call.1} parent=5 // pred_region
        %s247 = ssub.s32 %s16, 1
        %s248 = sand.u32 %s29, 1
        %s249 = scalar_lea.sflag [#allocation3], %s248
        %s250 = sand.u32 %s29, 1
        %s251 = smul.addr %s250, 512
        %s252 = scalar_lea.vmem [#allocation2], %s251
        // Predicated region
        $region41: #{tpu_custom_call.1} parent=39 // pred_check
          %p253 = pneg %p42
        $region42: #{tpu_custom_call.1} parent=39 // pred_check_branch
          %255 = sbr.rel (%p253) target = $region44
        $region43: #{tpu_custom_call.1} parent=39 // pred_region
          %256 = dma.done %s249, 8192
        $region44: #{tpu_custom_call.1} parent=39 // pred_fallthru
          _
        // Predicated region
        $region45: #{tpu_custom_call.1} parent=39 // pred_check
          %p257 = pneg %p63
        $region46: #{tpu_custom_call.1} parent=39 // pred_check_branch
          %259 = sbr.rel (%p257) target = $region48
        $region47: #{tpu_custom_call.1} parent=39 // pred_region
          %260 = dma.done [#allocation5], 49152
        $region48: #{tpu_custom_call.1} parent=39 // pred_fallthru
          _
        // Predicated region
        $region49: #{tpu_custom_call.1} parent=39 // pred_check
          %p261 = pneg %p84
        $region50: #{tpu_custom_call.1} parent=39 // pred_check_branch
          %263 = sbr.rel (%p261) target = $region52
        $region51: #{tpu_custom_call.1} parent=39 // pred_region
          %264 = dma.done [#allocation5], 36864
        $region52: #{tpu_custom_call.1} parent=39 // pred_fallthru
          _
        // Predicated region
        $region53: #{tpu_custom_call.1} parent=39 // pred_check
          %p265 = pneg %p105
        $region54: #{tpu_custom_call.1} parent=39 // pred_check_branch
          %267 = sbr.rel (%p265) target = $region56
        $region55: #{tpu_custom_call.1} parent=39 // pred_region
          %268 = dma.done [#allocation8], 64
        $region56: #{tpu_custom_call.1} parent=39 // pred_fallthru
          _
        // Predicated region
        $region57: #{tpu_custom_call.1} parent=39 // pred_check
          %p269 = pneg %p126
        $region58: #{tpu_custom_call.1} parent=39 // pred_check_branch
          %271 = sbr.rel (%p269) target = $region60
        $region59: #{tpu_custom_call.1} parent=39 // pred_region
          %272 = dma.done [#allocation8], 48
        $region60: #{tpu_custom_call.1} parent=39 // pred_fallthru
          _
        %s273 = sand.u32 %s29, 1
        %s274 = scalar_lea.sflag [#allocation3], %s273
        %s275 = sand.u32 %s29, 1
        %s276 = smul.addr %s275, 512
        %s277 = scalar_lea.vmem [#allocation2], %s276
        %p278 = pneg %p42
        %p279 = pneg %p39
        %p280 = pneg %p63
        %p281 = pneg %p60
        %p282 = pneg %p84
        %p283 = pneg %p81
        %p284 = pneg %p105
        %p285 = pneg %p102
        %p286 = pneg %p126
        %p287 = pneg %p123
        %p288 = pneg %p152
        %p289 = pneg %p149
        %s290 = smul.u32 16, %s21
        %p291 = scmp.lt.s32.totalorder %s290, 31
        %s292 = scalar_select %p291, %s290, 31
        %s293 = smul.addr %s292, 6
        %s294 = smul.addr %s293, 8
        %s295 = scalar_lea.vmem %s5, %s294
        %s296 = smul.u32 16, %s21
        %s297 = smul.u32 16, %s21
        %p298 = scmp.lt.s32.totalorder %s297, 31
        %s299 = scalar_select %p298, %s297, 31
        %s300 = smul.addr %s299, 6
        %s301 = smul.addr %s300, 8
        %s302 = scalar_lea.vmem %s5, %s301
        %s303 = smul.u32 16, %s21
        %v305 = vld [vmem:[%s252] sm:$0xff]
        %v306 = vld [vmem:[%s252 + $0x8] sm:$0xff]
        %v307 = vld [vmem:[%s252 + $0x10] sm:$0xff]
        %v308 = vld [vmem:[%s252 + $0x18] sm:$0xff]
        %v309 = vld [vmem:[%s252 + $0x20] sm:$0xff]
        %v310 = vld [vmem:[%s252 + $0x28] sm:$0xff]
        %v311 = vld [vmem:[%s252 + $0x30] sm:$0xff]
        %v312 = vld [vmem:[%s252 + $0x38] sm:$0xff]
        %v313 = vld [vmem:[%s252 + $0x40] sm:$0xff]
        %v314 = vld [vmem:[%s252 + $0x48] sm:$0xff]
        %v315 = vld [vmem:[%s252 + $0x50] sm:$0xff]
        %v316 = vld [vmem:[%s252 + $0x58] sm:$0xff]
        %v317 = vld [vmem:[%s252 + $0x60] sm:$0xff]
        %v318 = vld [vmem:[%s252 + $0x68] sm:$0xff]
        %v319 = vld [vmem:[%s252 + $0x70] sm:$0xff]
        %v320 = vld [vmem:[%s252 + $0x78] sm:$0xff]
        %v321 = vld [vmem:[%s252 + $0x80] sm:$0xff]
        %v322 = vld [vmem:[%s252 + $0x88] sm:$0xff]
        %v323 = vld [vmem:[%s252 + $0x90] sm:$0xff]
        %v324 = vld [vmem:[%s252 + $0x98] sm:$0xff]
        %v325 = vld [vmem:[%s252 + $0xa0] sm:$0xff]
        %v326 = vld [vmem:[%s252 + $0xa8] sm:$0xff]
        %v327 = vld [vmem:[%s252 + $0xb0] sm:$0xff]
        %v328 = vld [vmem:[%s252 + $0xb8] sm:$0xff]
        %v329 = vld [vmem:[%s252 + $0xc0] sm:$0xff]
        %v330 = vld [vmem:[%s252 + $0xc8] sm:$0xff]
        %v331 = vld [vmem:[%s252 + $0xd0] sm:$0xff]
        %v332 = vld [vmem:[%s252 + $0xd8] sm:$0xff]
        %v333 = vld [vmem:[%s252 + $0xe0] sm:$0xff]
        %v334 = vld [vmem:[%s252 + $0xe8] sm:$0xff]
        %v335 = vld [vmem:[%s252 + $0xf0] sm:$0xff]
        %v336 = vld [vmem:[%s252 + $0xf8] sm:$0xff]
        %v337 = vld [vmem:[%s252 + $0x100] sm:$0xff]
        %v338 = vld [vmem:[%s252 + $0x108] sm:$0xff]
        %v339 = vld [vmem:[%s252 + $0x110] sm:$0xff]
        %v340 = vld [vmem:[%s252 + $0x118] sm:$0xff]
        %v341 = vld [vmem:[%s252 + $0x120] sm:$0xff]
        %v342 = vld [vmem:[%s252 + $0x128] sm:$0xff]
        %v343 = vld [vmem:[%s252 + $0x130] sm:$0xff]
        %v344 = vld [vmem:[%s252 + $0x138] sm:$0xff]
        %v345 = vld [vmem:[%s252 + $0x140] sm:$0xff]
        %v346 = vld [vmem:[%s252 + $0x148] sm:$0xff]
        %v347 = vld [vmem:[%s252 + $0x150] sm:$0xff]
        %v348 = vld [vmem:[%s252 + $0x158] sm:$0xff]
        %v349 = vld [vmem:[%s252 + $0x160] sm:$0xff]
        %v350 = vld [vmem:[%s252 + $0x168] sm:$0xff]
        %v351 = vld [vmem:[%s252 + $0x170] sm:$0xff]
        %v352 = vld [vmem:[%s252 + $0x178] sm:$0xff]
        %v353 = vld [vmem:[%s252 + $0x180] sm:$0xff]
        %v354 = vld [vmem:[%s252 + $0x188] sm:$0xff]
        %v355 = vld [vmem:[%s252 + $0x190] sm:$0xff]
        %v356 = vld [vmem:[%s252 + $0x198] sm:$0xff]
        %v357 = vld [vmem:[%s252 + $0x1a0] sm:$0xff]
        %v358 = vld [vmem:[%s252 + $0x1a8] sm:$0xff]
        %v359 = vld [vmem:[%s252 + $0x1b0] sm:$0xff]
        %v360 = vld [vmem:[%s252 + $0x1b8] sm:$0xff]
        %v361 = vld [vmem:[%s252 + $0x1c0] sm:$0xff]
        %v362 = vld [vmem:[%s252 + $0x1c8] sm:$0xff]
        %v363 = vld [vmem:[%s252 + $0x1d0] sm:$0xff]
        %v364 = vld [vmem:[%s252 + $0x1d8] sm:$0xff]
        %v365 = vld [vmem:[%s252 + $0x1e0] sm:$0xff]
        %v366 = vld [vmem:[%s252 + $0x1e8] sm:$0xff]
        %v367 = vld [vmem:[%s252 + $0x1f0] sm:$0xff]
        %v368 = vld [vmem:[%s252 + $0x1f8] sm:$0xff]
        %v369 = vmax.bf16 %v305, 0
        %v370 = vmax.bf16 %v306, 0
        %v371 = vmax.bf16 %v307, 0
        %v372 = vmax.bf16 %v308, 0
        %v373 = vmax.bf16 %v309, 0
        %v374 = vmax.bf16 %v310, 0
        %v375 = vmax.bf16 %v311, 0
        %v376 = vmax.bf16 %v312, 0
        %v377 = vmax.bf16 %v313, 0
        %v378 = vmax.bf16 %v314, 0
        %v379 = vmax.bf16 %v315, 0
        %v380 = vmax.bf16 %v316, 0
        %v381 = vmax.bf16 %v317, 0
        %v382 = vmax.bf16 %v318, 0
        %v383 = vmax.bf16 %v319, 0
        %v384 = vmax.bf16 %v320, 0
        %v385 = vmax.bf16 %v321, 0
        %v386 = vmax.bf16 %v322, 0
        %v387 = vmax.bf16 %v323, 0
        %v388 = vmax.bf16 %v324, 0
        %v389 = vmax.bf16 %v325, 0
        %v390 = vmax.bf16 %v326, 0
        %v391 = vmax.bf16 %v327, 0
        %v392 = vmax.bf16 %v328, 0
        %v393 = vmax.bf16 %v329, 0
        %v394 = vmax.bf16 %v330, 0
        %v395 = vmax.bf16 %v331, 0
        %v396 = vmax.bf16 %v332, 0
        %v397 = vmax.bf16 %v333, 0
        %v398 = vmax.bf16 %v334, 0
        %v399 = vmax.bf16 %v335, 0
        %v400 = vmax.bf16 %v336, 0
        %v401 = vmax.bf16 %v337, 0
        %v402 = vmax.bf16 %v338, 0
        %v403 = vmax.bf16 %v339, 0
        %v404 = vmax.bf16 %v340, 0
        %v405 = vmax.bf16 %v341, 0
        %v406 = vmax.bf16 %v342, 0
        %v407 = vmax.bf16 %v343, 0
        %v408 = vmax.bf16 %v344, 0
        %v409 = vmax.bf16 %v345, 0
        %v410 = vmax.bf16 %v346, 0
        %v411 = vmax.bf16 %v347, 0
        %v412 = vmax.bf16 %v348, 0
        %v413 = vmax.bf16 %v349, 0
        %v414 = vmax.bf16 %v350, 0
        %v415 = vmax.bf16 %v351, 0
        %v416 = vmax.bf16 %v352, 0
        %v417 = vmax.bf16 %v353, 0
        %v418 = vmax.bf16 %v354, 0
        %v419 = vmax.bf16 %v355, 0
        %v420 = vmax.bf16 %v356, 0
        %v421 = vmax.bf16 %v357, 0
        %v422 = vmax.bf16 %v358, 0
        %v423 = vmax.bf16 %v359, 0
        %v424 = vmax.bf16 %v360, 0
        %v425 = vmax.bf16 %v361, 0
        %v426 = vmax.bf16 %v362, 0
        %v427 = vmax.bf16 %v363, 0
        %v428 = vmax.bf16 %v364, 0
        %v429 = vmax.bf16 %v365, 0
        %v430 = vmax.bf16 %v366, 0
        %v431 = vmax.bf16 %v367, 0
        %v432 = vmax.bf16 %v368, 0
        %v433 = vld [vmem:[#allocation4] sm:$0xff]
        %v434 = vld [vmem:[#allocation4 + $0x8] sm:$0xff]
        %v435 = vld [vmem:[#allocation4 + $0x10] sm:$0xff]
        %v436 = vld [vmem:[#allocation4 + $0x18] sm:$0xff]
        %v437 = vld [vmem:[#allocation4 + $0x20] sm:$0xff]
        %v438 = vld [vmem:[#allocation4 + $0x28] sm:$0xff]
        %v439 = vld [vmem:[#allocation4 + $0x30] sm:$0xff]
        %v440 = vld [vmem:[#allocation4 + $0x38] sm:$0xff]
        %v441 = vld [vmem:[#allocation4 + $0x40] sm:$0xff]
        %v442 = vld [vmem:[#allocation4 + $0x48] sm:$0xff]
        %v443 = vld [vmem:[#allocation4 + $0x50] sm:$0xff]
        %v444 = vld [vmem:[#allocation4 + $0x58] sm:$0xff]
        %v445 = vld [vmem:[#allocation4 + $0x60] sm:$0xff]
        %v446 = vld [vmem:[#allocation4 + $0x68] sm:$0xff]
        %v447 = vld [vmem:[#allocation4 + $0x70] sm:$0xff]
        %v448 = vld [vmem:[#allocation4 + $0x78] sm:$0xff]
        %v449 = vld [vmem:[#allocation4 + $0x80] sm:$0xff]
        %v450 = vld [vmem:[#allocation4 + $0x88] sm:$0xff]
        %v451 = vld [vmem:[#allocation4 + $0x90] sm:$0xff]
        %v452 = vld [vmem:[#allocation4 + $0x98] sm:$0xff]
        %v453 = vld [vmem:[#allocation4 + $0xa0] sm:$0xff]
        %v454 = vld [vmem:[#allocation4 + $0xa8] sm:$0xff]
        %v455 = vld [vmem:[#allocation4 + $0xb0] sm:$0xff]
        %v456 = vld [vmem:[#allocation4 + $0xb8] sm:$0xff]
        %v457 = vld [vmem:[#allocation4 + $0xc0] sm:$0xff]
        %v458 = vld [vmem:[#allocation4 + $0xc8] sm:$0xff]
        %v459 = vld [vmem:[#allocation4 + $0xd0] sm:$0xff]
        %v460 = vld [vmem:[#allocation4 + $0xd8] sm:$0xff]
        %v461 = vld [vmem:[#allocation4 + $0xe0] sm:$0xff]
        %v462 = vld [vmem:[#allocation4 + $0xe8] sm:$0xff]
        %v463 = vld [vmem:[#allocation4 + $0xf0] sm:$0xff]
        %v464 = vld [vmem:[#allocation4 + $0xf8] sm:$0xff]
        %v465 = vld [vmem:[#allocation4 + $0x100] sm:$0xff]
        %v466 = vld [vmem:[#allocation4 + $0x108] sm:$0xff]
        %v467 = vld [vmem:[#allocation4 + $0x110] sm:$0xff]
        %v468 = vld [vmem:[#allocation4 + $0x118] sm:$0xff]
        %v469 = vld [vmem:[#allocation4 + $0x120] sm:$0xff]
        %v470 = vld [vmem:[#allocation4 + $0x128] sm:$0xff]
        %v471 = vld [vmem:[#allocation4 + $0x130] sm:$0xff]
        %v472 = vld [vmem:[#allocation4 + $0x138] sm:$0xff]
        %v473 = vld [vmem:[#allocation4 + $0x140] sm:$0xff]
        %v474 = vld [vmem:[#allocation4 + $0x148] sm:$0xff]
        %v475 = vld [vmem:[#allocation4 + $0x150] sm:$0xff]
        %v476 = vld [vmem:[#allocation4 + $0x158] sm:$0xff]
        %v477 = vld [vmem:[#allocation4 + $0x160] sm:$0xff]
        %v478 = vld [vmem:[#allocation4 + $0x168] sm:$0xff]
        %v479 = vld [vmem:[#allocation4 + $0x170] sm:$0xff]
        %v480 = vld [vmem:[#allocation4 + $0x178] sm:$0xff]
        %v481 = vld [vmem:[#allocation4 + $0x180] sm:$0xff]
        %v482 = vld [vmem:[#allocation4 + $0x188] sm:$0xff]
        %v483 = vld [vmem:[#allocation4 + $0x190] sm:$0xff]
        %v484 = vld [vmem:[#allocation4 + $0x198] sm:$0xff]
        %v485 = vld [vmem:[#allocation4 + $0x1a0] sm:$0xff]
        %v486 = vld [vmem:[#allocation4 + $0x1a8] sm:$0xff]
        %v487 = vld [vmem:[#allocation4 + $0x1b0] sm:$0xff]
        %v488 = vld [vmem:[#allocation4 + $0x1b8] sm:$0xff]
        %v489 = vld [vmem:[#allocation4 + $0x1c0] sm:$0xff]
        %v490 = vld [vmem:[#allocation4 + $0x1c8] sm:$0xff]
        %v491 = vld [vmem:[#allocation4 + $0x1d0] sm:$0xff]
        %v492 = vld [vmem:[#allocation4 + $0x1d8] sm:$0xff]
        %v493 = vld [vmem:[#allocation4 + $0x1e0] sm:$0xff]
        %v494 = vld [vmem:[#allocation4 + $0x1e8] sm:$0xff]
        %v495 = vld [vmem:[#allocation4 + $0x1f0] sm:$0xff]
        %v496 = vld [vmem:[#allocation4 + $0x1f8] sm:$0xff]
        %v497 = vld [vmem:[#allocation4 + $0x200] sm:$0xff]
        %v498 = vld [vmem:[#allocation4 + $0x208] sm:$0xff]
        %v499 = vld [vmem:[#allocation4 + $0x210] sm:$0xff]
        %v500 = vld [vmem:[#allocation4 + $0x218] sm:$0xff]
        %v501 = vld [vmem:[#allocation4 + $0x220] sm:$0xff]
        %v502 = vld [vmem:[#allocation4 + $0x228] sm:$0xff]
        %v503 = vld [vmem:[#allocation4 + $0x230] sm:$0xff]
        %v504 = vld [vmem:[#allocation4 + $0x238] sm:$0xff]
        %v505 = vld [vmem:[#allocation4 + $0x240] sm:$0xff]
        %v506 = vld [vmem:[#allocation4 + $0x248] sm:$0xff]
        %v507 = vld [vmem:[#allocation4 + $0x250] sm:$0xff]
        %v508 = vld [vmem:[#allocation4 + $0x258] sm:$0xff]
        %v509 = vld [vmem:[#allocation4 + $0x260] sm:$0xff]
        %v510 = vld [vmem:[#allocation4 + $0x268] sm:$0xff]
        %v511 = vld [vmem:[#allocation4 + $0x270] sm:$0xff]
        %v512 = vld [vmem:[#allocation4 + $0x278] sm:$0xff]
        %v513 = vld [vmem:[#allocation4 + $0x280] sm:$0xff]
        %v514 = vld [vmem:[#allocation4 + $0x288] sm:$0xff]
        %v515 = vld [vmem:[#allocation4 + $0x290] sm:$0xff]
        %v516 = vld [vmem:[#allocation4 + $0x298] sm:$0xff]
        %v517 = vld [vmem:[#allocation4 + $0x2a0] sm:$0xff]
        %v518 = vld [vmem:[#allocation4 + $0x2a8] sm:$0xff]
        %v519 = vld [vmem:[#allocation4 + $0x2b0] sm:$0xff]
        %v520 = vld [vmem:[#allocation4 + $0x2b8] sm:$0xff]
        %v521 = vld [vmem:[#allocation4 + $0x2c0] sm:$0xff]
        %v522 = vld [vmem:[#allocation4 + $0x2c8] sm:$0xff]
        %v523 = vld [vmem:[#allocation4 + $0x2d0] sm:$0xff]
        %v524 = vld [vmem:[#allocation4 + $0x2d8] sm:$0xff]
        %v525 = vld [vmem:[#allocation4 + $0x2e0] sm:$0xff]
        %v526 = vld [vmem:[#allocation4 + $0x2e8] sm:$0xff]
        %v527 = vld [vmem:[#allocation4 + $0x2f0] sm:$0xff]
        %v528 = vld [vmem:[#allocation4 + $0x2f8] sm:$0xff]
        %v529 = vld [vmem:[#allocation4 + $0x300] sm:$0xff]
        %v530 = vld [vmem:[#allocation4 + $0x308] sm:$0xff]
        %v531 = vld [vmem:[#allocation4 + $0x310] sm:$0xff]
        %v532 = vld [vmem:[#allocation4 + $0x318] sm:$0xff]
        %v533 = vld [vmem:[#allocation4 + $0x320] sm:$0xff]
        %v534 = vld [vmem:[#allocation4 + $0x328] sm:$0xff]
        %v535 = vld [vmem:[#allocation4 + $0x330] sm:$0xff]
        %v536 = vld [vmem:[#allocation4 + $0x338] sm:$0xff]
        %v537 = vld [vmem:[#allocation4 + $0x340] sm:$0xff]
        %v538 = vld [vmem:[#allocation4 + $0x348] sm:$0xff]
        %v539 = vld [vmem:[#allocation4 + $0x350] sm:$0xff]
        %v540 = vld [vmem:[#allocation4 + $0x358] sm:$0xff]
        %v541 = vld [vmem:[#allocation4 + $0x360] sm:$0xff]
        %v542 = vld [vmem:[#allocation4 + $0x368] sm:$0xff]
        %v543 = vld [vmem:[#allocation4 + $0x370] sm:$0xff]
        %v544 = vld [vmem:[#allocation4 + $0x378] sm:$0xff]
        %v545 = vld [vmem:[#allocation4 + $0x380] sm:$0xff]
        %v546 = vld [vmem:[#allocation4 + $0x388] sm:$0xff]
        %v547 = vld [vmem:[#allocation4 + $0x390] sm:$0xff]
        %v548 = vld [vmem:[#allocation4 + $0x398] sm:$0xff]
        %v549 = vld [vmem:[#allocation4 + $0x3a0] sm:$0xff]
        %v550 = vld [vmem:[#allocation4 + $0x3a8] sm:$0xff]
        %v551 = vld [vmem:[#allocation4 + $0x3b0] sm:$0xff]
        %v552 = vld [vmem:[#allocation4 + $0x3b8] sm:$0xff]
        %v553 = vld [vmem:[#allocation4 + $0x3c0] sm:$0xff]
        %v554 = vld [vmem:[#allocation4 + $0x3c8] sm:$0xff]
        %v555 = vld [vmem:[#allocation4 + $0x3d0] sm:$0xff]
        %v556 = vld [vmem:[#allocation4 + $0x3d8] sm:$0xff]
        %v557 = vld [vmem:[#allocation4 + $0x3e0] sm:$0xff]
        %v558 = vld [vmem:[#allocation4 + $0x3e8] sm:$0xff]
        %v559 = vld [vmem:[#allocation4 + $0x3f0] sm:$0xff]
        %v560 = vld [vmem:[#allocation4 + $0x3f8] sm:$0xff]
        %s561 = scalar_lea.vmem [#allocation4], 1024
        %v562 = vld [vmem:[%s561] sm:$0xff]
        %v563 = vld [vmem:[%s561 + $0x8] sm:$0xff]
        %v564 = vld [vmem:[%s561 + $0x10] sm:$0xff]
        %v565 = vld [vmem:[%s561 + $0x18] sm:$0xff]
        %v566 = vld [vmem:[%s561 + $0x20] sm:$0xff]
        %v567 = vld [vmem:[%s561 + $0x28] sm:$0xff]
        %v568 = vld [vmem:[%s561 + $0x30] sm:$0xff]
        %v569 = vld [vmem:[%s561 + $0x38] sm:$0xff]
        %v570 = vld [vmem:[%s561 + $0x40] sm:$0xff]
        %v571 = vld [vmem:[%s561 + $0x48] sm:$0xff]
        %v572 = vld [vmem:[%s561 + $0x50] sm:$0xff]
        %v573 = vld [vmem:[%s561 + $0x58] sm:$0xff]
        %v574 = vld [vmem:[%s561 + $0x60] sm:$0xff]
        %v575 = vld [vmem:[%s561 + $0x68] sm:$0xff]
        %v576 = vld [vmem:[%s561 + $0x70] sm:$0xff]
        %v577 = vld [vmem:[%s561 + $0x78] sm:$0xff]
        %v578 = vld [vmem:[%s561 + $0x80] sm:$0xff]
        %v579 = vld [vmem:[%s561 + $0x88] sm:$0xff]
        %v580 = vld [vmem:[%s561 + $0x90] sm:$0xff]
        %v581 = vld [vmem:[%s561 + $0x98] sm:$0xff]
        %v582 = vld [vmem:[%s561 + $0xa0] sm:$0xff]
        %v583 = vld [vmem:[%s561 + $0xa8] sm:$0xff]
        %v584 = vld [vmem:[%s561 + $0xb0] sm:$0xff]
        %v585 = vld [vmem:[%s561 + $0xb8] sm:$0xff]
        %v586 = vld [vmem:[%s561 + $0xc0] sm:$0xff]
        %v587 = vld [vmem:[%s561 + $0xc8] sm:$0xff]
        %v588 = vld [vmem:[%s561 + $0xd0] sm:$0xff]
        %v589 = vld [vmem:[%s561 + $0xd8] sm:$0xff]
        %v590 = vld [vmem:[%s561 + $0xe0] sm:$0xff]
        %v591 = vld [vmem:[%s561 + $0xe8] sm:$0xff]
        %v592 = vld [vmem:[%s561 + $0xf0] sm:$0xff]
        %v593 = vld [vmem:[%s561 + $0xf8] sm:$0xff]
        %v594 = vld [vmem:[%s561 + $0x100] sm:$0xff]
        %v595 = vld [vmem:[%s561 + $0x108] sm:$0xff]
        %v596 = vld [vmem:[%s561 + $0x110] sm:$0xff]
        %v597 = vld [vmem:[%s561 + $0x118] sm:$0xff]
        %v598 = vld [vmem:[%s561 + $0x120] sm:$0xff]
        %v599 = vld [vmem:[%s561 + $0x128] sm:$0xff]
        %v600 = vld [vmem:[%s561 + $0x130] sm:$0xff]
        %v601 = vld [vmem:[%s561 + $0x138] sm:$0xff]
        %v602 = vld [vmem:[%s561 + $0x140] sm:$0xff]
        %v603 = vld [vmem:[%s561 + $0x148] sm:$0xff]
        %v604 = vld [vmem:[%s561 + $0x150] sm:$0xff]
        %v605 = vld [vmem:[%s561 + $0x158] sm:$0xff]
        %v606 = vld [vmem:[%s561 + $0x160] sm:$0xff]
        %v607 = vld [vmem:[%s561 + $0x168] sm:$0xff]
        %v608 = vld [vmem:[%s561 + $0x170] sm:$0xff]
        %v609 = vld [vmem:[%s561 + $0x178] sm:$0xff]
        %v610 = vld [vmem:[%s561 + $0x180] sm:$0xff]
        %v611 = vld [vmem:[%s561 + $0x188] sm:$0xff]
        %v612 = vld [vmem:[%s561 + $0x190] sm:$0xff]
        %v613 = vld [vmem:[%s561 + $0x198] sm:$0xff]
        %v614 = vld [vmem:[%s561 + $0x1a0] sm:$0xff]
        %v615 = vld [vmem:[%s561 + $0x1a8] sm:$0xff]
        %v616 = vld [vmem:[%s561 + $0x1b0] sm:$0xff]
        %v617 = vld [vmem:[%s561 + $0x1b8] sm:$0xff]
        %v618 = vld [vmem:[%s561 + $0x1c0] sm:$0xff]
        %v619 = vld [vmem:[%s561 + $0x1c8] sm:$0xff]
        %v620 = vld [vmem:[%s561 + $0x1d0] sm:$0xff]
        %v621 = vld [vmem:[%s561 + $0x1d8] sm:$0xff]
        %v622 = vld [vmem:[%s561 + $0x1e0] sm:$0xff]
        %v623 = vld [vmem:[%s561 + $0x1e8] sm:$0xff]
        %v624 = vld [vmem:[%s561 + $0x1f0] sm:$0xff]
        %v625 = vld [vmem:[%s561 + $0x1f8] sm:$0xff]
        %v626 = vld [vmem:[%s561 + $0x200] sm:$0xff]
        %v627 = vld [vmem:[%s561 + $0x208] sm:$0xff]
        %v628 = vld [vmem:[%s561 + $0x210] sm:$0xff]
        %v629 = vld [vmem:[%s561 + $0x218] sm:$0xff]
        %v630 = vld [vmem:[%s561 + $0x220] sm:$0xff]
        %v631 = vld [vmem:[%s561 + $0x228] sm:$0xff]
        %v632 = vld [vmem:[%s561 + $0x230] sm:$0xff]
        %v633 = vld [vmem:[%s561 + $0x238] sm:$0xff]
        %v634 = vld [vmem:[%s561 + $0x240] sm:$0xff]
        %v635 = vld [vmem:[%s561 + $0x248] sm:$0xff]
        %v636 = vld [vmem:[%s561 + $0x250] sm:$0xff]
        %v637 = vld [vmem:[%s561 + $0x258] sm:$0xff]
        %v638 = vld [vmem:[%s561 + $0x260] sm:$0xff]
        %v639 = vld [vmem:[%s561 + $0x268] sm:$0xff]
        %v640 = vld [vmem:[%s561 + $0x270] sm:$0xff]
        %v641 = vld [vmem:[%s561 + $0x278] sm:$0xff]
        %v642 = vld [vmem:[%s561 + $0x280] sm:$0xff]
        %v643 = vld [vmem:[%s561 + $0x288] sm:$0xff]
        %v644 = vld [vmem:[%s561 + $0x290] sm:$0xff]
        %v645 = vld [vmem:[%s561 + $0x298] sm:$0xff]
        %v646 = vld [vmem:[%s561 + $0x2a0] sm:$0xff]
        %v647 = vld [vmem:[%s561 + $0x2a8] sm:$0xff]
        %v648 = vld [vmem:[%s561 + $0x2b0] sm:$0xff]
        %v649 = vld [vmem:[%s561 + $0x2b8] sm:$0xff]
        %v650 = vld [vmem:[%s561 + $0x2c0] sm:$0xff]
        %v651 = vld [vmem:[%s561 + $0x2c8] sm:$0xff]
        %v652 = vld [vmem:[%s561 + $0x2d0] sm:$0xff]
        %v653 = vld [vmem:[%s561 + $0x2d8] sm:$0xff]
        %v654 = vld [vmem:[%s561 + $0x2e0] sm:$0xff]
        %v655 = vld [vmem:[%s561 + $0x2e8] sm:$0xff]
        %v656 = vld [vmem:[%s561 + $0x2f0] sm:$0xff]
        %v657 = vld [vmem:[%s561 + $0x2f8] sm:$0xff]
        %v658 = vld [vmem:[%s561 + $0x300] sm:$0xff]
        %v659 = vld [vmem:[%s561 + $0x308] sm:$0xff]
        %v660 = vld [vmem:[%s561 + $0x310] sm:$0xff]
        %v661 = vld [vmem:[%s561 + $0x318] sm:$0xff]
        %v662 = vld [vmem:[%s561 + $0x320] sm:$0xff]
        %v663 = vld [vmem:[%s561 + $0x328] sm:$0xff]
        %v664 = vld [vmem:[%s561 + $0x330] sm:$0xff]
        %v665 = vld [vmem:[%s561 + $0x338] sm:$0xff]
        %v666 = vld [vmem:[%s561 + $0x340] sm:$0xff]
        %v667 = vld [vmem:[%s561 + $0x348] sm:$0xff]
        %v668 = vld [vmem:[%s561 + $0x350] sm:$0xff]
        %v669 = vld [vmem:[%s561 + $0x358] sm:$0xff]
        %v670 = vld [vmem:[%s561 + $0x360] sm:$0xff]
        %v671 = vld [vmem:[%s561 + $0x368] sm:$0xff]
        %v672 = vld [vmem:[%s561 + $0x370] sm:$0xff]
        %v673 = vld [vmem:[%s561 + $0x378] sm:$0xff]
        %v674 = vld [vmem:[%s561 + $0x380] sm:$0xff]
        %v675 = vld [vmem:[%s561 + $0x388] sm:$0xff]
        %v676 = vld [vmem:[%s561 + $0x390] sm:$0xff]
        %v677 = vld [vmem:[%s561 + $0x398] sm:$0xff]
        %v678 = vld [vmem:[%s561 + $0x3a0] sm:$0xff]
        %v679 = vld [vmem:[%s561 + $0x3a8] sm:$0xff]
        %v680 = vld [vmem:[%s561 + $0x3b0] sm:$0xff]
        %v681 = vld [vmem:[%s561 + $0x3b8] sm:$0xff]
        %v682 = vld [vmem:[%s561 + $0x3c0] sm:$0xff]
        %v683 = vld [vmem:[%s561 + $0x3c8] sm:$0xff]
        %v684 = vld [vmem:[%s561 + $0x3d0] sm:$0xff]
        %v685 = vld [vmem:[%s561 + $0x3d8] sm:$0xff]
        %v686 = vld [vmem:[%s561 + $0x3e0] sm:$0xff]
        %v687 = vld [vmem:[%s561 + $0x3e8] sm:$0xff]
        %v688 = vld [vmem:[%s561 + $0x3f0] sm:$0xff]
        %v689 = vld [vmem:[%s561 + $0x3f8] sm:$0xff]
        %v754 = vunpack.c.l.b16 %v369
        %v755 = vunpack.c.h.b16 %v369
        %v756 = vunpack.c.l.b16 %v370
        %v757 = vunpack.c.h.b16 %v370
        %v758 = vunpack.c.l.b16 %v371
        %v759 = vunpack.c.h.b16 %v371
        %v760 = vunpack.c.l.b16 %v372
        %v761 = vunpack.c.h.b16 %v372
        %v762 = vunpack.c.l.b16 %v373
        %v763 = vunpack.c.h.b16 %v373
        %v764 = vunpack.c.l.b16 %v374
        %v765 = vunpack.c.h.b16 %v374
        %v766 = vunpack.c.l.b16 %v375
        %v767 = vunpack.c.h.b16 %v375
        %v768 = vunpack.c.l.b16 %v376
        %v769 = vunpack.c.h.b16 %v376
        %v770 = vunpack.c.l.b16 %v377
        %v771 = vunpack.c.h.b16 %v377
        %v772 = vunpack.c.l.b16 %v378
        %v773 = vunpack.c.h.b16 %v378
        %v774 = vunpack.c.l.b16 %v379
        %v775 = vunpack.c.h.b16 %v379
        %v776 = vunpack.c.l.b16 %v380
        %v777 = vunpack.c.h.b16 %v380
        %v778 = vunpack.c.l.b16 %v381
        %v779 = vunpack.c.h.b16 %v381
        %v780 = vunpack.c.l.b16 %v382
        %v781 = vunpack.c.h.b16 %v382
        %v782 = vunpack.c.l.b16 %v383
        %v783 = vunpack.c.h.b16 %v383
        %v784 = vunpack.c.l.b16 %v384
        %v785 = vunpack.c.h.b16 %v384
        %v786 = vunpack.c.l.b16 %v385
        %v787 = vunpack.c.h.b16 %v385
        %v788 = vunpack.c.l.b16 %v386
        %v789 = vunpack.c.h.b16 %v386
        %v790 = vunpack.c.l.b16 %v387
        %v791 = vunpack.c.h.b16 %v387
        %v792 = vunpack.c.l.b16 %v388
        %v793 = vunpack.c.h.b16 %v388
        %v794 = vunpack.c.l.b16 %v389
        %v795 = vunpack.c.h.b16 %v389
        %v796 = vunpack.c.l.b16 %v390
        %v797 = vunpack.c.h.b16 %v390
        %v798 = vunpack.c.l.b16 %v391
        %v799 = vunpack.c.h.b16 %v391
        %v800 = vunpack.c.l.b16 %v392
        %v801 = vunpack.c.h.b16 %v392
        %v802 = vunpack.c.l.b16 %v393
        %v803 = vunpack.c.h.b16 %v393
        %v804 = vunpack.c.l.b16 %v394
        %v805 = vunpack.c.h.b16 %v394
        %v806 = vunpack.c.l.b16 %v395
        %v807 = vunpack.c.h.b16 %v395
        %v808 = vunpack.c.l.b16 %v396
        %v809 = vunpack.c.h.b16 %v396
        %v810 = vunpack.c.l.b16 %v397
        %v811 = vunpack.c.h.b16 %v397
        %v812 = vunpack.c.l.b16 %v398
        %v813 = vunpack.c.h.b16 %v398
        %v814 = vunpack.c.l.b16 %v399
        %v815 = vunpack.c.h.b16 %v399
        %v816 = vunpack.c.l.b16 %v400
        %v817 = vunpack.c.h.b16 %v400
        %v818 = vunpack.c.l.b16 %v401
        %v819 = vunpack.c.h.b16 %v401
        %v820 = vunpack.c.l.b16 %v402
        %v821 = vunpack.c.h.b16 %v402
        %v822 = vunpack.c.l.b16 %v403
        %v823 = vunpack.c.h.b16 %v403
        %v824 = vunpack.c.l.b16 %v404
        %v825 = vunpack.c.h.b16 %v404
        %v826 = vunpack.c.l.b16 %v405
        %v827 = vunpack.c.h.b16 %v405
        %v828 = vunpack.c.l.b16 %v406
        %v829 = vunpack.c.h.b16 %v406
        %v830 = vunpack.c.l.b16 %v407
        %v831 = vunpack.c.h.b16 %v407
        %v832 = vunpack.c.l.b16 %v408
        %v833 = vunpack.c.h.b16 %v408
        %v834 = vunpack.c.l.b16 %v409
        %v835 = vunpack.c.h.b16 %v409
        %v836 = vunpack.c.l.b16 %v410
        %v837 = vunpack.c.h.b16 %v410
        %v838 = vunpack.c.l.b16 %v411
        %v839 = vunpack.c.h.b16 %v411
        %v840 = vunpack.c.l.b16 %v412
        %v841 = vunpack.c.h.b16 %v412
        %v842 = vunpack.c.l.b16 %v413
        %v843 = vunpack.c.h.b16 %v413
        %v844 = vunpack.c.l.b16 %v414
        %v845 = vunpack.c.h.b16 %v414
        %v846 = vunpack.c.l.b16 %v415
        %v847 = vunpack.c.h.b16 %v415
        %v848 = vunpack.c.l.b16 %v416
        %v849 = vunpack.c.h.b16 %v416
        %v850 = vunpack.c.l.b16 %v417
        %v851 = vunpack.c.h.b16 %v417
        %v852 = vunpack.c.l.b16 %v418
        %v853 = vunpack.c.h.b16 %v418
        %v854 = vunpack.c.l.b16 %v419
        %v855 = vunpack.c.h.b16 %v419
        %v856 = vunpack.c.l.b16 %v420
        %v857 = vunpack.c.h.b16 %v420
        %v858 = vunpack.c.l.b16 %v421
        %v859 = vunpack.c.h.b16 %v421
        %v860 = vunpack.c.l.b16 %v422
        %v861 = vunpack.c.h.b16 %v422
        %v862 = vunpack.c.l.b16 %v423
        %v863 = vunpack.c.h.b16 %v423
        %v864 = vunpack.c.l.b16 %v424
        %v865 = vunpack.c.h.b16 %v424
        %v866 = vunpack.c.l.b16 %v425
        %v867 = vunpack.c.h.b16 %v425
        %v868 = vunpack.c.l.b16 %v426
        %v869 = vunpack.c.h.b16 %v426
        %v870 = vunpack.c.l.b16 %v427
        %v871 = vunpack.c.h.b16 %v427
        %v872 = vunpack.c.l.b16 %v428
        %v873 = vunpack.c.h.b16 %v428
        %v874 = vunpack.c.l.b16 %v429
        %v875 = vunpack.c.h.b16 %v429
        %v876 = vunpack.c.l.b16 %v430
        %v877 = vunpack.c.h.b16 %v430
        %v878 = vunpack.c.l.b16 %v431
        %v879 = vunpack.c.h.b16 %v431
        %v880 = vunpack.c.l.b16 %v432
        %v881 = vunpack.c.h.b16 %v432
        %v882 = vpack.c.b16 %v758, %v754
        %v883 = vpack.c.b16 %v759, %v755
        %v884 = vpack.c.b16 %v760, %v756
        %v885 = vpack.c.b16 %v761, %v757
        %v886 = vpack.c.b16 %v766, %v762
        %v887 = vpack.c.b16 %v767, %v763
        %v888 = vpack.c.b16 %v768, %v764
        %v889 = vpack.c.b16 %v769, %v765
        %v890 = vpack.c.b16 %v774, %v770
        %v891 = vpack.c.b16 %v775, %v771
        %v892 = vpack.c.b16 %v776, %v772
        %v893 = vpack.c.b16 %v777, %v773
        %v894 = vpack.c.b16 %v782, %v778
        %v895 = vpack.c.b16 %v783, %v779
        %v896 = vpack.c.b16 %v784, %v780
        %v897 = vpack.c.b16 %v785, %v781
        %v898 = vpack.c.b16 %v790, %v786
        %v899 = vpack.c.b16 %v791, %v787
        %v900 = vpack.c.b16 %v792, %v788
        %v901 = vpack.c.b16 %v793, %v789
        %v902 = vpack.c.b16 %v798, %v794
        %v903 = vpack.c.b16 %v799, %v795
        %v904 = vpack.c.b16 %v800, %v796
        %v905 = vpack.c.b16 %v801, %v797
        %v906 = vpack.c.b16 %v806, %v802
        %v907 = vpack.c.b16 %v807, %v803
        %v908 = vpack.c.b16 %v808, %v804
        %v909 = vpack.c.b16 %v809, %v805
        %v910 = vpack.c.b16 %v814, %v810
        %v911 = vpack.c.b16 %v815, %v811
        %v912 = vpack.c.b16 %v816, %v812
        %v913 = vpack.c.b16 %v817, %v813
        %v914 = vpack.c.b16 %v822, %v818
        %v915 = vpack.c.b16 %v823, %v819
        %v916 = vpack.c.b16 %v824, %v820
        %v917 = vpack.c.b16 %v825, %v821
        %v918 = vpack.c.b16 %v830, %v826
        %v919 = vpack.c.b16 %v831, %v827
        %v920 = vpack.c.b16 %v832, %v828
        %v921 = vpack.c.b16 %v833, %v829
        %v922 = vpack.c.b16 %v838, %v834
        %v923 = vpack.c.b16 %v839, %v835
        %v924 = vpack.c.b16 %v840, %v836
        %v925 = vpack.c.b16 %v841, %v837
        %v926 = vpack.c.b16 %v846, %v842
        %v927 = vpack.c.b16 %v847, %v843
        %v928 = vpack.c.b16 %v848, %v844
        %v929 = vpack.c.b16 %v849, %v845
        %v930 = vpack.c.b16 %v854, %v850
        %v931 = vpack.c.b16 %v855, %v851
        %v932 = vpack.c.b16 %v856, %v852
        %v933 = vpack.c.b16 %v857, %v853
        %v934 = vpack.c.b16 %v862, %v858
        %v935 = vpack.c.b16 %v863, %v859
        %v936 = vpack.c.b16 %v864, %v860
        %v937 = vpack.c.b16 %v865, %v861
        %v938 = vpack.c.b16 %v870, %v866
        %v939 = vpack.c.b16 %v871, %v867
        %v940 = vpack.c.b16 %v872, %v868
        %v941 = vpack.c.b16 %v873, %v869
        %v942 = vpack.c.b16 %v878, %v874
        %v943 = vpack.c.b16 %v879, %v875
        %v944 = vpack.c.b16 %v880, %v876
        %v945 = vpack.c.b16 %v881, %v877
        %vm946 = vsmask.f32 7424
        %v948 = vshrl.u32 %v882, 16
        %v950 = vshll.u32 %v882, 16
        %v952 = vrot.slane %v950, 1
        %v953 = vor.u32 %v948, %v952
        %v955 = vshll.u32 %v886, 16
        %v957 = vrot.slane %v955, 1
        %v958 = vsel %vm946, %v953, %v957
        %v960 = vshrl.u32 %v883, 16
        %v962 = vshll.u32 %v883, 16
        %v964 = vrot.slane %v962, 1
        %v965 = vor.u32 %v960, %v964
        %v967 = vshll.u32 %v887, 16
        %v969 = vrot.slane %v967, 1
        %v970 = vsel %vm946, %v965, %v969
        %v972 = vshrl.u32 %v884, 16
        %v974 = vshll.u32 %v884, 16
        %v976 = vrot.slane %v974, 1
        %v977 = vor.u32 %v972, %v976
        %v979 = vshll.u32 %v888, 16
        %v981 = vrot.slane %v979, 1
        %v982 = vsel %vm946, %v977, %v981
        %v984 = vshrl.u32 %v885, 16
        %v986 = vshll.u32 %v885, 16
        %v988 = vrot.slane %v986, 1
        %v989 = vor.u32 %v984, %v988
        %v991 = vshll.u32 %v889, 16
        %v993 = vrot.slane %v991, 1
        %v994 = vsel %vm946, %v989, %v993
        %v995 = vshrl.u32 %v886, 16
        %v997 = vor.u32 %v995, %v957
        %v999 = vshll.u32 %v890, 16
        %v1001 = vrot.slane %v999, 1
        %v1002 = vsel %vm946, %v997, %v1001
        %v1003 = vshrl.u32 %v887, 16
        %v1005 = vor.u32 %v1003, %v969
        %v1007 = vshll.u32 %v891, 16
        %v1009 = vrot.slane %v1007, 1
        %v1010 = vsel %vm946, %v1005, %v1009
        %v1011 = vshrl.u32 %v888, 16
        %v1013 = vor.u32 %v1011, %v981
        %v1015 = vshll.u32 %v892, 16
        %v1017 = vrot.slane %v1015, 1
        %v1018 = vsel %vm946, %v1013, %v1017
        %v1019 = vshrl.u32 %v889, 16
        %v1021 = vor.u32 %v1019, %v993
        %v1023 = vshll.u32 %v893, 16
        %v1025 = vrot.slane %v1023, 1
        %v1026 = vsel %vm946, %v1021, %v1025
        %v1027 = vshrl.u32 %v890, 16
        %v1029 = vor.u32 %v1027, %v1001
        %v1031 = vshll.u32 %v894, 16
        %v1033 = vrot.slane %v1031, 1
        %v1034 = vsel %vm946, %v1029, %v1033
        %v1035 = vshrl.u32 %v891, 16
        %v1037 = vor.u32 %v1035, %v1009
        %v1039 = vshll.u32 %v895, 16
        %v1041 = vrot.slane %v1039, 1
        %v1042 = vsel %vm946, %v1037, %v1041
        %v1043 = vshrl.u32 %v892, 16
        %v1045 = vor.u32 %v1043, %v1017
        %v1047 = vshll.u32 %v896, 16
        %v1049 = vrot.slane %v1047, 1
        %v1050 = vsel %vm946, %v1045, %v1049
        %v1051 = vshrl.u32 %v893, 16
        %v1053 = vor.u32 %v1051, %v1025
        %v1055 = vshll.u32 %v897, 16
        %v1057 = vrot.slane %v1055, 1
        %v1058 = vsel %vm946, %v1053, %v1057
        %v1059 = vshrl.u32 %v894, 16
        %v1061 = vor.u32 %v1059, %v1033
        %v1063 = vshll.u32 %v898, 16
        %v1065 = vrot.slane %v1063, 1
        %v1066 = vsel %vm946, %v1061, %v1065
        %v1067 = vshrl.u32 %v895, 16
        %v1069 = vor.u32 %v1067, %v1041
        %v1071 = vshll.u32 %v899, 16
        %v1073 = vrot.slane %v1071, 1
        %v1074 = vsel %vm946, %v1069, %v1073
        %v1075 = vshrl.u32 %v896, 16
        %v1077 = vor.u32 %v1075, %v1049
        %v1079 = vshll.u32 %v900, 16
        %v1081 = vrot.slane %v1079, 1
        %v1082 = vsel %vm946, %v1077, %v1081
        %v1083 = vshrl.u32 %v897, 16
        %v1085 = vor.u32 %v1083, %v1057
        %v1087 = vshll.u32 %v901, 16
        %v1089 = vrot.slane %v1087, 1
        %v1090 = vsel %vm946, %v1085, %v1089
        %v1091 = vshrl.u32 %v898, 16
        %v1093 = vor.u32 %v1091, %v1065
        %v1095 = vshll.u32 %v902, 16
        %v1097 = vrot.slane %v1095, 1
        %v1098 = vsel %vm946, %v1093, %v1097
        %v1099 = vshrl.u32 %v899, 16
        %v1101 = vor.u32 %v1099, %v1073
        %v1103 = vshll.u32 %v903, 16
        %v1105 = vrot.slane %v1103, 1
        %v1106 = vsel %vm946, %v1101, %v1105
        %v1107 = vshrl.u32 %v900, 16
        %v1109 = vor.u32 %v1107, %v1081
        %v1111 = vshll.u32 %v904, 16
        %v1113 = vrot.slane %v1111, 1
        %v1114 = vsel %vm946, %v1109, %v1113
        %v1115 = vshrl.u32 %v901, 16
        %v1117 = vor.u32 %v1115, %v1089
        %v1119 = vshll.u32 %v905, 16
        %v1121 = vrot.slane %v1119, 1
        %v1122 = vsel %vm946, %v1117, %v1121
        %v1123 = vshrl.u32 %v902, 16
        %v1125 = vor.u32 %v1123, %v1097
        %v1127 = vshll.u32 %v906, 16
        %v1129 = vrot.slane %v1127, 1
        %v1130 = vsel %vm946, %v1125, %v1129
        %v1131 = vshrl.u32 %v903, 16
        %v1133 = vor.u32 %v1131, %v1105
        %v1135 = vshll.u32 %v907, 16
        %v1137 = vrot.slane %v1135, 1
        %v1138 = vsel %vm946, %v1133, %v1137
        %v1139 = vshrl.u32 %v904, 16
        %v1141 = vor.u32 %v1139, %v1113
        %v1143 = vshll.u32 %v908, 16
        %v1145 = vrot.slane %v1143, 1
        %v1146 = vsel %vm946, %v1141, %v1145
        %v1147 = vshrl.u32 %v905, 16
        %v1149 = vor.u32 %v1147, %v1121
        %v1151 = vshll.u32 %v909, 16
        %v1153 = vrot.slane %v1151, 1
        %v1154 = vsel %vm946, %v1149, %v1153
        %v1155 = vshrl.u32 %v906, 16
        %v1157 = vor.u32 %v1155, %v1129
        %v1159 = vshll.u32 %v910, 16
        %v1161 = vrot.slane %v1159, 1
        %v1162 = vsel %vm946, %v1157, %v1161
        %v1163 = vshrl.u32 %v907, 16
        %v1165 = vor.u32 %v1163, %v1137
        %v1167 = vshll.u32 %v911, 16
        %v1169 = vrot.slane %v1167, 1
        %v1170 = vsel %vm946, %v1165, %v1169
        %v1171 = vshrl.u32 %v908, 16
        %v1173 = vor.u32 %v1171, %v1145
        %v1175 = vshll.u32 %v912, 16
        %v1177 = vrot.slane %v1175, 1
        %v1178 = vsel %vm946, %v1173, %v1177
        %v1179 = vshrl.u32 %v909, 16
        %v1181 = vor.u32 %v1179, %v1153
        %v1183 = vshll.u32 %v913, 16
        %v1185 = vrot.slane %v1183, 1
        %v1186 = vsel %vm946, %v1181, %v1185
        %v1187 = vshrl.u32 %v910, 16
        %v1189 = vor.u32 %v1187, %v1161
        %v1191 = vshll.u32 %v914, 16
        %v1193 = vrot.slane %v1191, 1
        %v1194 = vsel %vm946, %v1189, %v1193
        %v1195 = vshrl.u32 %v911, 16
        %v1197 = vor.u32 %v1195, %v1169
        %v1199 = vshll.u32 %v915, 16
        %v1201 = vrot.slane %v1199, 1
        %v1202 = vsel %vm946, %v1197, %v1201
        %v1203 = vshrl.u32 %v912, 16
        %v1205 = vor.u32 %v1203, %v1177
        %v1207 = vshll.u32 %v916, 16
        %v1209 = vrot.slane %v1207, 1
        %v1210 = vsel %vm946, %v1205, %v1209
        %v1211 = vshrl.u32 %v913, 16
        %v1213 = vor.u32 %v1211, %v1185
        %v1215 = vshll.u32 %v917, 16
        %v1217 = vrot.slane %v1215, 1
        %v1218 = vsel %vm946, %v1213, %v1217
        %v1219 = vshrl.u32 %v914, 16
        %v1221 = vor.u32 %v1219, %v1193
        %v1223 = vshll.u32 %v918, 16
        %v1225 = vrot.slane %v1223, 1
        %v1226 = vsel %vm946, %v1221, %v1225
        %v1227 = vshrl.u32 %v915, 16
        %v1229 = vor.u32 %v1227, %v1201
        %v1231 = vshll.u32 %v919, 16
        %v1233 = vrot.slane %v1231, 1
        %v1234 = vsel %vm946, %v1229, %v1233
        %v1235 = vshrl.u32 %v916, 16
        %v1237 = vor.u32 %v1235, %v1209
        %v1239 = vshll.u32 %v920, 16
        %v1241 = vrot.slane %v1239, 1
        %v1242 = vsel %vm946, %v1237, %v1241
        %v1243 = vshrl.u32 %v917, 16
        %v1245 = vor.u32 %v1243, %v1217
        %v1247 = vshll.u32 %v921, 16
        %v1249 = vrot.slane %v1247, 1
        %v1250 = vsel %vm946, %v1245, %v1249
        %v1251 = vshrl.u32 %v918, 16
        %v1253 = vor.u32 %v1251, %v1225
        %v1255 = vshll.u32 %v922, 16
        %v1257 = vrot.slane %v1255, 1
        %v1258 = vsel %vm946, %v1253, %v1257
        %v1259 = vshrl.u32 %v919, 16
        %v1261 = vor.u32 %v1259, %v1233
        %v1263 = vshll.u32 %v923, 16
        %v1265 = vrot.slane %v1263, 1
        %v1266 = vsel %vm946, %v1261, %v1265
        %v1267 = vshrl.u32 %v920, 16
        %v1269 = vor.u32 %v1267, %v1241
        %v1271 = vshll.u32 %v924, 16
        %v1273 = vrot.slane %v1271, 1
        %v1274 = vsel %vm946, %v1269, %v1273
        %v1275 = vshrl.u32 %v921, 16
        %v1277 = vor.u32 %v1275, %v1249
        %v1279 = vshll.u32 %v925, 16
        %v1281 = vrot.slane %v1279, 1
        %v1282 = vsel %vm946, %v1277, %v1281
        %v1283 = vshrl.u32 %v922, 16
        %v1285 = vor.u32 %v1283, %v1257
        %v1287 = vshll.u32 %v926, 16
        %v1289 = vrot.slane %v1287, 1
        %v1290 = vsel %vm946, %v1285, %v1289
        %v1291 = vshrl.u32 %v923, 16
        %v1293 = vor.u32 %v1291, %v1265
        %v1295 = vshll.u32 %v927, 16
        %v1297 = vrot.slane %v1295, 1
        %v1298 = vsel %vm946, %v1293, %v1297
        %v1299 = vshrl.u32 %v924, 16
        %v1301 = vor.u32 %v1299, %v1273
        %v1303 = vshll.u32 %v928, 16
        %v1305 = vrot.slane %v1303, 1
        %v1306 = vsel %vm946, %v1301, %v1305
        %v1307 = vshrl.u32 %v925, 16
        %v1309 = vor.u32 %v1307, %v1281
        %v1311 = vshll.u32 %v929, 16
        %v1313 = vrot.slane %v1311, 1
        %v1314 = vsel %vm946, %v1309, %v1313
        %v1315 = vshrl.u32 %v926, 16
        %v1317 = vor.u32 %v1315, %v1289
        %v1319 = vshll.u32 %v930, 16
        %v1321 = vrot.slane %v1319, 1
        %v1322 = vsel %vm946, %v1317, %v1321
        %v1323 = vshrl.u32 %v927, 16
        %v1325 = vor.u32 %v1323, %v1297
        %v1327 = vshll.u32 %v931, 16
        %v1329 = vrot.slane %v1327, 1
        %v1330 = vsel %vm946, %v1325, %v1329
        %v1331 = vshrl.u32 %v928, 16
        %v1333 = vor.u32 %v1331, %v1305
        %v1335 = vshll.u32 %v932, 16
        %v1337 = vrot.slane %v1335, 1
        %v1338 = vsel %vm946, %v1333, %v1337
        %v1339 = vshrl.u32 %v929, 16
        %v1341 = vor.u32 %v1339, %v1313
        %v1343 = vshll.u32 %v933, 16
        %v1345 = vrot.slane %v1343, 1
        %v1346 = vsel %vm946, %v1341, %v1345
        %v1347 = vshrl.u32 %v930, 16
        %v1349 = vor.u32 %v1347, %v1321
        %v1351 = vshll.u32 %v934, 16
        %v1353 = vrot.slane %v1351, 1
        %v1354 = vsel %vm946, %v1349, %v1353
        %v1355 = vshrl.u32 %v931, 16
        %v1357 = vor.u32 %v1355, %v1329
        %v1359 = vshll.u32 %v935, 16
        %v1361 = vrot.slane %v1359, 1
        %v1362 = vsel %vm946, %v1357, %v1361
        %v1363 = vshrl.u32 %v932, 16
        %v1365 = vor.u32 %v1363, %v1337
        %v1367 = vshll.u32 %v936, 16
        %v1369 = vrot.slane %v1367, 1
        %v1370 = vsel %vm946, %v1365, %v1369
        %v1371 = vshrl.u32 %v933, 16
        %v1373 = vor.u32 %v1371, %v1345
        %v1375 = vshll.u32 %v937, 16
        %v1377 = vrot.slane %v1375, 1
        %v1378 = vsel %vm946, %v1373, %v1377
        %v1379 = vshrl.u32 %v934, 16
        %v1381 = vor.u32 %v1379, %v1353
        %v1383 = vshll.u32 %v938, 16
        %v1385 = vrot.slane %v1383, 1
        %v1386 = vsel %vm946, %v1381, %v1385
        %v1387 = vshrl.u32 %v935, 16
        %v1389 = vor.u32 %v1387, %v1361
        %v1391 = vshll.u32 %v939, 16
        %v1393 = vrot.slane %v1391, 1
        %v1394 = vsel %vm946, %v1389, %v1393
        %v1395 = vshrl.u32 %v936, 16
        %v1397 = vor.u32 %v1395, %v1369
        %v1399 = vshll.u32 %v940, 16
        %v1401 = vrot.slane %v1399, 1
        %v1402 = vsel %vm946, %v1397, %v1401
        %v1403 = vshrl.u32 %v937, 16
        %v1405 = vor.u32 %v1403, %v1377
        %v1407 = vshll.u32 %v941, 16
        %v1409 = vrot.slane %v1407, 1
        %v1410 = vsel %vm946, %v1405, %v1409
        %v1411 = vshrl.u32 %v938, 16
        %v1413 = vor.u32 %v1411, %v1385
        %v1415 = vshll.u32 %v942, 16
        %v1417 = vrot.slane %v1415, 1
        %v1418 = vsel %vm946, %v1413, %v1417
        %v1419 = vshrl.u32 %v939, 16
        %v1421 = vor.u32 %v1419, %v1393
        %v1423 = vshll.u32 %v943, 16
        %v1425 = vrot.slane %v1423, 1
        %v1426 = vsel %vm946, %v1421, %v1425
        %v1427 = vshrl.u32 %v940, 16
        %v1429 = vor.u32 %v1427, %v1401
        %v1431 = vshll.u32 %v944, 16
        %v1433 = vrot.slane %v1431, 1
        %v1434 = vsel %vm946, %v1429, %v1433
        %v1435 = vshrl.u32 %v941, 16
        %v1437 = vor.u32 %v1435, %v1409
        %v1439 = vshll.u32 %v945, 16
        %v1441 = vrot.slane %v1439, 1
        %v1442 = vsel %vm946, %v1437, %v1441
        %v1443 = vshrl.u32 %v942, 16
        %v1445 = vor.u32 %v1443, %v1417
        %v1446 = vshrl.u32 %v943, 16
        %v1448 = vor.u32 %v1446, %v1425
        %v1449 = vshrl.u32 %v944, 16
        %v1451 = vor.u32 %v1449, %v1433
        %v1452 = vshrl.u32 %v945, 16
        %v1454 = vor.u32 %v1452, %v1441
        %v1647 = vunpack.c.l.b16 %v562
        %v1648 = vunpack.c.h.b16 %v562
        %v1649 = vunpack.c.l.b16 %v563
        %v1650 = vunpack.c.h.b16 %v563
        %v1651 = vunpack.c.l.b16 %v564
        %v1652 = vunpack.c.h.b16 %v564
        %v1653 = vunpack.c.l.b16 %v565
        %v1654 = vunpack.c.h.b16 %v565
        %v1655 = vunpack.c.l.b16 %v566
        %v1656 = vunpack.c.h.b16 %v566
        %v1657 = vunpack.c.l.b16 %v567
        %v1658 = vunpack.c.h.b16 %v567
        %v1659 = vunpack.c.l.b16 %v568
        %v1660 = vunpack.c.h.b16 %v568
        %v1661 = vunpack.c.l.b16 %v569
        %v1662 = vunpack.c.h.b16 %v569
        %v1663 = vunpack.c.l.b16 %v570
        %v1664 = vunpack.c.h.b16 %v570
        %v1665 = vunpack.c.l.b16 %v571
        %v1666 = vunpack.c.h.b16 %v571
        %v1667 = vunpack.c.l.b16 %v572
        %v1668 = vunpack.c.h.b16 %v572
        %v1669 = vunpack.c.l.b16 %v573
        %v1670 = vunpack.c.h.b16 %v573
        %v1671 = vunpack.c.l.b16 %v574
        %v1672 = vunpack.c.h.b16 %v574
        %v1673 = vunpack.c.l.b16 %v575
        %v1674 = vunpack.c.h.b16 %v575
        %v1675 = vunpack.c.l.b16 %v576
        %v1676 = vunpack.c.h.b16 %v576
        %v1677 = vunpack.c.l.b16 %v577
        %v1678 = vunpack.c.h.b16 %v577
        %v1679 = vunpack.c.l.b16 %v578
        %v1680 = vunpack.c.h.b16 %v578
        %v1681 = vunpack.c.l.b16 %v579
        %v1682 = vunpack.c.h.b16 %v579
        %v1683 = vunpack.c.l.b16 %v580
        %v1684 = vunpack.c.h.b16 %v580
        %v1685 = vunpack.c.l.b16 %v581
        %v1686 = vunpack.c.h.b16 %v581
        %v1687 = vunpack.c.l.b16 %v582
        %v1688 = vunpack.c.h.b16 %v582
        %v1689 = vunpack.c.l.b16 %v583
        %v1690 = vunpack.c.h.b16 %v583
        %v1691 = vunpack.c.l.b16 %v584
        %v1692 = vunpack.c.h.b16 %v584
        %v1693 = vunpack.c.l.b16 %v585
        %v1694 = vunpack.c.h.b16 %v585
        %v1695 = vunpack.c.l.b16 %v586
        %v1696 = vunpack.c.h.b16 %v586
        %v1697 = vunpack.c.l.b16 %v587
        %v1698 = vunpack.c.h.b16 %v587
        %v1699 = vunpack.c.l.b16 %v588
        %v1700 = vunpack.c.h.b16 %v588
        %v1701 = vunpack.c.l.b16 %v589
        %v1702 = vunpack.c.h.b16 %v589
        %v1703 = vunpack.c.l.b16 %v590
        %v1704 = vunpack.c.h.b16 %v590
        %v1705 = vunpack.c.l.b16 %v591
        %v1706 = vunpack.c.h.b16 %v591
        %v1707 = vunpack.c.l.b16 %v592
        %v1708 = vunpack.c.h.b16 %v592
        %v1709 = vunpack.c.l.b16 %v593
        %v1710 = vunpack.c.h.b16 %v593
        %v1711 = vunpack.c.l.b16 %v594
        %v1712 = vunpack.c.h.b16 %v594
        %v1713 = vunpack.c.l.b16 %v595
        %v1714 = vunpack.c.h.b16 %v595
        %v1715 = vunpack.c.l.b16 %v596
        %v1716 = vunpack.c.h.b16 %v596
        %v1717 = vunpack.c.l.b16 %v597
        %v1718 = vunpack.c.h.b16 %v597
        %v1719 = vunpack.c.l.b16 %v598
        %v1720 = vunpack.c.h.b16 %v598
        %v1721 = vunpack.c.l.b16 %v599
        %v1722 = vunpack.c.h.b16 %v599
        %v1723 = vunpack.c.l.b16 %v600
        %v1724 = vunpack.c.h.b16 %v600
        %v1725 = vunpack.c.l.b16 %v601
        %v1726 = vunpack.c.h.b16 %v601
        %v1727 = vunpack.c.l.b16 %v602
        %v1728 = vunpack.c.h.b16 %v602
        %v1729 = vunpack.c.l.b16 %v603
        %v1730 = vunpack.c.h.b16 %v603
        %v1731 = vunpack.c.l.b16 %v604
        %v1732 = vunpack.c.h.b16 %v604
        %v1733 = vunpack.c.l.b16 %v605
        %v1734 = vunpack.c.h.b16 %v605
        %v1735 = vunpack.c.l.b16 %v606
        %v1736 = vunpack.c.h.b16 %v606
        %v1737 = vunpack.c.l.b16 %v607
        %v1738 = vunpack.c.h.b16 %v607
        %v1739 = vunpack.c.l.b16 %v608
        %v1740 = vunpack.c.h.b16 %v608
        %v1741 = vunpack.c.l.b16 %v609
        %v1742 = vunpack.c.h.b16 %v609
        %v1743 = vunpack.c.l.b16 %v610
        %v1744 = vunpack.c.h.b16 %v610
        %v1745 = vunpack.c.l.b16 %v611
        %v1746 = vunpack.c.h.b16 %v611
        %v1747 = vunpack.c.l.b16 %v612
        %v1748 = vunpack.c.h.b16 %v612
        %v1749 = vunpack.c.l.b16 %v613
        %v1750 = vunpack.c.h.b16 %v613
        %v1751 = vunpack.c.l.b16 %v614
        %v1752 = vunpack.c.h.b16 %v614
        %v1753 = vunpack.c.l.b16 %v615
        %v1754 = vunpack.c.h.b16 %v615
        %v1755 = vunpack.c.l.b16 %v616
        %v1756 = vunpack.c.h.b16 %v616
        %v1757 = vunpack.c.l.b16 %v617
        %v1758 = vunpack.c.h.b16 %v617
        %v1759 = vunpack.c.l.b16 %v618
        %v1760 = vunpack.c.h.b16 %v618
        %v1761 = vunpack.c.l.b16 %v619
        %v1762 = vunpack.c.h.b16 %v619
        %v1763 = vunpack.c.l.b16 %v620
        %v1764 = vunpack.c.h.b16 %v620
        %v1765 = vunpack.c.l.b16 %v621
        %v1766 = vunpack.c.h.b16 %v621
        %v1767 = vunpack.c.l.b16 %v622
        %v1768 = vunpack.c.h.b16 %v622
        %v1769 = vunpack.c.l.b16 %v623
        %v1770 = vunpack.c.h.b16 %v623
        %v1771 = vunpack.c.l.b16 %v624
        %v1772 = vunpack.c.h.b16 %v624
        %v1773 = vunpack.c.l.b16 %v625
        %v1774 = vunpack.c.h.b16 %v625
        %v1775 = vunpack.c.l.b16 %v626
        %v1776 = vunpack.c.h.b16 %v626
        %v1777 = vunpack.c.l.b16 %v627
        %v1778 = vunpack.c.h.b16 %v627
        %v1779 = vunpack.c.l.b16 %v628
        %v1780 = vunpack.c.h.b16 %v628
        %v1781 = vunpack.c.l.b16 %v629
        %v1782 = vunpack.c.h.b16 %v629
        %v1783 = vunpack.c.l.b16 %v630
        %v1784 = vunpack.c.h.b16 %v630
        %v1785 = vunpack.c.l.b16 %v631
        %v1786 = vunpack.c.h.b16 %v631
        %v1787 = vunpack.c.l.b16 %v632
        %v1788 = vunpack.c.h.b16 %v632
        %v1789 = vunpack.c.l.b16 %v633
        %v1790 = vunpack.c.h.b16 %v633
        %v1791 = vunpack.c.l.b16 %v634
        %v1792 = vunpack.c.h.b16 %v634
        %v1793 = vunpack.c.l.b16 %v635
        %v1794 = vunpack.c.h.b16 %v635
        %v1795 = vunpack.c.l.b16 %v636
        %v1796 = vunpack.c.h.b16 %v636
        %v1797 = vunpack.c.l.b16 %v637
        %v1798 = vunpack.c.h.b16 %v637
        %v1799 = vunpack.c.l.b16 %v638
        %v1800 = vunpack.c.h.b16 %v638
        %v1801 = vunpack.c.l.b16 %v639
        %v1802 = vunpack.c.h.b16 %v639
        %v1803 = vunpack.c.l.b16 %v640
        %v1804 = vunpack.c.h.b16 %v640
        %v1805 = vunpack.c.l.b16 %v641
        %v1806 = vunpack.c.h.b16 %v641
        %v1807 = vunpack.c.l.b16 %v642
        %v1808 = vunpack.c.h.b16 %v642
        %v1809 = vunpack.c.l.b16 %v643
        %v1810 = vunpack.c.h.b16 %v643
        %v1811 = vunpack.c.l.b16 %v644
        %v1812 = vunpack.c.h.b16 %v644
        %v1813 = vunpack.c.l.b16 %v645
        %v1814 = vunpack.c.h.b16 %v645
        %v1815 = vunpack.c.l.b16 %v646
        %v1816 = vunpack.c.h.b16 %v646
        %v1817 = vunpack.c.l.b16 %v647
        %v1818 = vunpack.c.h.b16 %v647
        %v1819 = vunpack.c.l.b16 %v648
        %v1820 = vunpack.c.h.b16 %v648
        %v1821 = vunpack.c.l.b16 %v649
        %v1822 = vunpack.c.h.b16 %v649
        %v1823 = vunpack.c.l.b16 %v650
        %v1824 = vunpack.c.h.b16 %v650
        %v1825 = vunpack.c.l.b16 %v651
        %v1826 = vunpack.c.h.b16 %v651
        %v1827 = vunpack.c.l.b16 %v652
        %v1828 = vunpack.c.h.b16 %v652
        %v1829 = vunpack.c.l.b16 %v653
        %v1830 = vunpack.c.h.b16 %v653
        %v1831 = vunpack.c.l.b16 %v654
        %v1832 = vunpack.c.h.b16 %v654
        %v1833 = vunpack.c.l.b16 %v655
        %v1834 = vunpack.c.h.b16 %v655
        %v1835 = vunpack.c.l.b16 %v656
        %v1836 = vunpack.c.h.b16 %v656
        %v1837 = vunpack.c.l.b16 %v657
        %v1838 = vunpack.c.h.b16 %v657
        %v1839 = vunpack.c.l.b16 %v658
        %v1840 = vunpack.c.h.b16 %v658
        %v1841 = vunpack.c.l.b16 %v659
        %v1842 = vunpack.c.h.b16 %v659
        %v1843 = vunpack.c.l.b16 %v660
        %v1844 = vunpack.c.h.b16 %v660
        %v1845 = vunpack.c.l.b16 %v661
        %v1846 = vunpack.c.h.b16 %v661
        %v1847 = vunpack.c.l.b16 %v662
        %v1848 = vunpack.c.h.b16 %v662
        %v1849 = vunpack.c.l.b16 %v663
        %v1850 = vunpack.c.h.b16 %v663
        %v1851 = vunpack.c.l.b16 %v664
        %v1852 = vunpack.c.h.b16 %v664
        %v1853 = vunpack.c.l.b16 %v665
        %v1854 = vunpack.c.h.b16 %v665
        %v1855 = vunpack.c.l.b16 %v666
        %v1856 = vunpack.c.h.b16 %v666
        %v1857 = vunpack.c.l.b16 %v667
        %v1858 = vunpack.c.h.b16 %v667
        %v1859 = vunpack.c.l.b16 %v668
        %v1860 = vunpack.c.h.b16 %v668
        %v1861 = vunpack.c.l.b16 %v669
        %v1862 = vunpack.c.h.b16 %v669
        %v1863 = vunpack.c.l.b16 %v670
        %v1864 = vunpack.c.h.b16 %v670
        %v1865 = vunpack.c.l.b16 %v671
        %v1866 = vunpack.c.h.b16 %v671
        %v1867 = vunpack.c.l.b16 %v672
        %v1868 = vunpack.c.h.b16 %v672
        %v1869 = vunpack.c.l.b16 %v673
        %v1870 = vunpack.c.h.b16 %v673
        %v1871 = vunpack.c.l.b16 %v674
        %v1872 = vunpack.c.h.b16 %v674
        %v1873 = vunpack.c.l.b16 %v675
        %v1874 = vunpack.c.h.b16 %v675
        %v1875 = vunpack.c.l.b16 %v676
        %v1876 = vunpack.c.h.b16 %v676
        %v1877 = vunpack.c.l.b16 %v677
        %v1878 = vunpack.c.h.b16 %v677
        %v1879 = vunpack.c.l.b16 %v678
        %v1880 = vunpack.c.h.b16 %v678
        %v1881 = vunpack.c.l.b16 %v679
        %v1882 = vunpack.c.h.b16 %v679
        %v1883 = vunpack.c.l.b16 %v680
        %v1884 = vunpack.c.h.b16 %v680
        %v1885 = vunpack.c.l.b16 %v681
        %v1886 = vunpack.c.h.b16 %v681
        %v1887 = vunpack.c.l.b16 %v682
        %v1888 = vunpack.c.h.b16 %v682
        %v1889 = vunpack.c.l.b16 %v683
        %v1890 = vunpack.c.h.b16 %v683
        %v1891 = vunpack.c.l.b16 %v684
        %v1892 = vunpack.c.h.b16 %v684
        %v1893 = vunpack.c.l.b16 %v685
        %v1894 = vunpack.c.h.b16 %v685
        %v1895 = vunpack.c.l.b16 %v686
        %v1896 = vunpack.c.h.b16 %v686
        %v1897 = vunpack.c.l.b16 %v687
        %v1898 = vunpack.c.h.b16 %v687
        %v1899 = vunpack.c.l.b16 %v688
        %v1900 = vunpack.c.h.b16 %v688
        %v1901 = vunpack.c.l.b16 %v689
        %v1902 = vunpack.c.h.b16 %v689
        %v1903 = vpack.c.b16 %v1651, %v1647
        %v1904 = vpack.c.b16 %v1652, %v1648
        %v1905 = vpack.c.b16 %v1653, %v1649
        %v1906 = vpack.c.b16 %v1654, %v1650
        %v1907 = vpack.c.b16 %v1659, %v1655
        %v1908 = vpack.c.b16 %v1660, %v1656
        %v1909 = vpack.c.b16 %v1661, %v1657
        %v1910 = vpack.c.b16 %v1662, %v1658
        %v1911 = vpack.c.b16 %v1667, %v1663
        %v1912 = vpack.c.b16 %v1668, %v1664
        %v1913 = vpack.c.b16 %v1669, %v1665
        %v1914 = vpack.c.b16 %v1670, %v1666
        %v1915 = vpack.c.b16 %v1675, %v1671
        %v1916 = vpack.c.b16 %v1676, %v1672
        %v1917 = vpack.c.b16 %v1677, %v1673
        %v1918 = vpack.c.b16 %v1678, %v1674
        %v1919 = vpack.c.b16 %v1683, %v1679
        %v1920 = vpack.c.b16 %v1684, %v1680
        %v1921 = vpack.c.b16 %v1685, %v1681
        %v1922 = vpack.c.b16 %v1686, %v1682
        %v1923 = vpack.c.b16 %v1691, %v1687
        %v1924 = vpack.c.b16 %v1692, %v1688
        %v1925 = vpack.c.b16 %v1693, %v1689
        %v1926 = vpack.c.b16 %v1694, %v1690
        %v1927 = vpack.c.b16 %v1699, %v1695
        %v1928 = vpack.c.b16 %v1700, %v1696
        %v1929 = vpack.c.b16 %v1701, %v1697
        %v1930 = vpack.c.b16 %v1702, %v1698
        %v1931 = vpack.c.b16 %v1707, %v1703
        %v1932 = vpack.c.b16 %v1708, %v1704
        %v1933 = vpack.c.b16 %v1709, %v1705
        %v1934 = vpack.c.b16 %v1710, %v1706
        %v1935 = vpack.c.b16 %v1715, %v1711
        %v1936 = vpack.c.b16 %v1716, %v1712
        %v1937 = vpack.c.b16 %v1717, %v1713
        %v1938 = vpack.c.b16 %v1718, %v1714
        %v1939 = vpack.c.b16 %v1723, %v1719
        %v1940 = vpack.c.b16 %v1724, %v1720
        %v1941 = vpack.c.b16 %v1725, %v1721
        %v1942 = vpack.c.b16 %v1726, %v1722
        %v1943 = vpack.c.b16 %v1731, %v1727
        %v1944 = vpack.c.b16 %v1732, %v1728
        %v1945 = vpack.c.b16 %v1733, %v1729
        %v1946 = vpack.c.b16 %v1734, %v1730
        %v1947 = vpack.c.b16 %v1739, %v1735
        %v1948 = vpack.c.b16 %v1740, %v1736
        %v1949 = vpack.c.b16 %v1741, %v1737
        %v1950 = vpack.c.b16 %v1742, %v1738
        %v1951 = vpack.c.b16 %v1747, %v1743
        %v1952 = vpack.c.b16 %v1748, %v1744
        %v1953 = vpack.c.b16 %v1749, %v1745
        %v1954 = vpack.c.b16 %v1750, %v1746
        %v1955 = vpack.c.b16 %v1755, %v1751
        %v1956 = vpack.c.b16 %v1756, %v1752
        %v1957 = vpack.c.b16 %v1757, %v1753
        %v1958 = vpack.c.b16 %v1758, %v1754
        %v1959 = vpack.c.b16 %v1763, %v1759
        %v1960 = vpack.c.b16 %v1764, %v1760
        %v1961 = vpack.c.b16 %v1765, %v1761
        %v1962 = vpack.c.b16 %v1766, %v1762
        %v1963 = vpack.c.b16 %v1771, %v1767
        %v1964 = vpack.c.b16 %v1772, %v1768
        %v1965 = vpack.c.b16 %v1773, %v1769
        %v1966 = vpack.c.b16 %v1774, %v1770
        %v1967 = vpack.c.b16 %v1779, %v1775
        %v1968 = vpack.c.b16 %v1780, %v1776
        %v1969 = vpack.c.b16 %v1781, %v1777
        %v1970 = vpack.c.b16 %v1782, %v1778
        %v1971 = vpack.c.b16 %v1787, %v1783
        %v1972 = vpack.c.b16 %v1788, %v1784
        %v1973 = vpack.c.b16 %v1789, %v1785
        %v1974 = vpack.c.b16 %v1790, %v1786
        %v1975 = vpack.c.b16 %v1795, %v1791
        %v1976 = vpack.c.b16 %v1796, %v1792
        %v1977 = vpack.c.b16 %v1797, %v1793
        %v1978 = vpack.c.b16 %v1798, %v1794
        %v1979 = vpack.c.b16 %v1803, %v1799
        %v1980 = vpack.c.b16 %v1804, %v1800
        %v1981 = vpack.c.b16 %v1805, %v1801
        %v1982 = vpack.c.b16 %v1806, %v1802
        %v1983 = vpack.c.b16 %v1811, %v1807
        %v1984 = vpack.c.b16 %v1812, %v1808
        %v1985 = vpack.c.b16 %v1813, %v1809
        %v1986 = vpack.c.b16 %v1814, %v1810
        %v1987 = vpack.c.b16 %v1819, %v1815
        %v1988 = vpack.c.b16 %v1820, %v1816
        %v1989 = vpack.c.b16 %v1821, %v1817
        %v1990 = vpack.c.b16 %v1822, %v1818
        %v1991 = vpack.c.b16 %v1827, %v1823
        %v1992 = vpack.c.b16 %v1828, %v1824
        %v1993 = vpack.c.b16 %v1829, %v1825
        %v1994 = vpack.c.b16 %v1830, %v1826
        %v1995 = vpack.c.b16 %v1835, %v1831
        %v1996 = vpack.c.b16 %v1836, %v1832
        %v1997 = vpack.c.b16 %v1837, %v1833
        %v1998 = vpack.c.b16 %v1838, %v1834
        %v1999 = vpack.c.b16 %v1843, %v1839
        %v2000 = vpack.c.b16 %v1844, %v1840
        %v2001 = vpack.c.b16 %v1845, %v1841
        %v2002 = vpack.c.b16 %v1846, %v1842
        %v2003 = vpack.c.b16 %v1851, %v1847
        %v2004 = vpack.c.b16 %v1852, %v1848
        %v2005 = vpack.c.b16 %v1853, %v1849
        %v2006 = vpack.c.b16 %v1854, %v1850
        %v2007 = vpack.c.b16 %v1859, %v1855
        %v2008 = vpack.c.b16 %v1860, %v1856
        %v2009 = vpack.c.b16 %v1861, %v1857
        %v2010 = vpack.c.b16 %v1862, %v1858
        %v2011 = vpack.c.b16 %v1867, %v1863
        %v2012 = vpack.c.b16 %v1868, %v1864
        %v2013 = vpack.c.b16 %v1869, %v1865
        %v2014 = vpack.c.b16 %v1870, %v1866
        %v2015 = vpack.c.b16 %v1875, %v1871
        %v2016 = vpack.c.b16 %v1876, %v1872
        %v2017 = vpack.c.b16 %v1877, %v1873
        %v2018 = vpack.c.b16 %v1878, %v1874
        %v2019 = vpack.c.b16 %v1883, %v1879
        %v2020 = vpack.c.b16 %v1884, %v1880
        %v2021 = vpack.c.b16 %v1885, %v1881
        %v2022 = vpack.c.b16 %v1886, %v1882
        %v2023 = vpack.c.b16 %v1891, %v1887
        %v2024 = vpack.c.b16 %v1892, %v1888
        %v2025 = vpack.c.b16 %v1893, %v1889
        %v2026 = vpack.c.b16 %v1894, %v1890
        %v2027 = vpack.c.b16 %v1899, %v1895
        %v2028 = vpack.c.b16 %v1900, %v1896
        %v2029 = vpack.c.b16 %v1901, %v1897
        %v2030 = vpack.c.b16 %v1902, %v1898
        %2159 = vmatprep.subr.bf16.mxu0 %v1932
        %2160 = vmatpush1.bf16.msra.mxu0 %v1931
        %2161 = vmatprep.subr.bf16.mxu0 %v1928
        %2162 = vmatpush1.bf16.msra.mxu0 %v1927
        %2163 = vmatprep.subr.bf16.mxu0 %v1924
        %2164 = vmatpush1.bf16.msra.mxu0 %v1923
        %2165 = vmatprep.subr.bf16.mxu0 %v1920
        %2166 = vmatpush1.bf16.msra.mxu0 %v1919
        %2167 = vmatprep.subr.bf16.mxu0 %v1916
        %2168 = vmatpush1.bf16.msra.mxu0 %v1915
        %2169 = vmatprep.subr.bf16.mxu0 %v1912
        %2170 = vmatpush1.bf16.msra.mxu0 %v1911
        %2171 = vmatprep.subr.bf16.mxu0 %v1908
        %2172 = vmatpush1.bf16.msra.mxu0 %v1907
        %2173 = vmatprep.subr.bf16.mxu0 %v1904
        %2174 = vmatpush1.bf16.msra.mxu0 %v1903
        %2175 = vmatprep.subr.bf16.mxu0 %v1964
        %2176 = vmatpush2.bf16.msra.mxu0 %v1963
        %2177 = vmatprep.subr.bf16.mxu0 %v1960
        %2178 = vmatpush2.bf16.msra.mxu0 %v1959
        %2179 = vmatprep.subr.bf16.mxu0 %v1956
        %2180 = vmatpush2.bf16.msra.mxu0 %v1955
        %2181 = vmatprep.subr.bf16.mxu0 %v1952
        %2182 = vmatpush2.bf16.msra.mxu0 %v1951
        %2183 = vmatprep.subr.bf16.mxu0 %v1948
        %2184 = vmatpush2.bf16.msra.mxu0 %v1947
        %2185 = vmatprep.subr.bf16.mxu0 %v1944
        %2186 = vmatpush2.bf16.msra.mxu0 %v1943
        %2187 = vmatprep.subr.bf16.mxu0 %v1940
        %2188 = vmatpush2.bf16.msra.mxu0 %v1939
        %2189 = vmatprep.subr.bf16.mxu0 %v1936
        %2190 = vmatpush2.bf16.msra.mxu0 %v1935
        %2191 = vmatprep.mubr.bf16.mxu0 %v970
        %2192 = vmatmul.mubr.bf16.gmra.mxu0 %v958
        %v2193 = vpop.f32.mrf.mxu0
        %v2194 = vadd.f32 0.0, %v2193
        %v2195 = vpop.f32.mrf.mxu0
        %v2196 = vadd.f32 0.0, %v2195
        %v2197 = vpop.f32.mrf.mxu0
        %v2198 = vadd.f32 0.0, %v2197
        %v2199 = vpop.f32.mrf.mxu0
        %v2200 = vadd.f32 0.0, %v2199
        %2201 = vmatprep.mubr.bf16.mxu0 %v1010
        %2202 = vmatmul.mubr.bf16.gmra.mxu0 %v1002
        %v2203 = vpop.f32.mrf.mxu0
        %v2204 = vadd.f32 0.0, %v2203
        %v2205 = vpop.f32.mrf.mxu0
        %v2206 = vadd.f32 0.0, %v2205
        %v2207 = vpop.f32.mrf.mxu0
        %v2208 = vadd.f32 0.0, %v2207
        %v2209 = vpop.f32.mrf.mxu0
        %v2210 = vadd.f32 0.0, %v2209
        %2211 = vmatprep.mubr.bf16.mxu0 %v1042
        %2212 = vmatmul.mubr.bf16.gmra.mxu0 %v1034
        %v2213 = vpop.f32.mrf.mxu0
        %v2214 = vadd.f32 0.0, %v2213
        %v2215 = vpop.f32.mrf.mxu0
        %v2216 = vadd.f32 0.0, %v2215
        %v2217 = vpop.f32.mrf.mxu0
        %v2218 = vadd.f32 0.0, %v2217
        %v2219 = vpop.f32.mrf.mxu0
        %v2220 = vadd.f32 0.0, %v2219
        %2221 = vmatprep.mubr.bf16.mxu0 %v1074
        %2222 = vmatmul.mubr.bf16.gmra.mxu0 %v1066
        %v2223 = vpop.f32.mrf.mxu0
        %v2224 = vadd.f32 0.0, %v2223
        %v2225 = vpop.f32.mrf.mxu0
        %v2226 = vadd.f32 0.0, %v2225
        %v2227 = vpop.f32.mrf.mxu0
        %v2228 = vadd.f32 0.0, %v2227
        %v2229 = vpop.f32.mrf.mxu0
        %v2230 = vadd.f32 0.0, %v2229
        %2231 = vmatprep.mubr.bf16.mxu0 %v1106
        %2232 = vmatmul.mubr.bf16.gmra.mxu0 %v1098
        %v2233 = vpop.f32.mrf.mxu0
        %v2234 = vadd.f32 0.0, %v2233
        %v2235 = vpop.f32.mrf.mxu0
        %v2236 = vadd.f32 0.0, %v2235
        %v2237 = vpop.f32.mrf.mxu0
        %v2238 = vadd.f32 0.0, %v2237
        %v2239 = vpop.f32.mrf.mxu0
        %v2240 = vadd.f32 0.0, %v2239
        %2241 = vmatprep.mubr.bf16.mxu0 %v1138
        %2242 = vmatmul.mubr.bf16.gmra.mxu0 %v1130
        %v2243 = vpop.f32.mrf.mxu0
        %v2244 = vadd.f32 0.0, %v2243
        %v2245 = vpop.f32.mrf.mxu0
        %v2246 = vadd.f32 0.0, %v2245
        %v2247 = vpop.f32.mrf.mxu0
        %v2248 = vadd.f32 0.0, %v2247
        %v2249 = vpop.f32.mrf.mxu0
        %v2250 = vadd.f32 0.0, %v2249
        %2251 = vmatprep.mubr.bf16.mxu0 %v1170
        %2252 = vmatmul.mubr.bf16.gmra.mxu0 %v1162
        %v2253 = vpop.f32.mrf.mxu0
        %v2254 = vadd.f32 0.0, %v2253
        %v2255 = vpop.f32.mrf.mxu0
        %v2256 = vadd.f32 0.0, %v2255
        %v2257 = vpop.f32.mrf.mxu0
        %v2258 = vadd.f32 0.0, %v2257
        %v2259 = vpop.f32.mrf.mxu0
        %v2260 = vadd.f32 0.0, %v2259
        %2261 = vmatprep.mubr.bf16.mxu0 %v1202
        %2262 = vmatmul.mubr.bf16.gmra.mxu0 %v1194
        %v2263 = vpop.f32.mrf.mxu0
        %v2264 = vadd.f32 0.0, %v2263
        %v2265 = vpop.f32.mrf.mxu0
        %v2266 = vadd.f32 0.0, %v2265
        %v2267 = vpop.f32.mrf.mxu0
        %v2268 = vadd.f32 0.0, %v2267
        %v2269 = vpop.f32.mrf.mxu0
        %v2270 = vadd.f32 0.0, %v2269
        %2271 = vmatprep.mubr.bf16.mxu0 %v1234
        %2272 = vmatmul.mubr.bf16.gmra.mxu0 %v1226
        %v2273 = vpop.f32.mrf.mxu0
        %v2274 = vadd.f32 0.0, %v2273
        %v2275 = vpop.f32.mrf.mxu0
        %v2276 = vadd.f32 0.0, %v2275
        %v2277 = vpop.f32.mrf.mxu0
        %v2278 = vadd.f32 0.0, %v2277
        %v2279 = vpop.f32.mrf.mxu0
        %v2280 = vadd.f32 0.0, %v2279
        %2281 = vmatprep.mubr.bf16.mxu0 %v1266
        %2282 = vmatmul.mubr.bf16.gmra.mxu0 %v1258
        %v2283 = vpop.f32.mrf.mxu0
        %v2284 = vadd.f32 0.0, %v2283
        %v2285 = vpop.f32.mrf.mxu0
        %v2286 = vadd.f32 0.0, %v2285
        %v2287 = vpop.f32.mrf.mxu0
        %v2288 = vadd.f32 0.0, %v2287
        %v2289 = vpop.f32.mrf.mxu0
        %v2290 = vadd.f32 0.0, %v2289
        %2291 = vmatprep.mubr.bf16.mxu0 %v1298
        %2292 = vmatmul.mubr.bf16.gmra.mxu0 %v1290
        %v2293 = vpop.f32.mrf.mxu0
        %v2294 = vadd.f32 0.0, %v2293
        %v2295 = vpop.f32.mrf.mxu0
        %v2296 = vadd.f32 0.0, %v2295
        %v2297 = vpop.f32.mrf.mxu0
        %v2298 = vadd.f32 0.0, %v2297
        %v2299 = vpop.f32.mrf.mxu0
        %v2300 = vadd.f32 0.0, %v2299
        %2301 = vmatprep.mubr.bf16.mxu0 %v1330
        %2302 = vmatmul.mubr.bf16.gmra.mxu0 %v1322
        %v2303 = vpop.f32.mrf.mxu0
        %v2304 = vadd.f32 0.0, %v2303
        %v2305 = vpop.f32.mrf.mxu0
        %v2306 = vadd.f32 0.0, %v2305
        %v2307 = vpop.f32.mrf.mxu0
        %v2308 = vadd.f32 0.0, %v2307
        %v2309 = vpop.f32.mrf.mxu0
        %v2310 = vadd.f32 0.0, %v2309
        %2311 = vmatprep.mubr.bf16.mxu0 %v1362
        %2312 = vmatmul.mubr.bf16.gmra.mxu0 %v1354
        %v2313 = vpop.f32.mrf.mxu0
        %v2314 = vadd.f32 0.0, %v2313
        %v2315 = vpop.f32.mrf.mxu0
        %v2316 = vadd.f32 0.0, %v2315
        %v2317 = vpop.f32.mrf.mxu0
        %v2318 = vadd.f32 0.0, %v2317
        %v2319 = vpop.f32.mrf.mxu0
        %v2320 = vadd.f32 0.0, %v2319
        %2321 = vmatprep.mubr.bf16.mxu0 %v1394
        %2322 = vmatmul.mubr.bf16.gmra.mxu0 %v1386
        %v2323 = vpop.f32.mrf.mxu0
        %v2324 = vadd.f32 0.0, %v2323
        %v2325 = vpop.f32.mrf.mxu0
        %v2326 = vadd.f32 0.0, %v2325
        %v2327 = vpop.f32.mrf.mxu0
        %v2328 = vadd.f32 0.0, %v2327
        %v2329 = vpop.f32.mrf.mxu0
        %v2330 = vadd.f32 0.0, %v2329
        %2331 = vmatprep.mubr.bf16.mxu0 %v1426
        %2332 = vmatmul.mubr.bf16.gmra.mxu0 %v1418
        %v2333 = vpop.f32.mrf.mxu0
        %v2334 = vadd.f32 0.0, %v2333
        %v2335 = vpop.f32.mrf.mxu0
        %v2336 = vadd.f32 0.0, %v2335
        %v2337 = vpop.f32.mrf.mxu0
        %v2338 = vadd.f32 0.0, %v2337
        %v2339 = vpop.f32.mrf.mxu0
        %v2340 = vadd.f32 0.0, %v2339
        %2341 = vmatprep.mubr.bf16.mxu0 %v1448
        %2342 = vmatmul.mubr.bf16.gmra.mxu0 %v1445
        %v2343 = vpop.f32.mrf.mxu0
        %v2344 = vadd.f32 0.0, %v2343
        %v2345 = vpop.f32.mrf.mxu0
        %v2346 = vadd.f32 0.0, %v2345
        %v2347 = vpop.f32.mrf.mxu0
        %v2348 = vadd.f32 0.0, %v2347
        %v2349 = vpop.f32.mrf.mxu0
        %v2350 = vadd.f32 0.0, %v2349
        %2351 = vdwg.mxu0
        %2352 = vmatprep.subr.bf16.mxu0 %v1996
        %2353 = vmatpush1.bf16.msra.mxu0 %v1995
        %2354 = vmatprep.subr.bf16.mxu0 %v1992
        %2355 = vmatpush1.bf16.msra.mxu0 %v1991
        %2356 = vmatprep.subr.bf16.mxu0 %v1988
        %2357 = vmatpush1.bf16.msra.mxu0 %v1987
        %2358 = vmatprep.subr.bf16.mxu0 %v1984
        %2359 = vmatpush1.bf16.msra.mxu0 %v1983
        %2360 = vmatprep.subr.bf16.mxu0 %v1980
        %2361 = vmatpush1.bf16.msra.mxu0 %v1979
        %2362 = vmatprep.subr.bf16.mxu0 %v1976
        %2363 = vmatpush1.bf16.msra.mxu0 %v1975
        %2364 = vmatprep.subr.bf16.mxu0 %v1972
        %2365 = vmatpush1.bf16.msra.mxu0 %v1971
        %2366 = vmatprep.subr.bf16.mxu0 %v1968
        %2367 = vmatpush1.bf16.msra.mxu0 %v1967
        %2368 = vmatprep.subr.bf16.mxu0 %v2028
        %2369 = vmatpush2.bf16.msra.mxu0 %v2027
        %2370 = vmatprep.subr.bf16.mxu0 %v2024
        %2371 = vmatpush2.bf16.msra.mxu0 %v2023
        %2372 = vmatprep.subr.bf16.mxu0 %v2020
        %2373 = vmatpush2.bf16.msra.mxu0 %v2019
        %2374 = vmatprep.subr.bf16.mxu0 %v2016
        %2375 = vmatpush2.bf16.msra.mxu0 %v2015
        %2376 = vmatprep.subr.bf16.mxu0 %v2012
        %2377 = vmatpush2.bf16.msra.mxu0 %v2011
        %2378 = vmatprep.subr.bf16.mxu0 %v2008
        %2379 = vmatpush2.bf16.msra.mxu0 %v2007
        %2380 = vmatprep.subr.bf16.mxu0 %v2004
        %2381 = vmatpush2.bf16.msra.mxu0 %v2003
        %2382 = vmatprep.subr.bf16.mxu0 %v2000
        %2383 = vmatpush2.bf16.msra.mxu0 %v1999
        %2384 = vmatprep.mubr.bf16.mxu0 %v994
        %2385 = vmatmul.mubr.bf16.gmra.mxu0 %v982
        %v2386 = vpop.f32.mrf.mxu0
        %v2387 = vadd.f32 %v2194, %v2386
        %v2388 = vpop.f32.mrf.mxu0
        %v2389 = vadd.f32 %v2196, %v2388
        %v2390 = vpop.f32.mrf.mxu0
        %v2391 = vadd.f32 %v2198, %v2390
        %v2392 = vpop.f32.mrf.mxu0
        %v2393 = vadd.f32 %v2200, %v2392
        %2394 = vmatprep.mubr.bf16.mxu0 %v1026
        %2395 = vmatmul.mubr.bf16.gmra.mxu0 %v1018
        %v2396 = vpop.f32.mrf.mxu0
        %v2397 = vadd.f32 %v2204, %v2396
        %v2398 = vpop.f32.mrf.mxu0
        %v2399 = vadd.f32 %v2206, %v2398
        %v2400 = vpop.f32.mrf.mxu0
        %v2401 = vadd.f32 %v2208, %v2400
        %v2402 = vpop.f32.mrf.mxu0
        %v2403 = vadd.f32 %v2210, %v2402
        %2404 = vmatprep.mubr.bf16.mxu0 %v1058
        %2405 = vmatmul.mubr.bf16.gmra.mxu0 %v1050
        %v2406 = vpop.f32.mrf.mxu0
        %v2407 = vadd.f32 %v2214, %v2406
        %v2408 = vpop.f32.mrf.mxu0
        %v2409 = vadd.f32 %v2216, %v2408
        %v2410 = vpop.f32.mrf.mxu0
        %v2411 = vadd.f32 %v2218, %v2410
        %v2412 = vpop.f32.mrf.mxu0
        %v2413 = vadd.f32 %v2220, %v2412
        %2414 = vmatprep.mubr.bf16.mxu0 %v1090
        %2415 = vmatmul.mubr.bf16.gmra.mxu0 %v1082
        %v2416 = vpop.f32.mrf.mxu0
        %v2417 = vadd.f32 %v2224, %v2416
        %v2418 = vpop.f32.mrf.mxu0
        %v2419 = vadd.f32 %v2226, %v2418
        %v2420 = vpop.f32.mrf.mxu0
        %v2421 = vadd.f32 %v2228, %v2420
        %v2422 = vpop.f32.mrf.mxu0
        %v2423 = vadd.f32 %v2230, %v2422
        %2424 = vmatprep.mubr.bf16.mxu0 %v1122
        %2425 = vmatmul.mubr.bf16.gmra.mxu0 %v1114
        %v2426 = vpop.f32.mrf.mxu0
        %v2427 = vadd.f32 %v2234, %v2426
        %v2428 = vpop.f32.mrf.mxu0
        %v2429 = vadd.f32 %v2236, %v2428
        %v2430 = vpop.f32.mrf.mxu0
        %v2431 = vadd.f32 %v2238, %v2430
        %v2432 = vpop.f32.mrf.mxu0
        %v2433 = vadd.f32 %v2240, %v2432
        %2434 = vmatprep.mubr.bf16.mxu0 %v1154
        %2435 = vmatmul.mubr.bf16.gmra.mxu0 %v1146
        %v2436 = vpop.f32.mrf.mxu0
        %v2437 = vadd.f32 %v2244, %v2436
        %v2438 = vpop.f32.mrf.mxu0
        %v2439 = vadd.f32 %v2246, %v2438
        %v2440 = vpop.f32.mrf.mxu0
        %v2441 = vadd.f32 %v2248, %v2440
        %v2442 = vpop.f32.mrf.mxu0
        %v2443 = vadd.f32 %v2250, %v2442
        %2444 = vmatprep.mubr.bf16.mxu0 %v1186
        %2445 = vmatmul.mubr.bf16.gmra.mxu0 %v1178
        %v2446 = vpop.f32.mrf.mxu0
        %v2447 = vadd.f32 %v2254, %v2446
        %v2448 = vpop.f32.mrf.mxu0
        %v2449 = vadd.f32 %v2256, %v2448
        %v2450 = vpop.f32.mrf.mxu0
        %v2451 = vadd.f32 %v2258, %v2450
        %v2452 = vpop.f32.mrf.mxu0
        %v2453 = vadd.f32 %v2260, %v2452
        %2454 = vmatprep.mubr.bf16.mxu0 %v1218
        %2455 = vmatmul.mubr.bf16.gmra.mxu0 %v1210
        %v2456 = vpop.f32.mrf.mxu0
        %v2457 = vadd.f32 %v2264, %v2456
        %v2458 = vpop.f32.mrf.mxu0
        %v2459 = vadd.f32 %v2266, %v2458
        %v2460 = vpop.f32.mrf.mxu0
        %v2461 = vadd.f32 %v2268, %v2460
        %v2462 = vpop.f32.mrf.mxu0
        %v2463 = vadd.f32 %v2270, %v2462
        %2464 = vmatprep.mubr.bf16.mxu0 %v1250
        %2465 = vmatmul.mubr.bf16.gmra.mxu0 %v1242
        %v2466 = vpop.f32.mrf.mxu0
        %v2467 = vadd.f32 %v2274, %v2466
        %v2468 = vpop.f32.mrf.mxu0
        %v2469 = vadd.f32 %v2276, %v2468
        %v2470 = vpop.f32.mrf.mxu0
        %v2471 = vadd.f32 %v2278, %v2470
        %v2472 = vpop.f32.mrf.mxu0
        %v2473 = vadd.f32 %v2280, %v2472
        %2474 = vmatprep.mubr.bf16.mxu0 %v1282
        %2475 = vmatmul.mubr.bf16.gmra.mxu0 %v1274
        %v2476 = vpop.f32.mrf.mxu0
        %v2477 = vadd.f32 %v2284, %v2476
        %v2478 = vpop.f32.mrf.mxu0
        %v2479 = vadd.f32 %v2286, %v2478
        %v2480 = vpop.f32.mrf.mxu0
        %v2481 = vadd.f32 %v2288, %v2480
        %v2482 = vpop.f32.mrf.mxu0
        %v2483 = vadd.f32 %v2290, %v2482
        %2484 = vmatprep.mubr.bf16.mxu0 %v1314
        %2485 = vmatmul.mubr.bf16.gmra.mxu0 %v1306
        %v2486 = vpop.f32.mrf.mxu0
        %v2487 = vadd.f32 %v2294, %v2486
        %v2488 = vpop.f32.mrf.mxu0
        %v2489 = vadd.f32 %v2296, %v2488
        %v2490 = vpop.f32.mrf.mxu0
        %v2491 = vadd.f32 %v2298, %v2490
        %v2492 = vpop.f32.mrf.mxu0
        %v2493 = vadd.f32 %v2300, %v2492
        %2494 = vmatprep.mubr.bf16.mxu0 %v1346
        %2495 = vmatmul.mubr.bf16.gmra.mxu0 %v1338
        %v2496 = vpop.f32.mrf.mxu0
        %v2497 = vadd.f32 %v2304, %v2496
        %v2498 = vpop.f32.mrf.mxu0
        %v2499 = vadd.f32 %v2306, %v2498
        %v2500 = vpop.f32.mrf.mxu0
        %v2501 = vadd.f32 %v2308, %v2500
        %v2502 = vpop.f32.mrf.mxu0
        %v2503 = vadd.f32 %v2310, %v2502
        %2504 = vmatprep.mubr.bf16.mxu0 %v1378
        %2505 = vmatmul.mubr.bf16.gmra.mxu0 %v1370
        %v2506 = vpop.f32.mrf.mxu0
        %v2507 = vadd.f32 %v2314, %v2506
        %v2508 = vpop.f32.mrf.mxu0
        %v2509 = vadd.f32 %v2316, %v2508
        %v2510 = vpop.f32.mrf.mxu0
        %v2511 = vadd.f32 %v2318, %v2510
        %v2512 = vpop.f32.mrf.mxu0
        %v2513 = vadd.f32 %v2320, %v2512
        %2514 = vmatprep.mubr.bf16.mxu0 %v1410
        %2515 = vmatmul.mubr.bf16.gmra.mxu0 %v1402
        %v2516 = vpop.f32.mrf.mxu0
        %v2517 = vadd.f32 %v2324, %v2516
        %v2518 = vpop.f32.mrf.mxu0
        %v2519 = vadd.f32 %v2326, %v2518
        %v2520 = vpop.f32.mrf.mxu0
        %v2521 = vadd.f32 %v2328, %v2520
        %v2522 = vpop.f32.mrf.mxu0
        %v2523 = vadd.f32 %v2330, %v2522
        %2524 = vmatprep.mubr.bf16.mxu0 %v1442
        %2525 = vmatmul.mubr.bf16.gmra.mxu0 %v1434
        %v2526 = vpop.f32.mrf.mxu0
        %v2527 = vadd.f32 %v2334, %v2526
        %v2528 = vpop.f32.mrf.mxu0
        %v2529 = vadd.f32 %v2336, %v2528
        %v2530 = vpop.f32.mrf.mxu0
        %v2531 = vadd.f32 %v2338, %v2530
        %v2532 = vpop.f32.mrf.mxu0
        %v2533 = vadd.f32 %v2340, %v2532
        %2534 = vmatprep.mubr.bf16.mxu0 %v1454
        %2535 = vmatmul.mubr.bf16.gmra.mxu0 %v1451
        %v2536 = vpop.f32.mrf.mxu0
        %v2537 = vadd.f32 %v2344, %v2536
        %v2538 = vpop.f32.mrf.mxu0
        %v2539 = vadd.f32 %v2346, %v2538
        %v2540 = vpop.f32.mrf.mxu0
        %v2541 = vadd.f32 %v2348, %v2540
        %v2542 = vpop.f32.mrf.mxu0
        %v2543 = vadd.f32 %v2350, %v2542
        %2544 = vdwg.mxu0
        %2545 = vmatprep.subr.bf16.mxu0 %v1934
        %2546 = vmatpush1.bf16.msra.mxu0 %v1933
        %2547 = vmatprep.subr.bf16.mxu0 %v1930
        %2548 = vmatpush1.bf16.msra.mxu0 %v1929
        %2549 = vmatprep.subr.bf16.mxu0 %v1926
        %2550 = vmatpush1.bf16.msra.mxu0 %v1925
        %2551 = vmatprep.subr.bf16.mxu0 %v1922
        %2552 = vmatpush1.bf16.msra.mxu0 %v1921
        %2553 = vmatprep.subr.bf16.mxu0 %v1918
        %2554 = vmatpush1.bf16.msra.mxu0 %v1917
        %2555 = vmatprep.subr.bf16.mxu0 %v1914
        %2556 = vmatpush1.bf16.msra.mxu0 %v1913
        %2557 = vmatprep.subr.bf16.mxu0 %v1910
        %2558 = vmatpush1.bf16.msra.mxu0 %v1909
        %2559 = vmatprep.subr.bf16.mxu0 %v1906
        %2560 = vmatpush1.bf16.msra.mxu0 %v1905
        %2561 = vmatprep.subr.bf16.mxu0 %v1966
        %2562 = vmatpush2.bf16.msra.mxu0 %v1965
        %2563 = vmatprep.subr.bf16.mxu0 %v1962
        %2564 = vmatpush2.bf16.msra.mxu0 %v1961
        %2565 = vmatprep.subr.bf16.mxu0 %v1958
        %2566 = vmatpush2.bf16.msra.mxu0 %v1957
        %2567 = vmatprep.subr.bf16.mxu0 %v1954
        %2568 = vmatpush2.bf16.msra.mxu0 %v1953
        %2569 = vmatprep.subr.bf16.mxu0 %v1950
        %2570 = vmatpush2.bf16.msra.mxu0 %v1949
        %2571 = vmatprep.subr.bf16.mxu0 %v1946
        %2572 = vmatpush2.bf16.msra.mxu0 %v1945
        %2573 = vmatprep.subr.bf16.mxu0 %v1942
        %2574 = vmatpush2.bf16.msra.mxu0 %v1941
        %2575 = vmatprep.subr.bf16.mxu0 %v1938
        %2576 = vmatpush2.bf16.msra.mxu0 %v1937
        %2577 = vmatprep.mubr.bf16.mxu0 %v970
        %2578 = vmatmul.mubr.bf16.gmra.mxu0 %v958
        %v2579 = vpop.f32.mrf.mxu0
        %v2580 = vadd.f32 0.0, %v2579
        %v2581 = vpop.f32.mrf.mxu0
        %v2582 = vadd.f32 0.0, %v2581
        %v2583 = vpop.f32.mrf.mxu0
        %v2584 = vadd.f32 0.0, %v2583
        %v2585 = vpop.f32.mrf.mxu0
        %v2586 = vadd.f32 0.0, %v2585
        %2587 = vmatprep.mubr.bf16.mxu0 %v1010
        %2588 = vmatmul.mubr.bf16.gmra.mxu0 %v1002
        %v2589 = vpop.f32.mrf.mxu0
        %v2590 = vadd.f32 0.0, %v2589
        %v2591 = vpop.f32.mrf.mxu0
        %v2592 = vadd.f32 0.0, %v2591
        %v2593 = vpop.f32.mrf.mxu0
        %v2594 = vadd.f32 0.0, %v2593
        %v2595 = vpop.f32.mrf.mxu0
        %v2596 = vadd.f32 0.0, %v2595
        %2597 = vmatprep.mubr.bf16.mxu0 %v1042
        %2598 = vmatmul.mubr.bf16.gmra.mxu0 %v1034
        %v2599 = vpop.f32.mrf.mxu0
        %v2600 = vadd.f32 0.0, %v2599
        %v2601 = vpop.f32.mrf.mxu0
        %v2602 = vadd.f32 0.0, %v2601
        %v2603 = vpop.f32.mrf.mxu0
        %v2604 = vadd.f32 0.0, %v2603
        %v2605 = vpop.f32.mrf.mxu0
        %v2606 = vadd.f32 0.0, %v2605
        %2607 = vmatprep.mubr.bf16.mxu0 %v1074
        %2608 = vmatmul.mubr.bf16.gmra.mxu0 %v1066
        %v2609 = vpop.f32.mrf.mxu0
        %v2610 = vadd.f32 0.0, %v2609
        %v2611 = vpop.f32.mrf.mxu0
        %v2612 = vadd.f32 0.0, %v2611
        %v2613 = vpop.f32.mrf.mxu0
        %v2614 = vadd.f32 0.0, %v2613
        %v2615 = vpop.f32.mrf.mxu0
        %v2616 = vadd.f32 0.0, %v2615
        %2617 = vmatprep.mubr.bf16.mxu0 %v1106
        %2618 = vmatmul.mubr.bf16.gmra.mxu0 %v1098
        %v2619 = vpop.f32.mrf.mxu0
        %v2620 = vadd.f32 0.0, %v2619
        %v2621 = vpop.f32.mrf.mxu0
        %v2622 = vadd.f32 0.0, %v2621
        %v2623 = vpop.f32.mrf.mxu0
        %v2624 = vadd.f32 0.0, %v2623
        %v2625 = vpop.f32.mrf.mxu0
        %v2626 = vadd.f32 0.0, %v2625
        %2627 = vmatprep.mubr.bf16.mxu0 %v1138
        %2628 = vmatmul.mubr.bf16.gmra.mxu0 %v1130
        %v2629 = vpop.f32.mrf.mxu0
        %v2630 = vadd.f32 0.0, %v2629
        %v2631 = vpop.f32.mrf.mxu0
        %v2632 = vadd.f32 0.0, %v2631
        %v2633 = vpop.f32.mrf.mxu0
        %v2634 = vadd.f32 0.0, %v2633
        %v2635 = vpop.f32.mrf.mxu0
        %v2636 = vadd.f32 0.0, %v2635
        %2637 = vmatprep.mubr.bf16.mxu0 %v1170
        %2638 = vmatmul.mubr.bf16.gmra.mxu0 %v1162
        %v2639 = vpop.f32.mrf.mxu0
        %v2640 = vadd.f32 0.0, %v2639
        %v2641 = vpop.f32.mrf.mxu0
        %v2642 = vadd.f32 0.0, %v2641
        %v2643 = vpop.f32.mrf.mxu0
        %v2644 = vadd.f32 0.0, %v2643
        %v2645 = vpop.f32.mrf.mxu0
        %v2646 = vadd.f32 0.0, %v2645
        %2647 = vmatprep.mubr.bf16.mxu0 %v1202
        %2648 = vmatmul.mubr.bf16.gmra.mxu0 %v1194
        %v2649 = vpop.f32.mrf.mxu0
        %v2650 = vadd.f32 0.0, %v2649
        %v2651 = vpop.f32.mrf.mxu0
        %v2652 = vadd.f32 0.0, %v2651
        %v2653 = vpop.f32.mrf.mxu0
        %v2654 = vadd.f32 0.0, %v2653
        %v2655 = vpop.f32.mrf.mxu0
        %v2656 = vadd.f32 0.0, %v2655
        %2657 = vmatprep.mubr.bf16.mxu0 %v1234
        %2658 = vmatmul.mubr.bf16.gmra.mxu0 %v1226
        %v2659 = vpop.f32.mrf.mxu0
        %v2660 = vadd.f32 0.0, %v2659
        %v2661 = vpop.f32.mrf.mxu0
        %v2662 = vadd.f32 0.0, %v2661
        %v2663 = vpop.f32.mrf.mxu0
        %v2664 = vadd.f32 0.0, %v2663
        %v2665 = vpop.f32.mrf.mxu0
        %v2666 = vadd.f32 0.0, %v2665
        %2667 = vmatprep.mubr.bf16.mxu0 %v1266
        %2668 = vmatmul.mubr.bf16.gmra.mxu0 %v1258
        %v2669 = vpop.f32.mrf.mxu0
        %v2670 = vadd.f32 0.0, %v2669
        %v2671 = vpop.f32.mrf.mxu0
        %v2672 = vadd.f32 0.0, %v2671
        %v2673 = vpop.f32.mrf.mxu0
        %v2674 = vadd.f32 0.0, %v2673
        %v2675 = vpop.f32.mrf.mxu0
        %v2676 = vadd.f32 0.0, %v2675
        %2677 = vmatprep.mubr.bf16.mxu0 %v1298
        %2678 = vmatmul.mubr.bf16.gmra.mxu0 %v1290
        %v2679 = vpop.f32.mrf.mxu0
        %v2680 = vadd.f32 0.0, %v2679
        %v2681 = vpop.f32.mrf.mxu0
        %v2682 = vadd.f32 0.0, %v2681
        %v2683 = vpop.f32.mrf.mxu0
        %v2684 = vadd.f32 0.0, %v2683
        %v2685 = vpop.f32.mrf.mxu0
        %v2686 = vadd.f32 0.0, %v2685
        %2687 = vmatprep.mubr.bf16.mxu0 %v1330
        %2688 = vmatmul.mubr.bf16.gmra.mxu0 %v1322
        %v2689 = vpop.f32.mrf.mxu0
        %v2690 = vadd.f32 0.0, %v2689
        %v2691 = vpop.f32.mrf.mxu0
        %v2692 = vadd.f32 0.0, %v2691
        %v2693 = vpop.f32.mrf.mxu0
        %v2694 = vadd.f32 0.0, %v2693
        %v2695 = vpop.f32.mrf.mxu0
        %v2696 = vadd.f32 0.0, %v2695
        %2697 = vmatprep.mubr.bf16.mxu0 %v1362
        %2698 = vmatmul.mubr.bf16.gmra.mxu0 %v1354
        %v2699 = vpop.f32.mrf.mxu0
        %v2700 = vadd.f32 0.0, %v2699
        %v2701 = vpop.f32.mrf.mxu0
        %v2702 = vadd.f32 0.0, %v2701
        %v2703 = vpop.f32.mrf.mxu0
        %v2704 = vadd.f32 0.0, %v2703
        %v2705 = vpop.f32.mrf.mxu0
        %v2706 = vadd.f32 0.0, %v2705
        %2707 = vmatprep.mubr.bf16.mxu0 %v1394
        %2708 = vmatmul.mubr.bf16.gmra.mxu0 %v1386
        %v2709 = vpop.f32.mrf.mxu0
        %v2710 = vadd.f32 0.0, %v2709
        %v2711 = vpop.f32.mrf.mxu0
        %v2712 = vadd.f32 0.0, %v2711
        %v2713 = vpop.f32.mrf.mxu0
        %v2714 = vadd.f32 0.0, %v2713
        %v2715 = vpop.f32.mrf.mxu0
        %v2716 = vadd.f32 0.0, %v2715
        %2717 = vmatprep.mubr.bf16.mxu0 %v1426
        %2718 = vmatmul.mubr.bf16.gmra.mxu0 %v1418
        %v2719 = vpop.f32.mrf.mxu0
        %v2720 = vadd.f32 0.0, %v2719
        %v2721 = vpop.f32.mrf.mxu0
        %v2722 = vadd.f32 0.0, %v2721
        %v2723 = vpop.f32.mrf.mxu0
        %v2724 = vadd.f32 0.0, %v2723
        %v2725 = vpop.f32.mrf.mxu0
        %v2726 = vadd.f32 0.0, %v2725
        %2727 = vmatprep.mubr.bf16.mxu0 %v1448
        %2728 = vmatmul.mubr.bf16.gmra.mxu0 %v1445
        %v2729 = vpop.f32.mrf.mxu0
        %v2730 = vadd.f32 0.0, %v2729
        %v2731 = vpop.f32.mrf.mxu0
        %v2732 = vadd.f32 0.0, %v2731
        %v2733 = vpop.f32.mrf.mxu0
        %v2734 = vadd.f32 0.0, %v2733
        %v2735 = vpop.f32.mrf.mxu0
        %v2736 = vadd.f32 0.0, %v2735
        %2737 = vdwg.mxu0
        %2738 = vmatprep.subr.bf16.mxu0 %v1998
        %2739 = vmatpush1.bf16.msra.mxu0 %v1997
        %2740 = vmatprep.subr.bf16.mxu0 %v1994
        %2741 = vmatpush1.bf16.msra.mxu0 %v1993
        %2742 = vmatprep.subr.bf16.mxu0 %v1990
        %2743 = vmatpush1.bf16.msra.mxu0 %v1989
        %2744 = vmatprep.subr.bf16.mxu0 %v1986
        %2745 = vmatpush1.bf16.msra.mxu0 %v1985
        %2746 = vmatprep.subr.bf16.mxu0 %v1982
        %2747 = vmatpush1.bf16.msra.mxu0 %v1981
        %2748 = vmatprep.subr.bf16.mxu0 %v1978
        %2749 = vmatpush1.bf16.msra.mxu0 %v1977
        %2750 = vmatprep.subr.bf16.mxu0 %v1974
        %2751 = vmatpush1.bf16.msra.mxu0 %v1973
        %2752 = vmatprep.subr.bf16.mxu0 %v1970
        %2753 = vmatpush1.bf16.msra.mxu0 %v1969
        %2754 = vmatprep.subr.bf16.mxu0 %v2030
        %2755 = vmatpush2.bf16.msra.mxu0 %v2029
        %2756 = vmatprep.subr.bf16.mxu0 %v2026
        %2757 = vmatpush2.bf16.msra.mxu0 %v2025
        %2758 = vmatprep.subr.bf16.mxu0 %v2022
        %2759 = vmatpush2.bf16.msra.mxu0 %v2021
        %2760 = vmatprep.subr.bf16.mxu0 %v2018
        %2761 = vmatpush2.bf16.msra.mxu0 %v2017
        %2762 = vmatprep.subr.bf16.mxu0 %v2014
        %2763 = vmatpush2.bf16.msra.mxu0 %v2013
        %2764 = vmatprep.subr.bf16.mxu0 %v2010
        %2765 = vmatpush2.bf16.msra.mxu0 %v2009
        %2766 = vmatprep.subr.bf16.mxu0 %v2006
        %2767 = vmatpush2.bf16.msra.mxu0 %v2005
        %2768 = vmatprep.subr.bf16.mxu0 %v2002
        %2769 = vmatpush2.bf16.msra.mxu0 %v2001
        %2770 = vmatprep.mubr.bf16.mxu0 %v994
        %2771 = vmatmul.mubr.bf16.gmra.mxu0 %v982
        %v2772 = vpop.f32.mrf.mxu0
        %v2773 = vadd.f32 %v2580, %v2772
        %v2774 = vpop.f32.mrf.mxu0
        %v2775 = vadd.f32 %v2582, %v2774
        %v2776 = vpop.f32.mrf.mxu0
        %v2777 = vadd.f32 %v2584, %v2776
        %v2778 = vpop.f32.mrf.mxu0
        %v2779 = vadd.f32 %v2586, %v2778
        %2780 = vmatprep.mubr.bf16.mxu0 %v1026
        %2781 = vmatmul.mubr.bf16.gmra.mxu0 %v1018
        %v2782 = vpop.f32.mrf.mxu0
        %v2783 = vadd.f32 %v2590, %v2782
        %v2784 = vpop.f32.mrf.mxu0
        %v2785 = vadd.f32 %v2592, %v2784
        %v2786 = vpop.f32.mrf.mxu0
        %v2787 = vadd.f32 %v2594, %v2786
        %v2788 = vpop.f32.mrf.mxu0
        %v2789 = vadd.f32 %v2596, %v2788
        %2790 = vmatprep.mubr.bf16.mxu0 %v1058
        %2791 = vmatmul.mubr.bf16.gmra.mxu0 %v1050
        %v2792 = vpop.f32.mrf.mxu0
        %v2793 = vadd.f32 %v2600, %v2792
        %v2794 = vpop.f32.mrf.mxu0
        %v2795 = vadd.f32 %v2602, %v2794
        %v2796 = vpop.f32.mrf.mxu0
        %v2797 = vadd.f32 %v2604, %v2796
        %v2798 = vpop.f32.mrf.mxu0
        %v2799 = vadd.f32 %v2606, %v2798
        %2800 = vmatprep.mubr.bf16.mxu0 %v1090
        %2801 = vmatmul.mubr.bf16.gmra.mxu0 %v1082
        %v2802 = vpop.f32.mrf.mxu0
        %v2803 = vadd.f32 %v2610, %v2802
        %v2804 = vpop.f32.mrf.mxu0
        %v2805 = vadd.f32 %v2612, %v2804
        %v2806 = vpop.f32.mrf.mxu0
        %v2807 = vadd.f32 %v2614, %v2806
        %v2808 = vpop.f32.mrf.mxu0
        %v2809 = vadd.f32 %v2616, %v2808
        %2810 = vmatprep.mubr.bf16.mxu0 %v1122
        %2811 = vmatmul.mubr.bf16.gmra.mxu0 %v1114
        %v2812 = vpop.f32.mrf.mxu0
        %v2813 = vadd.f32 %v2620, %v2812
        %v2814 = vpop.f32.mrf.mxu0
        %v2815 = vadd.f32 %v2622, %v2814
        %v2816 = vpop.f32.mrf.mxu0
        %v2817 = vadd.f32 %v2624, %v2816
        %v2818 = vpop.f32.mrf.mxu0
        %v2819 = vadd.f32 %v2626, %v2818
        %2820 = vmatprep.mubr.bf16.mxu0 %v1154
        %2821 = vmatmul.mubr.bf16.gmra.mxu0 %v1146
        %v2822 = vpop.f32.mrf.mxu0
        %v2823 = vadd.f32 %v2630, %v2822
        %v2824 = vpop.f32.mrf.mxu0
        %v2825 = vadd.f32 %v2632, %v2824
        %v2826 = vpop.f32.mrf.mxu0
        %v2827 = vadd.f32 %v2634, %v2826
        %v2828 = vpop.f32.mrf.mxu0
        %v2829 = vadd.f32 %v2636, %v2828
        %2830 = vmatprep.mubr.bf16.mxu0 %v1186
        %2831 = vmatmul.mubr.bf16.gmra.mxu0 %v1178
        %v2832 = vpop.f32.mrf.mxu0
        %v2833 = vadd.f32 %v2640, %v2832
        %v2834 = vpop.f32.mrf.mxu0
        %v2835 = vadd.f32 %v2642, %v2834
        %v2836 = vpop.f32.mrf.mxu0
        %v2837 = vadd.f32 %v2644, %v2836
        %v2838 = vpop.f32.mrf.mxu0
        %v2839 = vadd.f32 %v2646, %v2838
        %2840 = vmatprep.mubr.bf16.mxu0 %v1218
        %2841 = vmatmul.mubr.bf16.gmra.mxu0 %v1210
        %v2842 = vpop.f32.mrf.mxu0
        %v2843 = vadd.f32 %v2650, %v2842
        %v2844 = vpop.f32.mrf.mxu0
        %v2845 = vadd.f32 %v2652, %v2844
        %v2846 = vpop.f32.mrf.mxu0
        %v2847 = vadd.f32 %v2654, %v2846
        %v2848 = vpop.f32.mrf.mxu0
        %v2849 = vadd.f32 %v2656, %v2848
        %2850 = vmatprep.mubr.bf16.mxu0 %v1250
        %2851 = vmatmul.mubr.bf16.gmra.mxu0 %v1242
        %v2852 = vpop.f32.mrf.mxu0
        %v2853 = vadd.f32 %v2660, %v2852
        %v2854 = vpop.f32.mrf.mxu0
        %v2855 = vadd.f32 %v2662, %v2854
        %v2856 = vpop.f32.mrf.mxu0
        %v2857 = vadd.f32 %v2664, %v2856
        %v2858 = vpop.f32.mrf.mxu0
        %v2859 = vadd.f32 %v2666, %v2858
        %2860 = vmatprep.mubr.bf16.mxu0 %v1282
        %2861 = vmatmul.mubr.bf16.gmra.mxu0 %v1274
        %v2862 = vpop.f32.mrf.mxu0
        %v2863 = vadd.f32 %v2670, %v2862
        %v2864 = vpop.f32.mrf.mxu0
        %v2865 = vadd.f32 %v2672, %v2864
        %v2866 = vpop.f32.mrf.mxu0
        %v2867 = vadd.f32 %v2674, %v2866
        %v2868 = vpop.f32.mrf.mxu0
        %v2869 = vadd.f32 %v2676, %v2868
        %2870 = vmatprep.mubr.bf16.mxu0 %v1314
        %2871 = vmatmul.mubr.bf16.gmra.mxu0 %v1306
        %v2872 = vpop.f32.mrf.mxu0
        %v2873 = vadd.f32 %v2680, %v2872
        %v2874 = vpop.f32.mrf.mxu0
        %v2875 = vadd.f32 %v2682, %v2874
        %v2876 = vpop.f32.mrf.mxu0
        %v2877 = vadd.f32 %v2684, %v2876
        %v2878 = vpop.f32.mrf.mxu0
        %v2879 = vadd.f32 %v2686, %v2878
        %2880 = vmatprep.mubr.bf16.mxu0 %v1346
        %2881 = vmatmul.mubr.bf16.gmra.mxu0 %v1338
        %v2882 = vpop.f32.mrf.mxu0
        %v2883 = vadd.f32 %v2690, %v2882
        %v2884 = vpop.f32.mrf.mxu0
        %v2885 = vadd.f32 %v2692, %v2884
        %v2886 = vpop.f32.mrf.mxu0
        %v2887 = vadd.f32 %v2694, %v2886
        %v2888 = vpop.f32.mrf.mxu0
        %v2889 = vadd.f32 %v2696, %v2888
        %2890 = vmatprep.mubr.bf16.mxu0 %v1378
        %2891 = vmatmul.mubr.bf16.gmra.mxu0 %v1370
        %v2892 = vpop.f32.mrf.mxu0
        %v2893 = vadd.f32 %v2700, %v2892
        %v2894 = vpop.f32.mrf.mxu0
        %v2895 = vadd.f32 %v2702, %v2894
        %v2896 = vpop.f32.mrf.mxu0
        %v2897 = vadd.f32 %v2704, %v2896
        %v2898 = vpop.f32.mrf.mxu0
        %v2899 = vadd.f32 %v2706, %v2898
        %2900 = vmatprep.mubr.bf16.mxu0 %v1410
        %2901 = vmatmul.mubr.bf16.gmra.mxu0 %v1402
        %v2902 = vpop.f32.mrf.mxu0
        %v2903 = vadd.f32 %v2710, %v2902
        %v2904 = vpop.f32.mrf.mxu0
        %v2905 = vadd.f32 %v2712, %v2904
        %v2906 = vpop.f32.mrf.mxu0
        %v2907 = vadd.f32 %v2714, %v2906
        %v2908 = vpop.f32.mrf.mxu0
        %v2909 = vadd.f32 %v2716, %v2908
        %2910 = vmatprep.mubr.bf16.mxu0 %v1442
        %2911 = vmatmul.mubr.bf16.gmra.mxu0 %v1434
        %v2912 = vpop.f32.mrf.mxu0
        %v2913 = vadd.f32 %v2720, %v2912
        %v2914 = vpop.f32.mrf.mxu0
        %v2915 = vadd.f32 %v2722, %v2914
        %v2916 = vpop.f32.mrf.mxu0
        %v2917 = vadd.f32 %v2724, %v2916
        %v2918 = vpop.f32.mrf.mxu0
        %v2919 = vadd.f32 %v2726, %v2918
        %2920 = vmatprep.mubr.bf16.mxu0 %v1454
        %2921 = vmatmul.mubr.bf16.gmra.mxu0 %v1451
        %v2922 = vpop.f32.mrf.mxu0
        %v2923 = vadd.f32 %v2730, %v2922
        %v2924 = vpop.f32.mrf.mxu0
        %v2925 = vadd.f32 %v2732, %v2924
        %v2926 = vpop.f32.mrf.mxu0
        %v2927 = vadd.f32 %v2734, %v2926
        %v2928 = vpop.f32.mrf.mxu0
        %v2929 = vadd.f32 %v2736, %v2928
        %2930 = vdwg.mxu0
        %v3123 = vunpack.c.l.b16 %v433
        %v3124 = vunpack.c.h.b16 %v433
        %v3125 = vunpack.c.l.b16 %v434
        %v3126 = vunpack.c.h.b16 %v434
        %v3127 = vunpack.c.l.b16 %v435
        %v3128 = vunpack.c.h.b16 %v435
        %v3129 = vunpack.c.l.b16 %v436
        %v3130 = vunpack.c.h.b16 %v436
        %v3131 = vunpack.c.l.b16 %v437
        %v3132 = vunpack.c.h.b16 %v437
        %v3133 = vunpack.c.l.b16 %v438
        %v3134 = vunpack.c.h.b16 %v438
        %v3135 = vunpack.c.l.b16 %v439
        %v3136 = vunpack.c.h.b16 %v439
        %v3137 = vunpack.c.l.b16 %v440
        %v3138 = vunpack.c.h.b16 %v440
        %v3139 = vunpack.c.l.b16 %v441
        %v3140 = vunpack.c.h.b16 %v441
        %v3141 = vunpack.c.l.b16 %v442
        %v3142 = vunpack.c.h.b16 %v442
        %v3143 = vunpack.c.l.b16 %v443
        %v3144 = vunpack.c.h.b16 %v443
        %v3145 = vunpack.c.l.b16 %v444
        %v3146 = vunpack.c.h.b16 %v444
        %v3147 = vunpack.c.l.b16 %v445
        %v3148 = vunpack.c.h.b16 %v445
        %v3149 = vunpack.c.l.b16 %v446
        %v3150 = vunpack.c.h.b16 %v446
        %v3151 = vunpack.c.l.b16 %v447
        %v3152 = vunpack.c.h.b16 %v447
        %v3153 = vunpack.c.l.b16 %v448
        %v3154 = vunpack.c.h.b16 %v448
        %v3155 = vunpack.c.l.b16 %v449
        %v3156 = vunpack.c.h.b16 %v449
        %v3157 = vunpack.c.l.b16 %v450
        %v3158 = vunpack.c.h.b16 %v450
        %v3159 = vunpack.c.l.b16 %v451
        %v3160 = vunpack.c.h.b16 %v451
        %v3161 = vunpack.c.l.b16 %v452
        %v3162 = vunpack.c.h.b16 %v452
        %v3163 = vunpack.c.l.b16 %v453
        %v3164 = vunpack.c.h.b16 %v453
        %v3165 = vunpack.c.l.b16 %v454
        %v3166 = vunpack.c.h.b16 %v454
        %v3167 = vunpack.c.l.b16 %v455
        %v3168 = vunpack.c.h.b16 %v455
        %v3169 = vunpack.c.l.b16 %v456
        %v3170 = vunpack.c.h.b16 %v456
        %v3171 = vunpack.c.l.b16 %v457
        %v3172 = vunpack.c.h.b16 %v457
        %v3173 = vunpack.c.l.b16 %v458
        %v3174 = vunpack.c.h.b16 %v458
        %v3175 = vunpack.c.l.b16 %v459
        %v3176 = vunpack.c.h.b16 %v459
        %v3177 = vunpack.c.l.b16 %v460
        %v3178 = vunpack.c.h.b16 %v460
        %v3179 = vunpack.c.l.b16 %v461
        %v3180 = vunpack.c.h.b16 %v461
        %v3181 = vunpack.c.l.b16 %v462
        %v3182 = vunpack.c.h.b16 %v462
        %v3183 = vunpack.c.l.b16 %v463
        %v3184 = vunpack.c.h.b16 %v463
        %v3185 = vunpack.c.l.b16 %v464
        %v3186 = vunpack.c.h.b16 %v464
        %v3187 = vunpack.c.l.b16 %v465
        %v3188 = vunpack.c.h.b16 %v465
        %v3189 = vunpack.c.l.b16 %v466
        %v3190 = vunpack.c.h.b16 %v466
        %v3191 = vunpack.c.l.b16 %v467
        %v3192 = vunpack.c.h.b16 %v467
        %v3193 = vunpack.c.l.b16 %v468
        %v3194 = vunpack.c.h.b16 %v468
        %v3195 = vunpack.c.l.b16 %v469
        %v3196 = vunpack.c.h.b16 %v469
        %v3197 = vunpack.c.l.b16 %v470
        %v3198 = vunpack.c.h.b16 %v470
        %v3199 = vunpack.c.l.b16 %v471
        %v3200 = vunpack.c.h.b16 %v471
        %v3201 = vunpack.c.l.b16 %v472
        %v3202 = vunpack.c.h.b16 %v472
        %v3203 = vunpack.c.l.b16 %v473
        %v3204 = vunpack.c.h.b16 %v473
        %v3205 = vunpack.c.l.b16 %v474
        %v3206 = vunpack.c.h.b16 %v474
        %v3207 = vunpack.c.l.b16 %v475
        %v3208 = vunpack.c.h.b16 %v475
        %v3209 = vunpack.c.l.b16 %v476
        %v3210 = vunpack.c.h.b16 %v476
        %v3211 = vunpack.c.l.b16 %v477
        %v3212 = vunpack.c.h.b16 %v477
        %v3213 = vunpack.c.l.b16 %v478
        %v3214 = vunpack.c.h.b16 %v478
        %v3215 = vunpack.c.l.b16 %v479
        %v3216 = vunpack.c.h.b16 %v479
        %v3217 = vunpack.c.l.b16 %v480
        %v3218 = vunpack.c.h.b16 %v480
        %v3219 = vunpack.c.l.b16 %v481
        %v3220 = vunpack.c.h.b16 %v481
        %v3221 = vunpack.c.l.b16 %v482
        %v3222 = vunpack.c.h.b16 %v482
        %v3223 = vunpack.c.l.b16 %v483
        %v3224 = vunpack.c.h.b16 %v483
        %v3225 = vunpack.c.l.b16 %v484
        %v3226 = vunpack.c.h.b16 %v484
        %v3227 = vunpack.c.l.b16 %v485
        %v3228 = vunpack.c.h.b16 %v485
        %v3229 = vunpack.c.l.b16 %v486
        %v3230 = vunpack.c.h.b16 %v486
        %v3231 = vunpack.c.l.b16 %v487
        %v3232 = vunpack.c.h.b16 %v487
        %v3233 = vunpack.c.l.b16 %v488
        %v3234 = vunpack.c.h.b16 %v488
        %v3235 = vunpack.c.l.b16 %v489
        %v3236 = vunpack.c.h.b16 %v489
        %v3237 = vunpack.c.l.b16 %v490
        %v3238 = vunpack.c.h.b16 %v490
        %v3239 = vunpack.c.l.b16 %v491
        %v3240 = vunpack.c.h.b16 %v491
        %v3241 = vunpack.c.l.b16 %v492
        %v3242 = vunpack.c.h.b16 %v492
        %v3243 = vunpack.c.l.b16 %v493
        %v3244 = vunpack.c.h.b16 %v493
        %v3245 = vunpack.c.l.b16 %v494
        %v3246 = vunpack.c.h.b16 %v494
        %v3247 = vunpack.c.l.b16 %v495
        %v3248 = vunpack.c.h.b16 %v495
        %v3249 = vunpack.c.l.b16 %v496
        %v3250 = vunpack.c.h.b16 %v496
        %v3251 = vunpack.c.l.b16 %v497
        %v3252 = vunpack.c.h.b16 %v497
        %v3253 = vunpack.c.l.b16 %v498
        %v3254 = vunpack.c.h.b16 %v498
        %v3255 = vunpack.c.l.b16 %v499
        %v3256 = vunpack.c.h.b16 %v499
        %v3257 = vunpack.c.l.b16 %v500
        %v3258 = vunpack.c.h.b16 %v500
        %v3259 = vunpack.c.l.b16 %v501
        %v3260 = vunpack.c.h.b16 %v501
        %v3261 = vunpack.c.l.b16 %v502
        %v3262 = vunpack.c.h.b16 %v502
        %v3263 = vunpack.c.l.b16 %v503
        %v3264 = vunpack.c.h.b16 %v503
        %v3265 = vunpack.c.l.b16 %v504
        %v3266 = vunpack.c.h.b16 %v504
        %v3267 = vunpack.c.l.b16 %v505
        %v3268 = vunpack.c.h.b16 %v505
        %v3269 = vunpack.c.l.b16 %v506
        %v3270 = vunpack.c.h.b16 %v506
        %v3271 = vunpack.c.l.b16 %v507
        %v3272 = vunpack.c.h.b16 %v507
        %v3273 = vunpack.c.l.b16 %v508
        %v3274 = vunpack.c.h.b16 %v508
        %v3275 = vunpack.c.l.b16 %v509
        %v3276 = vunpack.c.h.b16 %v509
        %v3277 = vunpack.c.l.b16 %v510
        %v3278 = vunpack.c.h.b16 %v510
        %v3279 = vunpack.c.l.b16 %v511
        %v3280 = vunpack.c.h.b16 %v511
        %v3281 = vunpack.c.l.b16 %v512
        %v3282 = vunpack.c.h.b16 %v512
        %v3283 = vunpack.c.l.b16 %v513
        %v3284 = vunpack.c.h.b16 %v513
        %v3285 = vunpack.c.l.b16 %v514
        %v3286 = vunpack.c.h.b16 %v514
        %v3287 = vunpack.c.l.b16 %v515
        %v3288 = vunpack.c.h.b16 %v515
        %v3289 = vunpack.c.l.b16 %v516
        %v3290 = vunpack.c.h.b16 %v516
        %v3291 = vunpack.c.l.b16 %v517
        %v3292 = vunpack.c.h.b16 %v517
        %v3293 = vunpack.c.l.b16 %v518
        %v3294 = vunpack.c.h.b16 %v518
        %v3295 = vunpack.c.l.b16 %v519
        %v3296 = vunpack.c.h.b16 %v519
        %v3297 = vunpack.c.l.b16 %v520
        %v3298 = vunpack.c.h.b16 %v520
        %v3299 = vunpack.c.l.b16 %v521
        %v3300 = vunpack.c.h.b16 %v521
        %v3301 = vunpack.c.l.b16 %v522
        %v3302 = vunpack.c.h.b16 %v522
        %v3303 = vunpack.c.l.b16 %v523
        %v3304 = vunpack.c.h.b16 %v523
        %v3305 = vunpack.c.l.b16 %v524
        %v3306 = vunpack.c.h.b16 %v524
        %v3307 = vunpack.c.l.b16 %v525
        %v3308 = vunpack.c.h.b16 %v525
        %v3309 = vunpack.c.l.b16 %v526
        %v3310 = vunpack.c.h.b16 %v526
        %v3311 = vunpack.c.l.b16 %v527
        %v3312 = vunpack.c.h.b16 %v527
        %v3313 = vunpack.c.l.b16 %v528
        %v3314 = vunpack.c.h.b16 %v528
        %v3315 = vunpack.c.l.b16 %v529
        %v3316 = vunpack.c.h.b16 %v529
        %v3317 = vunpack.c.l.b16 %v530
        %v3318 = vunpack.c.h.b16 %v530
        %v3319 = vunpack.c.l.b16 %v531
        %v3320 = vunpack.c.h.b16 %v531
        %v3321 = vunpack.c.l.b16 %v532
        %v3322 = vunpack.c.h.b16 %v532
        %v3323 = vunpack.c.l.b16 %v533
        %v3324 = vunpack.c.h.b16 %v533
        %v3325 = vunpack.c.l.b16 %v534
        %v3326 = vunpack.c.h.b16 %v534
        %v3327 = vunpack.c.l.b16 %v535
        %v3328 = vunpack.c.h.b16 %v535
        %v3329 = vunpack.c.l.b16 %v536
        %v3330 = vunpack.c.h.b16 %v536
        %v3331 = vunpack.c.l.b16 %v537
        %v3332 = vunpack.c.h.b16 %v537
        %v3333 = vunpack.c.l.b16 %v538
        %v3334 = vunpack.c.h.b16 %v538
        %v3335 = vunpack.c.l.b16 %v539
        %v3336 = vunpack.c.h.b16 %v539
        %v3337 = vunpack.c.l.b16 %v540
        %v3338 = vunpack.c.h.b16 %v540
        %v3339 = vunpack.c.l.b16 %v541
        %v3340 = vunpack.c.h.b16 %v541
        %v3341 = vunpack.c.l.b16 %v542
        %v3342 = vunpack.c.h.b16 %v542
        %v3343 = vunpack.c.l.b16 %v543
        %v3344 = vunpack.c.h.b16 %v543
        %v3345 = vunpack.c.l.b16 %v544
        %v3346 = vunpack.c.h.b16 %v544
        %v3347 = vunpack.c.l.b16 %v545
        %v3348 = vunpack.c.h.b16 %v545
        %v3349 = vunpack.c.l.b16 %v546
        %v3350 = vunpack.c.h.b16 %v546
        %v3351 = vunpack.c.l.b16 %v547
        %v3352 = vunpack.c.h.b16 %v547
        %v3353 = vunpack.c.l.b16 %v548
        %v3354 = vunpack.c.h.b16 %v548
        %v3355 = vunpack.c.l.b16 %v549
        %v3356 = vunpack.c.h.b16 %v549
        %v3357 = vunpack.c.l.b16 %v550
        %v3358 = vunpack.c.h.b16 %v550
        %v3359 = vunpack.c.l.b16 %v551
        %v3360 = vunpack.c.h.b16 %v551
        %v3361 = vunpack.c.l.b16 %v552
        %v3362 = vunpack.c.h.b16 %v552
        %v3363 = vunpack.c.l.b16 %v553
        %v3364 = vunpack.c.h.b16 %v553
        %v3365 = vunpack.c.l.b16 %v554
        %v3366 = vunpack.c.h.b16 %v554
        %v3367 = vunpack.c.l.b16 %v555
        %v3368 = vunpack.c.h.b16 %v555
        %v3369 = vunpack.c.l.b16 %v556
        %v3370 = vunpack.c.h.b16 %v556
        %v3371 = vunpack.c.l.b16 %v557
        %v3372 = vunpack.c.h.b16 %v557
        %v3373 = vunpack.c.l.b16 %v558
        %v3374 = vunpack.c.h.b16 %v558
        %v3375 = vunpack.c.l.b16 %v559
        %v3376 = vunpack.c.h.b16 %v559
        %v3377 = vunpack.c.l.b16 %v560
        %v3378 = vunpack.c.h.b16 %v560
        %v3379 = vpack.c.b16 %v3127, %v3123
        %v3380 = vpack.c.b16 %v3128, %v3124
        %v3381 = vpack.c.b16 %v3129, %v3125
        %v3382 = vpack.c.b16 %v3130, %v3126
        %v3383 = vpack.c.b16 %v3135, %v3131
        %v3384 = vpack.c.b16 %v3136, %v3132
        %v3385 = vpack.c.b16 %v3137, %v3133
        %v3386 = vpack.c.b16 %v3138, %v3134
        %v3387 = vpack.c.b16 %v3143, %v3139
        %v3388 = vpack.c.b16 %v3144, %v3140
        %v3389 = vpack.c.b16 %v3145, %v3141
        %v3390 = vpack.c.b16 %v3146, %v3142
        %v3391 = vpack.c.b16 %v3151, %v3147
        %v3392 = vpack.c.b16 %v3152, %v3148
        %v3393 = vpack.c.b16 %v3153, %v3149
        %v3394 = vpack.c.b16 %v3154, %v3150
        %v3395 = vpack.c.b16 %v3159, %v3155
        %v3396 = vpack.c.b16 %v3160, %v3156
        %v3397 = vpack.c.b16 %v3161, %v3157
        %v3398 = vpack.c.b16 %v3162, %v3158
        %v3399 = vpack.c.b16 %v3167, %v3163
        %v3400 = vpack.c.b16 %v3168, %v3164
        %v3401 = vpack.c.b16 %v3169, %v3165
        %v3402 = vpack.c.b16 %v3170, %v3166
        %v3403 = vpack.c.b16 %v3175, %v3171
        %v3404 = vpack.c.b16 %v3176, %v3172
        %v3405 = vpack.c.b16 %v3177, %v3173
        %v3406 = vpack.c.b16 %v3178, %v3174
        %v3407 = vpack.c.b16 %v3183, %v3179
        %v3408 = vpack.c.b16 %v3184, %v3180
        %v3409 = vpack.c.b16 %v3185, %v3181
        %v3410 = vpack.c.b16 %v3186, %v3182
        %v3411 = vpack.c.b16 %v3191, %v3187
        %v3412 = vpack.c.b16 %v3192, %v3188
        %v3413 = vpack.c.b16 %v3193, %v3189
        %v3414 = vpack.c.b16 %v3194, %v3190
        %v3415 = vpack.c.b16 %v3199, %v3195
        %v3416 = vpack.c.b16 %v3200, %v3196
        %v3417 = vpack.c.b16 %v3201, %v3197
        %v3418 = vpack.c.b16 %v3202, %v3198
        %v3419 = vpack.c.b16 %v3207, %v3203
        %v3420 = vpack.c.b16 %v3208, %v3204
        %v3421 = vpack.c.b16 %v3209, %v3205
        %v3422 = vpack.c.b16 %v3210, %v3206
        %v3423 = vpack.c.b16 %v3215, %v3211
        %v3424 = vpack.c.b16 %v3216, %v3212
        %v3425 = vpack.c.b16 %v3217, %v3213
        %v3426 = vpack.c.b16 %v3218, %v3214
        %v3427 = vpack.c.b16 %v3223, %v3219
        %v3428 = vpack.c.b16 %v3224, %v3220
        %v3429 = vpack.c.b16 %v3225, %v3221
        %v3430 = vpack.c.b16 %v3226, %v3222
        %v3431 = vpack.c.b16 %v3231, %v3227
        %v3432 = vpack.c.b16 %v3232, %v3228
        %v3433 = vpack.c.b16 %v3233, %v3229
        %v3434 = vpack.c.b16 %v3234, %v3230
        %v3435 = vpack.c.b16 %v3239, %v3235
        %v3436 = vpack.c.b16 %v3240, %v3236
        %v3437 = vpack.c.b16 %v3241, %v3237
        %v3438 = vpack.c.b16 %v3242, %v3238
        %v3439 = vpack.c.b16 %v3247, %v3243
        %v3440 = vpack.c.b16 %v3248, %v3244
        %v3441 = vpack.c.b16 %v3249, %v3245
        %v3442 = vpack.c.b16 %v3250, %v3246
        %v3443 = vpack.c.b16 %v3255, %v3251
        %v3444 = vpack.c.b16 %v3256, %v3252
        %v3445 = vpack.c.b16 %v3257, %v3253
        %v3446 = vpack.c.b16 %v3258, %v3254
        %v3447 = vpack.c.b16 %v3263, %v3259
        %v3448 = vpack.c.b16 %v3264, %v3260
        %v3449 = vpack.c.b16 %v3265, %v3261
        %v3450 = vpack.c.b16 %v3266, %v3262
        %v3451 = vpack.c.b16 %v3271, %v3267
        %v3452 = vpack.c.b16 %v3272, %v3268
        %v3453 = vpack.c.b16 %v3273, %v3269
        %v3454 = vpack.c.b16 %v3274, %v3270
        %v3455 = vpack.c.b16 %v3279, %v3275
        %v3456 = vpack.c.b16 %v3280, %v3276
        %v3457 = vpack.c.b16 %v3281, %v3277
        %v3458 = vpack.c.b16 %v3282, %v3278
        %v3459 = vpack.c.b16 %v3287, %v3283
        %v3460 = vpack.c.b16 %v3288, %v3284
        %v3461 = vpack.c.b16 %v3289, %v3285
        %v3462 = vpack.c.b16 %v3290, %v3286
        %v3463 = vpack.c.b16 %v3295, %v3291
        %v3464 = vpack.c.b16 %v3296, %v3292
        %v3465 = vpack.c.b16 %v3297, %v3293
        %v3466 = vpack.c.b16 %v3298, %v3294
        %v3467 = vpack.c.b16 %v3303, %v3299
        %v3468 = vpack.c.b16 %v3304, %v3300
        %v3469 = vpack.c.b16 %v3305, %v3301
        %v3470 = vpack.c.b16 %v3306, %v3302
        %v3471 = vpack.c.b16 %v3311, %v3307
        %v3472 = vpack.c.b16 %v3312, %v3308
        %v3473 = vpack.c.b16 %v3313, %v3309
        %v3474 = vpack.c.b16 %v3314, %v3310
        %v3475 = vpack.c.b16 %v3319, %v3315
        %v3476 = vpack.c.b16 %v3320, %v3316
        %v3477 = vpack.c.b16 %v3321, %v3317
        %v3478 = vpack.c.b16 %v3322, %v3318
        %v3479 = vpack.c.b16 %v3327, %v3323
        %v3480 = vpack.c.b16 %v3328, %v3324
        %v3481 = vpack.c.b16 %v3329, %v3325
        %v3482 = vpack.c.b16 %v3330, %v3326
        %v3483 = vpack.c.b16 %v3335, %v3331
        %v3484 = vpack.c.b16 %v3336, %v3332
        %v3485 = vpack.c.b16 %v3337, %v3333
        %v3486 = vpack.c.b16 %v3338, %v3334
        %v3487 = vpack.c.b16 %v3343, %v3339
        %v3488 = vpack.c.b16 %v3344, %v3340
        %v3489 = vpack.c.b16 %v3345, %v3341
        %v3490 = vpack.c.b16 %v3346, %v3342
        %v3491 = vpack.c.b16 %v3351, %v3347
        %v3492 = vpack.c.b16 %v3352, %v3348
        %v3493 = vpack.c.b16 %v3353, %v3349
        %v3494 = vpack.c.b16 %v3354, %v3350
        %v3495 = vpack.c.b16 %v3359, %v3355
        %v3496 = vpack.c.b16 %v3360, %v3356
        %v3497 = vpack.c.b16 %v3361, %v3357
        %v3498 = vpack.c.b16 %v3362, %v3358
        %v3499 = vpack.c.b16 %v3367, %v3363
        %v3500 = vpack.c.b16 %v3368, %v3364
        %v3501 = vpack.c.b16 %v3369, %v3365
        %v3502 = vpack.c.b16 %v3370, %v3366
        %v3503 = vpack.c.b16 %v3375, %v3371
        %v3504 = vpack.c.b16 %v3376, %v3372
        %v3505 = vpack.c.b16 %v3377, %v3373
        %v3506 = vpack.c.b16 %v3378, %v3374
        %3635 = vmatprep.subr.bf16.mxu0 %v3408
        %3636 = vmatpush1.bf16.msra.mxu0 %v3407
        %3637 = vmatprep.subr.bf16.mxu0 %v3404
        %3638 = vmatpush1.bf16.msra.mxu0 %v3403
        %3639 = vmatprep.subr.bf16.mxu0 %v3400
        %3640 = vmatpush1.bf16.msra.mxu0 %v3399
        %3641 = vmatprep.subr.bf16.mxu0 %v3396
        %3642 = vmatpush1.bf16.msra.mxu0 %v3395
        %3643 = vmatprep.subr.bf16.mxu0 %v3392
        %3644 = vmatpush1.bf16.msra.mxu0 %v3391
        %3645 = vmatprep.subr.bf16.mxu0 %v3388
        %3646 = vmatpush1.bf16.msra.mxu0 %v3387
        %3647 = vmatprep.subr.bf16.mxu0 %v3384
        %3648 = vmatpush1.bf16.msra.mxu0 %v3383
        %3649 = vmatprep.subr.bf16.mxu0 %v3380
        %3650 = vmatpush1.bf16.msra.mxu0 %v3379
        %3651 = vmatprep.subr.bf16.mxu0 %v3440
        %3652 = vmatpush2.bf16.msra.mxu0 %v3439
        %3653 = vmatprep.subr.bf16.mxu0 %v3436
        %3654 = vmatpush2.bf16.msra.mxu0 %v3435
        %3655 = vmatprep.subr.bf16.mxu0 %v3432
        %3656 = vmatpush2.bf16.msra.mxu0 %v3431
        %3657 = vmatprep.subr.bf16.mxu0 %v3428
        %3658 = vmatpush2.bf16.msra.mxu0 %v3427
        %3659 = vmatprep.subr.bf16.mxu0 %v3424
        %3660 = vmatpush2.bf16.msra.mxu0 %v3423
        %3661 = vmatprep.subr.bf16.mxu0 %v3420
        %3662 = vmatpush2.bf16.msra.mxu0 %v3419
        %3663 = vmatprep.subr.bf16.mxu0 %v3416
        %3664 = vmatpush2.bf16.msra.mxu0 %v3415
        %3665 = vmatprep.subr.bf16.mxu0 %v3412
        %3666 = vmatpush2.bf16.msra.mxu0 %v3411
        %3667 = vmatprep.mubr.bf16.mxu0 %v883
        %3668 = vmatmul.mubr.bf16.gmra.mxu0 %v882
        %v3669 = vpop.f32.mrf.mxu0
        %v3670 = vadd.f32 %v2387, %v3669
        %v3671 = vpop.f32.mrf.mxu0
        %v3672 = vadd.f32 %v2389, %v3671
        %v3673 = vpop.f32.mrf.mxu0
        %v3674 = vadd.f32 %v2391, %v3673
        %v3675 = vpop.f32.mrf.mxu0
        %v3676 = vadd.f32 %v2393, %v3675
        %3677 = vmatprep.mubr.bf16.mxu0 %v887
        %3678 = vmatmul.mubr.bf16.gmra.mxu0 %v886
        %v3679 = vpop.f32.mrf.mxu0
        %v3680 = vadd.f32 %v2397, %v3679
        %v3681 = vpop.f32.mrf.mxu0
        %v3682 = vadd.f32 %v2399, %v3681
        %v3683 = vpop.f32.mrf.mxu0
        %v3684 = vadd.f32 %v2401, %v3683
        %v3685 = vpop.f32.mrf.mxu0
        %v3686 = vadd.f32 %v2403, %v3685
        %3687 = vmatprep.mubr.bf16.mxu0 %v891
        %3688 = vmatmul.mubr.bf16.gmra.mxu0 %v890
        %v3689 = vpop.f32.mrf.mxu0
        %v3690 = vadd.f32 %v2407, %v3689
        %v3691 = vpop.f32.mrf.mxu0
        %v3692 = vadd.f32 %v2409, %v3691
        %v3693 = vpop.f32.mrf.mxu0
        %v3694 = vadd.f32 %v2411, %v3693
        %v3695 = vpop.f32.mrf.mxu0
        %v3696 = vadd.f32 %v2413, %v3695
        %3697 = vmatprep.mubr.bf16.mxu0 %v895
        %3698 = vmatmul.mubr.bf16.gmra.mxu0 %v894
        %v3699 = vpop.f32.mrf.mxu0
        %v3700 = vadd.f32 %v2417, %v3699
        %v3701 = vpop.f32.mrf.mxu0
        %v3702 = vadd.f32 %v2419, %v3701
        %v3703 = vpop.f32.mrf.mxu0
        %v3704 = vadd.f32 %v2421, %v3703
        %v3705 = vpop.f32.mrf.mxu0
        %v3706 = vadd.f32 %v2423, %v3705
        %3707 = vmatprep.mubr.bf16.mxu0 %v899
        %3708 = vmatmul.mubr.bf16.gmra.mxu0 %v898
        %v3709 = vpop.f32.mrf.mxu0
        %v3710 = vadd.f32 %v2427, %v3709
        %v3711 = vpop.f32.mrf.mxu0
        %v3712 = vadd.f32 %v2429, %v3711
        %v3713 = vpop.f32.mrf.mxu0
        %v3714 = vadd.f32 %v2431, %v3713
        %v3715 = vpop.f32.mrf.mxu0
        %v3716 = vadd.f32 %v2433, %v3715
        %3717 = vmatprep.mubr.bf16.mxu0 %v903
        %3718 = vmatmul.mubr.bf16.gmra.mxu0 %v902
        %v3719 = vpop.f32.mrf.mxu0
        %v3720 = vadd.f32 %v2437, %v3719
        %v3721 = vpop.f32.mrf.mxu0
        %v3722 = vadd.f32 %v2439, %v3721
        %v3723 = vpop.f32.mrf.mxu0
        %v3724 = vadd.f32 %v2441, %v3723
        %v3725 = vpop.f32.mrf.mxu0
        %v3726 = vadd.f32 %v2443, %v3725
        %3727 = vmatprep.mubr.bf16.mxu0 %v907
        %3728 = vmatmul.mubr.bf16.gmra.mxu0 %v906
        %v3729 = vpop.f32.mrf.mxu0
        %v3730 = vadd.f32 %v2447, %v3729
        %v3731 = vpop.f32.mrf.mxu0
        %v3732 = vadd.f32 %v2449, %v3731
        %v3733 = vpop.f32.mrf.mxu0
        %v3734 = vadd.f32 %v2451, %v3733
        %v3735 = vpop.f32.mrf.mxu0
        %v3736 = vadd.f32 %v2453, %v3735
        %3737 = vmatprep.mubr.bf16.mxu0 %v911
        %3738 = vmatmul.mubr.bf16.gmra.mxu0 %v910
        %v3739 = vpop.f32.mrf.mxu0
        %v3740 = vadd.f32 %v2457, %v3739
        %v3741 = vpop.f32.mrf.mxu0
        %v3742 = vadd.f32 %v2459, %v3741
        %v3743 = vpop.f32.mrf.mxu0
        %v3744 = vadd.f32 %v2461, %v3743
        %v3745 = vpop.f32.mrf.mxu0
        %v3746 = vadd.f32 %v2463, %v3745
        %3747 = vmatprep.mubr.bf16.mxu0 %v915
        %3748 = vmatmul.mubr.bf16.gmra.mxu0 %v914
        %v3749 = vpop.f32.mrf.mxu0
        %v3750 = vadd.f32 %v2467, %v3749
        %v3751 = vpop.f32.mrf.mxu0
        %v3752 = vadd.f32 %v2469, %v3751
        %v3753 = vpop.f32.mrf.mxu0
        %v3754 = vadd.f32 %v2471, %v3753
        %v3755 = vpop.f32.mrf.mxu0
        %v3756 = vadd.f32 %v2473, %v3755
        %3757 = vmatprep.mubr.bf16.mxu0 %v919
        %3758 = vmatmul.mubr.bf16.gmra.mxu0 %v918
        %v3759 = vpop.f32.mrf.mxu0
        %v3760 = vadd.f32 %v2477, %v3759
        %v3761 = vpop.f32.mrf.mxu0
        %v3762 = vadd.f32 %v2479, %v3761
        %v3763 = vpop.f32.mrf.mxu0
        %v3764 = vadd.f32 %v2481, %v3763
        %v3765 = vpop.f32.mrf.mxu0
        %v3766 = vadd.f32 %v2483, %v3765
        %3767 = vmatprep.mubr.bf16.mxu0 %v923
        %3768 = vmatmul.mubr.bf16.gmra.mxu0 %v922
        %v3769 = vpop.f32.mrf.mxu0
        %v3770 = vadd.f32 %v2487, %v3769
        %v3771 = vpop.f32.mrf.mxu0
        %v3772 = vadd.f32 %v2489, %v3771
        %v3773 = vpop.f32.mrf.mxu0
        %v3774 = vadd.f32 %v2491, %v3773
        %v3775 = vpop.f32.mrf.mxu0
        %v3776 = vadd.f32 %v2493, %v3775
        %3777 = vmatprep.mubr.bf16.mxu0 %v927
        %3778 = vmatmul.mubr.bf16.gmra.mxu0 %v926
        %v3779 = vpop.f32.mrf.mxu0
        %v3780 = vadd.f32 %v2497, %v3779
        %v3781 = vpop.f32.mrf.mxu0
        %v3782 = vadd.f32 %v2499, %v3781
        %v3783 = vpop.f32.mrf.mxu0
        %v3784 = vadd.f32 %v2501, %v3783
        %v3785 = vpop.f32.mrf.mxu0
        %v3786 = vadd.f32 %v2503, %v3785
        %3787 = vmatprep.mubr.bf16.mxu0 %v931
        %3788 = vmatmul.mubr.bf16.gmra.mxu0 %v930
        %v3789 = vpop.f32.mrf.mxu0
        %v3790 = vadd.f32 %v2507, %v3789
        %v3791 = vpop.f32.mrf.mxu0
        %v3792 = vadd.f32 %v2509, %v3791
        %v3793 = vpop.f32.mrf.mxu0
        %v3794 = vadd.f32 %v2511, %v3793
        %v3795 = vpop.f32.mrf.mxu0
        %v3796 = vadd.f32 %v2513, %v3795
        %3797 = vmatprep.mubr.bf16.mxu0 %v935
        %3798 = vmatmul.mubr.bf16.gmra.mxu0 %v934
        %v3799 = vpop.f32.mrf.mxu0
        %v3800 = vadd.f32 %v2517, %v3799
        %v3801 = vpop.f32.mrf.mxu0
        %v3802 = vadd.f32 %v2519, %v3801
        %v3803 = vpop.f32.mrf.mxu0
        %v3804 = vadd.f32 %v2521, %v3803
        %v3805 = vpop.f32.mrf.mxu0
        %v3806 = vadd.f32 %v2523, %v3805
        %3807 = vmatprep.mubr.bf16.mxu0 %v939
        %3808 = vmatmul.mubr.bf16.gmra.mxu0 %v938
        %v3809 = vpop.f32.mrf.mxu0
        %v3810 = vadd.f32 %v2527, %v3809
        %v3811 = vpop.f32.mrf.mxu0
        %v3812 = vadd.f32 %v2529, %v3811
        %v3813 = vpop.f32.mrf.mxu0
        %v3814 = vadd.f32 %v2531, %v3813
        %v3815 = vpop.f32.mrf.mxu0
        %v3816 = vadd.f32 %v2533, %v3815
        %3817 = vmatprep.mubr.bf16.mxu0 %v943
        %3818 = vmatmul.mubr.bf16.gmra.mxu0 %v942
        %v3819 = vpop.f32.mrf.mxu0
        %v3820 = vadd.f32 %v2537, %v3819
        %v3821 = vpop.f32.mrf.mxu0
        %v3822 = vadd.f32 %v2539, %v3821
        %v3823 = vpop.f32.mrf.mxu0
        %v3824 = vadd.f32 %v2541, %v3823
        %v3825 = vpop.f32.mrf.mxu0
        %v3826 = vadd.f32 %v2543, %v3825
        %3827 = vdwg.mxu0
        %3828 = vmatprep.subr.bf16.mxu0 %v3472
        %3829 = vmatpush1.bf16.msra.mxu0 %v3471
        %3830 = vmatprep.subr.bf16.mxu0 %v3468
        %3831 = vmatpush1.bf16.msra.mxu0 %v3467
        %3832 = vmatprep.subr.bf16.mxu0 %v3464
        %3833 = vmatpush1.bf16.msra.mxu0 %v3463
        %3834 = vmatprep.subr.bf16.mxu0 %v3460
        %3835 = vmatpush1.bf16.msra.mxu0 %v3459
        %3836 = vmatprep.subr.bf16.mxu0 %v3456
        %3837 = vmatpush1.bf16.msra.mxu0 %v3455
        %3838 = vmatprep.subr.bf16.mxu0 %v3452
        %3839 = vmatpush1.bf16.msra.mxu0 %v3451
        %3840 = vmatprep.subr.bf16.mxu0 %v3448
        %3841 = vmatpush1.bf16.msra.mxu0 %v3447
        %3842 = vmatprep.subr.bf16.mxu0 %v3444
        %3843 = vmatpush1.bf16.msra.mxu0 %v3443
        %3844 = vmatprep.subr.bf16.mxu0 %v3504
        %3845 = vmatpush2.bf16.msra.mxu0 %v3503
        %3846 = vmatprep.subr.bf16.mxu0 %v3500
        %3847 = vmatpush2.bf16.msra.mxu0 %v3499
        %3848 = vmatprep.subr.bf16.mxu0 %v3496
        %3849 = vmatpush2.bf16.msra.mxu0 %v3495
        %3850 = vmatprep.subr.bf16.mxu0 %v3492
        %3851 = vmatpush2.bf16.msra.mxu0 %v3491
        %3852 = vmatprep.subr.bf16.mxu0 %v3488
        %3853 = vmatpush2.bf16.msra.mxu0 %v3487
        %3854 = vmatprep.subr.bf16.mxu0 %v3484
        %3855 = vmatpush2.bf16.msra.mxu0 %v3483
        %3856 = vmatprep.subr.bf16.mxu0 %v3480
        %3857 = vmatpush2.bf16.msra.mxu0 %v3479
        %3858 = vmatprep.subr.bf16.mxu0 %v3476
        %3859 = vmatpush2.bf16.msra.mxu0 %v3475
        %3860 = vmatprep.mubr.bf16.mxu0 %v885
        %3861 = vmatmul.mubr.bf16.gmra.mxu0 %v884
        %v3862 = vpop.f32.mrf.mxu0
        %v3863 = vadd.f32 %v3670, %v3862
        %v3864 = vpop.f32.mrf.mxu0
        %v3865 = vadd.f32 %v3672, %v3864
        %v3866 = vpop.f32.mrf.mxu0
        %v3867 = vadd.f32 %v3674, %v3866
        %v3868 = vpop.f32.mrf.mxu0
        %v3869 = vadd.f32 %v3676, %v3868
        %3870 = vmatprep.mubr.bf16.mxu0 %v889
        %3871 = vmatmul.mubr.bf16.gmra.mxu0 %v888
        %v3872 = vpop.f32.mrf.mxu0
        %v3873 = vadd.f32 %v3680, %v3872
        %v3874 = vpop.f32.mrf.mxu0
        %v3875 = vadd.f32 %v3682, %v3874
        %v3876 = vpop.f32.mrf.mxu0
        %v3877 = vadd.f32 %v3684, %v3876
        %v3878 = vpop.f32.mrf.mxu0
        %v3879 = vadd.f32 %v3686, %v3878
        %3880 = vmatprep.mubr.bf16.mxu0 %v893
        %3881 = vmatmul.mubr.bf16.gmra.mxu0 %v892
        %v3882 = vpop.f32.mrf.mxu0
        %v3883 = vadd.f32 %v3690, %v3882
        %v3884 = vpop.f32.mrf.mxu0
        %v3885 = vadd.f32 %v3692, %v3884
        %v3886 = vpop.f32.mrf.mxu0
        %v3887 = vadd.f32 %v3694, %v3886
        %v3888 = vpop.f32.mrf.mxu0
        %v3889 = vadd.f32 %v3696, %v3888
        %3890 = vmatprep.mubr.bf16.mxu0 %v897
        %3891 = vmatmul.mubr.bf16.gmra.mxu0 %v896
        %v3892 = vpop.f32.mrf.mxu0
        %v3893 = vadd.f32 %v3700, %v3892
        %v3894 = vpop.f32.mrf.mxu0
        %v3895 = vadd.f32 %v3702, %v3894
        %v3896 = vpop.f32.mrf.mxu0
        %v3897 = vadd.f32 %v3704, %v3896
        %v3898 = vpop.f32.mrf.mxu0
        %v3899 = vadd.f32 %v3706, %v3898
        %3900 = vmatprep.mubr.bf16.mxu0 %v901
        %3901 = vmatmul.mubr.bf16.gmra.mxu0 %v900
        %v3902 = vpop.f32.mrf.mxu0
        %v3903 = vadd.f32 %v3710, %v3902
        %v3904 = vpop.f32.mrf.mxu0
        %v3905 = vadd.f32 %v3712, %v3904
        %v3906 = vpop.f32.mrf.mxu0
        %v3907 = vadd.f32 %v3714, %v3906
        %v3908 = vpop.f32.mrf.mxu0
        %v3909 = vadd.f32 %v3716, %v3908
        %3910 = vmatprep.mubr.bf16.mxu0 %v905
        %3911 = vmatmul.mubr.bf16.gmra.mxu0 %v904
        %v3912 = vpop.f32.mrf.mxu0
        %v3913 = vadd.f32 %v3720, %v3912
        %v3914 = vpop.f32.mrf.mxu0
        %v3915 = vadd.f32 %v3722, %v3914
        %v3916 = vpop.f32.mrf.mxu0
        %v3917 = vadd.f32 %v3724, %v3916
        %v3918 = vpop.f32.mrf.mxu0
        %v3919 = vadd.f32 %v3726, %v3918
        %3920 = vmatprep.mubr.bf16.mxu0 %v909
        %3921 = vmatmul.mubr.bf16.gmra.mxu0 %v908
        %v3922 = vpop.f32.mrf.mxu0
        %v3923 = vadd.f32 %v3730, %v3922
        %v3924 = vpop.f32.mrf.mxu0
        %v3925 = vadd.f32 %v3732, %v3924
        %v3926 = vpop.f32.mrf.mxu0
        %v3927 = vadd.f32 %v3734, %v3926
        %v3928 = vpop.f32.mrf.mxu0
        %v3929 = vadd.f32 %v3736, %v3928
        %3930 = vmatprep.mubr.bf16.mxu0 %v913
        %3931 = vmatmul.mubr.bf16.gmra.mxu0 %v912
        %v3932 = vpop.f32.mrf.mxu0
        %v3933 = vadd.f32 %v3740, %v3932
        %v3934 = vpop.f32.mrf.mxu0
        %v3935 = vadd.f32 %v3742, %v3934
        %v3936 = vpop.f32.mrf.mxu0
        %v3937 = vadd.f32 %v3744, %v3936
        %v3938 = vpop.f32.mrf.mxu0
        %v3939 = vadd.f32 %v3746, %v3938
        %3940 = vmatprep.mubr.bf16.mxu0 %v917
        %3941 = vmatmul.mubr.bf16.gmra.mxu0 %v916
        %v3942 = vpop.f32.mrf.mxu0
        %v3943 = vadd.f32 %v3750, %v3942
        %v3944 = vpop.f32.mrf.mxu0
        %v3945 = vadd.f32 %v3752, %v3944
        %v3946 = vpop.f32.mrf.mxu0
        %v3947 = vadd.f32 %v3754, %v3946
        %v3948 = vpop.f32.mrf.mxu0
        %v3949 = vadd.f32 %v3756, %v3948
        %3950 = vmatprep.mubr.bf16.mxu0 %v921
        %3951 = vmatmul.mubr.bf16.gmra.mxu0 %v920
        %v3952 = vpop.f32.mrf.mxu0
        %v3953 = vadd.f32 %v3760, %v3952
        %v3954 = vpop.f32.mrf.mxu0
        %v3955 = vadd.f32 %v3762, %v3954
        %v3956 = vpop.f32.mrf.mxu0
        %v3957 = vadd.f32 %v3764, %v3956
        %v3958 = vpop.f32.mrf.mxu0
        %v3959 = vadd.f32 %v3766, %v3958
        %3960 = vmatprep.mubr.bf16.mxu0 %v925
        %3961 = vmatmul.mubr.bf16.gmra.mxu0 %v924
        %v3962 = vpop.f32.mrf.mxu0
        %v3963 = vadd.f32 %v3770, %v3962
        %v3964 = vpop.f32.mrf.mxu0
        %v3965 = vadd.f32 %v3772, %v3964
        %v3966 = vpop.f32.mrf.mxu0
        %v3967 = vadd.f32 %v3774, %v3966
        %v3968 = vpop.f32.mrf.mxu0
        %v3969 = vadd.f32 %v3776, %v3968
        %3970 = vmatprep.mubr.bf16.mxu0 %v929
        %3971 = vmatmul.mubr.bf16.gmra.mxu0 %v928
        %v3972 = vpop.f32.mrf.mxu0
        %v3973 = vadd.f32 %v3780, %v3972
        %v3974 = vpop.f32.mrf.mxu0
        %v3975 = vadd.f32 %v3782, %v3974
        %v3976 = vpop.f32.mrf.mxu0
        %v3977 = vadd.f32 %v3784, %v3976
        %v3978 = vpop.f32.mrf.mxu0
        %v3979 = vadd.f32 %v3786, %v3978
        %3980 = vmatprep.mubr.bf16.mxu0 %v933
        %3981 = vmatmul.mubr.bf16.gmra.mxu0 %v932
        %v3982 = vpop.f32.mrf.mxu0
        %v3983 = vadd.f32 %v3790, %v3982
        %v3984 = vpop.f32.mrf.mxu0
        %v3985 = vadd.f32 %v3792, %v3984
        %v3986 = vpop.f32.mrf.mxu0
        %v3987 = vadd.f32 %v3794, %v3986
        %v3988 = vpop.f32.mrf.mxu0
        %v3989 = vadd.f32 %v3796, %v3988
        %3990 = vmatprep.mubr.bf16.mxu0 %v937
        %3991 = vmatmul.mubr.bf16.gmra.mxu0 %v936
        %v3992 = vpop.f32.mrf.mxu0
        %v3993 = vadd.f32 %v3800, %v3992
        %v3994 = vpop.f32.mrf.mxu0
        %v3995 = vadd.f32 %v3802, %v3994
        %v3996 = vpop.f32.mrf.mxu0
        %v3997 = vadd.f32 %v3804, %v3996
        %v3998 = vpop.f32.mrf.mxu0
        %v3999 = vadd.f32 %v3806, %v3998
        %4000 = vmatprep.mubr.bf16.mxu0 %v941
        %4001 = vmatmul.mubr.bf16.gmra.mxu0 %v940
        %v4002 = vpop.f32.mrf.mxu0
        %v4003 = vadd.f32 %v3810, %v4002
        %v4004 = vpop.f32.mrf.mxu0
        %v4005 = vadd.f32 %v3812, %v4004
        %v4006 = vpop.f32.mrf.mxu0
        %v4007 = vadd.f32 %v3814, %v4006
        %v4008 = vpop.f32.mrf.mxu0
        %v4009 = vadd.f32 %v3816, %v4008
        %4010 = vmatprep.mubr.bf16.mxu0 %v945
        %4011 = vmatmul.mubr.bf16.gmra.mxu0 %v944
        %v4012 = vpop.f32.mrf.mxu0
        %v4013 = vadd.f32 %v3820, %v4012
        %v4014 = vpop.f32.mrf.mxu0
        %v4015 = vadd.f32 %v3822, %v4014
        %v4016 = vpop.f32.mrf.mxu0
        %v4017 = vadd.f32 %v3824, %v4016
        %v4018 = vpop.f32.mrf.mxu0
        %v4019 = vadd.f32 %v3826, %v4018
        %4020 = vdwg.mxu0
        %4021 = vmatprep.subr.bf16.mxu0 %v3410
        %4022 = vmatpush1.bf16.msra.mxu0 %v3409
        %4023 = vmatprep.subr.bf16.mxu0 %v3406
        %4024 = vmatpush1.bf16.msra.mxu0 %v3405
        %4025 = vmatprep.subr.bf16.mxu0 %v3402
        %4026 = vmatpush1.bf16.msra.mxu0 %v3401
        %4027 = vmatprep.subr.bf16.mxu0 %v3398
        %4028 = vmatpush1.bf16.msra.mxu0 %v3397
        %4029 = vmatprep.subr.bf16.mxu0 %v3394
        %4030 = vmatpush1.bf16.msra.mxu0 %v3393
        %4031 = vmatprep.subr.bf16.mxu0 %v3390
        %4032 = vmatpush1.bf16.msra.mxu0 %v3389
        %4033 = vmatprep.subr.bf16.mxu0 %v3386
        %4034 = vmatpush1.bf16.msra.mxu0 %v3385
        %4035 = vmatprep.subr.bf16.mxu0 %v3382
        %4036 = vmatpush1.bf16.msra.mxu0 %v3381
        %4037 = vmatprep.subr.bf16.mxu0 %v3442
        %4038 = vmatpush2.bf16.msra.mxu0 %v3441
        %4039 = vmatprep.subr.bf16.mxu0 %v3438
        %4040 = vmatpush2.bf16.msra.mxu0 %v3437
        %4041 = vmatprep.subr.bf16.mxu0 %v3434
        %4042 = vmatpush2.bf16.msra.mxu0 %v3433
        %4043 = vmatprep.subr.bf16.mxu0 %v3430
        %4044 = vmatpush2.bf16.msra.mxu0 %v3429
        %4045 = vmatprep.subr.bf16.mxu0 %v3426
        %4046 = vmatpush2.bf16.msra.mxu0 %v3425
        %4047 = vmatprep.subr.bf16.mxu0 %v3422
        %4048 = vmatpush2.bf16.msra.mxu0 %v3421
        %4049 = vmatprep.subr.bf16.mxu0 %v3418
        %4050 = vmatpush2.bf16.msra.mxu0 %v3417
        %4051 = vmatprep.subr.bf16.mxu0 %v3414
        %4052 = vmatpush2.bf16.msra.mxu0 %v3413
        %4053 = vmatprep.mubr.bf16.mxu0 %v883
        %4054 = vmatmul.mubr.bf16.gmra.mxu0 %v882
        %v4055 = vpop.f32.mrf.mxu0
        %v4056 = vadd.f32 %v2773, %v4055
        %v4057 = vpop.f32.mrf.mxu0
        %v4058 = vadd.f32 %v2775, %v4057
        %v4059 = vpop.f32.mrf.mxu0
        %v4060 = vadd.f32 %v2777, %v4059
        %v4061 = vpop.f32.mrf.mxu0
        %v4062 = vadd.f32 %v2779, %v4061
        %4063 = vmatprep.mubr.bf16.mxu0 %v887
        %4064 = vmatmul.mubr.bf16.gmra.mxu0 %v886
        %v4065 = vpop.f32.mrf.mxu0
        %v4066 = vadd.f32 %v2783, %v4065
        %v4067 = vpop.f32.mrf.mxu0
        %v4068 = vadd.f32 %v2785, %v4067
        %v4069 = vpop.f32.mrf.mxu0
        %v4070 = vadd.f32 %v2787, %v4069
        %v4071 = vpop.f32.mrf.mxu0
        %v4072 = vadd.f32 %v2789, %v4071
        %4073 = vmatprep.mubr.bf16.mxu0 %v891
        %4074 = vmatmul.mubr.bf16.gmra.mxu0 %v890
        %v4075 = vpop.f32.mrf.mxu0
        %v4076 = vadd.f32 %v2793, %v4075
        %v4077 = vpop.f32.mrf.mxu0
        %v4078 = vadd.f32 %v2795, %v4077
        %v4079 = vpop.f32.mrf.mxu0
        %v4080 = vadd.f32 %v2797, %v4079
        %v4081 = vpop.f32.mrf.mxu0
        %v4082 = vadd.f32 %v2799, %v4081
        %4083 = vmatprep.mubr.bf16.mxu0 %v895
        %4084 = vmatmul.mubr.bf16.gmra.mxu0 %v894
        %v4085 = vpop.f32.mrf.mxu0
        %v4086 = vadd.f32 %v2803, %v4085
        %v4087 = vpop.f32.mrf.mxu0
        %v4088 = vadd.f32 %v2805, %v4087
        %v4089 = vpop.f32.mrf.mxu0
        %v4090 = vadd.f32 %v2807, %v4089
        %v4091 = vpop.f32.mrf.mxu0
        %v4092 = vadd.f32 %v2809, %v4091
        %4093 = vmatprep.mubr.bf16.mxu0 %v899
        %4094 = vmatmul.mubr.bf16.gmra.mxu0 %v898
        %v4095 = vpop.f32.mrf.mxu0
        %v4096 = vadd.f32 %v2813, %v4095
        %v4097 = vpop.f32.mrf.mxu0
        %v4098 = vadd.f32 %v2815, %v4097
        %v4099 = vpop.f32.mrf.mxu0
        %v4100 = vadd.f32 %v2817, %v4099
        %v4101 = vpop.f32.mrf.mxu0
        %v4102 = vadd.f32 %v2819, %v4101
        %4103 = vmatprep.mubr.bf16.mxu0 %v903
        %4104 = vmatmul.mubr.bf16.gmra.mxu0 %v902
        %v4105 = vpop.f32.mrf.mxu0
        %v4106 = vadd.f32 %v2823, %v4105
        %v4107 = vpop.f32.mrf.mxu0
        %v4108 = vadd.f32 %v2825, %v4107
        %v4109 = vpop.f32.mrf.mxu0
        %v4110 = vadd.f32 %v2827, %v4109
        %v4111 = vpop.f32.mrf.mxu0
        %v4112 = vadd.f32 %v2829, %v4111
        %4113 = vmatprep.mubr.bf16.mxu0 %v907
        %4114 = vmatmul.mubr.bf16.gmra.mxu0 %v906
        %v4115 = vpop.f32.mrf.mxu0
        %v4116 = vadd.f32 %v2833, %v4115
        %v4117 = vpop.f32.mrf.mxu0
        %v4118 = vadd.f32 %v2835, %v4117
        %v4119 = vpop.f32.mrf.mxu0
        %v4120 = vadd.f32 %v2837, %v4119
        %v4121 = vpop.f32.mrf.mxu0
        %v4122 = vadd.f32 %v2839, %v4121
        %4123 = vmatprep.mubr.bf16.mxu0 %v911
        %4124 = vmatmul.mubr.bf16.gmra.mxu0 %v910
        %v4125 = vpop.f32.mrf.mxu0
        %v4126 = vadd.f32 %v2843, %v4125
        %v4127 = vpop.f32.mrf.mxu0
        %v4128 = vadd.f32 %v2845, %v4127
        %v4129 = vpop.f32.mrf.mxu0
        %v4130 = vadd.f32 %v2847, %v4129
        %v4131 = vpop.f32.mrf.mxu0
        %v4132 = vadd.f32 %v2849, %v4131
        %4133 = vmatprep.mubr.bf16.mxu0 %v915
        %4134 = vmatmul.mubr.bf16.gmra.mxu0 %v914
        %v4135 = vpop.f32.mrf.mxu0
        %v4136 = vadd.f32 %v2853, %v4135
        %v4137 = vpop.f32.mrf.mxu0
        %v4138 = vadd.f32 %v2855, %v4137
        %v4139 = vpop.f32.mrf.mxu0
        %v4140 = vadd.f32 %v2857, %v4139
        %v4141 = vpop.f32.mrf.mxu0
        %v4142 = vadd.f32 %v2859, %v4141
        %4143 = vmatprep.mubr.bf16.mxu0 %v919
        %4144 = vmatmul.mubr.bf16.gmra.mxu0 %v918
        %v4145 = vpop.f32.mrf.mxu0
        %v4146 = vadd.f32 %v2863, %v4145
        %v4147 = vpop.f32.mrf.mxu0
        %v4148 = vadd.f32 %v2865, %v4147
        %v4149 = vpop.f32.mrf.mxu0
        %v4150 = vadd.f32 %v2867, %v4149
        %v4151 = vpop.f32.mrf.mxu0
        %v4152 = vadd.f32 %v2869, %v4151
        %4153 = vmatprep.mubr.bf16.mxu0 %v923
        %4154 = vmatmul.mubr.bf16.gmra.mxu0 %v922
        %v4155 = vpop.f32.mrf.mxu0
        %v4156 = vadd.f32 %v2873, %v4155
        %v4157 = vpop.f32.mrf.mxu0
        %v4158 = vadd.f32 %v2875, %v4157
        %v4159 = vpop.f32.mrf.mxu0
        %v4160 = vadd.f32 %v2877, %v4159
        %v4161 = vpop.f32.mrf.mxu0
        %v4162 = vadd.f32 %v2879, %v4161
        %4163 = vmatprep.mubr.bf16.mxu0 %v927
        %4164 = vmatmul.mubr.bf16.gmra.mxu0 %v926
        %v4165 = vpop.f32.mrf.mxu0
        %v4166 = vadd.f32 %v2883, %v4165
        %v4167 = vpop.f32.mrf.mxu0
        %v4168 = vadd.f32 %v2885, %v4167
        %v4169 = vpop.f32.mrf.mxu0
        %v4170 = vadd.f32 %v2887, %v4169
        %v4171 = vpop.f32.mrf.mxu0
        %v4172 = vadd.f32 %v2889, %v4171
        %4173 = vmatprep.mubr.bf16.mxu0 %v931
        %4174 = vmatmul.mubr.bf16.gmra.mxu0 %v930
        %v4175 = vpop.f32.mrf.mxu0
        %v4176 = vadd.f32 %v2893, %v4175
        %v4177 = vpop.f32.mrf.mxu0
        %v4178 = vadd.f32 %v2895, %v4177
        %v4179 = vpop.f32.mrf.mxu0
        %v4180 = vadd.f32 %v2897, %v4179
        %v4181 = vpop.f32.mrf.mxu0
        %v4182 = vadd.f32 %v2899, %v4181
        %4183 = vmatprep.mubr.bf16.mxu0 %v935
        %4184 = vmatmul.mubr.bf16.gmra.mxu0 %v934
        %v4185 = vpop.f32.mrf.mxu0
        %v4186 = vadd.f32 %v2903, %v4185
        %v4187 = vpop.f32.mrf.mxu0
        %v4188 = vadd.f32 %v2905, %v4187
        %v4189 = vpop.f32.mrf.mxu0
        %v4190 = vadd.f32 %v2907, %v4189
        %v4191 = vpop.f32.mrf.mxu0
        %v4192 = vadd.f32 %v2909, %v4191
        %4193 = vmatprep.mubr.bf16.mxu0 %v939
        %4194 = vmatmul.mubr.bf16.gmra.mxu0 %v938
        %v4195 = vpop.f32.mrf.mxu0
        %v4196 = vadd.f32 %v2913, %v4195
        %v4197 = vpop.f32.mrf.mxu0
        %v4198 = vadd.f32 %v2915, %v4197
        %v4199 = vpop.f32.mrf.mxu0
        %v4200 = vadd.f32 %v2917, %v4199
        %v4201 = vpop.f32.mrf.mxu0
        %v4202 = vadd.f32 %v2919, %v4201
        %4203 = vmatprep.mubr.bf16.mxu0 %v943
        %4204 = vmatmul.mubr.bf16.gmra.mxu0 %v942
        %v4205 = vpop.f32.mrf.mxu0
        %v4206 = vadd.f32 %v2923, %v4205
        %v4207 = vpop.f32.mrf.mxu0
        %v4208 = vadd.f32 %v2925, %v4207
        %v4209 = vpop.f32.mrf.mxu0
        %v4210 = vadd.f32 %v2927, %v4209
        %v4211 = vpop.f32.mrf.mxu0
        %v4212 = vadd.f32 %v2929, %v4211
        %4213 = vdwg.mxu0
        %4214 = vmatprep.subr.bf16.mxu0 %v3474
        %4215 = vmatpush1.bf16.msra.mxu0 %v3473
        %4216 = vmatprep.subr.bf16.mxu0 %v3470
        %4217 = vmatpush1.bf16.msra.mxu0 %v3469
        %4218 = vmatprep.subr.bf16.mxu0 %v3466
        %4219 = vmatpush1.bf16.msra.mxu0 %v3465
        %4220 = vmatprep.subr.bf16.mxu0 %v3462
        %4221 = vmatpush1.bf16.msra.mxu0 %v3461
        %4222 = vmatprep.subr.bf16.mxu0 %v3458
        %4223 = vmatpush1.bf16.msra.mxu0 %v3457
        %4224 = vmatprep.subr.bf16.mxu0 %v3454
        %4225 = vmatpush1.bf16.msra.mxu0 %v3453
        %4226 = vmatprep.subr.bf16.mxu0 %v3450
        %4227 = vmatpush1.bf16.msra.mxu0 %v3449
        %4228 = vmatprep.subr.bf16.mxu0 %v3446
        %4229 = vmatpush1.bf16.msra.mxu0 %v3445
        %4230 = vmatprep.subr.bf16.mxu0 %v3506
        %4231 = vmatpush2.bf16.msra.mxu0 %v3505
        %4232 = vmatprep.subr.bf16.mxu0 %v3502
        %4233 = vmatpush2.bf16.msra.mxu0 %v3501
        %4234 = vmatprep.subr.bf16.mxu0 %v3498
        %4235 = vmatpush2.bf16.msra.mxu0 %v3497
        %4236 = vmatprep.subr.bf16.mxu0 %v3494
        %4237 = vmatpush2.bf16.msra.mxu0 %v3493
        %4238 = vmatprep.subr.bf16.mxu0 %v3490
        %4239 = vmatpush2.bf16.msra.mxu0 %v3489
        %4240 = vmatprep.subr.bf16.mxu0 %v3486
        %4241 = vmatpush2.bf16.msra.mxu0 %v3485
        %4242 = vmatprep.subr.bf16.mxu0 %v3482
        %4243 = vmatpush2.bf16.msra.mxu0 %v3481
        %4244 = vmatprep.subr.bf16.mxu0 %v3478
        %4245 = vmatpush2.bf16.msra.mxu0 %v3477
        %4246 = vmatprep.mubr.bf16.mxu0 %v885
        %4247 = vmatmul.mubr.bf16.gmra.mxu0 %v884
        %v4248 = vpop.f32.mrf.mxu0
        %v4249 = vadd.f32 %v4056, %v4248
        %v4250 = vpop.f32.mrf.mxu0
        %v4251 = vadd.f32 %v4058, %v4250
        %v4252 = vpop.f32.mrf.mxu0
        %v4253 = vadd.f32 %v4060, %v4252
        %v4254 = vpop.f32.mrf.mxu0
        %v4255 = vadd.f32 %v4062, %v4254
        %4256 = vmatprep.mubr.bf16.mxu0 %v889
        %4257 = vmatmul.mubr.bf16.gmra.mxu0 %v888
        %v4258 = vpop.f32.mrf.mxu0
        %v4259 = vadd.f32 %v4066, %v4258
        %v4260 = vpop.f32.mrf.mxu0
        %v4261 = vadd.f32 %v4068, %v4260
        %v4262 = vpop.f32.mrf.mxu0
        %v4263 = vadd.f32 %v4070, %v4262
        %v4264 = vpop.f32.mrf.mxu0
        %v4265 = vadd.f32 %v4072, %v4264
        %4266 = vmatprep.mubr.bf16.mxu0 %v893
        %4267 = vmatmul.mubr.bf16.gmra.mxu0 %v892
        %v4268 = vpop.f32.mrf.mxu0
        %v4269 = vadd.f32 %v4076, %v4268
        %v4270 = vpop.f32.mrf.mxu0
        %v4271 = vadd.f32 %v4078, %v4270
        %v4272 = vpop.f32.mrf.mxu0
        %v4273 = vadd.f32 %v4080, %v4272
        %v4274 = vpop.f32.mrf.mxu0
        %v4275 = vadd.f32 %v4082, %v4274
        %4276 = vmatprep.mubr.bf16.mxu0 %v897
        %4277 = vmatmul.mubr.bf16.gmra.mxu0 %v896
        %v4278 = vpop.f32.mrf.mxu0
        %v4279 = vadd.f32 %v4086, %v4278
        %v4280 = vpop.f32.mrf.mxu0
        %v4281 = vadd.f32 %v4088, %v4280
        %v4282 = vpop.f32.mrf.mxu0
        %v4283 = vadd.f32 %v4090, %v4282
        %v4284 = vpop.f32.mrf.mxu0
        %v4285 = vadd.f32 %v4092, %v4284
        %4286 = vmatprep.mubr.bf16.mxu0 %v901
        %4287 = vmatmul.mubr.bf16.gmra.mxu0 %v900
        %v4288 = vpop.f32.mrf.mxu0
        %v4289 = vadd.f32 %v4096, %v4288
        %v4290 = vpop.f32.mrf.mxu0
        %v4291 = vadd.f32 %v4098, %v4290
        %v4292 = vpop.f32.mrf.mxu0
        %v4293 = vadd.f32 %v4100, %v4292
        %v4294 = vpop.f32.mrf.mxu0
        %v4295 = vadd.f32 %v4102, %v4294
        %4296 = vmatprep.mubr.bf16.mxu0 %v905
        %4297 = vmatmul.mubr.bf16.gmra.mxu0 %v904
        %v4298 = vpop.f32.mrf.mxu0
        %v4299 = vadd.f32 %v4106, %v4298
        %v4300 = vpop.f32.mrf.mxu0
        %v4301 = vadd.f32 %v4108, %v4300
        %v4302 = vpop.f32.mrf.mxu0
        %v4303 = vadd.f32 %v4110, %v4302
        %v4304 = vpop.f32.mrf.mxu0
        %v4305 = vadd.f32 %v4112, %v4304
        %4306 = vmatprep.mubr.bf16.mxu0 %v909
        %4307 = vmatmul.mubr.bf16.gmra.mxu0 %v908
        %v4308 = vpop.f32.mrf.mxu0
        %v4309 = vadd.f32 %v4116, %v4308
        %v4310 = vpop.f32.mrf.mxu0
        %v4311 = vadd.f32 %v4118, %v4310
        %v4312 = vpop.f32.mrf.mxu0
        %v4313 = vadd.f32 %v4120, %v4312
        %v4314 = vpop.f32.mrf.mxu0
        %v4315 = vadd.f32 %v4122, %v4314
        %4316 = vmatprep.mubr.bf16.mxu0 %v913
        %4317 = vmatmul.mubr.bf16.gmra.mxu0 %v912
        %v4318 = vpop.f32.mrf.mxu0
        %v4319 = vadd.f32 %v4126, %v4318
        %v4320 = vpop.f32.mrf.mxu0
        %v4321 = vadd.f32 %v4128, %v4320
        %v4322 = vpop.f32.mrf.mxu0
        %v4323 = vadd.f32 %v4130, %v4322
        %v4324 = vpop.f32.mrf.mxu0
        %v4325 = vadd.f32 %v4132, %v4324
        %4326 = vmatprep.mubr.bf16.mxu0 %v917
        %4327 = vmatmul.mubr.bf16.gmra.mxu0 %v916
        %v4328 = vpop.f32.mrf.mxu0
        %v4329 = vadd.f32 %v4136, %v4328
        %v4330 = vpop.f32.mrf.mxu0
        %v4331 = vadd.f32 %v4138, %v4330
        %v4332 = vpop.f32.mrf.mxu0
        %v4333 = vadd.f32 %v4140, %v4332
        %v4334 = vpop.f32.mrf.mxu0
        %v4335 = vadd.f32 %v4142, %v4334
        %4336 = vmatprep.mubr.bf16.mxu0 %v921
        %4337 = vmatmul.mubr.bf16.gmra.mxu0 %v920
        %v4338 = vpop.f32.mrf.mxu0
        %v4339 = vadd.f32 %v4146, %v4338
        %v4340 = vpop.f32.mrf.mxu0
        %v4341 = vadd.f32 %v4148, %v4340
        %v4342 = vpop.f32.mrf.mxu0
        %v4343 = vadd.f32 %v4150, %v4342
        %v4344 = vpop.f32.mrf.mxu0
        %v4345 = vadd.f32 %v4152, %v4344
        %4346 = vmatprep.mubr.bf16.mxu0 %v925
        %4347 = vmatmul.mubr.bf16.gmra.mxu0 %v924
        %v4348 = vpop.f32.mrf.mxu0
        %v4349 = vadd.f32 %v4156, %v4348
        %v4350 = vpop.f32.mrf.mxu0
        %v4351 = vadd.f32 %v4158, %v4350
        %v4352 = vpop.f32.mrf.mxu0
        %v4353 = vadd.f32 %v4160, %v4352
        %v4354 = vpop.f32.mrf.mxu0
        %v4355 = vadd.f32 %v4162, %v4354
        %4356 = vmatprep.mubr.bf16.mxu0 %v929
        %4357 = vmatmul.mubr.bf16.gmra.mxu0 %v928
        %v4358 = vpop.f32.mrf.mxu0
        %v4359 = vadd.f32 %v4166, %v4358
        %v4360 = vpop.f32.mrf.mxu0
        %v4361 = vadd.f32 %v4168, %v4360
        %v4362 = vpop.f32.mrf.mxu0
        %v4363 = vadd.f32 %v4170, %v4362
        %v4364 = vpop.f32.mrf.mxu0
        %v4365 = vadd.f32 %v4172, %v4364
        %4366 = vmatprep.mubr.bf16.mxu0 %v933
        %4367 = vmatmul.mubr.bf16.gmra.mxu0 %v932
        %v4368 = vpop.f32.mrf.mxu0
        %v4369 = vadd.f32 %v4176, %v4368
        %v4370 = vpop.f32.mrf.mxu0
        %v4371 = vadd.f32 %v4178, %v4370
        %v4372 = vpop.f32.mrf.mxu0
        %v4373 = vadd.f32 %v4180, %v4372
        %v4374 = vpop.f32.mrf.mxu0
        %v4375 = vadd.f32 %v4182, %v4374
        %4376 = vmatprep.mubr.bf16.mxu0 %v937
        %4377 = vmatmul.mubr.bf16.gmra.mxu0 %v936
        %v4378 = vpop.f32.mrf.mxu0
        %v4379 = vadd.f32 %v4186, %v4378
        %v4380 = vpop.f32.mrf.mxu0
        %v4381 = vadd.f32 %v4188, %v4380
        %v4382 = vpop.f32.mrf.mxu0
        %v4383 = vadd.f32 %v4190, %v4382
        %v4384 = vpop.f32.mrf.mxu0
        %v4385 = vadd.f32 %v4192, %v4384
        %4386 = vmatprep.mubr.bf16.mxu0 %v941
        %4387 = vmatmul.mubr.bf16.gmra.mxu0 %v940
        %v4388 = vpop.f32.mrf.mxu0
        %v4389 = vadd.f32 %v4196, %v4388
        %v4390 = vpop.f32.mrf.mxu0
        %v4391 = vadd.f32 %v4198, %v4390
        %v4392 = vpop.f32.mrf.mxu0
        %v4393 = vadd.f32 %v4200, %v4392
        %v4394 = vpop.f32.mrf.mxu0
        %v4395 = vadd.f32 %v4202, %v4394
        %4396 = vmatprep.mubr.bf16.mxu0 %v945
        %4397 = vmatmul.mubr.bf16.gmra.mxu0 %v944
        %v4398 = vpop.f32.mrf.mxu0
        %v4399 = vadd.f32 %v4206, %v4398
        %v4400 = vpop.f32.mrf.mxu0
        %v4401 = vadd.f32 %v4208, %v4400
        %v4402 = vpop.f32.mrf.mxu0
        %v4403 = vadd.f32 %v4210, %v4402
        %v4404 = vpop.f32.mrf.mxu0
        %v4405 = vadd.f32 %v4212, %v4404
        %4406 = vdwg.mxu0
        %s4407 = scalar_lea.vmem [#allocation4], 2048
        %v4408 = vld [vmem:[%s4407] sm:$0xff]
        %v4409 = vld [vmem:[%s4407 + $0x8] sm:$0xff]
        %v4410 = vld [vmem:[%s4407 + $0x10] sm:$0xff]
        %v4411 = vld [vmem:[%s4407 + $0x18] sm:$0xff]
        %v4412 = vld [vmem:[%s4407 + $0x20] sm:$0xff]
        %v4413 = vld [vmem:[%s4407 + $0x28] sm:$0xff]
        %v4414 = vld [vmem:[%s4407 + $0x30] sm:$0xff]
        %v4415 = vld [vmem:[%s4407 + $0x38] sm:$0xff]
        %v4416 = vld [vmem:[%s4407 + $0x40] sm:$0xff]
        %v4417 = vld [vmem:[%s4407 + $0x48] sm:$0xff]
        %v4418 = vld [vmem:[%s4407 + $0x50] sm:$0xff]
        %v4419 = vld [vmem:[%s4407 + $0x58] sm:$0xff]
        %v4420 = vld [vmem:[%s4407 + $0x60] sm:$0xff]
        %v4421 = vld [vmem:[%s4407 + $0x68] sm:$0xff]
        %v4422 = vld [vmem:[%s4407 + $0x70] sm:$0xff]
        %v4423 = vld [vmem:[%s4407 + $0x78] sm:$0xff]
        %v4424 = vld [vmem:[%s4407 + $0x80] sm:$0xff]
        %v4425 = vld [vmem:[%s4407 + $0x88] sm:$0xff]
        %v4426 = vld [vmem:[%s4407 + $0x90] sm:$0xff]
        %v4427 = vld [vmem:[%s4407 + $0x98] sm:$0xff]
        %v4428 = vld [vmem:[%s4407 + $0xa0] sm:$0xff]
        %v4429 = vld [vmem:[%s4407 + $0xa8] sm:$0xff]
        %v4430 = vld [vmem:[%s4407 + $0xb0] sm:$0xff]
        %v4431 = vld [vmem:[%s4407 + $0xb8] sm:$0xff]
        %v4432 = vld [vmem:[%s4407 + $0xc0] sm:$0xff]
        %v4433 = vld [vmem:[%s4407 + $0xc8] sm:$0xff]
        %v4434 = vld [vmem:[%s4407 + $0xd0] sm:$0xff]
        %v4435 = vld [vmem:[%s4407 + $0xd8] sm:$0xff]
        %v4436 = vld [vmem:[%s4407 + $0xe0] sm:$0xff]
        %v4437 = vld [vmem:[%s4407 + $0xe8] sm:$0xff]
        %v4438 = vld [vmem:[%s4407 + $0xf0] sm:$0xff]
        %v4439 = vld [vmem:[%s4407 + $0xf8] sm:$0xff]
        %v4440 = vld [vmem:[%s4407 + $0x100] sm:$0xff]
        %v4441 = vld [vmem:[%s4407 + $0x108] sm:$0xff]
        %v4442 = vld [vmem:[%s4407 + $0x110] sm:$0xff]
        %v4443 = vld [vmem:[%s4407 + $0x118] sm:$0xff]
        %v4444 = vld [vmem:[%s4407 + $0x120] sm:$0xff]
        %v4445 = vld [vmem:[%s4407 + $0x128] sm:$0xff]
        %v4446 = vld [vmem:[%s4407 + $0x130] sm:$0xff]
        %v4447 = vld [vmem:[%s4407 + $0x138] sm:$0xff]
        %v4448 = vld [vmem:[%s4407 + $0x140] sm:$0xff]
        %v4449 = vld [vmem:[%s4407 + $0x148] sm:$0xff]
        %v4450 = vld [vmem:[%s4407 + $0x150] sm:$0xff]
        %v4451 = vld [vmem:[%s4407 + $0x158] sm:$0xff]
        %v4452 = vld [vmem:[%s4407 + $0x160] sm:$0xff]
        %v4453 = vld [vmem:[%s4407 + $0x168] sm:$0xff]
        %v4454 = vld [vmem:[%s4407 + $0x170] sm:$0xff]
        %v4455 = vld [vmem:[%s4407 + $0x178] sm:$0xff]
        %v4456 = vld [vmem:[%s4407 + $0x180] sm:$0xff]
        %v4457 = vld [vmem:[%s4407 + $0x188] sm:$0xff]
        %v4458 = vld [vmem:[%s4407 + $0x190] sm:$0xff]
        %v4459 = vld [vmem:[%s4407 + $0x198] sm:$0xff]
        %v4460 = vld [vmem:[%s4407 + $0x1a0] sm:$0xff]
        %v4461 = vld [vmem:[%s4407 + $0x1a8] sm:$0xff]
        %v4462 = vld [vmem:[%s4407 + $0x1b0] sm:$0xff]
        %v4463 = vld [vmem:[%s4407 + $0x1b8] sm:$0xff]
        %v4464 = vld [vmem:[%s4407 + $0x1c0] sm:$0xff]
        %v4465 = vld [vmem:[%s4407 + $0x1c8] sm:$0xff]
        %v4466 = vld [vmem:[%s4407 + $0x1d0] sm:$0xff]
        %v4467 = vld [vmem:[%s4407 + $0x1d8] sm:$0xff]
        %v4468 = vld [vmem:[%s4407 + $0x1e0] sm:$0xff]
        %v4469 = vld [vmem:[%s4407 + $0x1e8] sm:$0xff]
        %v4470 = vld [vmem:[%s4407 + $0x1f0] sm:$0xff]
        %v4471 = vld [vmem:[%s4407 + $0x1f8] sm:$0xff]
        %v4472 = vld [vmem:[%s4407 + $0x200] sm:$0xff]
        %v4473 = vld [vmem:[%s4407 + $0x208] sm:$0xff]
        %v4474 = vld [vmem:[%s4407 + $0x210] sm:$0xff]
        %v4475 = vld [vmem:[%s4407 + $0x218] sm:$0xff]
        %v4476 = vld [vmem:[%s4407 + $0x220] sm:$0xff]
        %v4477 = vld [vmem:[%s4407 + $0x228] sm:$0xff]
        %v4478 = vld [vmem:[%s4407 + $0x230] sm:$0xff]
        %v4479 = vld [vmem:[%s4407 + $0x238] sm:$0xff]
        %v4480 = vld [vmem:[%s4407 + $0x240] sm:$0xff]
        %v4481 = vld [vmem:[%s4407 + $0x248] sm:$0xff]
        %v4482 = vld [vmem:[%s4407 + $0x250] sm:$0xff]
        %v4483 = vld [vmem:[%s4407 + $0x258] sm:$0xff]
        %v4484 = vld [vmem:[%s4407 + $0x260] sm:$0xff]
        %v4485 = vld [vmem:[%s4407 + $0x268] sm:$0xff]
        %v4486 = vld [vmem:[%s4407 + $0x270] sm:$0xff]
        %v4487 = vld [vmem:[%s4407 + $0x278] sm:$0xff]
        %v4488 = vld [vmem:[%s4407 + $0x280] sm:$0xff]
        %v4489 = vld [vmem:[%s4407 + $0x288] sm:$0xff]
        %v4490 = vld [vmem:[%s4407 + $0x290] sm:$0xff]
        %v4491 = vld [vmem:[%s4407 + $0x298] sm:$0xff]
        %v4492 = vld [vmem:[%s4407 + $0x2a0] sm:$0xff]
        %v4493 = vld [vmem:[%s4407 + $0x2a8] sm:$0xff]
        %v4494 = vld [vmem:[%s4407 + $0x2b0] sm:$0xff]
        %v4495 = vld [vmem:[%s4407 + $0x2b8] sm:$0xff]
        %v4496 = vld [vmem:[%s4407 + $0x2c0] sm:$0xff]
        %v4497 = vld [vmem:[%s4407 + $0x2c8] sm:$0xff]
        %v4498 = vld [vmem:[%s4407 + $0x2d0] sm:$0xff]
        %v4499 = vld [vmem:[%s4407 + $0x2d8] sm:$0xff]
        %v4500 = vld [vmem:[%s4407 + $0x2e0] sm:$0xff]
        %v4501 = vld [vmem:[%s4407 + $0x2e8] sm:$0xff]
        %v4502 = vld [vmem:[%s4407 + $0x2f0] sm:$0xff]
        %v4503 = vld [vmem:[%s4407 + $0x2f8] sm:$0xff]
        %v4504 = vld [vmem:[%s4407 + $0x300] sm:$0xff]
        %v4505 = vld [vmem:[%s4407 + $0x308] sm:$0xff]
        %v4506 = vld [vmem:[%s4407 + $0x310] sm:$0xff]
        %v4507 = vld [vmem:[%s4407 + $0x318] sm:$0xff]
        %v4508 = vld [vmem:[%s4407 + $0x320] sm:$0xff]
        %v4509 = vld [vmem:[%s4407 + $0x328] sm:$0xff]
        %v4510 = vld [vmem:[%s4407 + $0x330] sm:$0xff]
        %v4511 = vld [vmem:[%s4407 + $0x338] sm:$0xff]
        %v4512 = vld [vmem:[%s4407 + $0x340] sm:$0xff]
        %v4513 = vld [vmem:[%s4407 + $0x348] sm:$0xff]
        %v4514 = vld [vmem:[%s4407 + $0x350] sm:$0xff]
        %v4515 = vld [vmem:[%s4407 + $0x358] sm:$0xff]
        %v4516 = vld [vmem:[%s4407 + $0x360] sm:$0xff]
        %v4517 = vld [vmem:[%s4407 + $0x368] sm:$0xff]
        %v4518 = vld [vmem:[%s4407 + $0x370] sm:$0xff]
        %v4519 = vld [vmem:[%s4407 + $0x378] sm:$0xff]
        %v4520 = vld [vmem:[%s4407 + $0x380] sm:$0xff]
        %v4521 = vld [vmem:[%s4407 + $0x388] sm:$0xff]
        %v4522 = vld [vmem:[%s4407 + $0x390] sm:$0xff]
        %v4523 = vld [vmem:[%s4407 + $0x398] sm:$0xff]
        %v4524 = vld [vmem:[%s4407 + $0x3a0] sm:$0xff]
        %v4525 = vld [vmem:[%s4407 + $0x3a8] sm:$0xff]
        %v4526 = vld [vmem:[%s4407 + $0x3b0] sm:$0xff]
        %v4527 = vld [vmem:[%s4407 + $0x3b8] sm:$0xff]
        %v4528 = vld [vmem:[%s4407 + $0x3c0] sm:$0xff]
        %v4529 = vld [vmem:[%s4407 + $0x3c8] sm:$0xff]
        %v4530 = vld [vmem:[%s4407 + $0x3d0] sm:$0xff]
        %v4531 = vld [vmem:[%s4407 + $0x3d8] sm:$0xff]
        %v4532 = vld [vmem:[%s4407 + $0x3e0] sm:$0xff]
        %v4533 = vld [vmem:[%s4407 + $0x3e8] sm:$0xff]
        %v4534 = vld [vmem:[%s4407 + $0x3f0] sm:$0xff]
        %v4535 = vld [vmem:[%s4407 + $0x3f8] sm:$0xff]
        %vm4536 = vcmask 1046528
        %v4537 = vrot.slane %v882, 1
        %v4538 = vrot.slane %v886, 1
        %v4539 = vsel %vm4536, %v4537, %v4538
        %v4540 = vrot.slane %v883, 1
        %v4541 = vrot.slane %v887, 1
        %v4542 = vsel %vm4536, %v4540, %v4541
        %v4543 = vrot.slane %v884, 1
        %v4544 = vrot.slane %v888, 1
        %v4545 = vsel %vm4536, %v4543, %v4544
        %v4546 = vrot.slane %v885, 1
        %v4547 = vrot.slane %v889, 1
        %v4548 = vsel %vm4536, %v4546, %v4547
        %v4549 = vrot.slane %v890, 1
        %v4550 = vsel %vm4536, %v4538, %v4549
        %v4551 = vrot.slane %v891, 1
        %v4552 = vsel %vm4536, %v4541, %v4551
        %v4553 = vrot.slane %v892, 1
        %v4554 = vsel %vm4536, %v4544, %v4553
        %v4555 = vrot.slane %v893, 1
        %v4556 = vsel %vm4536, %v4547, %v4555
        %v4557 = vrot.slane %v894, 1
        %v4558 = vsel %vm4536, %v4549, %v4557
        %v4559 = vrot.slane %v895, 1
        %v4560 = vsel %vm4536, %v4551, %v4559
        %v4561 = vrot.slane %v896, 1
        %v4562 = vsel %vm4536, %v4553, %v4561
        %v4563 = vrot.slane %v897, 1
        %v4564 = vsel %vm4536, %v4555, %v4563
        %v4565 = vrot.slane %v898, 1
        %v4566 = vsel %vm4536, %v4557, %v4565
        %v4567 = vrot.slane %v899, 1
        %v4568 = vsel %vm4536, %v4559, %v4567
        %v4569 = vrot.slane %v900, 1
        %v4570 = vsel %vm4536, %v4561, %v4569
        %v4571 = vrot.slane %v901, 1
        %v4572 = vsel %vm4536, %v4563, %v4571
        %v4573 = vrot.slane %v902, 1
        %v4574 = vsel %vm4536, %v4565, %v4573
        %v4575 = vrot.slane %v903, 1
        %v4576 = vsel %vm4536, %v4567, %v4575
        %v4577 = vrot.slane %v904, 1
        %v4578 = vsel %vm4536, %v4569, %v4577
        %v4579 = vrot.slane %v905, 1
        %v4580 = vsel %vm4536, %v4571, %v4579
        %v4581 = vrot.slane %v906, 1
        %v4582 = vsel %vm4536, %v4573, %v4581
        %v4583 = vrot.slane %v907, 1
        %v4584 = vsel %vm4536, %v4575, %v4583
        %v4585 = vrot.slane %v908, 1
        %v4586 = vsel %vm4536, %v4577, %v4585
        %v4587 = vrot.slane %v909, 1
        %v4588 = vsel %vm4536, %v4579, %v4587
        %v4589 = vrot.slane %v910, 1
        %v4590 = vsel %vm4536, %v4581, %v4589
        %v4591 = vrot.slane %v911, 1
        %v4592 = vsel %vm4536, %v4583, %v4591
        %v4593 = vrot.slane %v912, 1
        %v4594 = vsel %vm4536, %v4585, %v4593
        %v4595 = vrot.slane %v913, 1
        %v4596 = vsel %vm4536, %v4587, %v4595
        %v4597 = vrot.slane %v914, 1
        %v4598 = vsel %vm4536, %v4589, %v4597
        %v4599 = vrot.slane %v915, 1
        %v4600 = vsel %vm4536, %v4591, %v4599
        %v4601 = vrot.slane %v916, 1
        %v4602 = vsel %vm4536, %v4593, %v4601
        %v4603 = vrot.slane %v917, 1
        %v4604 = vsel %vm4536, %v4595, %v4603
        %v4605 = vrot.slane %v918, 1
        %v4606 = vsel %vm4536, %v4597, %v4605
        %v4607 = vrot.slane %v919, 1
        %v4608 = vsel %vm4536, %v4599, %v4607
        %v4609 = vrot.slane %v920, 1
        %v4610 = vsel %vm4536, %v4601, %v4609
        %v4611 = vrot.slane %v921, 1
        %v4612 = vsel %vm4536, %v4603, %v4611
        %v4613 = vrot.slane %v922, 1
        %v4614 = vsel %vm4536, %v4605, %v4613
        %v4615 = vrot.slane %v923, 1
        %v4616 = vsel %vm4536, %v4607, %v4615
        %v4617 = vrot.slane %v924, 1
        %v4618 = vsel %vm4536, %v4609, %v4617
        %v4619 = vrot.slane %v925, 1
        %v4620 = vsel %vm4536, %v4611, %v4619
        %v4621 = vrot.slane %v926, 1
        %v4622 = vsel %vm4536, %v4613, %v4621
        %v4623 = vrot.slane %v927, 1
        %v4624 = vsel %vm4536, %v4615, %v4623
        %v4625 = vrot.slane %v928, 1
        %v4626 = vsel %vm4536, %v4617, %v4625
        %v4627 = vrot.slane %v929, 1
        %v4628 = vsel %vm4536, %v4619, %v4627
        %v4629 = vrot.slane %v930, 1
        %v4630 = vsel %vm4536, %v4621, %v4629
        %v4631 = vrot.slane %v931, 1
        %v4632 = vsel %vm4536, %v4623, %v4631
        %v4633 = vrot.slane %v932, 1
        %v4634 = vsel %vm4536, %v4625, %v4633
        %v4635 = vrot.slane %v933, 1
        %v4636 = vsel %vm4536, %v4627, %v4635
        %v4637 = vrot.slane %v934, 1
        %v4638 = vsel %vm4536, %v4629, %v4637
        %v4639 = vrot.slane %v935, 1
        %v4640 = vsel %vm4536, %v4631, %v4639
        %v4641 = vrot.slane %v936, 1
        %v4642 = vsel %vm4536, %v4633, %v4641
        %v4643 = vrot.slane %v937, 1
        %v4644 = vsel %vm4536, %v4635, %v4643
        %v4645 = vrot.slane %v938, 1
        %v4646 = vsel %vm4536, %v4637, %v4645
        %v4647 = vrot.slane %v939, 1
        %v4648 = vsel %vm4536, %v4639, %v4647
        %v4649 = vrot.slane %v940, 1
        %v4650 = vsel %vm4536, %v4641, %v4649
        %v4651 = vrot.slane %v941, 1
        %v4652 = vsel %vm4536, %v4643, %v4651
        %v4653 = vrot.slane %v942, 1
        %v4654 = vsel %vm4536, %v4645, %v4653
        %v4655 = vrot.slane %v943, 1
        %v4656 = vsel %vm4536, %v4647, %v4655
        %v4657 = vrot.slane %v944, 1
        %v4658 = vsel %vm4536, %v4649, %v4657
        %v4659 = vrot.slane %v945, 1
        %v4660 = vsel %vm4536, %v4651, %v4659
        %v4853 = vunpack.c.l.b16 %v4408
        %v4854 = vunpack.c.h.b16 %v4408
        %v4855 = vunpack.c.l.b16 %v4409
        %v4856 = vunpack.c.h.b16 %v4409
        %v4857 = vunpack.c.l.b16 %v4410
        %v4858 = vunpack.c.h.b16 %v4410
        %v4859 = vunpack.c.l.b16 %v4411
        %v4860 = vunpack.c.h.b16 %v4411
        %v4861 = vunpack.c.l.b16 %v4412
        %v4862 = vunpack.c.h.b16 %v4412
        %v4863 = vunpack.c.l.b16 %v4413
        %v4864 = vunpack.c.h.b16 %v4413
        %v4865 = vunpack.c.l.b16 %v4414
        %v4866 = vunpack.c.h.b16 %v4414
        %v4867 = vunpack.c.l.b16 %v4415
        %v4868 = vunpack.c.h.b16 %v4415
        %v4869 = vunpack.c.l.b16 %v4416
        %v4870 = vunpack.c.h.b16 %v4416
        %v4871 = vunpack.c.l.b16 %v4417
        %v4872 = vunpack.c.h.b16 %v4417
        %v4873 = vunpack.c.l.b16 %v4418
        %v4874 = vunpack.c.h.b16 %v4418
        %v4875 = vunpack.c.l.b16 %v4419
        %v4876 = vunpack.c.h.b16 %v4419
        %v4877 = vunpack.c.l.b16 %v4420
        %v4878 = vunpack.c.h.b16 %v4420
        %v4879 = vunpack.c.l.b16 %v4421
        %v4880 = vunpack.c.h.b16 %v4421
        %v4881 = vunpack.c.l.b16 %v4422
        %v4882 = vunpack.c.h.b16 %v4422
        %v4883 = vunpack.c.l.b16 %v4423
        %v4884 = vunpack.c.h.b16 %v4423
        %v4885 = vunpack.c.l.b16 %v4424
        %v4886 = vunpack.c.h.b16 %v4424
        %v4887 = vunpack.c.l.b16 %v4425
        %v4888 = vunpack.c.h.b16 %v4425
        %v4889 = vunpack.c.l.b16 %v4426
        %v4890 = vunpack.c.h.b16 %v4426
        %v4891 = vunpack.c.l.b16 %v4427
        %v4892 = vunpack.c.h.b16 %v4427
        %v4893 = vunpack.c.l.b16 %v4428
        %v4894 = vunpack.c.h.b16 %v4428
        %v4895 = vunpack.c.l.b16 %v4429
        %v4896 = vunpack.c.h.b16 %v4429
        %v4897 = vunpack.c.l.b16 %v4430
        %v4898 = vunpack.c.h.b16 %v4430
        %v4899 = vunpack.c.l.b16 %v4431
        %v4900 = vunpack.c.h.b16 %v4431
        %v4901 = vunpack.c.l.b16 %v4432
        %v4902 = vunpack.c.h.b16 %v4432
        %v4903 = vunpack.c.l.b16 %v4433
        %v4904 = vunpack.c.h.b16 %v4433
        %v4905 = vunpack.c.l.b16 %v4434
        %v4906 = vunpack.c.h.b16 %v4434
        %v4907 = vunpack.c.l.b16 %v4435
        %v4908 = vunpack.c.h.b16 %v4435
        %v4909 = vunpack.c.l.b16 %v4436
        %v4910 = vunpack.c.h.b16 %v4436
        %v4911 = vunpack.c.l.b16 %v4437
        %v4912 = vunpack.c.h.b16 %v4437
        %v4913 = vunpack.c.l.b16 %v4438
        %v4914 = vunpack.c.h.b16 %v4438
        %v4915 = vunpack.c.l.b16 %v4439
        %v4916 = vunpack.c.h.b16 %v4439
        %v4917 = vunpack.c.l.b16 %v4440
        %v4918 = vunpack.c.h.b16 %v4440
        %v4919 = vunpack.c.l.b16 %v4441
        %v4920 = vunpack.c.h.b16 %v4441
        %v4921 = vunpack.c.l.b16 %v4442
        %v4922 = vunpack.c.h.b16 %v4442
        %v4923 = vunpack.c.l.b16 %v4443
        %v4924 = vunpack.c.h.b16 %v4443
        %v4925 = vunpack.c.l.b16 %v4444
        %v4926 = vunpack.c.h.b16 %v4444
        %v4927 = vunpack.c.l.b16 %v4445
        %v4928 = vunpack.c.h.b16 %v4445
        %v4929 = vunpack.c.l.b16 %v4446
        %v4930 = vunpack.c.h.b16 %v4446
        %v4931 = vunpack.c.l.b16 %v4447
        %v4932 = vunpack.c.h.b16 %v4447
        %v4933 = vunpack.c.l.b16 %v4448
        %v4934 = vunpack.c.h.b16 %v4448
        %v4935 = vunpack.c.l.b16 %v4449
        %v4936 = vunpack.c.h.b16 %v4449
        %v4937 = vunpack.c.l.b16 %v4450
        %v4938 = vunpack.c.h.b16 %v4450
        %v4939 = vunpack.c.l.b16 %v4451
        %v4940 = vunpack.c.h.b16 %v4451
        %v4941 = vunpack.c.l.b16 %v4452
        %v4942 = vunpack.c.h.b16 %v4452
        %v4943 = vunpack.c.l.b16 %v4453
        %v4944 = vunpack.c.h.b16 %v4453
        %v4945 = vunpack.c.l.b16 %v4454
        %v4946 = vunpack.c.h.b16 %v4454
        %v4947 = vunpack.c.l.b16 %v4455
        %v4948 = vunpack.c.h.b16 %v4455
        %v4949 = vunpack.c.l.b16 %v4456
        %v4950 = vunpack.c.h.b16 %v4456
        %v4951 = vunpack.c.l.b16 %v4457
        %v4952 = vunpack.c.h.b16 %v4457
        %v4953 = vunpack.c.l.b16 %v4458
        %v4954 = vunpack.c.h.b16 %v4458
        %v4955 = vunpack.c.l.b16 %v4459
        %v4956 = vunpack.c.h.b16 %v4459
        %v4957 = vunpack.c.l.b16 %v4460
        %v4958 = vunpack.c.h.b16 %v4460
        %v4959 = vunpack.c.l.b16 %v4461
        %v4960 = vunpack.c.h.b16 %v4461
        %v4961 = vunpack.c.l.b16 %v4462
        %v4962 = vunpack.c.h.b16 %v4462
        %v4963 = vunpack.c.l.b16 %v4463
        %v4964 = vunpack.c.h.b16 %v4463
        %v4965 = vunpack.c.l.b16 %v4464
        %v4966 = vunpack.c.h.b16 %v4464
        %v4967 = vunpack.c.l.b16 %v4465
        %v4968 = vunpack.c.h.b16 %v4465
        %v4969 = vunpack.c.l.b16 %v4466
        %v4970 = vunpack.c.h.b16 %v4466
        %v4971 = vunpack.c.l.b16 %v4467
        %v4972 = vunpack.c.h.b16 %v4467
        %v4973 = vunpack.c.l.b16 %v4468
        %v4974 = vunpack.c.h.b16 %v4468
        %v4975 = vunpack.c.l.b16 %v4469
        %v4976 = vunpack.c.h.b16 %v4469
        %v4977 = vunpack.c.l.b16 %v4470
        %v4978 = vunpack.c.h.b16 %v4470
        %v4979 = vunpack.c.l.b16 %v4471
        %v4980 = vunpack.c.h.b16 %v4471
        %v4981 = vunpack.c.l.b16 %v4472
        %v4982 = vunpack.c.h.b16 %v4472
        %v4983 = vunpack.c.l.b16 %v4473
        %v4984 = vunpack.c.h.b16 %v4473
        %v4985 = vunpack.c.l.b16 %v4474
        %v4986 = vunpack.c.h.b16 %v4474
        %v4987 = vunpack.c.l.b16 %v4475
        %v4988 = vunpack.c.h.b16 %v4475
        %v4989 = vunpack.c.l.b16 %v4476
        %v4990 = vunpack.c.h.b16 %v4476
        %v4991 = vunpack.c.l.b16 %v4477
        %v4992 = vunpack.c.h.b16 %v4477
        %v4993 = vunpack.c.l.b16 %v4478
        %v4994 = vunpack.c.h.b16 %v4478
        %v4995 = vunpack.c.l.b16 %v4479
        %v4996 = vunpack.c.h.b16 %v4479
        %v4997 = vunpack.c.l.b16 %v4480
        %v4998 = vunpack.c.h.b16 %v4480
        %v4999 = vunpack.c.l.b16 %v4481
        %v5000 = vunpack.c.h.b16 %v4481
        %v5001 = vunpack.c.l.b16 %v4482
        %v5002 = vunpack.c.h.b16 %v4482
        %v5003 = vunpack.c.l.b16 %v4483
        %v5004 = vunpack.c.h.b16 %v4483
        %v5005 = vunpack.c.l.b16 %v4484
        %v5006 = vunpack.c.h.b16 %v4484
        %v5007 = vunpack.c.l.b16 %v4485
        %v5008 = vunpack.c.h.b16 %v4485
        %v5009 = vunpack.c.l.b16 %v4486
        %v5010 = vunpack.c.h.b16 %v4486
        %v5011 = vunpack.c.l.b16 %v4487
        %v5012 = vunpack.c.h.b16 %v4487
        %v5013 = vunpack.c.l.b16 %v4488
        %v5014 = vunpack.c.h.b16 %v4488
        %v5015 = vunpack.c.l.b16 %v4489
        %v5016 = vunpack.c.h.b16 %v4489
        %v5017 = vunpack.c.l.b16 %v4490
        %v5018 = vunpack.c.h.b16 %v4490
        %v5019 = vunpack.c.l.b16 %v4491
        %v5020 = vunpack.c.h.b16 %v4491
        %v5021 = vunpack.c.l.b16 %v4492
        %v5022 = vunpack.c.h.b16 %v4492
        %v5023 = vunpack.c.l.b16 %v4493
        %v5024 = vunpack.c.h.b16 %v4493
        %v5025 = vunpack.c.l.b16 %v4494
        %v5026 = vunpack.c.h.b16 %v4494
        %v5027 = vunpack.c.l.b16 %v4495
        %v5028 = vunpack.c.h.b16 %v4495
        %v5029 = vunpack.c.l.b16 %v4496
        %v5030 = vunpack.c.h.b16 %v4496
        %v5031 = vunpack.c.l.b16 %v4497
        %v5032 = vunpack.c.h.b16 %v4497
        %v5033 = vunpack.c.l.b16 %v4498
        %v5034 = vunpack.c.h.b16 %v4498
        %v5035 = vunpack.c.l.b16 %v4499
        %v5036 = vunpack.c.h.b16 %v4499
        %v5037 = vunpack.c.l.b16 %v4500
        %v5038 = vunpack.c.h.b16 %v4500
        %v5039 = vunpack.c.l.b16 %v4501
        %v5040 = vunpack.c.h.b16 %v4501
        %v5041 = vunpack.c.l.b16 %v4502
        %v5042 = vunpack.c.h.b16 %v4502
        %v5043 = vunpack.c.l.b16 %v4503
        %v5044 = vunpack.c.h.b16 %v4503
        %v5045 = vunpack.c.l.b16 %v4504
        %v5046 = vunpack.c.h.b16 %v4504
        %v5047 = vunpack.c.l.b16 %v4505
        %v5048 = vunpack.c.h.b16 %v4505
        %v5049 = vunpack.c.l.b16 %v4506
        %v5050 = vunpack.c.h.b16 %v4506
        %v5051 = vunpack.c.l.b16 %v4507
        %v5052 = vunpack.c.h.b16 %v4507
        %v5053 = vunpack.c.l.b16 %v4508
        %v5054 = vunpack.c.h.b16 %v4508
        %v5055 = vunpack.c.l.b16 %v4509
        %v5056 = vunpack.c.h.b16 %v4509
        %v5057 = vunpack.c.l.b16 %v4510
        %v5058 = vunpack.c.h.b16 %v4510
        %v5059 = vunpack.c.l.b16 %v4511
        %v5060 = vunpack.c.h.b16 %v4511
        %v5061 = vunpack.c.l.b16 %v4512
        %v5062 = vunpack.c.h.b16 %v4512
        %v5063 = vunpack.c.l.b16 %v4513
        %v5064 = vunpack.c.h.b16 %v4513
        %v5065 = vunpack.c.l.b16 %v4514
        %v5066 = vunpack.c.h.b16 %v4514
        %v5067 = vunpack.c.l.b16 %v4515
        %v5068 = vunpack.c.h.b16 %v4515
        %v5069 = vunpack.c.l.b16 %v4516
        %v5070 = vunpack.c.h.b16 %v4516
        %v5071 = vunpack.c.l.b16 %v4517
        %v5072 = vunpack.c.h.b16 %v4517
        %v5073 = vunpack.c.l.b16 %v4518
        %v5074 = vunpack.c.h.b16 %v4518
        %v5075 = vunpack.c.l.b16 %v4519
        %v5076 = vunpack.c.h.b16 %v4519
        %v5077 = vunpack.c.l.b16 %v4520
        %v5078 = vunpack.c.h.b16 %v4520
        %v5079 = vunpack.c.l.b16 %v4521
        %v5080 = vunpack.c.h.b16 %v4521
        %v5081 = vunpack.c.l.b16 %v4522
        %v5082 = vunpack.c.h.b16 %v4522
        %v5083 = vunpack.c.l.b16 %v4523
        %v5084 = vunpack.c.h.b16 %v4523
        %v5085 = vunpack.c.l.b16 %v4524
        %v5086 = vunpack.c.h.b16 %v4524
        %v5087 = vunpack.c.l.b16 %v4525
        %v5088 = vunpack.c.h.b16 %v4525
        %v5089 = vunpack.c.l.b16 %v4526
        %v5090 = vunpack.c.h.b16 %v4526
        %v5091 = vunpack.c.l.b16 %v4527
        %v5092 = vunpack.c.h.b16 %v4527
        %v5093 = vunpack.c.l.b16 %v4528
        %v5094 = vunpack.c.h.b16 %v4528
        %v5095 = vunpack.c.l.b16 %v4529
        %v5096 = vunpack.c.h.b16 %v4529
        %v5097 = vunpack.c.l.b16 %v4530
        %v5098 = vunpack.c.h.b16 %v4530
        %v5099 = vunpack.c.l.b16 %v4531
        %v5100 = vunpack.c.h.b16 %v4531
        %v5101 = vunpack.c.l.b16 %v4532
        %v5102 = vunpack.c.h.b16 %v4532
        %v5103 = vunpack.c.l.b16 %v4533
        %v5104 = vunpack.c.h.b16 %v4533
        %v5105 = vunpack.c.l.b16 %v4534
        %v5106 = vunpack.c.h.b16 %v4534
        %v5107 = vunpack.c.l.b16 %v4535
        %v5108 = vunpack.c.h.b16 %v4535
        %v5109 = vpack.c.b16 %v4857, %v4853
        %v5110 = vpack.c.b16 %v4858, %v4854
        %v5111 = vpack.c.b16 %v4859, %v4855
        %v5112 = vpack.c.b16 %v4860, %v4856
        %v5113 = vpack.c.b16 %v4865, %v4861
        %v5114 = vpack.c.b16 %v4866, %v4862
        %v5115 = vpack.c.b16 %v4867, %v4863
        %v5116 = vpack.c.b16 %v4868, %v4864
        %v5117 = vpack.c.b16 %v4873, %v4869
        %v5118 = vpack.c.b16 %v4874, %v4870
        %v5119 = vpack.c.b16 %v4875, %v4871
        %v5120 = vpack.c.b16 %v4876, %v4872
        %v5121 = vpack.c.b16 %v4881, %v4877
        %v5122 = vpack.c.b16 %v4882, %v4878
        %v5123 = vpack.c.b16 %v4883, %v4879
        %v5124 = vpack.c.b16 %v4884, %v4880
        %v5125 = vpack.c.b16 %v4889, %v4885
        %v5126 = vpack.c.b16 %v4890, %v4886
        %v5127 = vpack.c.b16 %v4891, %v4887
        %v5128 = vpack.c.b16 %v4892, %v4888
        %v5129 = vpack.c.b16 %v4897, %v4893
        %v5130 = vpack.c.b16 %v4898, %v4894
        %v5131 = vpack.c.b16 %v4899, %v4895
        %v5132 = vpack.c.b16 %v4900, %v4896
        %v5133 = vpack.c.b16 %v4905, %v4901
        %v5134 = vpack.c.b16 %v4906, %v4902
        %v5135 = vpack.c.b16 %v4907, %v4903
        %v5136 = vpack.c.b16 %v4908, %v4904
        %v5137 = vpack.c.b16 %v4913, %v4909
        %v5138 = vpack.c.b16 %v4914, %v4910
        %v5139 = vpack.c.b16 %v4915, %v4911
        %v5140 = vpack.c.b16 %v4916, %v4912
        %v5141 = vpack.c.b16 %v4921, %v4917
        %v5142 = vpack.c.b16 %v4922, %v4918
        %v5143 = vpack.c.b16 %v4923, %v4919
        %v5144 = vpack.c.b16 %v4924, %v4920
        %v5145 = vpack.c.b16 %v4929, %v4925
        %v5146 = vpack.c.b16 %v4930, %v4926
        %v5147 = vpack.c.b16 %v4931, %v4927
        %v5148 = vpack.c.b16 %v4932, %v4928
        %v5149 = vpack.c.b16 %v4937, %v4933
        %v5150 = vpack.c.b16 %v4938, %v4934
        %v5151 = vpack.c.b16 %v4939, %v4935
        %v5152 = vpack.c.b16 %v4940, %v4936
        %v5153 = vpack.c.b16 %v4945, %v4941
        %v5154 = vpack.c.b16 %v4946, %v4942
        %v5155 = vpack.c.b16 %v4947, %v4943
        %v5156 = vpack.c.b16 %v4948, %v4944
        %v5157 = vpack.c.b16 %v4953, %v4949
        %v5158 = vpack.c.b16 %v4954, %v4950
        %v5159 = vpack.c.b16 %v4955, %v4951
        %v5160 = vpack.c.b16 %v4956, %v4952
        %v5161 = vpack.c.b16 %v4961, %v4957
        %v5162 = vpack.c.b16 %v4962, %v4958
        %v5163 = vpack.c.b16 %v4963, %v4959
        %v5164 = vpack.c.b16 %v4964, %v4960
        %v5165 = vpack.c.b16 %v4969, %v4965
        %v5166 = vpack.c.b16 %v4970, %v4966
        %v5167 = vpack.c.b16 %v4971, %v4967
        %v5168 = vpack.c.b16 %v4972, %v4968
        %v5169 = vpack.c.b16 %v4977, %v4973
        %v5170 = vpack.c.b16 %v4978, %v4974
        %v5171 = vpack.c.b16 %v4979, %v4975
        %v5172 = vpack.c.b16 %v4980, %v4976
        %v5173 = vpack.c.b16 %v4985, %v4981
        %v5174 = vpack.c.b16 %v4986, %v4982
        %v5175 = vpack.c.b16 %v4987, %v4983
        %v5176 = vpack.c.b16 %v4988, %v4984
        %v5177 = vpack.c.b16 %v4993, %v4989
        %v5178 = vpack.c.b16 %v4994, %v4990
        %v5179 = vpack.c.b16 %v4995, %v4991
        %v5180 = vpack.c.b16 %v4996, %v4992
        %v5181 = vpack.c.b16 %v5001, %v4997
        %v5182 = vpack.c.b16 %v5002, %v4998
        %v5183 = vpack.c.b16 %v5003, %v4999
        %v5184 = vpack.c.b16 %v5004, %v5000
        %v5185 = vpack.c.b16 %v5009, %v5005
        %v5186 = vpack.c.b16 %v5010, %v5006
        %v5187 = vpack.c.b16 %v5011, %v5007
        %v5188 = vpack.c.b16 %v5012, %v5008
        %v5189 = vpack.c.b16 %v5017, %v5013
        %v5190 = vpack.c.b16 %v5018, %v5014
        %v5191 = vpack.c.b16 %v5019, %v5015
        %v5192 = vpack.c.b16 %v5020, %v5016
        %v5193 = vpack.c.b16 %v5025, %v5021
        %v5194 = vpack.c.b16 %v5026, %v5022
        %v5195 = vpack.c.b16 %v5027, %v5023
        %v5196 = vpack.c.b16 %v5028, %v5024
        %v5197 = vpack.c.b16 %v5033, %v5029
        %v5198 = vpack.c.b16 %v5034, %v5030
        %v5199 = vpack.c.b16 %v5035, %v5031
        %v5200 = vpack.c.b16 %v5036, %v5032
        %v5201 = vpack.c.b16 %v5041, %v5037
        %v5202 = vpack.c.b16 %v5042, %v5038
        %v5203 = vpack.c.b16 %v5043, %v5039
        %v5204 = vpack.c.b16 %v5044, %v5040
        %v5205 = vpack.c.b16 %v5049, %v5045
        %v5206 = vpack.c.b16 %v5050, %v5046
        %v5207 = vpack.c.b16 %v5051, %v5047
        %v5208 = vpack.c.b16 %v5052, %v5048
        %v5209 = vpack.c.b16 %v5057, %v5053
        %v5210 = vpack.c.b16 %v5058, %v5054
        %v5211 = vpack.c.b16 %v5059, %v5055
        %v5212 = vpack.c.b16 %v5060, %v5056
        %v5213 = vpack.c.b16 %v5065, %v5061
        %v5214 = vpack.c.b16 %v5066, %v5062
        %v5215 = vpack.c.b16 %v5067, %v5063
        %v5216 = vpack.c.b16 %v5068, %v5064
        %v5217 = vpack.c.b16 %v5073, %v5069
        %v5218 = vpack.c.b16 %v5074, %v5070
        %v5219 = vpack.c.b16 %v5075, %v5071
        %v5220 = vpack.c.b16 %v5076, %v5072
        %v5221 = vpack.c.b16 %v5081, %v5077
        %v5222 = vpack.c.b16 %v5082, %v5078
        %v5223 = vpack.c.b16 %v5083, %v5079
        %v5224 = vpack.c.b16 %v5084, %v5080
        %v5225 = vpack.c.b16 %v5089, %v5085
        %v5226 = vpack.c.b16 %v5090, %v5086
        %v5227 = vpack.c.b16 %v5091, %v5087
        %v5228 = vpack.c.b16 %v5092, %v5088
        %v5229 = vpack.c.b16 %v5097, %v5093
        %v5230 = vpack.c.b16 %v5098, %v5094
        %v5231 = vpack.c.b16 %v5099, %v5095
        %v5232 = vpack.c.b16 %v5100, %v5096
        %v5233 = vpack.c.b16 %v5105, %v5101
        %v5234 = vpack.c.b16 %v5106, %v5102
        %v5235 = vpack.c.b16 %v5107, %v5103
        %v5236 = vpack.c.b16 %v5108, %v5104
        %5365 = vmatprep.subr.bf16.mxu0 %v5138
        %5366 = vmatpush1.bf16.msra.mxu0 %v5137
        %5367 = vmatprep.subr.bf16.mxu0 %v5134
        %5368 = vmatpush1.bf16.msra.mxu0 %v5133
        %5369 = vmatprep.subr.bf16.mxu0 %v5130
        %5370 = vmatpush1.bf16.msra.mxu0 %v5129
        %5371 = vmatprep.subr.bf16.mxu0 %v5126
        %5372 = vmatpush1.bf16.msra.mxu0 %v5125
        %5373 = vmatprep.subr.bf16.mxu0 %v5122
        %5374 = vmatpush1.bf16.msra.mxu0 %v5121
        %5375 = vmatprep.subr.bf16.mxu0 %v5118
        %5376 = vmatpush1.bf16.msra.mxu0 %v5117
        %5377 = vmatprep.subr.bf16.mxu0 %v5114
        %5378 = vmatpush1.bf16.msra.mxu0 %v5113
        %5379 = vmatprep.subr.bf16.mxu0 %v5110
        %5380 = vmatpush1.bf16.msra.mxu0 %v5109
        %5381 = vmatprep.subr.bf16.mxu0 %v5170
        %5382 = vmatpush2.bf16.msra.mxu0 %v5169
        %5383 = vmatprep.subr.bf16.mxu0 %v5166
        %5384 = vmatpush2.bf16.msra.mxu0 %v5165
        %5385 = vmatprep.subr.bf16.mxu0 %v5162
        %5386 = vmatpush2.bf16.msra.mxu0 %v5161
        %5387 = vmatprep.subr.bf16.mxu0 %v5158
        %5388 = vmatpush2.bf16.msra.mxu0 %v5157
        %5389 = vmatprep.subr.bf16.mxu0 %v5154
        %5390 = vmatpush2.bf16.msra.mxu0 %v5153
        %5391 = vmatprep.subr.bf16.mxu0 %v5150
        %5392 = vmatpush2.bf16.msra.mxu0 %v5149
        %5393 = vmatprep.subr.bf16.mxu0 %v5146
        %5394 = vmatpush2.bf16.msra.mxu0 %v5145
        %5395 = vmatprep.subr.bf16.mxu0 %v5142
        %5396 = vmatpush2.bf16.msra.mxu0 %v5141
        %5397 = vmatprep.mubr.bf16.mxu0 %v4542
        %5398 = vmatmul.mubr.bf16.gmra.mxu0 %v4539
        %v5399 = vpop.f32.mrf.mxu0
        %v5400 = vadd.f32 0.0, %v5399
        %v5401 = vpop.f32.mrf.mxu0
        %v5402 = vadd.f32 0.0, %v5401
        %v5403 = vpop.f32.mrf.mxu0
        %v5404 = vadd.f32 0.0, %v5403
        %v5405 = vpop.f32.mrf.mxu0
        %v5406 = vadd.f32 0.0, %v5405
        %5407 = vmatprep.mubr.bf16.mxu0 %v4552
        %5408 = vmatmul.mubr.bf16.gmra.mxu0 %v4550
        %v5409 = vpop.f32.mrf.mxu0
        %v5410 = vadd.f32 0.0, %v5409
        %v5411 = vpop.f32.mrf.mxu0
        %v5412 = vadd.f32 0.0, %v5411
        %v5413 = vpop.f32.mrf.mxu0
        %v5414 = vadd.f32 0.0, %v5413
        %v5415 = vpop.f32.mrf.mxu0
        %v5416 = vadd.f32 0.0, %v5415
        %5417 = vmatprep.mubr.bf16.mxu0 %v4560
        %5418 = vmatmul.mubr.bf16.gmra.mxu0 %v4558
        %v5419 = vpop.f32.mrf.mxu0
        %v5420 = vadd.f32 0.0, %v5419
        %v5421 = vpop.f32.mrf.mxu0
        %v5422 = vadd.f32 0.0, %v5421
        %v5423 = vpop.f32.mrf.mxu0
        %v5424 = vadd.f32 0.0, %v5423
        %v5425 = vpop.f32.mrf.mxu0
        %v5426 = vadd.f32 0.0, %v5425
        %5427 = vmatprep.mubr.bf16.mxu0 %v4568
        %5428 = vmatmul.mubr.bf16.gmra.mxu0 %v4566
        %v5429 = vpop.f32.mrf.mxu0
        %v5430 = vadd.f32 0.0, %v5429
        %v5431 = vpop.f32.mrf.mxu0
        %v5432 = vadd.f32 0.0, %v5431
        %v5433 = vpop.f32.mrf.mxu0
        %v5434 = vadd.f32 0.0, %v5433
        %v5435 = vpop.f32.mrf.mxu0
        %v5436 = vadd.f32 0.0, %v5435
        %5437 = vmatprep.mubr.bf16.mxu0 %v4576
        %5438 = vmatmul.mubr.bf16.gmra.mxu0 %v4574
        %v5439 = vpop.f32.mrf.mxu0
        %v5440 = vadd.f32 0.0, %v5439
        %v5441 = vpop.f32.mrf.mxu0
        %v5442 = vadd.f32 0.0, %v5441
        %v5443 = vpop.f32.mrf.mxu0
        %v5444 = vadd.f32 0.0, %v5443
        %v5445 = vpop.f32.mrf.mxu0
        %v5446 = vadd.f32 0.0, %v5445
        %5447 = vmatprep.mubr.bf16.mxu0 %v4584
        %5448 = vmatmul.mubr.bf16.gmra.mxu0 %v4582
        %v5449 = vpop.f32.mrf.mxu0
        %v5450 = vadd.f32 0.0, %v5449
        %v5451 = vpop.f32.mrf.mxu0
        %v5452 = vadd.f32 0.0, %v5451
        %v5453 = vpop.f32.mrf.mxu0
        %v5454 = vadd.f32 0.0, %v5453
        %v5455 = vpop.f32.mrf.mxu0
        %v5456 = vadd.f32 0.0, %v5455
        %5457 = vmatprep.mubr.bf16.mxu0 %v4592
        %5458 = vmatmul.mubr.bf16.gmra.mxu0 %v4590
        %v5459 = vpop.f32.mrf.mxu0
        %v5460 = vadd.f32 0.0, %v5459
        %v5461 = vpop.f32.mrf.mxu0
        %v5462 = vadd.f32 0.0, %v5461
        %v5463 = vpop.f32.mrf.mxu0
        %v5464 = vadd.f32 0.0, %v5463
        %v5465 = vpop.f32.mrf.mxu0
        %v5466 = vadd.f32 0.0, %v5465
        %5467 = vmatprep.mubr.bf16.mxu0 %v4600
        %5468 = vmatmul.mubr.bf16.gmra.mxu0 %v4598
        %v5469 = vpop.f32.mrf.mxu0
        %v5470 = vadd.f32 0.0, %v5469
        %v5471 = vpop.f32.mrf.mxu0
        %v5472 = vadd.f32 0.0, %v5471
        %v5473 = vpop.f32.mrf.mxu0
        %v5474 = vadd.f32 0.0, %v5473
        %v5475 = vpop.f32.mrf.mxu0
        %v5476 = vadd.f32 0.0, %v5475
        %5477 = vmatprep.mubr.bf16.mxu0 %v4608
        %5478 = vmatmul.mubr.bf16.gmra.mxu0 %v4606
        %v5479 = vpop.f32.mrf.mxu0
        %v5480 = vadd.f32 0.0, %v5479
        %v5481 = vpop.f32.mrf.mxu0
        %v5482 = vadd.f32 0.0, %v5481
        %v5483 = vpop.f32.mrf.mxu0
        %v5484 = vadd.f32 0.0, %v5483
        %v5485 = vpop.f32.mrf.mxu0
        %v5486 = vadd.f32 0.0, %v5485
        %5487 = vmatprep.mubr.bf16.mxu0 %v4616
        %5488 = vmatmul.mubr.bf16.gmra.mxu0 %v4614
        %v5489 = vpop.f32.mrf.mxu0
        %v5490 = vadd.f32 0.0, %v5489
        %v5491 = vpop.f32.mrf.mxu0
        %v5492 = vadd.f32 0.0, %v5491
        %v5493 = vpop.f32.mrf.mxu0
        %v5494 = vadd.f32 0.0, %v5493
        %v5495 = vpop.f32.mrf.mxu0
        %v5496 = vadd.f32 0.0, %v5495
        %5497 = vmatprep.mubr.bf16.mxu0 %v4624
        %5498 = vmatmul.mubr.bf16.gmra.mxu0 %v4622
        %v5499 = vpop.f32.mrf.mxu0
        %v5500 = vadd.f32 0.0, %v5499
        %v5501 = vpop.f32.mrf.mxu0
        %v5502 = vadd.f32 0.0, %v5501
        %v5503 = vpop.f32.mrf.mxu0
        %v5504 = vadd.f32 0.0, %v5503
        %v5505 = vpop.f32.mrf.mxu0
        %v5506 = vadd.f32 0.0, %v5505
        %5507 = vmatprep.mubr.bf16.mxu0 %v4632
        %5508 = vmatmul.mubr.bf16.gmra.mxu0 %v4630
        %v5509 = vpop.f32.mrf.mxu0
        %v5510 = vadd.f32 0.0, %v5509
        %v5511 = vpop.f32.mrf.mxu0
        %v5512 = vadd.f32 0.0, %v5511
        %v5513 = vpop.f32.mrf.mxu0
        %v5514 = vadd.f32 0.0, %v5513
        %v5515 = vpop.f32.mrf.mxu0
        %v5516 = vadd.f32 0.0, %v5515
        %5517 = vmatprep.mubr.bf16.mxu0 %v4640
        %5518 = vmatmul.mubr.bf16.gmra.mxu0 %v4638
        %v5519 = vpop.f32.mrf.mxu0
        %v5520 = vadd.f32 0.0, %v5519
        %v5521 = vpop.f32.mrf.mxu0
        %v5522 = vadd.f32 0.0, %v5521
        %v5523 = vpop.f32.mrf.mxu0
        %v5524 = vadd.f32 0.0, %v5523
        %v5525 = vpop.f32.mrf.mxu0
        %v5526 = vadd.f32 0.0, %v5525
        %5527 = vmatprep.mubr.bf16.mxu0 %v4648
        %5528 = vmatmul.mubr.bf16.gmra.mxu0 %v4646
        %v5529 = vpop.f32.mrf.mxu0
        %v5530 = vadd.f32 0.0, %v5529
        %v5531 = vpop.f32.mrf.mxu0
        %v5532 = vadd.f32 0.0, %v5531
        %v5533 = vpop.f32.mrf.mxu0
        %v5534 = vadd.f32 0.0, %v5533
        %v5535 = vpop.f32.mrf.mxu0
        %v5536 = vadd.f32 0.0, %v5535
        %5537 = vmatprep.mubr.bf16.mxu0 %v4656
        %5538 = vmatmul.mubr.bf16.gmra.mxu0 %v4654
        %v5539 = vpop.f32.mrf.mxu0
        %v5540 = vadd.f32 0.0, %v5539
        %v5541 = vpop.f32.mrf.mxu0
        %v5542 = vadd.f32 0.0, %v5541
        %v5543 = vpop.f32.mrf.mxu0
        %v5544 = vadd.f32 0.0, %v5543
        %v5545 = vpop.f32.mrf.mxu0
        %v5546 = vadd.f32 0.0, %v5545
        %5547 = vmatprep.mubr.bf16.mxu0 %v4655
        %5548 = vmatmul.mubr.bf16.gmra.mxu0 %v4653
        %v5549 = vpop.f32.mrf.mxu0
        %v5550 = vadd.f32 0.0, %v5549
        %v5551 = vpop.f32.mrf.mxu0
        %v5552 = vadd.f32 0.0, %v5551
        %v5553 = vpop.f32.mrf.mxu0
        %v5554 = vadd.f32 0.0, %v5553
        %v5555 = vpop.f32.mrf.mxu0
        %v5556 = vadd.f32 0.0, %v5555
        %5557 = vdwg.mxu0
        %5558 = vmatprep.subr.bf16.mxu0 %v5202
        %5559 = vmatpush1.bf16.msra.mxu0 %v5201
        %5560 = vmatprep.subr.bf16.mxu0 %v5198
        %5561 = vmatpush1.bf16.msra.mxu0 %v5197
        %5562 = vmatprep.subr.bf16.mxu0 %v5194
        %5563 = vmatpush1.bf16.msra.mxu0 %v5193
        %5564 = vmatprep.subr.bf16.mxu0 %v5190
        %5565 = vmatpush1.bf16.msra.mxu0 %v5189
        %5566 = vmatprep.subr.bf16.mxu0 %v5186
        %5567 = vmatpush1.bf16.msra.mxu0 %v5185
        %5568 = vmatprep.subr.bf16.mxu0 %v5182
        %5569 = vmatpush1.bf16.msra.mxu0 %v5181
        %5570 = vmatprep.subr.bf16.mxu0 %v5178
        %5571 = vmatpush1.bf16.msra.mxu0 %v5177
        %5572 = vmatprep.subr.bf16.mxu0 %v5174
        %5573 = vmatpush1.bf16.msra.mxu0 %v5173
        %5574 = vmatprep.subr.bf16.mxu0 %v5234
        %5575 = vmatpush2.bf16.msra.mxu0 %v5233
        %5576 = vmatprep.subr.bf16.mxu0 %v5230
        %5577 = vmatpush2.bf16.msra.mxu0 %v5229
        %5578 = vmatprep.subr.bf16.mxu0 %v5226
        %5579 = vmatpush2.bf16.msra.mxu0 %v5225
        %5580 = vmatprep.subr.bf16.mxu0 %v5222
        %5581 = vmatpush2.bf16.msra.mxu0 %v5221
        %5582 = vmatprep.subr.bf16.mxu0 %v5218
        %5583 = vmatpush2.bf16.msra.mxu0 %v5217
        %5584 = vmatprep.subr.bf16.mxu0 %v5214
        %5585 = vmatpush2.bf16.msra.mxu0 %v5213
        %5586 = vmatprep.subr.bf16.mxu0 %v5210
        %5587 = vmatpush2.bf16.msra.mxu0 %v5209
        %5588 = vmatprep.subr.bf16.mxu0 %v5206
        %5589 = vmatpush2.bf16.msra.mxu0 %v5205
        %5590 = vmatprep.mubr.bf16.mxu0 %v4548
        %5591 = vmatmul.mubr.bf16.gmra.mxu0 %v4545
        %v5592 = vpop.f32.mrf.mxu0
        %v5593 = vadd.f32 %v5400, %v5592
        %v5594 = vpop.f32.mrf.mxu0
        %v5595 = vadd.f32 %v5402, %v5594
        %v5596 = vpop.f32.mrf.mxu0
        %v5597 = vadd.f32 %v5404, %v5596
        %v5598 = vpop.f32.mrf.mxu0
        %v5599 = vadd.f32 %v5406, %v5598
        %5600 = vmatprep.mubr.bf16.mxu0 %v4556
        %5601 = vmatmul.mubr.bf16.gmra.mxu0 %v4554
        %v5602 = vpop.f32.mrf.mxu0
        %v5603 = vadd.f32 %v5410, %v5602
        %v5604 = vpop.f32.mrf.mxu0
        %v5605 = vadd.f32 %v5412, %v5604
        %v5606 = vpop.f32.mrf.mxu0
        %v5607 = vadd.f32 %v5414, %v5606
        %v5608 = vpop.f32.mrf.mxu0
        %v5609 = vadd.f32 %v5416, %v5608
        %5610 = vmatprep.mubr.bf16.mxu0 %v4564
        %5611 = vmatmul.mubr.bf16.gmra.mxu0 %v4562
        %v5612 = vpop.f32.mrf.mxu0
        %v5613 = vadd.f32 %v5420, %v5612
        %v5614 = vpop.f32.mrf.mxu0
        %v5615 = vadd.f32 %v5422, %v5614
        %v5616 = vpop.f32.mrf.mxu0
        %v5617 = vadd.f32 %v5424, %v5616
        %v5618 = vpop.f32.mrf.mxu0
        %v5619 = vadd.f32 %v5426, %v5618
        %5620 = vmatprep.mubr.bf16.mxu0 %v4572
        %5621 = vmatmul.mubr.bf16.gmra.mxu0 %v4570
        %v5622 = vpop.f32.mrf.mxu0
        %v5623 = vadd.f32 %v5430, %v5622
        %v5624 = vpop.f32.mrf.mxu0
        %v5625 = vadd.f32 %v5432, %v5624
        %v5626 = vpop.f32.mrf.mxu0
        %v5627 = vadd.f32 %v5434, %v5626
        %v5628 = vpop.f32.mrf.mxu0
        %v5629 = vadd.f32 %v5436, %v5628
        %5630 = vmatprep.mubr.bf16.mxu0 %v4580
        %5631 = vmatmul.mubr.bf16.gmra.mxu0 %v4578
        %v5632 = vpop.f32.mrf.mxu0
        %v5633 = vadd.f32 %v5440, %v5632
        %v5634 = vpop.f32.mrf.mxu0
        %v5635 = vadd.f32 %v5442, %v5634
        %v5636 = vpop.f32.mrf.mxu0
        %v5637 = vadd.f32 %v5444, %v5636
        %v5638 = vpop.f32.mrf.mxu0
        %v5639 = vadd.f32 %v5446, %v5638
        %5640 = vmatprep.mubr.bf16.mxu0 %v4588
        %5641 = vmatmul.mubr.bf16.gmra.mxu0 %v4586
        %v5642 = vpop.f32.mrf.mxu0
        %v5643 = vadd.f32 %v5450, %v5642
        %v5644 = vpop.f32.mrf.mxu0
        %v5645 = vadd.f32 %v5452, %v5644
        %v5646 = vpop.f32.mrf.mxu0
        %v5647 = vadd.f32 %v5454, %v5646
        %v5648 = vpop.f32.mrf.mxu0
        %v5649 = vadd.f32 %v5456, %v5648
        %5650 = vmatprep.mubr.bf16.mxu0 %v4596
        %5651 = vmatmul.mubr.bf16.gmra.mxu0 %v4594
        %v5652 = vpop.f32.mrf.mxu0
        %v5653 = vadd.f32 %v5460, %v5652
        %v5654 = vpop.f32.mrf.mxu0
        %v5655 = vadd.f32 %v5462, %v5654
        %v5656 = vpop.f32.mrf.mxu0
        %v5657 = vadd.f32 %v5464, %v5656
        %v5658 = vpop.f32.mrf.mxu0
        %v5659 = vadd.f32 %v5466, %v5658
        %5660 = vmatprep.mubr.bf16.mxu0 %v4604
        %5661 = vmatmul.mubr.bf16.gmra.mxu0 %v4602
        %v5662 = vpop.f32.mrf.mxu0
        %v5663 = vadd.f32 %v5470, %v5662
        %v5664 = vpop.f32.mrf.mxu0
        %v5665 = vadd.f32 %v5472, %v5664
        %v5666 = vpop.f32.mrf.mxu0
        %v5667 = vadd.f32 %v5474, %v5666
        %v5668 = vpop.f32.mrf.mxu0
        %v5669 = vadd.f32 %v5476, %v5668
        %5670 = vmatprep.mubr.bf16.mxu0 %v4612
        %5671 = vmatmul.mubr.bf16.gmra.mxu0 %v4610
        %v5672 = vpop.f32.mrf.mxu0
        %v5673 = vadd.f32 %v5480, %v5672
        %v5674 = vpop.f32.mrf.mxu0
        %v5675 = vadd.f32 %v5482, %v5674
        %v5676 = vpop.f32.mrf.mxu0
        %v5677 = vadd.f32 %v5484, %v5676
        %v5678 = vpop.f32.mrf.mxu0
        %v5679 = vadd.f32 %v5486, %v5678
        %5680 = vmatprep.mubr.bf16.mxu0 %v4620
        %5681 = vmatmul.mubr.bf16.gmra.mxu0 %v4618
        %v5682 = vpop.f32.mrf.mxu0
        %v5683 = vadd.f32 %v5490, %v5682
        %v5684 = vpop.f32.mrf.mxu0
        %v5685 = vadd.f32 %v5492, %v5684
        %v5686 = vpop.f32.mrf.mxu0
        %v5687 = vadd.f32 %v5494, %v5686
        %v5688 = vpop.f32.mrf.mxu0
        %v5689 = vadd.f32 %v5496, %v5688
        %5690 = vmatprep.mubr.bf16.mxu0 %v4628
        %5691 = vmatmul.mubr.bf16.gmra.mxu0 %v4626
        %v5692 = vpop.f32.mrf.mxu0
        %v5693 = vadd.f32 %v5500, %v5692
        %v5694 = vpop.f32.mrf.mxu0
        %v5695 = vadd.f32 %v5502, %v5694
        %v5696 = vpop.f32.mrf.mxu0
        %v5697 = vadd.f32 %v5504, %v5696
        %v5698 = vpop.f32.mrf.mxu0
        %v5699 = vadd.f32 %v5506, %v5698
        %5700 = vmatprep.mubr.bf16.mxu0 %v4636
        %5701 = vmatmul.mubr.bf16.gmra.mxu0 %v4634
        %v5702 = vpop.f32.mrf.mxu0
        %v5703 = vadd.f32 %v5510, %v5702
        %v5704 = vpop.f32.mrf.mxu0
        %v5705 = vadd.f32 %v5512, %v5704
        %v5706 = vpop.f32.mrf.mxu0
        %v5707 = vadd.f32 %v5514, %v5706
        %v5708 = vpop.f32.mrf.mxu0
        %v5709 = vadd.f32 %v5516, %v5708
        %5710 = vmatprep.mubr.bf16.mxu0 %v4644
        %5711 = vmatmul.mubr.bf16.gmra.mxu0 %v4642
        %v5712 = vpop.f32.mrf.mxu0
        %v5713 = vadd.f32 %v5520, %v5712
        %v5714 = vpop.f32.mrf.mxu0
        %v5715 = vadd.f32 %v5522, %v5714
        %v5716 = vpop.f32.mrf.mxu0
        %v5717 = vadd.f32 %v5524, %v5716
        %v5718 = vpop.f32.mrf.mxu0
        %v5719 = vadd.f32 %v5526, %v5718
        %5720 = vmatprep.mubr.bf16.mxu0 %v4652
        %5721 = vmatmul.mubr.bf16.gmra.mxu0 %v4650
        %v5722 = vpop.f32.mrf.mxu0
        %v5723 = vadd.f32 %v5530, %v5722
        %v5724 = vpop.f32.mrf.mxu0
        %v5725 = vadd.f32 %v5532, %v5724
        %v5726 = vpop.f32.mrf.mxu0
        %v5727 = vadd.f32 %v5534, %v5726
        %v5728 = vpop.f32.mrf.mxu0
        %v5729 = vadd.f32 %v5536, %v5728
        %5730 = vmatprep.mubr.bf16.mxu0 %v4660
        %5731 = vmatmul.mubr.bf16.gmra.mxu0 %v4658
        %v5732 = vpop.f32.mrf.mxu0
        %v5733 = vadd.f32 %v5540, %v5732
        %v5734 = vpop.f32.mrf.mxu0
        %v5735 = vadd.f32 %v5542, %v5734
        %v5736 = vpop.f32.mrf.mxu0
        %v5737 = vadd.f32 %v5544, %v5736
        %v5738 = vpop.f32.mrf.mxu0
        %v5739 = vadd.f32 %v5546, %v5738
        %5740 = vmatprep.mubr.bf16.mxu0 %v4659
        %5741 = vmatmul.mubr.bf16.gmra.mxu0 %v4657
        %v5742 = vpop.f32.mrf.mxu0
        %v5743 = vadd.f32 %v5550, %v5742
        %v5744 = vpop.f32.mrf.mxu0
        %v5745 = vadd.f32 %v5552, %v5744
        %v5746 = vpop.f32.mrf.mxu0
        %v5747 = vadd.f32 %v5554, %v5746
        %v5748 = vpop.f32.mrf.mxu0
        %v5749 = vadd.f32 %v5556, %v5748
        %5750 = vdwg.mxu0
        %5751 = vmatprep.subr.bf16.mxu0 %v5140
        %5752 = vmatpush1.bf16.msra.mxu0 %v5139
        %5753 = vmatprep.subr.bf16.mxu0 %v5136
        %5754 = vmatpush1.bf16.msra.mxu0 %v5135
        %5755 = vmatprep.subr.bf16.mxu0 %v5132
        %5756 = vmatpush1.bf16.msra.mxu0 %v5131
        %5757 = vmatprep.subr.bf16.mxu0 %v5128
        %5758 = vmatpush1.bf16.msra.mxu0 %v5127
        %5759 = vmatprep.subr.bf16.mxu0 %v5124
        %5760 = vmatpush1.bf16.msra.mxu0 %v5123
        %5761 = vmatprep.subr.bf16.mxu0 %v5120
        %5762 = vmatpush1.bf16.msra.mxu0 %v5119
        %5763 = vmatprep.subr.bf16.mxu0 %v5116
        %5764 = vmatpush1.bf16.msra.mxu0 %v5115
        %5765 = vmatprep.subr.bf16.mxu0 %v5112
        %5766 = vmatpush1.bf16.msra.mxu0 %v5111
        %5767 = vmatprep.subr.bf16.mxu0 %v5172
        %5768 = vmatpush2.bf16.msra.mxu0 %v5171
        %5769 = vmatprep.subr.bf16.mxu0 %v5168
        %5770 = vmatpush2.bf16.msra.mxu0 %v5167
        %5771 = vmatprep.subr.bf16.mxu0 %v5164
        %5772 = vmatpush2.bf16.msra.mxu0 %v5163
        %5773 = vmatprep.subr.bf16.mxu0 %v5160
        %5774 = vmatpush2.bf16.msra.mxu0 %v5159
        %5775 = vmatprep.subr.bf16.mxu0 %v5156
        %5776 = vmatpush2.bf16.msra.mxu0 %v5155
        %5777 = vmatprep.subr.bf16.mxu0 %v5152
        %5778 = vmatpush2.bf16.msra.mxu0 %v5151
        %5779 = vmatprep.subr.bf16.mxu0 %v5148
        %5780 = vmatpush2.bf16.msra.mxu0 %v5147
        %5781 = vmatprep.subr.bf16.mxu0 %v5144
        %5782 = vmatpush2.bf16.msra.mxu0 %v5143
        %5783 = vmatprep.mubr.bf16.mxu0 %v4542
        %5784 = vmatmul.mubr.bf16.gmra.mxu0 %v4539
        %v5785 = vpop.f32.mrf.mxu0
        %v5786 = vadd.f32 0.0, %v5785
        %v5787 = vpop.f32.mrf.mxu0
        %v5788 = vadd.f32 0.0, %v5787
        %v5789 = vpop.f32.mrf.mxu0
        %v5790 = vadd.f32 0.0, %v5789
        %v5791 = vpop.f32.mrf.mxu0
        %v5792 = vadd.f32 0.0, %v5791
        %5793 = vmatprep.mubr.bf16.mxu0 %v4552
        %5794 = vmatmul.mubr.bf16.gmra.mxu0 %v4550
        %v5795 = vpop.f32.mrf.mxu0
        %v5796 = vadd.f32 0.0, %v5795
        %v5797 = vpop.f32.mrf.mxu0
        %v5798 = vadd.f32 0.0, %v5797
        %v5799 = vpop.f32.mrf.mxu0
        %v5800 = vadd.f32 0.0, %v5799
        %v5801 = vpop.f32.mrf.mxu0
        %v5802 = vadd.f32 0.0, %v5801
        %5803 = vmatprep.mubr.bf16.mxu0 %v4560
        %5804 = vmatmul.mubr.bf16.gmra.mxu0 %v4558
        %v5805 = vpop.f32.mrf.mxu0
        %v5806 = vadd.f32 0.0, %v5805
        %v5807 = vpop.f32.mrf.mxu0
        %v5808 = vadd.f32 0.0, %v5807
        %v5809 = vpop.f32.mrf.mxu0
        %v5810 = vadd.f32 0.0, %v5809
        %v5811 = vpop.f32.mrf.mxu0
        %v5812 = vadd.f32 0.0, %v5811
        %5813 = vmatprep.mubr.bf16.mxu0 %v4568
        %5814 = vmatmul.mubr.bf16.gmra.mxu0 %v4566
        %v5815 = vpop.f32.mrf.mxu0
        %v5816 = vadd.f32 0.0, %v5815
        %v5817 = vpop.f32.mrf.mxu0
        %v5818 = vadd.f32 0.0, %v5817
        %v5819 = vpop.f32.mrf.mxu0
        %v5820 = vadd.f32 0.0, %v5819
        %v5821 = vpop.f32.mrf.mxu0
        %v5822 = vadd.f32 0.0, %v5821
        %5823 = vmatprep.mubr.bf16.mxu0 %v4576
        %5824 = vmatmul.mubr.bf16.gmra.mxu0 %v4574
        %v5825 = vpop.f32.mrf.mxu0
        %v5826 = vadd.f32 0.0, %v5825
        %v5827 = vpop.f32.mrf.mxu0
        %v5828 = vadd.f32 0.0, %v5827
        %v5829 = vpop.f32.mrf.mxu0
        %v5830 = vadd.f32 0.0, %v5829
        %v5831 = vpop.f32.mrf.mxu0
        %v5832 = vadd.f32 0.0, %v5831
        %5833 = vmatprep.mubr.bf16.mxu0 %v4584
        %5834 = vmatmul.mubr.bf16.gmra.mxu0 %v4582
        %v5835 = vpop.f32.mrf.mxu0
        %v5836 = vadd.f32 0.0, %v5835
        %v5837 = vpop.f32.mrf.mxu0
        %v5838 = vadd.f32 0.0, %v5837
        %v5839 = vpop.f32.mrf.mxu0
        %v5840 = vadd.f32 0.0, %v5839
        %v5841 = vpop.f32.mrf.mxu0
        %v5842 = vadd.f32 0.0, %v5841
        %5843 = vmatprep.mubr.bf16.mxu0 %v4592
        %5844 = vmatmul.mubr.bf16.gmra.mxu0 %v4590
        %v5845 = vpop.f32.mrf.mxu0
        %v5846 = vadd.f32 0.0, %v5845
        %v5847 = vpop.f32.mrf.mxu0
        %v5848 = vadd.f32 0.0, %v5847
        %v5849 = vpop.f32.mrf.mxu0
        %v5850 = vadd.f32 0.0, %v5849
        %v5851 = vpop.f32.mrf.mxu0
        %v5852 = vadd.f32 0.0, %v5851
        %5853 = vmatprep.mubr.bf16.mxu0 %v4600
        %5854 = vmatmul.mubr.bf16.gmra.mxu0 %v4598
        %v5855 = vpop.f32.mrf.mxu0
        %v5856 = vadd.f32 0.0, %v5855
        %v5857 = vpop.f32.mrf.mxu0
        %v5858 = vadd.f32 0.0, %v5857
        %v5859 = vpop.f32.mrf.mxu0
        %v5860 = vadd.f32 0.0, %v5859
        %v5861 = vpop.f32.mrf.mxu0
        %v5862 = vadd.f32 0.0, %v5861
        %5863 = vmatprep.mubr.bf16.mxu0 %v4608
        %5864 = vmatmul.mubr.bf16.gmra.mxu0 %v4606
        %v5865 = vpop.f32.mrf.mxu0
        %v5866 = vadd.f32 0.0, %v5865
        %v5867 = vpop.f32.mrf.mxu0
        %v5868 = vadd.f32 0.0, %v5867
        %v5869 = vpop.f32.mrf.mxu0
        %v5870 = vadd.f32 0.0, %v5869
        %v5871 = vpop.f32.mrf.mxu0
        %v5872 = vadd.f32 0.0, %v5871
        %5873 = vmatprep.mubr.bf16.mxu0 %v4616
        %5874 = vmatmul.mubr.bf16.gmra.mxu0 %v4614
        %v5875 = vpop.f32.mrf.mxu0
        %v5876 = vadd.f32 0.0, %v5875
        %v5877 = vpop.f32.mrf.mxu0
        %v5878 = vadd.f32 0.0, %v5877
        %v5879 = vpop.f32.mrf.mxu0
        %v5880 = vadd.f32 0.0, %v5879
        %v5881 = vpop.f32.mrf.mxu0
        %v5882 = vadd.f32 0.0, %v5881
        %5883 = vmatprep.mubr.bf16.mxu0 %v4624
        %5884 = vmatmul.mubr.bf16.gmra.mxu0 %v4622
        %v5885 = vpop.f32.mrf.mxu0
        %v5886 = vadd.f32 0.0, %v5885
        %v5887 = vpop.f32.mrf.mxu0
        %v5888 = vadd.f32 0.0, %v5887
        %v5889 = vpop.f32.mrf.mxu0
        %v5890 = vadd.f32 0.0, %v5889
        %v5891 = vpop.f32.mrf.mxu0
        %v5892 = vadd.f32 0.0, %v5891
        %5893 = vmatprep.mubr.bf16.mxu0 %v4632
        %5894 = vmatmul.mubr.bf16.gmra.mxu0 %v4630
        %v5895 = vpop.f32.mrf.mxu0
        %v5896 = vadd.f32 0.0, %v5895
        %v5897 = vpop.f32.mrf.mxu0
        %v5898 = vadd.f32 0.0, %v5897
        %v5899 = vpop.f32.mrf.mxu0
        %v5900 = vadd.f32 0.0, %v5899
        %v5901 = vpop.f32.mrf.mxu0
        %v5902 = vadd.f32 0.0, %v5901
        %5903 = vmatprep.mubr.bf16.mxu0 %v4640
        %5904 = vmatmul.mubr.bf16.gmra.mxu0 %v4638
        %v5905 = vpop.f32.mrf.mxu0
        %v5906 = vadd.f32 0.0, %v5905
        %v5907 = vpop.f32.mrf.mxu0
        %v5908 = vadd.f32 0.0, %v5907
        %v5909 = vpop.f32.mrf.mxu0
        %v5910 = vadd.f32 0.0, %v5909
        %v5911 = vpop.f32.mrf.mxu0
        %v5912 = vadd.f32 0.0, %v5911
        %5913 = vmatprep.mubr.bf16.mxu0 %v4648
        %5914 = vmatmul.mubr.bf16.gmra.mxu0 %v4646
        %v5915 = vpop.f32.mrf.mxu0
        %v5916 = vadd.f32 0.0, %v5915
        %v5917 = vpop.f32.mrf.mxu0
        %v5918 = vadd.f32 0.0, %v5917
        %v5919 = vpop.f32.mrf.mxu0
        %v5920 = vadd.f32 0.0, %v5919
        %v5921 = vpop.f32.mrf.mxu0
        %v5922 = vadd.f32 0.0, %v5921
        %5923 = vmatprep.mubr.bf16.mxu0 %v4656
        %5924 = vmatmul.mubr.bf16.gmra.mxu0 %v4654
        %v5925 = vpop.f32.mrf.mxu0
        %v5926 = vadd.f32 0.0, %v5925
        %v5927 = vpop.f32.mrf.mxu0
        %v5928 = vadd.f32 0.0, %v5927
        %v5929 = vpop.f32.mrf.mxu0
        %v5930 = vadd.f32 0.0, %v5929
        %v5931 = vpop.f32.mrf.mxu0
        %v5932 = vadd.f32 0.0, %v5931
        %5933 = vmatprep.mubr.bf16.mxu0 %v4655
        %5934 = vmatmul.mubr.bf16.gmra.mxu0 %v4653
        %v5935 = vpop.f32.mrf.mxu0
        %v5936 = vadd.f32 0.0, %v5935
        %v5937 = vpop.f32.mrf.mxu0
        %v5938 = vadd.f32 0.0, %v5937
        %v5939 = vpop.f32.mrf.mxu0
        %v5940 = vadd.f32 0.0, %v5939
        %v5941 = vpop.f32.mrf.mxu0
        %v5942 = vadd.f32 0.0, %v5941
        %5943 = vdwg.mxu0
        %5944 = vmatprep.subr.bf16.mxu0 %v5204
        %5945 = vmatpush1.bf16.msra.mxu0 %v5203
        %5946 = vmatprep.subr.bf16.mxu0 %v5200
        %5947 = vmatpush1.bf16.msra.mxu0 %v5199
        %5948 = vmatprep.subr.bf16.mxu0 %v5196
        %5949 = vmatpush1.bf16.msra.mxu0 %v5195
        %5950 = vmatprep.subr.bf16.mxu0 %v5192
        %5951 = vmatpush1.bf16.msra.mxu0 %v5191
        %5952 = vmatprep.subr.bf16.mxu0 %v5188
        %5953 = vmatpush1.bf16.msra.mxu0 %v5187
        %5954 = vmatprep.subr.bf16.mxu0 %v5184
        %5955 = vmatpush1.bf16.msra.mxu0 %v5183
        %5956 = vmatprep.subr.bf16.mxu0 %v5180
        %5957 = vmatpush1.bf16.msra.mxu0 %v5179
        %5958 = vmatprep.subr.bf16.mxu0 %v5176
        %5959 = vmatpush1.bf16.msra.mxu0 %v5175
        %5960 = vmatprep.subr.bf16.mxu0 %v5236
        %5961 = vmatpush2.bf16.msra.mxu0 %v5235
        %5962 = vmatprep.subr.bf16.mxu0 %v5232
        %5963 = vmatpush2.bf16.msra.mxu0 %v5231
        %5964 = vmatprep.subr.bf16.mxu0 %v5228
        %5965 = vmatpush2.bf16.msra.mxu0 %v5227
        %5966 = vmatprep.subr.bf16.mxu0 %v5224
        %5967 = vmatpush2.bf16.msra.mxu0 %v5223
        %5968 = vmatprep.subr.bf16.mxu0 %v5220
        %5969 = vmatpush2.bf16.msra.mxu0 %v5219
        %5970 = vmatprep.subr.bf16.mxu0 %v5216
        %5971 = vmatpush2.bf16.msra.mxu0 %v5215
        %5972 = vmatprep.subr.bf16.mxu0 %v5212
        %5973 = vmatpush2.bf16.msra.mxu0 %v5211
        %5974 = vmatprep.subr.bf16.mxu0 %v5208
        %5975 = vmatpush2.bf16.msra.mxu0 %v5207
        %5976 = vmatprep.mubr.bf16.mxu0 %v4548
        %5977 = vmatmul.mubr.bf16.gmra.mxu0 %v4545
        %v5978 = vpop.f32.mrf.mxu0
        %v5979 = vadd.f32 %v5786, %v5978
        %v5980 = vpop.f32.mrf.mxu0
        %v5981 = vadd.f32 %v5788, %v5980
        %v5982 = vpop.f32.mrf.mxu0
        %v5983 = vadd.f32 %v5790, %v5982
        %v5984 = vpop.f32.mrf.mxu0
        %v5985 = vadd.f32 %v5792, %v5984
        %5986 = vmatprep.mubr.bf16.mxu0 %v4556
        %5987 = vmatmul.mubr.bf16.gmra.mxu0 %v4554
        %v5988 = vpop.f32.mrf.mxu0
        %v5989 = vadd.f32 %v5796, %v5988
        %v5990 = vpop.f32.mrf.mxu0
        %v5991 = vadd.f32 %v5798, %v5990
        %v5992 = vpop.f32.mrf.mxu0
        %v5993 = vadd.f32 %v5800, %v5992
        %v5994 = vpop.f32.mrf.mxu0
        %v5995 = vadd.f32 %v5802, %v5994
        %5996 = vmatprep.mubr.bf16.mxu0 %v4564
        %5997 = vmatmul.mubr.bf16.gmra.mxu0 %v4562
        %v5998 = vpop.f32.mrf.mxu0
        %v5999 = vadd.f32 %v5806, %v5998
        %v6000 = vpop.f32.mrf.mxu0
        %v6001 = vadd.f32 %v5808, %v6000
        %v6002 = vpop.f32.mrf.mxu0
        %v6003 = vadd.f32 %v5810, %v6002
        %v6004 = vpop.f32.mrf.mxu0
        %v6005 = vadd.f32 %v5812, %v6004
        %6006 = vmatprep.mubr.bf16.mxu0 %v4572
        %6007 = vmatmul.mubr.bf16.gmra.mxu0 %v4570
        %v6008 = vpop.f32.mrf.mxu0
        %v6009 = vadd.f32 %v5816, %v6008
        %v6010 = vpop.f32.mrf.mxu0
        %v6011 = vadd.f32 %v5818, %v6010
        %v6012 = vpop.f32.mrf.mxu0
        %v6013 = vadd.f32 %v5820, %v6012
        %v6014 = vpop.f32.mrf.mxu0
        %v6015 = vadd.f32 %v5822, %v6014
        %6016 = vmatprep.mubr.bf16.mxu0 %v4580
        %6017 = vmatmul.mubr.bf16.gmra.mxu0 %v4578
        %v6018 = vpop.f32.mrf.mxu0
        %v6019 = vadd.f32 %v5826, %v6018
        %v6020 = vpop.f32.mrf.mxu0
        %v6021 = vadd.f32 %v5828, %v6020
        %v6022 = vpop.f32.mrf.mxu0
        %v6023 = vadd.f32 %v5830, %v6022
        %v6024 = vpop.f32.mrf.mxu0
        %v6025 = vadd.f32 %v5832, %v6024
        %6026 = vmatprep.mubr.bf16.mxu0 %v4588
        %6027 = vmatmul.mubr.bf16.gmra.mxu0 %v4586
        %v6028 = vpop.f32.mrf.mxu0
        %v6029 = vadd.f32 %v5836, %v6028
        %v6030 = vpop.f32.mrf.mxu0
        %v6031 = vadd.f32 %v5838, %v6030
        %v6032 = vpop.f32.mrf.mxu0
        %v6033 = vadd.f32 %v5840, %v6032
        %v6034 = vpop.f32.mrf.mxu0
        %v6035 = vadd.f32 %v5842, %v6034
        %6036 = vmatprep.mubr.bf16.mxu0 %v4596
        %6037 = vmatmul.mubr.bf16.gmra.mxu0 %v4594
        %v6038 = vpop.f32.mrf.mxu0
        %v6039 = vadd.f32 %v5846, %v6038
        %v6040 = vpop.f32.mrf.mxu0
        %v6041 = vadd.f32 %v5848, %v6040
        %v6042 = vpop.f32.mrf.mxu0
        %v6043 = vadd.f32 %v5850, %v6042
        %v6044 = vpop.f32.mrf.mxu0
        %v6045 = vadd.f32 %v5852, %v6044
        %6046 = vmatprep.mubr.bf16.mxu0 %v4604
        %6047 = vmatmul.mubr.bf16.gmra.mxu0 %v4602
        %v6048 = vpop.f32.mrf.mxu0
        %v6049 = vadd.f32 %v5856, %v6048
        %v6050 = vpop.f32.mrf.mxu0
        %v6051 = vadd.f32 %v5858, %v6050
        %v6052 = vpop.f32.mrf.mxu0
        %v6053 = vadd.f32 %v5860, %v6052
        %v6054 = vpop.f32.mrf.mxu0
        %v6055 = vadd.f32 %v5862, %v6054
        %6056 = vmatprep.mubr.bf16.mxu0 %v4612
        %6057 = vmatmul.mubr.bf16.gmra.mxu0 %v4610
        %v6058 = vpop.f32.mrf.mxu0
        %v6059 = vadd.f32 %v5866, %v6058
        %v6060 = vpop.f32.mrf.mxu0
        %v6061 = vadd.f32 %v5868, %v6060
        %v6062 = vpop.f32.mrf.mxu0
        %v6063 = vadd.f32 %v5870, %v6062
        %v6064 = vpop.f32.mrf.mxu0
        %v6065 = vadd.f32 %v5872, %v6064
        %6066 = vmatprep.mubr.bf16.mxu0 %v4620
        %6067 = vmatmul.mubr.bf16.gmra.mxu0 %v4618
        %v6068 = vpop.f32.mrf.mxu0
        %v6069 = vadd.f32 %v5876, %v6068
        %v6070 = vpop.f32.mrf.mxu0
        %v6071 = vadd.f32 %v5878, %v6070
        %v6072 = vpop.f32.mrf.mxu0
        %v6073 = vadd.f32 %v5880, %v6072
        %v6074 = vpop.f32.mrf.mxu0
        %v6075 = vadd.f32 %v5882, %v6074
        %6076 = vmatprep.mubr.bf16.mxu0 %v4628
        %6077 = vmatmul.mubr.bf16.gmra.mxu0 %v4626
        %v6078 = vpop.f32.mrf.mxu0
        %v6079 = vadd.f32 %v5886, %v6078
        %v6080 = vpop.f32.mrf.mxu0
        %v6081 = vadd.f32 %v5888, %v6080
        %v6082 = vpop.f32.mrf.mxu0
        %v6083 = vadd.f32 %v5890, %v6082
        %v6084 = vpop.f32.mrf.mxu0
        %v6085 = vadd.f32 %v5892, %v6084
        %6086 = vmatprep.mubr.bf16.mxu0 %v4636
        %6087 = vmatmul.mubr.bf16.gmra.mxu0 %v4634
        %v6088 = vpop.f32.mrf.mxu0
        %v6089 = vadd.f32 %v5896, %v6088
        %v6090 = vpop.f32.mrf.mxu0
        %v6091 = vadd.f32 %v5898, %v6090
        %v6092 = vpop.f32.mrf.mxu0
        %v6093 = vadd.f32 %v5900, %v6092
        %v6094 = vpop.f32.mrf.mxu0
        %v6095 = vadd.f32 %v5902, %v6094
        %6096 = vmatprep.mubr.bf16.mxu0 %v4644
        %6097 = vmatmul.mubr.bf16.gmra.mxu0 %v4642
        %v6098 = vpop.f32.mrf.mxu0
        %v6099 = vadd.f32 %v5906, %v6098
        %v6100 = vpop.f32.mrf.mxu0
        %v6101 = vadd.f32 %v5908, %v6100
        %v6102 = vpop.f32.mrf.mxu0
        %v6103 = vadd.f32 %v5910, %v6102
        %v6104 = vpop.f32.mrf.mxu0
        %v6105 = vadd.f32 %v5912, %v6104
        %6106 = vmatprep.mubr.bf16.mxu0 %v4652
        %6107 = vmatmul.mubr.bf16.gmra.mxu0 %v4650
        %v6108 = vpop.f32.mrf.mxu0
        %v6109 = vadd.f32 %v5916, %v6108
        %v6110 = vpop.f32.mrf.mxu0
        %v6111 = vadd.f32 %v5918, %v6110
        %v6112 = vpop.f32.mrf.mxu0
        %v6113 = vadd.f32 %v5920, %v6112
        %v6114 = vpop.f32.mrf.mxu0
        %v6115 = vadd.f32 %v5922, %v6114
        %6116 = vmatprep.mubr.bf16.mxu0 %v4660
        %6117 = vmatmul.mubr.bf16.gmra.mxu0 %v4658
        %v6118 = vpop.f32.mrf.mxu0
        %v6119 = vadd.f32 %v5926, %v6118
        %v6120 = vpop.f32.mrf.mxu0
        %v6121 = vadd.f32 %v5928, %v6120
        %v6122 = vpop.f32.mrf.mxu0
        %v6123 = vadd.f32 %v5930, %v6122
        %v6124 = vpop.f32.mrf.mxu0
        %v6125 = vadd.f32 %v5932, %v6124
        %6126 = vmatprep.mubr.bf16.mxu0 %v4659
        %6127 = vmatmul.mubr.bf16.gmra.mxu0 %v4657
        %v6128 = vpop.f32.mrf.mxu0
        %v6129 = vadd.f32 %v5936, %v6128
        %v6130 = vpop.f32.mrf.mxu0
        %v6131 = vadd.f32 %v5938, %v6130
        %v6132 = vpop.f32.mrf.mxu0
        %v6133 = vadd.f32 %v5940, %v6132
        %v6134 = vpop.f32.mrf.mxu0
        %v6135 = vadd.f32 %v5942, %v6134
        %6136 = vdwg.mxu0
        %v6137 = vadd.f32 %v3863, %v5593
        %v6138 = vadd.f32 %v3865, %v5595
        %v6139 = vadd.f32 %v4249, %v5979
        %v6140 = vadd.f32 %v4251, %v5981
        %v6141 = vadd.f32 %v3867, %v5597
        %v6142 = vadd.f32 %v3869, %v5599
        %v6143 = vadd.f32 %v4253, %v5983
        %v6144 = vadd.f32 %v4255, %v5985
        %v6145 = vadd.f32 %v3873, %v5603
        %v6146 = vadd.f32 %v3875, %v5605
        %v6147 = vadd.f32 %v4259, %v5989
        %v6148 = vadd.f32 %v4261, %v5991
        %v6149 = vadd.f32 %v3877, %v5607
        %v6150 = vadd.f32 %v3879, %v5609
        %v6151 = vadd.f32 %v4263, %v5993
        %v6152 = vadd.f32 %v4265, %v5995
        %v6153 = vadd.f32 %v3883, %v5613
        %v6154 = vadd.f32 %v3885, %v5615
        %v6155 = vadd.f32 %v4269, %v5999
        %v6156 = vadd.f32 %v4271, %v6001
        %v6157 = vadd.f32 %v3887, %v5617
        %v6158 = vadd.f32 %v3889, %v5619
        %v6159 = vadd.f32 %v4273, %v6003
        %v6160 = vadd.f32 %v4275, %v6005
        %v6161 = vadd.f32 %v3893, %v5623
        %v6162 = vadd.f32 %v3895, %v5625
        %v6163 = vadd.f32 %v4279, %v6009
        %v6164 = vadd.f32 %v4281, %v6011
        %v6165 = vadd.f32 %v3897, %v5627
        %v6166 = vadd.f32 %v3899, %v5629
        %v6167 = vadd.f32 %v4283, %v6013
        %v6168 = vadd.f32 %v4285, %v6015
        %v6169 = vadd.f32 %v3903, %v5633
        %v6170 = vadd.f32 %v3905, %v5635
        %v6171 = vadd.f32 %v4289, %v6019
        %v6172 = vadd.f32 %v4291, %v6021
        %v6173 = vadd.f32 %v3907, %v5637
        %v6174 = vadd.f32 %v3909, %v5639
        %v6175 = vadd.f32 %v4293, %v6023
        %v6176 = vadd.f32 %v4295, %v6025
        %v6177 = vadd.f32 %v3913, %v5643
        %v6178 = vadd.f32 %v3915, %v5645
        %v6179 = vadd.f32 %v4299, %v6029
        %v6180 = vadd.f32 %v4301, %v6031
        %v6181 = vadd.f32 %v3917, %v5647
        %v6182 = vadd.f32 %v3919, %v5649
        %v6183 = vadd.f32 %v4303, %v6033
        %v6184 = vadd.f32 %v4305, %v6035
        %v6185 = vadd.f32 %v3923, %v5653
        %v6186 = vadd.f32 %v3925, %v5655
        %v6187 = vadd.f32 %v4309, %v6039
        %v6188 = vadd.f32 %v4311, %v6041
        %v6189 = vadd.f32 %v3927, %v5657
        %v6190 = vadd.f32 %v3929, %v5659
        %v6191 = vadd.f32 %v4313, %v6043
        %v6192 = vadd.f32 %v4315, %v6045
        %v6193 = vadd.f32 %v3933, %v5663
        %v6194 = vadd.f32 %v3935, %v5665
        %v6195 = vadd.f32 %v4319, %v6049
        %v6196 = vadd.f32 %v4321, %v6051
        %v6197 = vadd.f32 %v3937, %v5667
        %v6198 = vadd.f32 %v3939, %v5669
        %v6199 = vadd.f32 %v4323, %v6053
        %v6200 = vadd.f32 %v4325, %v6055
        %v6201 = vadd.f32 %v3943, %v5673
        %v6202 = vadd.f32 %v3945, %v5675
        %v6203 = vadd.f32 %v4329, %v6059
        %v6204 = vadd.f32 %v4331, %v6061
        %v6205 = vadd.f32 %v3947, %v5677
        %v6206 = vadd.f32 %v3949, %v5679
        %v6207 = vadd.f32 %v4333, %v6063
        %v6208 = vadd.f32 %v4335, %v6065
        %v6209 = vadd.f32 %v3953, %v5683
        %v6210 = vadd.f32 %v3955, %v5685
        %v6211 = vadd.f32 %v4339, %v6069
        %v6212 = vadd.f32 %v4341, %v6071
        %v6213 = vadd.f32 %v3957, %v5687
        %v6214 = vadd.f32 %v3959, %v5689
        %v6215 = vadd.f32 %v4343, %v6073
        %v6216 = vadd.f32 %v4345, %v6075
        %v6217 = vadd.f32 %v3963, %v5693
        %v6218 = vadd.f32 %v3965, %v5695
        %v6219 = vadd.f32 %v4349, %v6079
        %v6220 = vadd.f32 %v4351, %v6081
        %v6221 = vadd.f32 %v3967, %v5697
        %v6222 = vadd.f32 %v3969, %v5699
        %v6223 = vadd.f32 %v4353, %v6083
        %v6224 = vadd.f32 %v4355, %v6085
        %v6225 = vadd.f32 %v3973, %v5703
        %v6226 = vadd.f32 %v3975, %v5705
        %v6227 = vadd.f32 %v4359, %v6089
        %v6228 = vadd.f32 %v4361, %v6091
        %v6229 = vadd.f32 %v3977, %v5707
        %v6230 = vadd.f32 %v3979, %v5709
        %v6231 = vadd.f32 %v4363, %v6093
        %v6232 = vadd.f32 %v4365, %v6095
        %v6233 = vadd.f32 %v3983, %v5713
        %v6234 = vadd.f32 %v3985, %v5715
        %v6235 = vadd.f32 %v4369, %v6099
        %v6236 = vadd.f32 %v4371, %v6101
        %v6237 = vadd.f32 %v3987, %v5717
        %v6238 = vadd.f32 %v3989, %v5719
        %v6239 = vadd.f32 %v4373, %v6103
        %v6240 = vadd.f32 %v4375, %v6105
        %v6241 = vadd.f32 %v3993, %v5723
        %v6242 = vadd.f32 %v3995, %v5725
        %v6243 = vadd.f32 %v4379, %v6109
        %v6244 = vadd.f32 %v4381, %v6111
        %v6245 = vadd.f32 %v3997, %v5727
        %v6246 = vadd.f32 %v3999, %v5729
        %v6247 = vadd.f32 %v4383, %v6113
        %v6248 = vadd.f32 %v4385, %v6115
        %v6249 = vadd.f32 %v4003, %v5733
        %v6250 = vadd.f32 %v4005, %v5735
        %v6251 = vadd.f32 %v4389, %v6119
        %v6252 = vadd.f32 %v4391, %v6121
        %v6253 = vadd.f32 %v4007, %v5737
        %v6254 = vadd.f32 %v4009, %v5739
        %v6255 = vadd.f32 %v4393, %v6123
        %v6256 = vadd.f32 %v4395, %v6125
        %v6257 = vadd.f32 %v4013, %v5743
        %v6258 = vadd.f32 %v4015, %v5745
        %v6259 = vadd.f32 %v4399, %v6129
        %v6260 = vadd.f32 %v4401, %v6131
        %v6261 = vadd.f32 %v4017, %v5747
        %v6262 = vadd.f32 %v4019, %v5749
        %v6263 = vadd.f32 %v4403, %v6133
        %v6264 = vadd.f32 %v4405, %v6135
        %v6265 = vld [vmem:[#allocation7] sm:$0xf]
        %v6267 = vlaneseq
        %v6268 = vshrl.u32 %v6267, 7
        %v6269 = vsub.s32 0, %v6268
        %v6270 = vrot.slane %v6265, %v6269
        %v6271 = vlaneseq
        %v6272 = vshrl.u32 %v6271, 7
        %v6273 = vsub.s32 1, %v6272
        %v6274 = vrot.slane %v6265, %v6273
        %v6275 = vlaneseq
        %v6276 = vshrl.u32 %v6275, 7
        %v6277 = vsub.s32 2, %v6276
        %v6278 = vrot.slane %v6265, %v6277
        %v6279 = vlaneseq
        %v6280 = vshrl.u32 %v6279, 7
        %v6281 = vsub.s32 3, %v6280
        %v6282 = vrot.slane %v6265, %v6281
        %v6287 = vadd.f32 %v6137, %v6270
        %v6288 = vadd.f32 %v6138, %v6274
        %v6289 = vadd.f32 %v6139, %v6278
        %v6290 = vadd.f32 %v6140, %v6282
        %v6291 = vadd.f32 %v6141, %v6270
        %v6292 = vadd.f32 %v6142, %v6274
        %v6293 = vadd.f32 %v6143, %v6278
        %v6294 = vadd.f32 %v6144, %v6282
        %v6295 = vadd.f32 %v6145, %v6270
        %v6296 = vadd.f32 %v6146, %v6274
        %v6297 = vadd.f32 %v6147, %v6278
        %v6298 = vadd.f32 %v6148, %v6282
        %v6299 = vadd.f32 %v6149, %v6270
        %v6300 = vadd.f32 %v6150, %v6274
        %v6301 = vadd.f32 %v6151, %v6278
        %v6302 = vadd.f32 %v6152, %v6282
        %v6303 = vadd.f32 %v6153, %v6270
        %v6304 = vadd.f32 %v6154, %v6274
        %v6305 = vadd.f32 %v6155, %v6278
        %v6306 = vadd.f32 %v6156, %v6282
        %v6307 = vadd.f32 %v6157, %v6270
        %v6308 = vadd.f32 %v6158, %v6274
        %v6309 = vadd.f32 %v6159, %v6278
        %v6310 = vadd.f32 %v6160, %v6282
        %v6311 = vadd.f32 %v6161, %v6270
        %v6312 = vadd.f32 %v6162, %v6274
        %v6313 = vadd.f32 %v6163, %v6278
        %v6314 = vadd.f32 %v6164, %v6282
        %v6315 = vadd.f32 %v6165, %v6270
        %v6316 = vadd.f32 %v6166, %v6274
        %v6317 = vadd.f32 %v6167, %v6278
        %v6318 = vadd.f32 %v6168, %v6282
        %v6319 = vadd.f32 %v6169, %v6270
        %v6320 = vadd.f32 %v6170, %v6274
        %v6321 = vadd.f32 %v6171, %v6278
        %v6322 = vadd.f32 %v6172, %v6282
        %v6323 = vadd.f32 %v6173, %v6270
        %v6324 = vadd.f32 %v6174, %v6274
        %v6325 = vadd.f32 %v6175, %v6278
        %v6326 = vadd.f32 %v6176, %v6282
        %v6327 = vadd.f32 %v6177, %v6270
        %v6328 = vadd.f32 %v6178, %v6274
        %v6329 = vadd.f32 %v6179, %v6278
        %v6330 = vadd.f32 %v6180, %v6282
        %v6331 = vadd.f32 %v6181, %v6270
        %v6332 = vadd.f32 %v6182, %v6274
        %v6333 = vadd.f32 %v6183, %v6278
        %v6334 = vadd.f32 %v6184, %v6282
        %v6335 = vadd.f32 %v6185, %v6270
        %v6336 = vadd.f32 %v6186, %v6274
        %v6337 = vadd.f32 %v6187, %v6278
        %v6338 = vadd.f32 %v6188, %v6282
        %v6339 = vadd.f32 %v6189, %v6270
        %v6340 = vadd.f32 %v6190, %v6274
        %v6341 = vadd.f32 %v6191, %v6278
        %v6342 = vadd.f32 %v6192, %v6282
        %v6343 = vadd.f32 %v6193, %v6270
        %v6344 = vadd.f32 %v6194, %v6274
        %v6345 = vadd.f32 %v6195, %v6278
        %v6346 = vadd.f32 %v6196, %v6282
        %v6347 = vadd.f32 %v6197, %v6270
        %v6348 = vadd.f32 %v6198, %v6274
        %v6349 = vadd.f32 %v6199, %v6278
        %v6350 = vadd.f32 %v6200, %v6282
        %v6351 = vadd.f32 %v6201, %v6270
        %v6352 = vadd.f32 %v6202, %v6274
        %v6353 = vadd.f32 %v6203, %v6278
        %v6354 = vadd.f32 %v6204, %v6282
        %v6355 = vadd.f32 %v6205, %v6270
        %v6356 = vadd.f32 %v6206, %v6274
        %v6357 = vadd.f32 %v6207, %v6278
        %v6358 = vadd.f32 %v6208, %v6282
        %v6359 = vadd.f32 %v6209, %v6270
        %v6360 = vadd.f32 %v6210, %v6274
        %v6361 = vadd.f32 %v6211, %v6278
        %v6362 = vadd.f32 %v6212, %v6282
        %v6363 = vadd.f32 %v6213, %v6270
        %v6364 = vadd.f32 %v6214, %v6274
        %v6365 = vadd.f32 %v6215, %v6278
        %v6366 = vadd.f32 %v6216, %v6282
        %v6367 = vadd.f32 %v6217, %v6270
        %v6368 = vadd.f32 %v6218, %v6274
        %v6369 = vadd.f32 %v6219, %v6278
        %v6370 = vadd.f32 %v6220, %v6282
        %v6371 = vadd.f32 %v6221, %v6270
        %v6372 = vadd.f32 %v6222, %v6274
        %v6373 = vadd.f32 %v6223, %v6278
        %v6374 = vadd.f32 %v6224, %v6282
        %v6375 = vadd.f32 %v6225, %v6270
        %v6376 = vadd.f32 %v6226, %v6274
        %v6377 = vadd.f32 %v6227, %v6278
        %v6378 = vadd.f32 %v6228, %v6282
        %v6379 = vadd.f32 %v6229, %v6270
        %v6380 = vadd.f32 %v6230, %v6274
        %v6381 = vadd.f32 %v6231, %v6278
        %v6382 = vadd.f32 %v6232, %v6282
        %v6383 = vadd.f32 %v6233, %v6270
        %v6384 = vadd.f32 %v6234, %v6274
        %v6385 = vadd.f32 %v6235, %v6278
        %v6386 = vadd.f32 %v6236, %v6282
        %v6387 = vadd.f32 %v6237, %v6270
        %v6388 = vadd.f32 %v6238, %v6274
        %v6389 = vadd.f32 %v6239, %v6278
        %v6390 = vadd.f32 %v6240, %v6282
        %v6391 = vadd.f32 %v6241, %v6270
        %v6392 = vadd.f32 %v6242, %v6274
        %v6393 = vadd.f32 %v6243, %v6278
        %v6394 = vadd.f32 %v6244, %v6282
        %v6395 = vadd.f32 %v6245, %v6270
        %v6396 = vadd.f32 %v6246, %v6274
        %v6397 = vadd.f32 %v6247, %v6278
        %v6398 = vadd.f32 %v6248, %v6282
        %v6399 = vadd.f32 %v6249, %v6270
        %v6400 = vadd.f32 %v6250, %v6274
        %v6401 = vadd.f32 %v6251, %v6278
        %v6402 = vadd.f32 %v6252, %v6282
        %v6403 = vadd.f32 %v6253, %v6270
        %v6404 = vadd.f32 %v6254, %v6274
        %v6405 = vadd.f32 %v6255, %v6278
        %v6406 = vadd.f32 %v6256, %v6282
        %v6407 = vadd.f32 %v6257, %v6270
        %v6408 = vadd.f32 %v6258, %v6274
        %v6409 = vadd.f32 %v6259, %v6278
        %v6410 = vadd.f32 %v6260, %v6282
        %v6411 = vadd.f32 %v6261, %v6270
        %v6412 = vadd.f32 %v6262, %v6274
        %v6413 = vadd.f32 %v6263, %v6278
        %v6414 = vadd.f32 %v6264, %v6282
        %v6415 = vpack.c.bf16 %v6291, %v6287
        %v6416 = vpack.c.bf16 %v6292, %v6288
        %v6417 = vpack.c.bf16 %v6293, %v6289
        %v6418 = vpack.c.bf16 %v6294, %v6290
        %v6419 = vpack.c.bf16 %v6299, %v6295
        %v6420 = vpack.c.bf16 %v6300, %v6296
        %v6421 = vpack.c.bf16 %v6301, %v6297
        %v6422 = vpack.c.bf16 %v6302, %v6298
        %v6423 = vpack.c.bf16 %v6307, %v6303
        %v6424 = vpack.c.bf16 %v6308, %v6304
        %v6425 = vpack.c.bf16 %v6309, %v6305
        %v6426 = vpack.c.bf16 %v6310, %v6306
        %v6427 = vpack.c.bf16 %v6315, %v6311
        %v6428 = vpack.c.bf16 %v6316, %v6312
        %v6429 = vpack.c.bf16 %v6317, %v6313
        %v6430 = vpack.c.bf16 %v6318, %v6314
        %v6431 = vpack.c.bf16 %v6323, %v6319
        %v6432 = vpack.c.bf16 %v6324, %v6320
        %v6433 = vpack.c.bf16 %v6325, %v6321
        %v6434 = vpack.c.bf16 %v6326, %v6322
        %v6435 = vpack.c.bf16 %v6331, %v6327
        %v6436 = vpack.c.bf16 %v6332, %v6328
        %v6437 = vpack.c.bf16 %v6333, %v6329
        %v6438 = vpack.c.bf16 %v6334, %v6330
        %v6439 = vpack.c.bf16 %v6339, %v6335
        %v6440 = vpack.c.bf16 %v6340, %v6336
        %v6441 = vpack.c.bf16 %v6341, %v6337
        %v6442 = vpack.c.bf16 %v6342, %v6338
        %v6443 = vpack.c.bf16 %v6347, %v6343
        %v6444 = vpack.c.bf16 %v6348, %v6344
        %v6445 = vpack.c.bf16 %v6349, %v6345
        %v6446 = vpack.c.bf16 %v6350, %v6346
        %v6447 = vpack.c.bf16 %v6355, %v6351
        %v6448 = vpack.c.bf16 %v6356, %v6352
        %v6449 = vpack.c.bf16 %v6357, %v6353
        %v6450 = vpack.c.bf16 %v6358, %v6354
        %v6451 = vpack.c.bf16 %v6363, %v6359
        %v6452 = vpack.c.bf16 %v6364, %v6360
        %v6453 = vpack.c.bf16 %v6365, %v6361
        %v6454 = vpack.c.bf16 %v6366, %v6362
        %v6455 = vpack.c.bf16 %v6371, %v6367
        %v6456 = vpack.c.bf16 %v6372, %v6368
        %v6457 = vpack.c.bf16 %v6373, %v6369
        %v6458 = vpack.c.bf16 %v6374, %v6370
        %v6459 = vpack.c.bf16 %v6379, %v6375
        %v6460 = vpack.c.bf16 %v6380, %v6376
        %v6461 = vpack.c.bf16 %v6381, %v6377
        %v6462 = vpack.c.bf16 %v6382, %v6378
        %v6463 = vpack.c.bf16 %v6387, %v6383
        %v6464 = vpack.c.bf16 %v6388, %v6384
        %v6465 = vpack.c.bf16 %v6389, %v6385
        %v6466 = vpack.c.bf16 %v6390, %v6386
        %v6467 = vpack.c.bf16 %v6395, %v6391
        %v6468 = vpack.c.bf16 %v6396, %v6392
        %v6469 = vpack.c.bf16 %v6397, %v6393
        %v6470 = vpack.c.bf16 %v6398, %v6394
        %v6471 = vpack.c.bf16 %v6403, %v6399
        %v6472 = vpack.c.bf16 %v6404, %v6400
        %v6473 = vpack.c.bf16 %v6405, %v6401
        %v6474 = vpack.c.bf16 %v6406, %v6402
        %v6475 = vpack.c.bf16 %v6411, %v6407
        %v6476 = vpack.c.bf16 %v6412, %v6408
        %v6477 = vpack.c.bf16 %v6413, %v6409
        %v6478 = vpack.c.bf16 %v6414, %v6410
        %v6479 = vmax.bf16 %v6415, 0
        %v6480 = vmax.bf16 %v6416, 0
        %v6481 = vmax.bf16 %v6417, 0
        %v6482 = vmax.bf16 %v6418, 0
        %v6483 = vmax.bf16 %v6419, 0
        %v6484 = vmax.bf16 %v6420, 0
        %v6485 = vmax.bf16 %v6421, 0
        %v6486 = vmax.bf16 %v6422, 0
        %v6487 = vmax.bf16 %v6423, 0
        %v6488 = vmax.bf16 %v6424, 0
        %v6489 = vmax.bf16 %v6425, 0
        %v6490 = vmax.bf16 %v6426, 0
        %v6491 = vmax.bf16 %v6427, 0
        %v6492 = vmax.bf16 %v6428, 0
        %v6493 = vmax.bf16 %v6429, 0
        %v6494 = vmax.bf16 %v6430, 0
        %v6495 = vmax.bf16 %v6431, 0
        %v6496 = vmax.bf16 %v6432, 0
        %v6497 = vmax.bf16 %v6433, 0
        %v6498 = vmax.bf16 %v6434, 0
        %v6499 = vmax.bf16 %v6435, 0
        %v6500 = vmax.bf16 %v6436, 0
        %v6501 = vmax.bf16 %v6437, 0
        %v6502 = vmax.bf16 %v6438, 0
        %v6503 = vmax.bf16 %v6439, 0
        %v6504 = vmax.bf16 %v6440, 0
        %v6505 = vmax.bf16 %v6441, 0
        %v6506 = vmax.bf16 %v6442, 0
        %v6507 = vmax.bf16 %v6443, 0
        %v6508 = vmax.bf16 %v6444, 0
        %v6509 = vmax.bf16 %v6445, 0
        %v6510 = vmax.bf16 %v6446, 0
        %v6511 = vmax.bf16 %v6447, 0
        %v6512 = vmax.bf16 %v6448, 0
        %v6513 = vmax.bf16 %v6449, 0
        %v6514 = vmax.bf16 %v6450, 0
        %v6515 = vmax.bf16 %v6451, 0
        %v6516 = vmax.bf16 %v6452, 0
        %v6517 = vmax.bf16 %v6453, 0
        %v6518 = vmax.bf16 %v6454, 0
        %v6519 = vmax.bf16 %v6455, 0
        %v6520 = vmax.bf16 %v6456, 0
        %v6521 = vmax.bf16 %v6457, 0
        %v6522 = vmax.bf16 %v6458, 0
        %v6523 = vmax.bf16 %v6459, 0
        %v6524 = vmax.bf16 %v6460, 0
        %v6525 = vmax.bf16 %v6461, 0
        %v6526 = vmax.bf16 %v6462, 0
        %v6527 = vmax.bf16 %v6463, 0
        %v6528 = vmax.bf16 %v6464, 0
        %v6529 = vmax.bf16 %v6465, 0
        %v6530 = vmax.bf16 %v6466, 0
        %v6531 = vmax.bf16 %v6467, 0
        %v6532 = vmax.bf16 %v6468, 0
        %v6533 = vmax.bf16 %v6469, 0
        %v6534 = vmax.bf16 %v6470, 0
        %v6535 = vmax.bf16 %v6471, 0
        %v6536 = vmax.bf16 %v6472, 0
        %v6537 = vmax.bf16 %v6473, 0
        %v6538 = vmax.bf16 %v6474, 0
        %v6539 = vmax.bf16 %v6475, 0
        %v6540 = vmax.bf16 %v6476, 0
        %v6541 = vmax.bf16 %v6477, 0
        %v6542 = vmax.bf16 %v6478, 0
        %v6543 = vld [vmem:[#allocation6] sm:$0xff]
        %v6544 = vld [vmem:[#allocation6 + $0x8] sm:$0xf]
        %v6545 = vld [vmem:[#allocation6 + $0xc] sm:$0xff]
        %v6546 = vld [vmem:[#allocation6 + $0x14] sm:$0xf]
        %v6547 = vld [vmem:[#allocation6 + $0x18] sm:$0xff]
        %v6548 = vld [vmem:[#allocation6 + $0x20] sm:$0xf]
        %v6549 = vld [vmem:[#allocation6 + $0x24] sm:$0xff]
        %v6550 = vld [vmem:[#allocation6 + $0x2c] sm:$0xf]
        %v6551 = vld [vmem:[#allocation6 + $0x30] sm:$0xff]
        %v6552 = vld [vmem:[#allocation6 + $0x38] sm:$0xf]
        %v6553 = vld [vmem:[#allocation6 + $0x3c] sm:$0xff]
        %v6554 = vld [vmem:[#allocation6 + $0x44] sm:$0xf]
        %v6555 = vld [vmem:[#allocation6 + $0x48] sm:$0xff]
        %v6556 = vld [vmem:[#allocation6 + $0x50] sm:$0xf]
        %v6557 = vld [vmem:[#allocation6 + $0x54] sm:$0xff]
        %v6558 = vld [vmem:[#allocation6 + $0x5c] sm:$0xf]
        %v6559 = vld [vmem:[#allocation6 + $0x60] sm:$0xff]
        %v6560 = vld [vmem:[#allocation6 + $0x68] sm:$0xf]
        %v6561 = vld [vmem:[#allocation6 + $0x6c] sm:$0xff]
        %v6562 = vld [vmem:[#allocation6 + $0x74] sm:$0xf]
        %v6563 = vld [vmem:[#allocation6 + $0x78] sm:$0xff]
        %v6564 = vld [vmem:[#allocation6 + $0x80] sm:$0xf]
        %v6565 = vld [vmem:[#allocation6 + $0x84] sm:$0xff]
        %v6566 = vld [vmem:[#allocation6 + $0x8c] sm:$0xf]
        %v6567 = vld [vmem:[#allocation6 + $0x90] sm:$0xff]
        %v6568 = vld [vmem:[#allocation6 + $0x98] sm:$0xf]
        %v6569 = vld [vmem:[#allocation6 + $0x9c] sm:$0xff]
        %v6570 = vld [vmem:[#allocation6 + $0xa4] sm:$0xf]
        %v6571 = vld [vmem:[#allocation6 + $0xa8] sm:$0xff]
        %v6572 = vld [vmem:[#allocation6 + $0xb0] sm:$0xf]
        %v6573 = vld [vmem:[#allocation6 + $0xb4] sm:$0xff]
        %v6574 = vld [vmem:[#allocation6 + $0xbc] sm:$0xf]
        %v6575 = vld [vmem:[#allocation6 + $0xc0] sm:$0xff]
        %v6576 = vld [vmem:[#allocation6 + $0xc8] sm:$0xf]
        %v6577 = vld [vmem:[#allocation6 + $0xcc] sm:$0xff]
        %v6578 = vld [vmem:[#allocation6 + $0xd4] sm:$0xf]
        %v6579 = vld [vmem:[#allocation6 + $0xd8] sm:$0xff]
        %v6580 = vld [vmem:[#allocation6 + $0xe0] sm:$0xf]
        %v6581 = vld [vmem:[#allocation6 + $0xe4] sm:$0xff]
        %v6582 = vld [vmem:[#allocation6 + $0xec] sm:$0xf]
        %v6583 = vld [vmem:[#allocation6 + $0xf0] sm:$0xff]
        %v6584 = vld [vmem:[#allocation6 + $0xf8] sm:$0xf]
        %v6585 = vld [vmem:[#allocation6 + $0xfc] sm:$0xff]
        %v6586 = vld [vmem:[#allocation6 + $0x104] sm:$0xf]
        %v6587 = vld [vmem:[#allocation6 + $0x108] sm:$0xff]
        %v6588 = vld [vmem:[#allocation6 + $0x110] sm:$0xf]
        %v6589 = vld [vmem:[#allocation6 + $0x114] sm:$0xff]
        %v6590 = vld [vmem:[#allocation6 + $0x11c] sm:$0xf]
        %v6591 = vld [vmem:[#allocation6 + $0x120] sm:$0xff]
        %v6592 = vld [vmem:[#allocation6 + $0x128] sm:$0xf]
        %v6593 = vld [vmem:[#allocation6 + $0x12c] sm:$0xff]
        %v6594 = vld [vmem:[#allocation6 + $0x134] sm:$0xf]
        %v6595 = vld [vmem:[#allocation6 + $0x138] sm:$0xff]
        %v6596 = vld [vmem:[#allocation6 + $0x140] sm:$0xf]
        %v6597 = vld [vmem:[#allocation6 + $0x144] sm:$0xff]
        %v6598 = vld [vmem:[#allocation6 + $0x14c] sm:$0xf]
        %v6599 = vld [vmem:[#allocation6 + $0x150] sm:$0xff]
        %v6600 = vld [vmem:[#allocation6 + $0x158] sm:$0xf]
        %v6601 = vld [vmem:[#allocation6 + $0x15c] sm:$0xff]
        %v6602 = vld [vmem:[#allocation6 + $0x164] sm:$0xf]
        %v6603 = vld [vmem:[#allocation6 + $0x168] sm:$0xff]
        %v6604 = vld [vmem:[#allocation6 + $0x170] sm:$0xf]
        %v6605 = vld [vmem:[#allocation6 + $0x174] sm:$0xff]
        %v6606 = vld [vmem:[#allocation6 + $0x17c] sm:$0xf]
        %v6607 = vld [vmem:[#allocation6 + $0x180] sm:$0xff]
        %v6608 = vld [vmem:[#allocation6 + $0x188] sm:$0xf]
        %v6609 = vld [vmem:[#allocation6 + $0x18c] sm:$0xff]
        %v6610 = vld [vmem:[#allocation6 + $0x194] sm:$0xf]
        %v6611 = vld [vmem:[#allocation6 + $0x198] sm:$0xff]
        %v6612 = vld [vmem:[#allocation6 + $0x1a0] sm:$0xf]
        %v6613 = vld [vmem:[#allocation6 + $0x1a4] sm:$0xff]
        %v6614 = vld [vmem:[#allocation6 + $0x1ac] sm:$0xf]
        %v6615 = vld [vmem:[#allocation6 + $0x1b0] sm:$0xff]
        %v6616 = vld [vmem:[#allocation6 + $0x1b8] sm:$0xf]
        %v6617 = vld [vmem:[#allocation6 + $0x1bc] sm:$0xff]
        %v6618 = vld [vmem:[#allocation6 + $0x1c4] sm:$0xf]
        %v6619 = vld [vmem:[#allocation6 + $0x1c8] sm:$0xff]
        %v6620 = vld [vmem:[#allocation6 + $0x1d0] sm:$0xf]
        %v6621 = vld [vmem:[#allocation6 + $0x1d4] sm:$0xff]
        %v6622 = vld [vmem:[#allocation6 + $0x1dc] sm:$0xf]
        %v6623 = vld [vmem:[#allocation6 + $0x1e0] sm:$0xff]
        %v6624 = vld [vmem:[#allocation6 + $0x1e8] sm:$0xf]
        %v6625 = vld [vmem:[#allocation6 + $0x1ec] sm:$0xff]
        %v6626 = vld [vmem:[#allocation6 + $0x1f4] sm:$0xf]
        %v6627 = vld [vmem:[#allocation6 + $0x1f8] sm:$0xff]
        %v6628 = vld [vmem:[#allocation6 + $0x200] sm:$0xf]
        %v6629 = vld [vmem:[#allocation6 + $0x204] sm:$0xff]
        %v6630 = vld [vmem:[#allocation6 + $0x20c] sm:$0xf]
        %v6631 = vld [vmem:[#allocation6 + $0x210] sm:$0xff]
        %v6632 = vld [vmem:[#allocation6 + $0x218] sm:$0xf]
        %v6633 = vld [vmem:[#allocation6 + $0x21c] sm:$0xff]
        %v6634 = vld [vmem:[#allocation6 + $0x224] sm:$0xf]
        %v6635 = vld [vmem:[#allocation6 + $0x228] sm:$0xff]
        %v6636 = vld [vmem:[#allocation6 + $0x230] sm:$0xf]
        %v6637 = vld [vmem:[#allocation6 + $0x234] sm:$0xff]
        %v6638 = vld [vmem:[#allocation6 + $0x23c] sm:$0xf]
        %v6639 = vld [vmem:[#allocation6 + $0x240] sm:$0xff]
        %v6640 = vld [vmem:[#allocation6 + $0x248] sm:$0xf]
        %v6641 = vld [vmem:[#allocation6 + $0x24c] sm:$0xff]
        %v6642 = vld [vmem:[#allocation6 + $0x254] sm:$0xf]
        %v6643 = vld [vmem:[#allocation6 + $0x258] sm:$0xff]
        %v6644 = vld [vmem:[#allocation6 + $0x260] sm:$0xf]
        %v6645 = vld [vmem:[#allocation6 + $0x264] sm:$0xff]
        %v6646 = vld [vmem:[#allocation6 + $0x26c] sm:$0xf]
        %v6647 = vld [vmem:[#allocation6 + $0x270] sm:$0xff]
        %v6648 = vld [vmem:[#allocation6 + $0x278] sm:$0xf]
        %v6649 = vld [vmem:[#allocation6 + $0x27c] sm:$0xff]
        %v6650 = vld [vmem:[#allocation6 + $0x284] sm:$0xf]
        %v6651 = vld [vmem:[#allocation6 + $0x288] sm:$0xff]
        %v6652 = vld [vmem:[#allocation6 + $0x290] sm:$0xf]
        %v6653 = vld [vmem:[#allocation6 + $0x294] sm:$0xff]
        %v6654 = vld [vmem:[#allocation6 + $0x29c] sm:$0xf]
        %v6655 = vld [vmem:[#allocation6 + $0x2a0] sm:$0xff]
        %v6656 = vld [vmem:[#allocation6 + $0x2a8] sm:$0xf]
        %v6657 = vld [vmem:[#allocation6 + $0x2ac] sm:$0xff]
        %v6658 = vld [vmem:[#allocation6 + $0x2b4] sm:$0xf]
        %v6659 = vld [vmem:[#allocation6 + $0x2b8] sm:$0xff]
        %v6660 = vld [vmem:[#allocation6 + $0x2c0] sm:$0xf]
        %v6661 = vld [vmem:[#allocation6 + $0x2c4] sm:$0xff]
        %v6662 = vld [vmem:[#allocation6 + $0x2cc] sm:$0xf]
        %v6663 = vld [vmem:[#allocation6 + $0x2d0] sm:$0xff]
        %v6664 = vld [vmem:[#allocation6 + $0x2d8] sm:$0xf]
        %v6665 = vld [vmem:[#allocation6 + $0x2dc] sm:$0xff]
        %v6666 = vld [vmem:[#allocation6 + $0x2e4] sm:$0xf]
        %v6667 = vld [vmem:[#allocation6 + $0x2e8] sm:$0xff]
        %v6668 = vld [vmem:[#allocation6 + $0x2f0] sm:$0xf]
        %v6669 = vld [vmem:[#allocation6 + $0x2f4] sm:$0xff]
        %v6670 = vld [vmem:[#allocation6 + $0x2fc] sm:$0xf]
        %s6671 = scalar_lea.vmem [#allocation6], 768
        %v6672 = vld [vmem:[%s6671] sm:$0xff]
        %v6673 = vld [vmem:[%s6671 + $0x8] sm:$0xf]
        %v6674 = vld [vmem:[%s6671 + $0xc] sm:$0xff]
        %v6675 = vld [vmem:[%s6671 + $0x14] sm:$0xf]
        %v6676 = vld [vmem:[%s6671 + $0x18] sm:$0xff]
        %v6677 = vld [vmem:[%s6671 + $0x20] sm:$0xf]
        %v6678 = vld [vmem:[%s6671 + $0x24] sm:$0xff]
        %v6679 = vld [vmem:[%s6671 + $0x2c] sm:$0xf]
        %v6680 = vld [vmem:[%s6671 + $0x30] sm:$0xff]
        %v6681 = vld [vmem:[%s6671 + $0x38] sm:$0xf]
        %v6682 = vld [vmem:[%s6671 + $0x3c] sm:$0xff]
        %v6683 = vld [vmem:[%s6671 + $0x44] sm:$0xf]
        %v6684 = vld [vmem:[%s6671 + $0x48] sm:$0xff]
        %v6685 = vld [vmem:[%s6671 + $0x50] sm:$0xf]
        %v6686 = vld [vmem:[%s6671 + $0x54] sm:$0xff]
        %v6687 = vld [vmem:[%s6671 + $0x5c] sm:$0xf]
        %v6688 = vld [vmem:[%s6671 + $0x60] sm:$0xff]
        %v6689 = vld [vmem:[%s6671 + $0x68] sm:$0xf]
        %v6690 = vld [vmem:[%s6671 + $0x6c] sm:$0xff]
        %v6691 = vld [vmem:[%s6671 + $0x74] sm:$0xf]
        %v6692 = vld [vmem:[%s6671 + $0x78] sm:$0xff]
        %v6693 = vld [vmem:[%s6671 + $0x80] sm:$0xf]
        %v6694 = vld [vmem:[%s6671 + $0x84] sm:$0xff]
        %v6695 = vld [vmem:[%s6671 + $0x8c] sm:$0xf]
        %v6696 = vld [vmem:[%s6671 + $0x90] sm:$0xff]
        %v6697 = vld [vmem:[%s6671 + $0x98] sm:$0xf]
        %v6698 = vld [vmem:[%s6671 + $0x9c] sm:$0xff]
        %v6699 = vld [vmem:[%s6671 + $0xa4] sm:$0xf]
        %v6700 = vld [vmem:[%s6671 + $0xa8] sm:$0xff]
        %v6701 = vld [vmem:[%s6671 + $0xb0] sm:$0xf]
        %v6702 = vld [vmem:[%s6671 + $0xb4] sm:$0xff]
        %v6703 = vld [vmem:[%s6671 + $0xbc] sm:$0xf]
        %v6704 = vld [vmem:[%s6671 + $0xc0] sm:$0xff]
        %v6705 = vld [vmem:[%s6671 + $0xc8] sm:$0xf]
        %v6706 = vld [vmem:[%s6671 + $0xcc] sm:$0xff]
        %v6707 = vld [vmem:[%s6671 + $0xd4] sm:$0xf]
        %v6708 = vld [vmem:[%s6671 + $0xd8] sm:$0xff]
        %v6709 = vld [vmem:[%s6671 + $0xe0] sm:$0xf]
        %v6710 = vld [vmem:[%s6671 + $0xe4] sm:$0xff]
        %v6711 = vld [vmem:[%s6671 + $0xec] sm:$0xf]
        %v6712 = vld [vmem:[%s6671 + $0xf0] sm:$0xff]
        %v6713 = vld [vmem:[%s6671 + $0xf8] sm:$0xf]
        %v6714 = vld [vmem:[%s6671 + $0xfc] sm:$0xff]
        %v6715 = vld [vmem:[%s6671 + $0x104] sm:$0xf]
        %v6716 = vld [vmem:[%s6671 + $0x108] sm:$0xff]
        %v6717 = vld [vmem:[%s6671 + $0x110] sm:$0xf]
        %v6718 = vld [vmem:[%s6671 + $0x114] sm:$0xff]
        %v6719 = vld [vmem:[%s6671 + $0x11c] sm:$0xf]
        %v6720 = vld [vmem:[%s6671 + $0x120] sm:$0xff]
        %v6721 = vld [vmem:[%s6671 + $0x128] sm:$0xf]
        %v6722 = vld [vmem:[%s6671 + $0x12c] sm:$0xff]
        %v6723 = vld [vmem:[%s6671 + $0x134] sm:$0xf]
        %v6724 = vld [vmem:[%s6671 + $0x138] sm:$0xff]
        %v6725 = vld [vmem:[%s6671 + $0x140] sm:$0xf]
        %v6726 = vld [vmem:[%s6671 + $0x144] sm:$0xff]
        %v6727 = vld [vmem:[%s6671 + $0x14c] sm:$0xf]
        %v6728 = vld [vmem:[%s6671 + $0x150] sm:$0xff]
        %v6729 = vld [vmem:[%s6671 + $0x158] sm:$0xf]
        %v6730 = vld [vmem:[%s6671 + $0x15c] sm:$0xff]
        %v6731 = vld [vmem:[%s6671 + $0x164] sm:$0xf]
        %v6732 = vld [vmem:[%s6671 + $0x168] sm:$0xff]
        %v6733 = vld [vmem:[%s6671 + $0x170] sm:$0xf]
        %v6734 = vld [vmem:[%s6671 + $0x174] sm:$0xff]
        %v6735 = vld [vmem:[%s6671 + $0x17c] sm:$0xf]
        %v6736 = vld [vmem:[%s6671 + $0x180] sm:$0xff]
        %v6737 = vld [vmem:[%s6671 + $0x188] sm:$0xf]
        %v6738 = vld [vmem:[%s6671 + $0x18c] sm:$0xff]
        %v6739 = vld [vmem:[%s6671 + $0x194] sm:$0xf]
        %v6740 = vld [vmem:[%s6671 + $0x198] sm:$0xff]
        %v6741 = vld [vmem:[%s6671 + $0x1a0] sm:$0xf]
        %v6742 = vld [vmem:[%s6671 + $0x1a4] sm:$0xff]
        %v6743 = vld [vmem:[%s6671 + $0x1ac] sm:$0xf]
        %v6744 = vld [vmem:[%s6671 + $0x1b0] sm:$0xff]
        %v6745 = vld [vmem:[%s6671 + $0x1b8] sm:$0xf]
        %v6746 = vld [vmem:[%s6671 + $0x1bc] sm:$0xff]
        %v6747 = vld [vmem:[%s6671 + $0x1c4] sm:$0xf]
        %v6748 = vld [vmem:[%s6671 + $0x1c8] sm:$0xff]
        %v6749 = vld [vmem:[%s6671 + $0x1d0] sm:$0xf]
        %v6750 = vld [vmem:[%s6671 + $0x1d4] sm:$0xff]
        %v6751 = vld [vmem:[%s6671 + $0x1dc] sm:$0xf]
        %v6752 = vld [vmem:[%s6671 + $0x1e0] sm:$0xff]
        %v6753 = vld [vmem:[%s6671 + $0x1e8] sm:$0xf]
        %v6754 = vld [vmem:[%s6671 + $0x1ec] sm:$0xff]
        %v6755 = vld [vmem:[%s6671 + $0x1f4] sm:$0xf]
        %v6756 = vld [vmem:[%s6671 + $0x1f8] sm:$0xff]
        %v6757 = vld [vmem:[%s6671 + $0x200] sm:$0xf]
        %v6758 = vld [vmem:[%s6671 + $0x204] sm:$0xff]
        %v6759 = vld [vmem:[%s6671 + $0x20c] sm:$0xf]
        %v6760 = vld [vmem:[%s6671 + $0x210] sm:$0xff]
        %v6761 = vld [vmem:[%s6671 + $0x218] sm:$0xf]
        %v6762 = vld [vmem:[%s6671 + $0x21c] sm:$0xff]
        %v6763 = vld [vmem:[%s6671 + $0x224] sm:$0xf]
        %v6764 = vld [vmem:[%s6671 + $0x228] sm:$0xff]
        %v6765 = vld [vmem:[%s6671 + $0x230] sm:$0xf]
        %v6766 = vld [vmem:[%s6671 + $0x234] sm:$0xff]
        %v6767 = vld [vmem:[%s6671 + $0x23c] sm:$0xf]
        %v6768 = vld [vmem:[%s6671 + $0x240] sm:$0xff]
        %v6769 = vld [vmem:[%s6671 + $0x248] sm:$0xf]
        %v6770 = vld [vmem:[%s6671 + $0x24c] sm:$0xff]
        %v6771 = vld [vmem:[%s6671 + $0x254] sm:$0xf]
        %v6772 = vld [vmem:[%s6671 + $0x258] sm:$0xff]
        %v6773 = vld [vmem:[%s6671 + $0x260] sm:$0xf]
        %v6774 = vld [vmem:[%s6671 + $0x264] sm:$0xff]
        %v6775 = vld [vmem:[%s6671 + $0x26c] sm:$0xf]
        %v6776 = vld [vmem:[%s6671 + $0x270] sm:$0xff]
        %v6777 = vld [vmem:[%s6671 + $0x278] sm:$0xf]
        %v6778 = vld [vmem:[%s6671 + $0x27c] sm:$0xff]
        %v6779 = vld [vmem:[%s6671 + $0x284] sm:$0xf]
        %v6780 = vld [vmem:[%s6671 + $0x288] sm:$0xff]
        %v6781 = vld [vmem:[%s6671 + $0x290] sm:$0xf]
        %v6782 = vld [vmem:[%s6671 + $0x294] sm:$0xff]
        %v6783 = vld [vmem:[%s6671 + $0x29c] sm:$0xf]
        %v6784 = vld [vmem:[%s6671 + $0x2a0] sm:$0xff]
        %v6785 = vld [vmem:[%s6671 + $0x2a8] sm:$0xf]
        %v6786 = vld [vmem:[%s6671 + $0x2ac] sm:$0xff]
        %v6787 = vld [vmem:[%s6671 + $0x2b4] sm:$0xf]
        %v6788 = vld [vmem:[%s6671 + $0x2b8] sm:$0xff]
        %v6789 = vld [vmem:[%s6671 + $0x2c0] sm:$0xf]
        %v6790 = vld [vmem:[%s6671 + $0x2c4] sm:$0xff]
        %v6791 = vld [vmem:[%s6671 + $0x2cc] sm:$0xf]
        %v6792 = vld [vmem:[%s6671 + $0x2d0] sm:$0xff]
        %v6793 = vld [vmem:[%s6671 + $0x2d8] sm:$0xf]
        %v6794 = vld [vmem:[%s6671 + $0x2dc] sm:$0xff]
        %v6795 = vld [vmem:[%s6671 + $0x2e4] sm:$0xf]
        %v6796 = vld [vmem:[%s6671 + $0x2e8] sm:$0xff]
        %v6797 = vld [vmem:[%s6671 + $0x2f0] sm:$0xf]
        %v6798 = vld [vmem:[%s6671 + $0x2f4] sm:$0xff]
        %v6799 = vld [vmem:[%s6671 + $0x2fc] sm:$0xf]
        %v6801 = vshrl.u32 %v6479, 16
        %v6803 = vshll.u32 %v6479, 16
        %v6805 = vrot.slane %v6803, 1
        %v6806 = vor.u32 %v6801, %v6805
        %v6808 = vshll.u32 %v6483, 16
        %v6810 = vrot.slane %v6808, 1
        %v6811 = vsel %vm946, %v6806, %v6810
        %v6813 = vshrl.u32 %v6480, 16
        %v6815 = vshll.u32 %v6480, 16
        %v6817 = vrot.slane %v6815, 1
        %v6818 = vor.u32 %v6813, %v6817
        %v6820 = vshll.u32 %v6484, 16
        %v6822 = vrot.slane %v6820, 1
        %v6823 = vsel %vm946, %v6818, %v6822
        %v6825 = vshrl.u32 %v6481, 16
        %v6827 = vshll.u32 %v6481, 16
        %v6829 = vrot.slane %v6827, 1
        %v6830 = vor.u32 %v6825, %v6829
        %v6832 = vshll.u32 %v6485, 16
        %v6834 = vrot.slane %v6832, 1
        %v6835 = vsel %vm946, %v6830, %v6834
        %v6837 = vshrl.u32 %v6482, 16
        %v6839 = vshll.u32 %v6482, 16
        %v6841 = vrot.slane %v6839, 1
        %v6842 = vor.u32 %v6837, %v6841
        %v6844 = vshll.u32 %v6486, 16
        %v6846 = vrot.slane %v6844, 1
        %v6847 = vsel %vm946, %v6842, %v6846
        %v6848 = vshrl.u32 %v6483, 16
        %v6850 = vor.u32 %v6848, %v6810
        %v6852 = vshll.u32 %v6487, 16
        %v6854 = vrot.slane %v6852, 1
        %v6855 = vsel %vm946, %v6850, %v6854
        %v6856 = vshrl.u32 %v6484, 16
        %v6858 = vor.u32 %v6856, %v6822
        %v6860 = vshll.u32 %v6488, 16
        %v6862 = vrot.slane %v6860, 1
        %v6863 = vsel %vm946, %v6858, %v6862
        %v6864 = vshrl.u32 %v6485, 16
        %v6866 = vor.u32 %v6864, %v6834
        %v6868 = vshll.u32 %v6489, 16
        %v6870 = vrot.slane %v6868, 1
        %v6871 = vsel %vm946, %v6866, %v6870
        %v6872 = vshrl.u32 %v6486, 16
        %v6874 = vor.u32 %v6872, %v6846
        %v6876 = vshll.u32 %v6490, 16
        %v6878 = vrot.slane %v6876, 1
        %v6879 = vsel %vm946, %v6874, %v6878
        %v6880 = vshrl.u32 %v6487, 16
        %v6882 = vor.u32 %v6880, %v6854
        %v6884 = vshll.u32 %v6491, 16
        %v6886 = vrot.slane %v6884, 1
        %v6887 = vsel %vm946, %v6882, %v6886
        %v6888 = vshrl.u32 %v6488, 16
        %v6890 = vor.u32 %v6888, %v6862
        %v6892 = vshll.u32 %v6492, 16
        %v6894 = vrot.slane %v6892, 1
        %v6895 = vsel %vm946, %v6890, %v6894
        %v6896 = vshrl.u32 %v6489, 16
        %v6898 = vor.u32 %v6896, %v6870
        %v6900 = vshll.u32 %v6493, 16
        %v6902 = vrot.slane %v6900, 1
        %v6903 = vsel %vm946, %v6898, %v6902
        %v6904 = vshrl.u32 %v6490, 16
        %v6906 = vor.u32 %v6904, %v6878
        %v6908 = vshll.u32 %v6494, 16
        %v6910 = vrot.slane %v6908, 1
        %v6911 = vsel %vm946, %v6906, %v6910
        %v6912 = vshrl.u32 %v6491, 16
        %v6914 = vor.u32 %v6912, %v6886
        %v6916 = vshll.u32 %v6495, 16
        %v6918 = vrot.slane %v6916, 1
        %v6919 = vsel %vm946, %v6914, %v6918
        %v6920 = vshrl.u32 %v6492, 16
        %v6922 = vor.u32 %v6920, %v6894
        %v6924 = vshll.u32 %v6496, 16
        %v6926 = vrot.slane %v6924, 1
        %v6927 = vsel %vm946, %v6922, %v6926
        %v6928 = vshrl.u32 %v6493, 16
        %v6930 = vor.u32 %v6928, %v6902
        %v6932 = vshll.u32 %v6497, 16
        %v6934 = vrot.slane %v6932, 1
        %v6935 = vsel %vm946, %v6930, %v6934
        %v6936 = vshrl.u32 %v6494, 16
        %v6938 = vor.u32 %v6936, %v6910
        %v6940 = vshll.u32 %v6498, 16
        %v6942 = vrot.slane %v6940, 1
        %v6943 = vsel %vm946, %v6938, %v6942
        %v6944 = vshrl.u32 %v6495, 16
        %v6946 = vor.u32 %v6944, %v6918
        %v6948 = vshll.u32 %v6499, 16
        %v6950 = vrot.slane %v6948, 1
        %v6951 = vsel %vm946, %v6946, %v6950
        %v6952 = vshrl.u32 %v6496, 16
        %v6954 = vor.u32 %v6952, %v6926
        %v6956 = vshll.u32 %v6500, 16
        %v6958 = vrot.slane %v6956, 1
        %v6959 = vsel %vm946, %v6954, %v6958
        %v6960 = vshrl.u32 %v6497, 16
        %v6962 = vor.u32 %v6960, %v6934
        %v6964 = vshll.u32 %v6501, 16
        %v6966 = vrot.slane %v6964, 1
        %v6967 = vsel %vm946, %v6962, %v6966
        %v6968 = vshrl.u32 %v6498, 16
        %v6970 = vor.u32 %v6968, %v6942
        %v6972 = vshll.u32 %v6502, 16
        %v6974 = vrot.slane %v6972, 1
        %v6975 = vsel %vm946, %v6970, %v6974
        %v6976 = vshrl.u32 %v6499, 16
        %v6978 = vor.u32 %v6976, %v6950
        %v6980 = vshll.u32 %v6503, 16
        %v6982 = vrot.slane %v6980, 1
        %v6983 = vsel %vm946, %v6978, %v6982
        %v6984 = vshrl.u32 %v6500, 16
        %v6986 = vor.u32 %v6984, %v6958
        %v6988 = vshll.u32 %v6504, 16
        %v6990 = vrot.slane %v6988, 1
        %v6991 = vsel %vm946, %v6986, %v6990
        %v6992 = vshrl.u32 %v6501, 16
        %v6994 = vor.u32 %v6992, %v6966
        %v6996 = vshll.u32 %v6505, 16
        %v6998 = vrot.slane %v6996, 1
        %v6999 = vsel %vm946, %v6994, %v6998
        %v7000 = vshrl.u32 %v6502, 16
        %v7002 = vor.u32 %v7000, %v6974
        %v7004 = vshll.u32 %v6506, 16
        %v7006 = vrot.slane %v7004, 1
        %v7007 = vsel %vm946, %v7002, %v7006
        %v7008 = vshrl.u32 %v6503, 16
        %v7010 = vor.u32 %v7008, %v6982
        %v7012 = vshll.u32 %v6507, 16
        %v7014 = vrot.slane %v7012, 1
        %v7015 = vsel %vm946, %v7010, %v7014
        %v7016 = vshrl.u32 %v6504, 16
        %v7018 = vor.u32 %v7016, %v6990
        %v7020 = vshll.u32 %v6508, 16
        %v7022 = vrot.slane %v7020, 1
        %v7023 = vsel %vm946, %v7018, %v7022
        %v7024 = vshrl.u32 %v6505, 16
        %v7026 = vor.u32 %v7024, %v6998
        %v7028 = vshll.u32 %v6509, 16
        %v7030 = vrot.slane %v7028, 1
        %v7031 = vsel %vm946, %v7026, %v7030
        %v7032 = vshrl.u32 %v6506, 16
        %v7034 = vor.u32 %v7032, %v7006
        %v7036 = vshll.u32 %v6510, 16
        %v7038 = vrot.slane %v7036, 1
        %v7039 = vsel %vm946, %v7034, %v7038
        %v7040 = vshrl.u32 %v6507, 16
        %v7042 = vor.u32 %v7040, %v7014
        %v7044 = vshll.u32 %v6511, 16
        %v7046 = vrot.slane %v7044, 1
        %v7047 = vsel %vm946, %v7042, %v7046
        %v7048 = vshrl.u32 %v6508, 16
        %v7050 = vor.u32 %v7048, %v7022
        %v7052 = vshll.u32 %v6512, 16
        %v7054 = vrot.slane %v7052, 1
        %v7055 = vsel %vm946, %v7050, %v7054
        %v7056 = vshrl.u32 %v6509, 16
        %v7058 = vor.u32 %v7056, %v7030
        %v7060 = vshll.u32 %v6513, 16
        %v7062 = vrot.slane %v7060, 1
        %v7063 = vsel %vm946, %v7058, %v7062
        %v7064 = vshrl.u32 %v6510, 16
        %v7066 = vor.u32 %v7064, %v7038
        %v7068 = vshll.u32 %v6514, 16
        %v7070 = vrot.slane %v7068, 1
        %v7071 = vsel %vm946, %v7066, %v7070
        %v7072 = vshrl.u32 %v6511, 16
        %v7074 = vor.u32 %v7072, %v7046
        %v7076 = vshll.u32 %v6515, 16
        %v7078 = vrot.slane %v7076, 1
        %v7079 = vsel %vm946, %v7074, %v7078
        %v7080 = vshrl.u32 %v6512, 16
        %v7082 = vor.u32 %v7080, %v7054
        %v7084 = vshll.u32 %v6516, 16
        %v7086 = vrot.slane %v7084, 1
        %v7087 = vsel %vm946, %v7082, %v7086
        %v7088 = vshrl.u32 %v6513, 16
        %v7090 = vor.u32 %v7088, %v7062
        %v7092 = vshll.u32 %v6517, 16
        %v7094 = vrot.slane %v7092, 1
        %v7095 = vsel %vm946, %v7090, %v7094
        %v7096 = vshrl.u32 %v6514, 16
        %v7098 = vor.u32 %v7096, %v7070
        %v7100 = vshll.u32 %v6518, 16
        %v7102 = vrot.slane %v7100, 1
        %v7103 = vsel %vm946, %v7098, %v7102
        %v7104 = vshrl.u32 %v6515, 16
        %v7106 = vor.u32 %v7104, %v7078
        %v7108 = vshll.u32 %v6519, 16
        %v7110 = vrot.slane %v7108, 1
        %v7111 = vsel %vm946, %v7106, %v7110
        %v7112 = vshrl.u32 %v6516, 16
        %v7114 = vor.u32 %v7112, %v7086
        %v7116 = vshll.u32 %v6520, 16
        %v7118 = vrot.slane %v7116, 1
        %v7119 = vsel %vm946, %v7114, %v7118
        %v7120 = vshrl.u32 %v6517, 16
        %v7122 = vor.u32 %v7120, %v7094
        %v7124 = vshll.u32 %v6521, 16
        %v7126 = vrot.slane %v7124, 1
        %v7127 = vsel %vm946, %v7122, %v7126
        %v7128 = vshrl.u32 %v6518, 16
        %v7130 = vor.u32 %v7128, %v7102
        %v7132 = vshll.u32 %v6522, 16
        %v7134 = vrot.slane %v7132, 1
        %v7135 = vsel %vm946, %v7130, %v7134
        %v7136 = vshrl.u32 %v6519, 16
        %v7138 = vor.u32 %v7136, %v7110
        %v7140 = vshll.u32 %v6523, 16
        %v7142 = vrot.slane %v7140, 1
        %v7143 = vsel %vm946, %v7138, %v7142
        %v7144 = vshrl.u32 %v6520, 16
        %v7146 = vor.u32 %v7144, %v7118
        %v7148 = vshll.u32 %v6524, 16
        %v7150 = vrot.slane %v7148, 1
        %v7151 = vsel %vm946, %v7146, %v7150
        %v7152 = vshrl.u32 %v6521, 16
        %v7154 = vor.u32 %v7152, %v7126
        %v7156 = vshll.u32 %v6525, 16
        %v7158 = vrot.slane %v7156, 1
        %v7159 = vsel %vm946, %v7154, %v7158
        %v7160 = vshrl.u32 %v6522, 16
        %v7162 = vor.u32 %v7160, %v7134
        %v7164 = vshll.u32 %v6526, 16
        %v7166 = vrot.slane %v7164, 1
        %v7167 = vsel %vm946, %v7162, %v7166
        %v7168 = vshrl.u32 %v6523, 16
        %v7170 = vor.u32 %v7168, %v7142
        %v7172 = vshll.u32 %v6527, 16
        %v7174 = vrot.slane %v7172, 1
        %v7175 = vsel %vm946, %v7170, %v7174
        %v7176 = vshrl.u32 %v6524, 16
        %v7178 = vor.u32 %v7176, %v7150
        %v7180 = vshll.u32 %v6528, 16
        %v7182 = vrot.slane %v7180, 1
        %v7183 = vsel %vm946, %v7178, %v7182
        %v7184 = vshrl.u32 %v6525, 16
        %v7186 = vor.u32 %v7184, %v7158
        %v7188 = vshll.u32 %v6529, 16
        %v7190 = vrot.slane %v7188, 1
        %v7191 = vsel %vm946, %v7186, %v7190
        %v7192 = vshrl.u32 %v6526, 16
        %v7194 = vor.u32 %v7192, %v7166
        %v7196 = vshll.u32 %v6530, 16
        %v7198 = vrot.slane %v7196, 1
        %v7199 = vsel %vm946, %v7194, %v7198
        %v7200 = vshrl.u32 %v6527, 16
        %v7202 = vor.u32 %v7200, %v7174
        %v7204 = vshll.u32 %v6531, 16
        %v7206 = vrot.slane %v7204, 1
        %v7207 = vsel %vm946, %v7202, %v7206
        %v7208 = vshrl.u32 %v6528, 16
        %v7210 = vor.u32 %v7208, %v7182
        %v7212 = vshll.u32 %v6532, 16
        %v7214 = vrot.slane %v7212, 1
        %v7215 = vsel %vm946, %v7210, %v7214
        %v7216 = vshrl.u32 %v6529, 16
        %v7218 = vor.u32 %v7216, %v7190
        %v7220 = vshll.u32 %v6533, 16
        %v7222 = vrot.slane %v7220, 1
        %v7223 = vsel %vm946, %v7218, %v7222
        %v7224 = vshrl.u32 %v6530, 16
        %v7226 = vor.u32 %v7224, %v7198
        %v7228 = vshll.u32 %v6534, 16
        %v7230 = vrot.slane %v7228, 1
        %v7231 = vsel %vm946, %v7226, %v7230
        %v7232 = vshrl.u32 %v6531, 16
        %v7234 = vor.u32 %v7232, %v7206
        %v7236 = vshll.u32 %v6535, 16
        %v7238 = vrot.slane %v7236, 1
        %v7239 = vsel %vm946, %v7234, %v7238
        %v7240 = vshrl.u32 %v6532, 16
        %v7242 = vor.u32 %v7240, %v7214
        %v7244 = vshll.u32 %v6536, 16
        %v7246 = vrot.slane %v7244, 1
        %v7247 = vsel %vm946, %v7242, %v7246
        %v7248 = vshrl.u32 %v6533, 16
        %v7250 = vor.u32 %v7248, %v7222
        %v7252 = vshll.u32 %v6537, 16
        %v7254 = vrot.slane %v7252, 1
        %v7255 = vsel %vm946, %v7250, %v7254
        %v7256 = vshrl.u32 %v6534, 16
        %v7258 = vor.u32 %v7256, %v7230
        %v7260 = vshll.u32 %v6538, 16
        %v7262 = vrot.slane %v7260, 1
        %v7263 = vsel %vm946, %v7258, %v7262
        %v7264 = vshrl.u32 %v6535, 16
        %v7266 = vor.u32 %v7264, %v7238
        %v7268 = vshll.u32 %v6539, 16
        %v7270 = vrot.slane %v7268, 1
        %v7271 = vsel %vm946, %v7266, %v7270
        %v7272 = vshrl.u32 %v6536, 16
        %v7274 = vor.u32 %v7272, %v7246
        %v7276 = vshll.u32 %v6540, 16
        %v7278 = vrot.slane %v7276, 1
        %v7279 = vsel %vm946, %v7274, %v7278
        %v7280 = vshrl.u32 %v6537, 16
        %v7282 = vor.u32 %v7280, %v7254
        %v7284 = vshll.u32 %v6541, 16
        %v7286 = vrot.slane %v7284, 1
        %v7287 = vsel %vm946, %v7282, %v7286
        %v7288 = vshrl.u32 %v6538, 16
        %v7290 = vor.u32 %v7288, %v7262
        %v7292 = vshll.u32 %v6542, 16
        %v7294 = vrot.slane %v7292, 1
        %v7295 = vsel %vm946, %v7290, %v7294
        %v7296 = vshrl.u32 %v6539, 16
        %v7298 = vor.u32 %v7296, %v7270
        %v7299 = vshrl.u32 %v6540, 16
        %v7301 = vor.u32 %v7299, %v7278
        %v7302 = vshrl.u32 %v6541, 16
        %v7304 = vor.u32 %v7302, %v7286
        %v7305 = vshrl.u32 %v6542, 16
        %v7307 = vor.u32 %v7305, %v7294
        %v7500 = vunpack.c.l.b16 %v6672
        %v7501 = vunpack.c.h.b16 %v6672
        %v7502 = vunpack.c.l.b16 %v6673
        %v7503 = vunpack.c.l.b16 %v6674
        %v7504 = vunpack.c.h.b16 %v6674
        %v7505 = vunpack.c.l.b16 %v6675
        %v7506 = vunpack.c.l.b16 %v6676
        %v7507 = vunpack.c.h.b16 %v6676
        %v7508 = vunpack.c.l.b16 %v6677
        %v7509 = vunpack.c.l.b16 %v6678
        %v7510 = vunpack.c.h.b16 %v6678
        %v7511 = vunpack.c.l.b16 %v6679
        %v7512 = vunpack.c.l.b16 %v6680
        %v7513 = vunpack.c.h.b16 %v6680
        %v7514 = vunpack.c.l.b16 %v6681
        %v7515 = vunpack.c.l.b16 %v6682
        %v7516 = vunpack.c.h.b16 %v6682
        %v7517 = vunpack.c.l.b16 %v6683
        %v7518 = vunpack.c.l.b16 %v6684
        %v7519 = vunpack.c.h.b16 %v6684
        %v7520 = vunpack.c.l.b16 %v6685
        %v7521 = vunpack.c.l.b16 %v6686
        %v7522 = vunpack.c.h.b16 %v6686
        %v7523 = vunpack.c.l.b16 %v6687
        %v7524 = vunpack.c.l.b16 %v6688
        %v7525 = vunpack.c.h.b16 %v6688
        %v7526 = vunpack.c.l.b16 %v6689
        %v7527 = vunpack.c.l.b16 %v6690
        %v7528 = vunpack.c.h.b16 %v6690
        %v7529 = vunpack.c.l.b16 %v6691
        %v7530 = vunpack.c.l.b16 %v6692
        %v7531 = vunpack.c.h.b16 %v6692
        %v7532 = vunpack.c.l.b16 %v6693
        %v7533 = vunpack.c.l.b16 %v6694
        %v7534 = vunpack.c.h.b16 %v6694
        %v7535 = vunpack.c.l.b16 %v6695
        %v7536 = vunpack.c.l.b16 %v6696
        %v7537 = vunpack.c.h.b16 %v6696
        %v7538 = vunpack.c.l.b16 %v6697
        %v7539 = vunpack.c.l.b16 %v6698
        %v7540 = vunpack.c.h.b16 %v6698
        %v7541 = vunpack.c.l.b16 %v6699
        %v7542 = vunpack.c.l.b16 %v6700
        %v7543 = vunpack.c.h.b16 %v6700
        %v7544 = vunpack.c.l.b16 %v6701
        %v7545 = vunpack.c.l.b16 %v6702
        %v7546 = vunpack.c.h.b16 %v6702
        %v7547 = vunpack.c.l.b16 %v6703
        %v7548 = vunpack.c.l.b16 %v6704
        %v7549 = vunpack.c.h.b16 %v6704
        %v7550 = vunpack.c.l.b16 %v6705
        %v7551 = vunpack.c.l.b16 %v6706
        %v7552 = vunpack.c.h.b16 %v6706
        %v7553 = vunpack.c.l.b16 %v6707
        %v7554 = vunpack.c.l.b16 %v6708
        %v7555 = vunpack.c.h.b16 %v6708
        %v7556 = vunpack.c.l.b16 %v6709
        %v7557 = vunpack.c.l.b16 %v6710
        %v7558 = vunpack.c.h.b16 %v6710
        %v7559 = vunpack.c.l.b16 %v6711
        %v7560 = vunpack.c.l.b16 %v6712
        %v7561 = vunpack.c.h.b16 %v6712
        %v7562 = vunpack.c.l.b16 %v6713
        %v7563 = vunpack.c.l.b16 %v6714
        %v7564 = vunpack.c.h.b16 %v6714
        %v7565 = vunpack.c.l.b16 %v6715
        %v7566 = vunpack.c.l.b16 %v6716
        %v7567 = vunpack.c.h.b16 %v6716
        %v7568 = vunpack.c.l.b16 %v6717
        %v7569 = vunpack.c.l.b16 %v6718
        %v7570 = vunpack.c.h.b16 %v6718
        %v7571 = vunpack.c.l.b16 %v6719
        %v7572 = vunpack.c.l.b16 %v6720
        %v7573 = vunpack.c.h.b16 %v6720
        %v7574 = vunpack.c.l.b16 %v6721
        %v7575 = vunpack.c.l.b16 %v6722
        %v7576 = vunpack.c.h.b16 %v6722
        %v7577 = vunpack.c.l.b16 %v6723
        %v7578 = vunpack.c.l.b16 %v6724
        %v7579 = vunpack.c.h.b16 %v6724
        %v7580 = vunpack.c.l.b16 %v6725
        %v7581 = vunpack.c.l.b16 %v6726
        %v7582 = vunpack.c.h.b16 %v6726
        %v7583 = vunpack.c.l.b16 %v6727
        %v7584 = vunpack.c.l.b16 %v6728
        %v7585 = vunpack.c.h.b16 %v6728
        %v7586 = vunpack.c.l.b16 %v6729
        %v7587 = vunpack.c.l.b16 %v6730
        %v7588 = vunpack.c.h.b16 %v6730
        %v7589 = vunpack.c.l.b16 %v6731
        %v7590 = vunpack.c.l.b16 %v6732
        %v7591 = vunpack.c.h.b16 %v6732
        %v7592 = vunpack.c.l.b16 %v6733
        %v7593 = vunpack.c.l.b16 %v6734
        %v7594 = vunpack.c.h.b16 %v6734
        %v7595 = vunpack.c.l.b16 %v6735
        %v7596 = vunpack.c.l.b16 %v6736
        %v7597 = vunpack.c.h.b16 %v6736
        %v7598 = vunpack.c.l.b16 %v6737
        %v7599 = vunpack.c.l.b16 %v6738
        %v7600 = vunpack.c.h.b16 %v6738
        %v7601 = vunpack.c.l.b16 %v6739
        %v7602 = vunpack.c.l.b16 %v6740
        %v7603 = vunpack.c.h.b16 %v6740
        %v7604 = vunpack.c.l.b16 %v6741
        %v7605 = vunpack.c.l.b16 %v6742
        %v7606 = vunpack.c.h.b16 %v6742
        %v7607 = vunpack.c.l.b16 %v6743
        %v7608 = vunpack.c.l.b16 %v6744
        %v7609 = vunpack.c.h.b16 %v6744
        %v7610 = vunpack.c.l.b16 %v6745
        %v7611 = vunpack.c.l.b16 %v6746
        %v7612 = vunpack.c.h.b16 %v6746
        %v7613 = vunpack.c.l.b16 %v6747
        %v7614 = vunpack.c.l.b16 %v6748
        %v7615 = vunpack.c.h.b16 %v6748
        %v7616 = vunpack.c.l.b16 %v6749
        %v7617 = vunpack.c.l.b16 %v6750
        %v7618 = vunpack.c.h.b16 %v6750
        %v7619 = vunpack.c.l.b16 %v6751
        %v7620 = vunpack.c.l.b16 %v6752
        %v7621 = vunpack.c.h.b16 %v6752
        %v7622 = vunpack.c.l.b16 %v6753
        %v7623 = vunpack.c.l.b16 %v6754
        %v7624 = vunpack.c.h.b16 %v6754
        %v7625 = vunpack.c.l.b16 %v6755
        %v7626 = vunpack.c.l.b16 %v6756
        %v7627 = vunpack.c.h.b16 %v6756
        %v7628 = vunpack.c.l.b16 %v6757
        %v7629 = vunpack.c.l.b16 %v6758
        %v7630 = vunpack.c.h.b16 %v6758
        %v7631 = vunpack.c.l.b16 %v6759
        %v7632 = vunpack.c.l.b16 %v6760
        %v7633 = vunpack.c.h.b16 %v6760
        %v7634 = vunpack.c.l.b16 %v6761
        %v7635 = vunpack.c.l.b16 %v6762
        %v7636 = vunpack.c.h.b16 %v6762
        %v7637 = vunpack.c.l.b16 %v6763
        %v7638 = vunpack.c.l.b16 %v6764
        %v7639 = vunpack.c.h.b16 %v6764
        %v7640 = vunpack.c.l.b16 %v6765
        %v7641 = vunpack.c.l.b16 %v6766
        %v7642 = vunpack.c.h.b16 %v6766
        %v7643 = vunpack.c.l.b16 %v6767
        %v7644 = vunpack.c.l.b16 %v6768
        %v7645 = vunpack.c.h.b16 %v6768
        %v7646 = vunpack.c.l.b16 %v6769
        %v7647 = vunpack.c.l.b16 %v6770
        %v7648 = vunpack.c.h.b16 %v6770
        %v7649 = vunpack.c.l.b16 %v6771
        %v7650 = vunpack.c.l.b16 %v6772
        %v7651 = vunpack.c.h.b16 %v6772
        %v7652 = vunpack.c.l.b16 %v6773
        %v7653 = vunpack.c.l.b16 %v6774
        %v7654 = vunpack.c.h.b16 %v6774
        %v7655 = vunpack.c.l.b16 %v6775
        %v7656 = vunpack.c.l.b16 %v6776
        %v7657 = vunpack.c.h.b16 %v6776
        %v7658 = vunpack.c.l.b16 %v6777
        %v7659 = vunpack.c.l.b16 %v6778
        %v7660 = vunpack.c.h.b16 %v6778
        %v7661 = vunpack.c.l.b16 %v6779
        %v7662 = vunpack.c.l.b16 %v6780
        %v7663 = vunpack.c.h.b16 %v6780
        %v7664 = vunpack.c.l.b16 %v6781
        %v7665 = vunpack.c.l.b16 %v6782
        %v7666 = vunpack.c.h.b16 %v6782
        %v7667 = vunpack.c.l.b16 %v6783
        %v7668 = vunpack.c.l.b16 %v6784
        %v7669 = vunpack.c.h.b16 %v6784
        %v7670 = vunpack.c.l.b16 %v6785
        %v7671 = vunpack.c.l.b16 %v6786
        %v7672 = vunpack.c.h.b16 %v6786
        %v7673 = vunpack.c.l.b16 %v6787
        %v7674 = vunpack.c.l.b16 %v6788
        %v7675 = vunpack.c.h.b16 %v6788
        %v7676 = vunpack.c.l.b16 %v6789
        %v7677 = vunpack.c.l.b16 %v6790
        %v7678 = vunpack.c.h.b16 %v6790
        %v7679 = vunpack.c.l.b16 %v6791
        %v7680 = vunpack.c.l.b16 %v6792
        %v7681 = vunpack.c.h.b16 %v6792
        %v7682 = vunpack.c.l.b16 %v6793
        %v7683 = vunpack.c.l.b16 %v6794
        %v7684 = vunpack.c.h.b16 %v6794
        %v7685 = vunpack.c.l.b16 %v6795
        %v7686 = vunpack.c.l.b16 %v6796
        %v7687 = vunpack.c.h.b16 %v6796
        %v7688 = vunpack.c.l.b16 %v6797
        %v7689 = vunpack.c.l.b16 %v6798
        %v7690 = vunpack.c.h.b16 %v6798
        %v7691 = vunpack.c.l.b16 %v6799
        %v7692 = vpack.c.b16 %v7503, %v7500
        %v7693 = vpack.c.b16 %v7504, %v7501
        %v7694 = vpack.c.b16 %v7505, %v7502
        %v7695 = vpack.c.b16 %v7509, %v7506
        %v7696 = vpack.c.b16 %v7510, %v7507
        %v7697 = vpack.c.b16 %v7511, %v7508
        %v7698 = vpack.c.b16 %v7515, %v7512
        %v7699 = vpack.c.b16 %v7516, %v7513
        %v7700 = vpack.c.b16 %v7517, %v7514
        %v7701 = vpack.c.b16 %v7521, %v7518
        %v7702 = vpack.c.b16 %v7522, %v7519
        %v7703 = vpack.c.b16 %v7523, %v7520
        %v7704 = vpack.c.b16 %v7527, %v7524
        %v7705 = vpack.c.b16 %v7528, %v7525
        %v7706 = vpack.c.b16 %v7529, %v7526
        %v7707 = vpack.c.b16 %v7533, %v7530
        %v7708 = vpack.c.b16 %v7534, %v7531
        %v7709 = vpack.c.b16 %v7535, %v7532
        %v7710 = vpack.c.b16 %v7539, %v7536
        %v7711 = vpack.c.b16 %v7540, %v7537
        %v7712 = vpack.c.b16 %v7541, %v7538
        %v7713 = vpack.c.b16 %v7545, %v7542
        %v7714 = vpack.c.b16 %v7546, %v7543
        %v7715 = vpack.c.b16 %v7547, %v7544
        %v7716 = vpack.c.b16 %v7551, %v7548
        %v7717 = vpack.c.b16 %v7552, %v7549
        %v7718 = vpack.c.b16 %v7553, %v7550
        %v7719 = vpack.c.b16 %v7557, %v7554
        %v7720 = vpack.c.b16 %v7558, %v7555
        %v7721 = vpack.c.b16 %v7559, %v7556
        %v7722 = vpack.c.b16 %v7563, %v7560
        %v7723 = vpack.c.b16 %v7564, %v7561
        %v7724 = vpack.c.b16 %v7565, %v7562
        %v7725 = vpack.c.b16 %v7569, %v7566
        %v7726 = vpack.c.b16 %v7570, %v7567
        %v7727 = vpack.c.b16 %v7571, %v7568
        %v7728 = vpack.c.b16 %v7575, %v7572
        %v7729 = vpack.c.b16 %v7576, %v7573
        %v7730 = vpack.c.b16 %v7577, %v7574
        %v7731 = vpack.c.b16 %v7581, %v7578
        %v7732 = vpack.c.b16 %v7582, %v7579
        %v7733 = vpack.c.b16 %v7583, %v7580
        %v7734 = vpack.c.b16 %v7587, %v7584
        %v7735 = vpack.c.b16 %v7588, %v7585
        %v7736 = vpack.c.b16 %v7589, %v7586
        %v7737 = vpack.c.b16 %v7593, %v7590
        %v7738 = vpack.c.b16 %v7594, %v7591
        %v7739 = vpack.c.b16 %v7595, %v7592
        %v7740 = vpack.c.b16 %v7599, %v7596
        %v7741 = vpack.c.b16 %v7600, %v7597
        %v7742 = vpack.c.b16 %v7601, %v7598
        %v7743 = vpack.c.b16 %v7605, %v7602
        %v7744 = vpack.c.b16 %v7606, %v7603
        %v7745 = vpack.c.b16 %v7607, %v7604
        %v7746 = vpack.c.b16 %v7611, %v7608
        %v7747 = vpack.c.b16 %v7612, %v7609
        %v7748 = vpack.c.b16 %v7613, %v7610
        %v7749 = vpack.c.b16 %v7617, %v7614
        %v7750 = vpack.c.b16 %v7618, %v7615
        %v7751 = vpack.c.b16 %v7619, %v7616
        %v7752 = vpack.c.b16 %v7623, %v7620
        %v7753 = vpack.c.b16 %v7624, %v7621
        %v7754 = vpack.c.b16 %v7625, %v7622
        %v7755 = vpack.c.b16 %v7629, %v7626
        %v7756 = vpack.c.b16 %v7630, %v7627
        %v7757 = vpack.c.b16 %v7631, %v7628
        %v7758 = vpack.c.b16 %v7635, %v7632
        %v7759 = vpack.c.b16 %v7636, %v7633
        %v7760 = vpack.c.b16 %v7637, %v7634
        %v7761 = vpack.c.b16 %v7641, %v7638
        %v7762 = vpack.c.b16 %v7642, %v7639
        %v7763 = vpack.c.b16 %v7643, %v7640
        %v7764 = vpack.c.b16 %v7647, %v7644
        %v7765 = vpack.c.b16 %v7648, %v7645
        %v7766 = vpack.c.b16 %v7649, %v7646
        %v7767 = vpack.c.b16 %v7653, %v7650
        %v7768 = vpack.c.b16 %v7654, %v7651
        %v7769 = vpack.c.b16 %v7655, %v7652
        %v7770 = vpack.c.b16 %v7659, %v7656
        %v7771 = vpack.c.b16 %v7660, %v7657
        %v7772 = vpack.c.b16 %v7661, %v7658
        %v7773 = vpack.c.b16 %v7665, %v7662
        %v7774 = vpack.c.b16 %v7666, %v7663
        %v7775 = vpack.c.b16 %v7667, %v7664
        %v7776 = vpack.c.b16 %v7671, %v7668
        %v7777 = vpack.c.b16 %v7672, %v7669
        %v7778 = vpack.c.b16 %v7673, %v7670
        %v7779 = vpack.c.b16 %v7677, %v7674
        %v7780 = vpack.c.b16 %v7678, %v7675
        %v7781 = vpack.c.b16 %v7679, %v7676
        %v7782 = vpack.c.b16 %v7683, %v7680
        %v7783 = vpack.c.b16 %v7684, %v7681
        %v7784 = vpack.c.b16 %v7685, %v7682
        %v7785 = vpack.c.b16 %v7689, %v7686
        %v7786 = vpack.c.b16 %v7690, %v7687
        %v7787 = vpack.c.b16 %v7691, %v7688
        %7884 = vmatprep.subr.bf16.mxu0 %v7714
        %7885 = vmatpush1.bf16.msra.mxu0 %v7713
        %7886 = vmatprep.subr.bf16.mxu0 %v7711
        %7887 = vmatpush1.bf16.msra.mxu0 %v7710
        %7888 = vmatprep.subr.bf16.mxu0 %v7708
        %7889 = vmatpush1.bf16.msra.mxu0 %v7707
        %7890 = vmatprep.subr.bf16.mxu0 %v7705
        %7891 = vmatpush1.bf16.msra.mxu0 %v7704
        %7892 = vmatprep.subr.bf16.mxu0 %v7702
        %7893 = vmatpush1.bf16.msra.mxu0 %v7701
        %7894 = vmatprep.subr.bf16.mxu0 %v7699
        %7895 = vmatpush1.bf16.msra.mxu0 %v7698
        %7896 = vmatprep.subr.bf16.mxu0 %v7696
        %7897 = vmatpush1.bf16.msra.mxu0 %v7695
        %7898 = vmatprep.subr.bf16.mxu0 %v7693
        %7899 = vmatpush1.bf16.msra.mxu0 %v7692
        %7900 = vmatprep.subr.bf16.mxu0 %v7738
        %7901 = vmatpush2.bf16.msra.mxu0 %v7737
        %7902 = vmatprep.subr.bf16.mxu0 %v7735
        %7903 = vmatpush2.bf16.msra.mxu0 %v7734
        %7904 = vmatprep.subr.bf16.mxu0 %v7732
        %7905 = vmatpush2.bf16.msra.mxu0 %v7731
        %7906 = vmatprep.subr.bf16.mxu0 %v7729
        %7907 = vmatpush2.bf16.msra.mxu0 %v7728
        %7908 = vmatprep.subr.bf16.mxu0 %v7726
        %7909 = vmatpush2.bf16.msra.mxu0 %v7725
        %7910 = vmatprep.subr.bf16.mxu0 %v7723
        %7911 = vmatpush2.bf16.msra.mxu0 %v7722
        %7912 = vmatprep.subr.bf16.mxu0 %v7720
        %7913 = vmatpush2.bf16.msra.mxu0 %v7719
        %7914 = vmatprep.subr.bf16.mxu0 %v7717
        %7915 = vmatpush2.bf16.msra.mxu0 %v7716
        %7916 = vmatprep.mubr.bf16.mxu0 %v6823
        %7917 = vmatmul.mubr.bf16.gmra.mxu0 %v6811
        %v7918 = vpop.f32.mrf.mxu0
        %v7919 = vadd.f32 0.0, %v7918
        %v7920 = vpop.f32.mrf.mxu0
        %v7921 = vadd.f32 0.0, %v7920
        %v7922 = vpop.f32.mrf.mxu0
        %v7923 = vadd.f32 0.0, %v7922
        %v7924 = vpop.f32.mrf.mxu0
        %v7925 = vadd.f32 0.0, %v7924
        %7926 = vmatprep.mubr.bf16.mxu0 %v6863
        %7927 = vmatmul.mubr.bf16.gmra.mxu0 %v6855
        %v7928 = vpop.f32.mrf.mxu0
        %v7929 = vadd.f32 0.0, %v7928
        %v7930 = vpop.f32.mrf.mxu0
        %v7931 = vadd.f32 0.0, %v7930
        %v7932 = vpop.f32.mrf.mxu0
        %v7933 = vadd.f32 0.0, %v7932
        %v7934 = vpop.f32.mrf.mxu0
        %v7935 = vadd.f32 0.0, %v7934
        %7936 = vmatprep.mubr.bf16.mxu0 %v6895
        %7937 = vmatmul.mubr.bf16.gmra.mxu0 %v6887
        %v7938 = vpop.f32.mrf.mxu0
        %v7939 = vadd.f32 0.0, %v7938
        %v7940 = vpop.f32.mrf.mxu0
        %v7941 = vadd.f32 0.0, %v7940
        %v7942 = vpop.f32.mrf.mxu0
        %v7943 = vadd.f32 0.0, %v7942
        %v7944 = vpop.f32.mrf.mxu0
        %v7945 = vadd.f32 0.0, %v7944
        %7946 = vmatprep.mubr.bf16.mxu0 %v6927
        %7947 = vmatmul.mubr.bf16.gmra.mxu0 %v6919
        %v7948 = vpop.f32.mrf.mxu0
        %v7949 = vadd.f32 0.0, %v7948
        %v7950 = vpop.f32.mrf.mxu0
        %v7951 = vadd.f32 0.0, %v7950
        %v7952 = vpop.f32.mrf.mxu0
        %v7953 = vadd.f32 0.0, %v7952
        %v7954 = vpop.f32.mrf.mxu0
        %v7955 = vadd.f32 0.0, %v7954
        %7956 = vmatprep.mubr.bf16.mxu0 %v6959
        %7957 = vmatmul.mubr.bf16.gmra.mxu0 %v6951
        %v7958 = vpop.f32.mrf.mxu0
        %v7959 = vadd.f32 0.0, %v7958
        %v7960 = vpop.f32.mrf.mxu0
        %v7961 = vadd.f32 0.0, %v7960
        %v7962 = vpop.f32.mrf.mxu0
        %v7963 = vadd.f32 0.0, %v7962
        %v7964 = vpop.f32.mrf.mxu0
        %v7965 = vadd.f32 0.0, %v7964
        %7966 = vmatprep.mubr.bf16.mxu0 %v6991
        %7967 = vmatmul.mubr.bf16.gmra.mxu0 %v6983
        %v7968 = vpop.f32.mrf.mxu0
        %v7969 = vadd.f32 0.0, %v7968
        %v7970 = vpop.f32.mrf.mxu0
        %v7971 = vadd.f32 0.0, %v7970
        %v7972 = vpop.f32.mrf.mxu0
        %v7973 = vadd.f32 0.0, %v7972
        %v7974 = vpop.f32.mrf.mxu0
        %v7975 = vadd.f32 0.0, %v7974
        %7976 = vmatprep.mubr.bf16.mxu0 %v7023
        %7977 = vmatmul.mubr.bf16.gmra.mxu0 %v7015
        %v7978 = vpop.f32.mrf.mxu0
        %v7979 = vadd.f32 0.0, %v7978
        %v7980 = vpop.f32.mrf.mxu0
        %v7981 = vadd.f32 0.0, %v7980
        %v7982 = vpop.f32.mrf.mxu0
        %v7983 = vadd.f32 0.0, %v7982
        %v7984 = vpop.f32.mrf.mxu0
        %v7985 = vadd.f32 0.0, %v7984
        %7986 = vmatprep.mubr.bf16.mxu0 %v7055
        %7987 = vmatmul.mubr.bf16.gmra.mxu0 %v7047
        %v7988 = vpop.f32.mrf.mxu0
        %v7989 = vadd.f32 0.0, %v7988
        %v7990 = vpop.f32.mrf.mxu0
        %v7991 = vadd.f32 0.0, %v7990
        %v7992 = vpop.f32.mrf.mxu0
        %v7993 = vadd.f32 0.0, %v7992
        %v7994 = vpop.f32.mrf.mxu0
        %v7995 = vadd.f32 0.0, %v7994
        %7996 = vmatprep.mubr.bf16.mxu0 %v7087
        %7997 = vmatmul.mubr.bf16.gmra.mxu0 %v7079
        %v7998 = vpop.f32.mrf.mxu0
        %v7999 = vadd.f32 0.0, %v7998
        %v8000 = vpop.f32.mrf.mxu0
        %v8001 = vadd.f32 0.0, %v8000
        %v8002 = vpop.f32.mrf.mxu0
        %v8003 = vadd.f32 0.0, %v8002
        %v8004 = vpop.f32.mrf.mxu0
        %v8005 = vadd.f32 0.0, %v8004
        %8006 = vmatprep.mubr.bf16.mxu0 %v7119
        %8007 = vmatmul.mubr.bf16.gmra.mxu0 %v7111
        %v8008 = vpop.f32.mrf.mxu0
        %v8009 = vadd.f32 0.0, %v8008
        %v8010 = vpop.f32.mrf.mxu0
        %v8011 = vadd.f32 0.0, %v8010
        %v8012 = vpop.f32.mrf.mxu0
        %v8013 = vadd.f32 0.0, %v8012
        %v8014 = vpop.f32.mrf.mxu0
        %v8015 = vadd.f32 0.0, %v8014
        %8016 = vmatprep.mubr.bf16.mxu0 %v7151
        %8017 = vmatmul.mubr.bf16.gmra.mxu0 %v7143
        %v8018 = vpop.f32.mrf.mxu0
        %v8019 = vadd.f32 0.0, %v8018
        %v8020 = vpop.f32.mrf.mxu0
        %v8021 = vadd.f32 0.0, %v8020
        %v8022 = vpop.f32.mrf.mxu0
        %v8023 = vadd.f32 0.0, %v8022
        %v8024 = vpop.f32.mrf.mxu0
        %v8025 = vadd.f32 0.0, %v8024
        %8026 = vmatprep.mubr.bf16.mxu0 %v7183
        %8027 = vmatmul.mubr.bf16.gmra.mxu0 %v7175
        %v8028 = vpop.f32.mrf.mxu0
        %v8029 = vadd.f32 0.0, %v8028
        %v8030 = vpop.f32.mrf.mxu0
        %v8031 = vadd.f32 0.0, %v8030
        %v8032 = vpop.f32.mrf.mxu0
        %v8033 = vadd.f32 0.0, %v8032
        %v8034 = vpop.f32.mrf.mxu0
        %v8035 = vadd.f32 0.0, %v8034
        %8036 = vmatprep.mubr.bf16.mxu0 %v7215
        %8037 = vmatmul.mubr.bf16.gmra.mxu0 %v7207
        %v8038 = vpop.f32.mrf.mxu0
        %v8039 = vadd.f32 0.0, %v8038
        %v8040 = vpop.f32.mrf.mxu0
        %v8041 = vadd.f32 0.0, %v8040
        %v8042 = vpop.f32.mrf.mxu0
        %v8043 = vadd.f32 0.0, %v8042
        %v8044 = vpop.f32.mrf.mxu0
        %v8045 = vadd.f32 0.0, %v8044
        %8046 = vmatprep.mubr.bf16.mxu0 %v7247
        %8047 = vmatmul.mubr.bf16.gmra.mxu0 %v7239
        %v8048 = vpop.f32.mrf.mxu0
        %v8049 = vadd.f32 0.0, %v8048
        %v8050 = vpop.f32.mrf.mxu0
        %v8051 = vadd.f32 0.0, %v8050
        %v8052 = vpop.f32.mrf.mxu0
        %v8053 = vadd.f32 0.0, %v8052
        %v8054 = vpop.f32.mrf.mxu0
        %v8055 = vadd.f32 0.0, %v8054
        %8056 = vmatprep.mubr.bf16.mxu0 %v7279
        %8057 = vmatmul.mubr.bf16.gmra.mxu0 %v7271
        %v8058 = vpop.f32.mrf.mxu0
        %v8059 = vadd.f32 0.0, %v8058
        %v8060 = vpop.f32.mrf.mxu0
        %v8061 = vadd.f32 0.0, %v8060
        %v8062 = vpop.f32.mrf.mxu0
        %v8063 = vadd.f32 0.0, %v8062
        %v8064 = vpop.f32.mrf.mxu0
        %v8065 = vadd.f32 0.0, %v8064
        %8066 = vmatprep.mubr.bf16.mxu0 %v7301
        %8067 = vmatmul.mubr.bf16.gmra.mxu0 %v7298
        %v8068 = vpop.f32.mrf.mxu0
        %v8069 = vadd.f32 0.0, %v8068
        %v8070 = vpop.f32.mrf.mxu0
        %v8071 = vadd.f32 0.0, %v8070
        %v8072 = vpop.f32.mrf.mxu0
        %v8073 = vadd.f32 0.0, %v8072
        %v8074 = vpop.f32.mrf.mxu0
        %v8075 = vadd.f32 0.0, %v8074
        %8076 = vdwg.mxu0
        %8077 = vmatprep.subr.bf16.mxu0 %v7762
        %8078 = vmatpush1.bf16.msra.mxu0 %v7761
        %8079 = vmatprep.subr.bf16.mxu0 %v7759
        %8080 = vmatpush1.bf16.msra.mxu0 %v7758
        %8081 = vmatprep.subr.bf16.mxu0 %v7756
        %8082 = vmatpush1.bf16.msra.mxu0 %v7755
        %8083 = vmatprep.subr.bf16.mxu0 %v7753
        %8084 = vmatpush1.bf16.msra.mxu0 %v7752
        %8085 = vmatprep.subr.bf16.mxu0 %v7750
        %8086 = vmatpush1.bf16.msra.mxu0 %v7749
        %8087 = vmatprep.subr.bf16.mxu0 %v7747
        %8088 = vmatpush1.bf16.msra.mxu0 %v7746
        %8089 = vmatprep.subr.bf16.mxu0 %v7744
        %8090 = vmatpush1.bf16.msra.mxu0 %v7743
        %8091 = vmatprep.subr.bf16.mxu0 %v7741
        %8092 = vmatpush1.bf16.msra.mxu0 %v7740
        %8093 = vmatprep.subr.bf16.mxu0 %v7786
        %8094 = vmatpush2.bf16.msra.mxu0 %v7785
        %8095 = vmatprep.subr.bf16.mxu0 %v7783
        %8096 = vmatpush2.bf16.msra.mxu0 %v7782
        %8097 = vmatprep.subr.bf16.mxu0 %v7780
        %8098 = vmatpush2.bf16.msra.mxu0 %v7779
        %8099 = vmatprep.subr.bf16.mxu0 %v7777
        %8100 = vmatpush2.bf16.msra.mxu0 %v7776
        %8101 = vmatprep.subr.bf16.mxu0 %v7774
        %8102 = vmatpush2.bf16.msra.mxu0 %v7773
        %8103 = vmatprep.subr.bf16.mxu0 %v7771
        %8104 = vmatpush2.bf16.msra.mxu0 %v7770
        %8105 = vmatprep.subr.bf16.mxu0 %v7768
        %8106 = vmatpush2.bf16.msra.mxu0 %v7767
        %8107 = vmatprep.subr.bf16.mxu0 %v7765
        %8108 = vmatpush2.bf16.msra.mxu0 %v7764
        %8109 = vmatprep.mubr.bf16.mxu0 %v6847
        %8110 = vmatmul.mubr.bf16.gmra.mxu0 %v6835
        %v8111 = vpop.f32.mrf.mxu0
        %v8112 = vadd.f32 %v7919, %v8111
        %v8113 = vpop.f32.mrf.mxu0
        %v8114 = vadd.f32 %v7921, %v8113
        %v8115 = vpop.f32.mrf.mxu0
        %v8116 = vadd.f32 %v7923, %v8115
        %v8117 = vpop.f32.mrf.mxu0
        %v8118 = vadd.f32 %v7925, %v8117
        %8119 = vmatprep.mubr.bf16.mxu0 %v6879
        %8120 = vmatmul.mubr.bf16.gmra.mxu0 %v6871
        %v8121 = vpop.f32.mrf.mxu0
        %v8122 = vadd.f32 %v7929, %v8121
        %v8123 = vpop.f32.mrf.mxu0
        %v8124 = vadd.f32 %v7931, %v8123
        %v8125 = vpop.f32.mrf.mxu0
        %v8126 = vadd.f32 %v7933, %v8125
        %v8127 = vpop.f32.mrf.mxu0
        %v8128 = vadd.f32 %v7935, %v8127
        %8129 = vmatprep.mubr.bf16.mxu0 %v6911
        %8130 = vmatmul.mubr.bf16.gmra.mxu0 %v6903
        %v8131 = vpop.f32.mrf.mxu0
        %v8132 = vadd.f32 %v7939, %v8131
        %v8133 = vpop.f32.mrf.mxu0
        %v8134 = vadd.f32 %v7941, %v8133
        %v8135 = vpop.f32.mrf.mxu0
        %v8136 = vadd.f32 %v7943, %v8135
        %v8137 = vpop.f32.mrf.mxu0
        %v8138 = vadd.f32 %v7945, %v8137
        %8139 = vmatprep.mubr.bf16.mxu0 %v6943
        %8140 = vmatmul.mubr.bf16.gmra.mxu0 %v6935
        %v8141 = vpop.f32.mrf.mxu0
        %v8142 = vadd.f32 %v7949, %v8141
        %v8143 = vpop.f32.mrf.mxu0
        %v8144 = vadd.f32 %v7951, %v8143
        %v8145 = vpop.f32.mrf.mxu0
        %v8146 = vadd.f32 %v7953, %v8145
        %v8147 = vpop.f32.mrf.mxu0
        %v8148 = vadd.f32 %v7955, %v8147
        %8149 = vmatprep.mubr.bf16.mxu0 %v6975
        %8150 = vmatmul.mubr.bf16.gmra.mxu0 %v6967
        %v8151 = vpop.f32.mrf.mxu0
        %v8152 = vadd.f32 %v7959, %v8151
        %v8153 = vpop.f32.mrf.mxu0
        %v8154 = vadd.f32 %v7961, %v8153
        %v8155 = vpop.f32.mrf.mxu0
        %v8156 = vadd.f32 %v7963, %v8155
        %v8157 = vpop.f32.mrf.mxu0
        %v8158 = vadd.f32 %v7965, %v8157
        %8159 = vmatprep.mubr.bf16.mxu0 %v7007
        %8160 = vmatmul.mubr.bf16.gmra.mxu0 %v6999
        %v8161 = vpop.f32.mrf.mxu0
        %v8162 = vadd.f32 %v7969, %v8161
        %v8163 = vpop.f32.mrf.mxu0
        %v8164 = vadd.f32 %v7971, %v8163
        %v8165 = vpop.f32.mrf.mxu0
        %v8166 = vadd.f32 %v7973, %v8165
        %v8167 = vpop.f32.mrf.mxu0
        %v8168 = vadd.f32 %v7975, %v8167
        %8169 = vmatprep.mubr.bf16.mxu0 %v7039
        %8170 = vmatmul.mubr.bf16.gmra.mxu0 %v7031
        %v8171 = vpop.f32.mrf.mxu0
        %v8172 = vadd.f32 %v7979, %v8171
        %v8173 = vpop.f32.mrf.mxu0
        %v8174 = vadd.f32 %v7981, %v8173
        %v8175 = vpop.f32.mrf.mxu0
        %v8176 = vadd.f32 %v7983, %v8175
        %v8177 = vpop.f32.mrf.mxu0
        %v8178 = vadd.f32 %v7985, %v8177
        %8179 = vmatprep.mubr.bf16.mxu0 %v7071
        %8180 = vmatmul.mubr.bf16.gmra.mxu0 %v7063
        %v8181 = vpop.f32.mrf.mxu0
        %v8182 = vadd.f32 %v7989, %v8181
        %v8183 = vpop.f32.mrf.mxu0
        %v8184 = vadd.f32 %v7991, %v8183
        %v8185 = vpop.f32.mrf.mxu0
        %v8186 = vadd.f32 %v7993, %v8185
        %v8187 = vpop.f32.mrf.mxu0
        %v8188 = vadd.f32 %v7995, %v8187
        %8189 = vmatprep.mubr.bf16.mxu0 %v7103
        %8190 = vmatmul.mubr.bf16.gmra.mxu0 %v7095
        %v8191 = vpop.f32.mrf.mxu0
        %v8192 = vadd.f32 %v7999, %v8191
        %v8193 = vpop.f32.mrf.mxu0
        %v8194 = vadd.f32 %v8001, %v8193
        %v8195 = vpop.f32.mrf.mxu0
        %v8196 = vadd.f32 %v8003, %v8195
        %v8197 = vpop.f32.mrf.mxu0
        %v8198 = vadd.f32 %v8005, %v8197
        %8199 = vmatprep.mubr.bf16.mxu0 %v7135
        %8200 = vmatmul.mubr.bf16.gmra.mxu0 %v7127
        %v8201 = vpop.f32.mrf.mxu0
        %v8202 = vadd.f32 %v8009, %v8201
        %v8203 = vpop.f32.mrf.mxu0
        %v8204 = vadd.f32 %v8011, %v8203
        %v8205 = vpop.f32.mrf.mxu0
        %v8206 = vadd.f32 %v8013, %v8205
        %v8207 = vpop.f32.mrf.mxu0
        %v8208 = vadd.f32 %v8015, %v8207
        %8209 = vmatprep.mubr.bf16.mxu0 %v7167
        %8210 = vmatmul.mubr.bf16.gmra.mxu0 %v7159
        %v8211 = vpop.f32.mrf.mxu0
        %v8212 = vadd.f32 %v8019, %v8211
        %v8213 = vpop.f32.mrf.mxu0
        %v8214 = vadd.f32 %v8021, %v8213
        %v8215 = vpop.f32.mrf.mxu0
        %v8216 = vadd.f32 %v8023, %v8215
        %v8217 = vpop.f32.mrf.mxu0
        %v8218 = vadd.f32 %v8025, %v8217
        %8219 = vmatprep.mubr.bf16.mxu0 %v7199
        %8220 = vmatmul.mubr.bf16.gmra.mxu0 %v7191
        %v8221 = vpop.f32.mrf.mxu0
        %v8222 = vadd.f32 %v8029, %v8221
        %v8223 = vpop.f32.mrf.mxu0
        %v8224 = vadd.f32 %v8031, %v8223
        %v8225 = vpop.f32.mrf.mxu0
        %v8226 = vadd.f32 %v8033, %v8225
        %v8227 = vpop.f32.mrf.mxu0
        %v8228 = vadd.f32 %v8035, %v8227
        %8229 = vmatprep.mubr.bf16.mxu0 %v7231
        %8230 = vmatmul.mubr.bf16.gmra.mxu0 %v7223
        %v8231 = vpop.f32.mrf.mxu0
        %v8232 = vadd.f32 %v8039, %v8231
        %v8233 = vpop.f32.mrf.mxu0
        %v8234 = vadd.f32 %v8041, %v8233
        %v8235 = vpop.f32.mrf.mxu0
        %v8236 = vadd.f32 %v8043, %v8235
        %v8237 = vpop.f32.mrf.mxu0
        %v8238 = vadd.f32 %v8045, %v8237
        %8239 = vmatprep.mubr.bf16.mxu0 %v7263
        %8240 = vmatmul.mubr.bf16.gmra.mxu0 %v7255
        %v8241 = vpop.f32.mrf.mxu0
        %v8242 = vadd.f32 %v8049, %v8241
        %v8243 = vpop.f32.mrf.mxu0
        %v8244 = vadd.f32 %v8051, %v8243
        %v8245 = vpop.f32.mrf.mxu0
        %v8246 = vadd.f32 %v8053, %v8245
        %v8247 = vpop.f32.mrf.mxu0
        %v8248 = vadd.f32 %v8055, %v8247
        %8249 = vmatprep.mubr.bf16.mxu0 %v7295
        %8250 = vmatmul.mubr.bf16.gmra.mxu0 %v7287
        %v8251 = vpop.f32.mrf.mxu0
        %v8252 = vadd.f32 %v8059, %v8251
        %v8253 = vpop.f32.mrf.mxu0
        %v8254 = vadd.f32 %v8061, %v8253
        %v8255 = vpop.f32.mrf.mxu0
        %v8256 = vadd.f32 %v8063, %v8255
        %v8257 = vpop.f32.mrf.mxu0
        %v8258 = vadd.f32 %v8065, %v8257
        %8259 = vmatprep.mubr.bf16.mxu0 %v7307
        %8260 = vmatmul.mubr.bf16.gmra.mxu0 %v7304
        %v8261 = vpop.f32.mrf.mxu0
        %v8262 = vadd.f32 %v8069, %v8261
        %v8263 = vpop.f32.mrf.mxu0
        %v8264 = vadd.f32 %v8071, %v8263
        %v8265 = vpop.f32.mrf.mxu0
        %v8266 = vadd.f32 %v8073, %v8265
        %v8267 = vpop.f32.mrf.mxu0
        %v8268 = vadd.f32 %v8075, %v8267
        %8269 = vdwg.mxu0
        %8270 = vmatprep.subr.bf16.mxu0 0
        %8271 = vmatpush1.bf16.msra.mxu0 %v7715
        %8272 = vmatprep.subr.bf16.mxu0 0
        %8273 = vmatpush1.bf16.msra.mxu0 %v7712
        %8274 = vmatprep.subr.bf16.mxu0 0
        %8275 = vmatpush1.bf16.msra.mxu0 %v7709
        %8276 = vmatprep.subr.bf16.mxu0 0
        %8277 = vmatpush1.bf16.msra.mxu0 %v7706
        %8278 = vmatprep.subr.bf16.mxu0 0
        %8279 = vmatpush1.bf16.msra.mxu0 %v7703
        %8280 = vmatprep.subr.bf16.mxu0 0
        %8281 = vmatpush1.bf16.msra.mxu0 %v7700
        %8282 = vmatprep.subr.bf16.mxu0 0
        %8283 = vmatpush1.bf16.msra.mxu0 %v7697
        %8284 = vmatprep.subr.bf16.mxu0 0
        %8285 = vmatpush1.bf16.msra.mxu0 %v7694
        %8286 = vmatprep.subr.bf16.mxu0 0
        %8287 = vmatpush2.bf16.msra.mxu0 %v7739
        %8288 = vmatprep.subr.bf16.mxu0 0
        %8289 = vmatpush2.bf16.msra.mxu0 %v7736
        %8290 = vmatprep.subr.bf16.mxu0 0
        %8291 = vmatpush2.bf16.msra.mxu0 %v7733
        %8292 = vmatprep.subr.bf16.mxu0 0
        %8293 = vmatpush2.bf16.msra.mxu0 %v7730
        %8294 = vmatprep.subr.bf16.mxu0 0
        %8295 = vmatpush2.bf16.msra.mxu0 %v7727
        %8296 = vmatprep.subr.bf16.mxu0 0
        %8297 = vmatpush2.bf16.msra.mxu0 %v7724
        %8298 = vmatprep.subr.bf16.mxu0 0
        %8299 = vmatpush2.bf16.msra.mxu0 %v7721
        %8300 = vmatprep.subr.bf16.mxu0 0
        %8301 = vmatpush2.bf16.msra.mxu0 %v7718
        %8302 = vmatprep.mubr.bf16.mxu0 %v6823
        %8303 = vmatmul.mubr.bf16.gmra.mxu0 %v6811
        %v8304 = vpop.f32.mrf.mxu0
        %v8305 = vadd.f32 0.0, %v8304
        %v8306 = vpop.f32.mrf.mxu0
        %v8307 = vpop.f32.mrf.mxu0
        %v8308 = vadd.f32 0.0, %v8307
        %v8309 = vpop.f32.mrf.mxu0
        %8310 = vmatprep.mubr.bf16.mxu0 %v6863
        %8311 = vmatmul.mubr.bf16.gmra.mxu0 %v6855
        %v8312 = vpop.f32.mrf.mxu0
        %v8313 = vadd.f32 0.0, %v8312
        %v8314 = vpop.f32.mrf.mxu0
        %v8315 = vpop.f32.mrf.mxu0
        %v8316 = vadd.f32 0.0, %v8315
        %v8317 = vpop.f32.mrf.mxu0
        %8318 = vmatprep.mubr.bf16.mxu0 %v6895
        %8319 = vmatmul.mubr.bf16.gmra.mxu0 %v6887
        %v8320 = vpop.f32.mrf.mxu0
        %v8321 = vadd.f32 0.0, %v8320
        %v8322 = vpop.f32.mrf.mxu0
        %v8323 = vpop.f32.mrf.mxu0
        %v8324 = vadd.f32 0.0, %v8323
        %v8325 = vpop.f32.mrf.mxu0
        %8326 = vmatprep.mubr.bf16.mxu0 %v6927
        %8327 = vmatmul.mubr.bf16.gmra.mxu0 %v6919
        %v8328 = vpop.f32.mrf.mxu0
        %v8329 = vadd.f32 0.0, %v8328
        %v8330 = vpop.f32.mrf.mxu0
        %v8331 = vpop.f32.mrf.mxu0
        %v8332 = vadd.f32 0.0, %v8331
        %v8333 = vpop.f32.mrf.mxu0
        %8334 = vmatprep.mubr.bf16.mxu0 %v6959
        %8335 = vmatmul.mubr.bf16.gmra.mxu0 %v6951
        %v8336 = vpop.f32.mrf.mxu0
        %v8337 = vadd.f32 0.0, %v8336
        %v8338 = vpop.f32.mrf.mxu0
        %v8339 = vpop.f32.mrf.mxu0
        %v8340 = vadd.f32 0.0, %v8339
        %v8341 = vpop.f32.mrf.mxu0
        %8342 = vmatprep.mubr.bf16.mxu0 %v6991
        %8343 = vmatmul.mubr.bf16.gmra.mxu0 %v6983
        %v8344 = vpop.f32.mrf.mxu0
        %v8345 = vadd.f32 0.0, %v8344
        %v8346 = vpop.f32.mrf.mxu0
        %v8347 = vpop.f32.mrf.mxu0
        %v8348 = vadd.f32 0.0, %v8347
        %v8349 = vpop.f32.mrf.mxu0
        %8350 = vmatprep.mubr.bf16.mxu0 %v7023
        %8351 = vmatmul.mubr.bf16.gmra.mxu0 %v7015
        %v8352 = vpop.f32.mrf.mxu0
        %v8353 = vadd.f32 0.0, %v8352
        %v8354 = vpop.f32.mrf.mxu0
        %v8355 = vpop.f32.mrf.mxu0
        %v8356 = vadd.f32 0.0, %v8355
        %v8357 = vpop.f32.mrf.mxu0
        %8358 = vmatprep.mubr.bf16.mxu0 %v7055
        %8359 = vmatmul.mubr.bf16.gmra.mxu0 %v7047
        %v8360 = vpop.f32.mrf.mxu0
        %v8361 = vadd.f32 0.0, %v8360
        %v8362 = vpop.f32.mrf.mxu0
        %v8363 = vpop.f32.mrf.mxu0
        %v8364 = vadd.f32 0.0, %v8363
        %v8365 = vpop.f32.mrf.mxu0
        %8366 = vmatprep.mubr.bf16.mxu0 %v7087
        %8367 = vmatmul.mubr.bf16.gmra.mxu0 %v7079
        %v8368 = vpop.f32.mrf.mxu0
        %v8369 = vadd.f32 0.0, %v8368
        %v8370 = vpop.f32.mrf.mxu0
        %v8371 = vpop.f32.mrf.mxu0
        %v8372 = vadd.f32 0.0, %v8371
        %v8373 = vpop.f32.mrf.mxu0
        %8374 = vmatprep.mubr.bf16.mxu0 %v7119
        %8375 = vmatmul.mubr.bf16.gmra.mxu0 %v7111
        %v8376 = vpop.f32.mrf.mxu0
        %v8377 = vadd.f32 0.0, %v8376
        %v8378 = vpop.f32.mrf.mxu0
        %v8379 = vpop.f32.mrf.mxu0
        %v8380 = vadd.f32 0.0, %v8379
        %v8381 = vpop.f32.mrf.mxu0
        %8382 = vmatprep.mubr.bf16.mxu0 %v7151
        %8383 = vmatmul.mubr.bf16.gmra.mxu0 %v7143
        %v8384 = vpop.f32.mrf.mxu0
        %v8385 = vadd.f32 0.0, %v8384
        %v8386 = vpop.f32.mrf.mxu0
        %v8387 = vpop.f32.mrf.mxu0
        %v8388 = vadd.f32 0.0, %v8387
        %v8389 = vpop.f32.mrf.mxu0
        %8390 = vmatprep.mubr.bf16.mxu0 %v7183
        %8391 = vmatmul.mubr.bf16.gmra.mxu0 %v7175
        %v8392 = vpop.f32.mrf.mxu0
        %v8393 = vadd.f32 0.0, %v8392
        %v8394 = vpop.f32.mrf.mxu0
        %v8395 = vpop.f32.mrf.mxu0
        %v8396 = vadd.f32 0.0, %v8395
        %v8397 = vpop.f32.mrf.mxu0
        %8398 = vmatprep.mubr.bf16.mxu0 %v7215
        %8399 = vmatmul.mubr.bf16.gmra.mxu0 %v7207
        %v8400 = vpop.f32.mrf.mxu0
        %v8401 = vadd.f32 0.0, %v8400
        %v8402 = vpop.f32.mrf.mxu0
        %v8403 = vpop.f32.mrf.mxu0
        %v8404 = vadd.f32 0.0, %v8403
        %v8405 = vpop.f32.mrf.mxu0
        %8406 = vmatprep.mubr.bf16.mxu0 %v7247
        %8407 = vmatmul.mubr.bf16.gmra.mxu0 %v7239
        %v8408 = vpop.f32.mrf.mxu0
        %v8409 = vadd.f32 0.0, %v8408
        %v8410 = vpop.f32.mrf.mxu0
        %v8411 = vpop.f32.mrf.mxu0
        %v8412 = vadd.f32 0.0, %v8411
        %v8413 = vpop.f32.mrf.mxu0
        %8414 = vmatprep.mubr.bf16.mxu0 %v7279
        %8415 = vmatmul.mubr.bf16.gmra.mxu0 %v7271
        %v8416 = vpop.f32.mrf.mxu0
        %v8417 = vadd.f32 0.0, %v8416
        %v8418 = vpop.f32.mrf.mxu0
        %v8419 = vpop.f32.mrf.mxu0
        %v8420 = vadd.f32 0.0, %v8419
        %v8421 = vpop.f32.mrf.mxu0
        %8422 = vmatprep.mubr.bf16.mxu0 %v7301
        %8423 = vmatmul.mubr.bf16.gmra.mxu0 %v7298
        %v8424 = vpop.f32.mrf.mxu0
        %v8425 = vadd.f32 0.0, %v8424
        %v8426 = vpop.f32.mrf.mxu0
        %v8427 = vpop.f32.mrf.mxu0
        %v8428 = vadd.f32 0.0, %v8427
        %v8429 = vpop.f32.mrf.mxu0
        %8430 = vdwg.mxu0
        %8431 = vmatprep.subr.bf16.mxu0 0
        %8432 = vmatpush1.bf16.msra.mxu0 %v7763
        %8433 = vmatprep.subr.bf16.mxu0 0
        %8434 = vmatpush1.bf16.msra.mxu0 %v7760
        %8435 = vmatprep.subr.bf16.mxu0 0
        %8436 = vmatpush1.bf16.msra.mxu0 %v7757
        %8437 = vmatprep.subr.bf16.mxu0 0
        %8438 = vmatpush1.bf16.msra.mxu0 %v7754
        %8439 = vmatprep.subr.bf16.mxu0 0
        %8440 = vmatpush1.bf16.msra.mxu0 %v7751
        %8441 = vmatprep.subr.bf16.mxu0 0
        %8442 = vmatpush1.bf16.msra.mxu0 %v7748
        %8443 = vmatprep.subr.bf16.mxu0 0
        %8444 = vmatpush1.bf16.msra.mxu0 %v7745
        %8445 = vmatprep.subr.bf16.mxu0 0
        %8446 = vmatpush1.bf16.msra.mxu0 %v7742
        %8447 = vmatprep.subr.bf16.mxu0 0
        %8448 = vmatpush2.bf16.msra.mxu0 %v7787
        %8449 = vmatprep.subr.bf16.mxu0 0
        %8450 = vmatpush2.bf16.msra.mxu0 %v7784
        %8451 = vmatprep.subr.bf16.mxu0 0
        %8452 = vmatpush2.bf16.msra.mxu0 %v7781
        %8453 = vmatprep.subr.bf16.mxu0 0
        %8454 = vmatpush2.bf16.msra.mxu0 %v7778
        %8455 = vmatprep.subr.bf16.mxu0 0
        %8456 = vmatpush2.bf16.msra.mxu0 %v7775
        %8457 = vmatprep.subr.bf16.mxu0 0
        %8458 = vmatpush2.bf16.msra.mxu0 %v7772
        %8459 = vmatprep.subr.bf16.mxu0 0
        %8460 = vmatpush2.bf16.msra.mxu0 %v7769
        %8461 = vmatprep.subr.bf16.mxu0 0
        %8462 = vmatpush2.bf16.msra.mxu0 %v7766
        %8463 = vmatprep.mubr.bf16.mxu0 %v6847
        %8464 = vmatmul.mubr.bf16.gmra.mxu0 %v6835
        %v8465 = vpop.f32.mrf.mxu0
        %v8466 = vadd.f32 %v8305, %v8465
        %v8467 = vpop.f32.mrf.mxu0
        %v8468 = vpop.f32.mrf.mxu0
        %v8469 = vadd.f32 %v8308, %v8468
        %v8470 = vpop.f32.mrf.mxu0
        %8471 = vmatprep.mubr.bf16.mxu0 %v6879
        %8472 = vmatmul.mubr.bf16.gmra.mxu0 %v6871
        %v8473 = vpop.f32.mrf.mxu0
        %v8474 = vadd.f32 %v8313, %v8473
        %v8475 = vpop.f32.mrf.mxu0
        %v8476 = vpop.f32.mrf.mxu0
        %v8477 = vadd.f32 %v8316, %v8476
        %v8478 = vpop.f32.mrf.mxu0
        %8479 = vmatprep.mubr.bf16.mxu0 %v6911
        %8480 = vmatmul.mubr.bf16.gmra.mxu0 %v6903
        %v8481 = vpop.f32.mrf.mxu0
        %v8482 = vadd.f32 %v8321, %v8481
        %v8483 = vpop.f32.mrf.mxu0
        %v8484 = vpop.f32.mrf.mxu0
        %v8485 = vadd.f32 %v8324, %v8484
        %v8486 = vpop.f32.mrf.mxu0
        %8487 = vmatprep.mubr.bf16.mxu0 %v6943
        %8488 = vmatmul.mubr.bf16.gmra.mxu0 %v6935
        %v8489 = vpop.f32.mrf.mxu0
        %v8490 = vadd.f32 %v8329, %v8489
        %v8491 = vpop.f32.mrf.mxu0
        %v8492 = vpop.f32.mrf.mxu0
        %v8493 = vadd.f32 %v8332, %v8492
        %v8494 = vpop.f32.mrf.mxu0
        %8495 = vmatprep.mubr.bf16.mxu0 %v6975
        %8496 = vmatmul.mubr.bf16.gmra.mxu0 %v6967
        %v8497 = vpop.f32.mrf.mxu0
        %v8498 = vadd.f32 %v8337, %v8497
        %v8499 = vpop.f32.mrf.mxu0
        %v8500 = vpop.f32.mrf.mxu0
        %v8501 = vadd.f32 %v8340, %v8500
        %v8502 = vpop.f32.mrf.mxu0
        %8503 = vmatprep.mubr.bf16.mxu0 %v7007
        %8504 = vmatmul.mubr.bf16.gmra.mxu0 %v6999
        %v8505 = vpop.f32.mrf.mxu0
        %v8506 = vadd.f32 %v8345, %v8505
        %v8507 = vpop.f32.mrf.mxu0
        %v8508 = vpop.f32.mrf.mxu0
        %v8509 = vadd.f32 %v8348, %v8508
        %v8510 = vpop.f32.mrf.mxu0
        %8511 = vmatprep.mubr.bf16.mxu0 %v7039
        %8512 = vmatmul.mubr.bf16.gmra.mxu0 %v7031
        %v8513 = vpop.f32.mrf.mxu0
        %v8514 = vadd.f32 %v8353, %v8513
        %v8515 = vpop.f32.mrf.mxu0
        %v8516 = vpop.f32.mrf.mxu0
        %v8517 = vadd.f32 %v8356, %v8516
        %v8518 = vpop.f32.mrf.mxu0
        %8519 = vmatprep.mubr.bf16.mxu0 %v7071
        %8520 = vmatmul.mubr.bf16.gmra.mxu0 %v7063
        %v8521 = vpop.f32.mrf.mxu0
        %v8522 = vadd.f32 %v8361, %v8521
        %v8523 = vpop.f32.mrf.mxu0
        %v8524 = vpop.f32.mrf.mxu0
        %v8525 = vadd.f32 %v8364, %v8524
        %v8526 = vpop.f32.mrf.mxu0
        %8527 = vmatprep.mubr.bf16.mxu0 %v7103
        %8528 = vmatmul.mubr.bf16.gmra.mxu0 %v7095
        %v8529 = vpop.f32.mrf.mxu0
        %v8530 = vadd.f32 %v8369, %v8529
        %v8531 = vpop.f32.mrf.mxu0
        %v8532 = vpop.f32.mrf.mxu0
        %v8533 = vadd.f32 %v8372, %v8532
        %v8534 = vpop.f32.mrf.mxu0
        %8535 = vmatprep.mubr.bf16.mxu0 %v7135
        %8536 = vmatmul.mubr.bf16.gmra.mxu0 %v7127
        %v8537 = vpop.f32.mrf.mxu0
        %v8538 = vadd.f32 %v8377, %v8537
        %v8539 = vpop.f32.mrf.mxu0
        %v8540 = vpop.f32.mrf.mxu0
        %v8541 = vadd.f32 %v8380, %v8540
        %v8542 = vpop.f32.mrf.mxu0
        %8543 = vmatprep.mubr.bf16.mxu0 %v7167
        %8544 = vmatmul.mubr.bf16.gmra.mxu0 %v7159
        %v8545 = vpop.f32.mrf.mxu0
        %v8546 = vadd.f32 %v8385, %v8545
        %v8547 = vpop.f32.mrf.mxu0
        %v8548 = vpop.f32.mrf.mxu0
        %v8549 = vadd.f32 %v8388, %v8548
        %v8550 = vpop.f32.mrf.mxu0
        %8551 = vmatprep.mubr.bf16.mxu0 %v7199
        %8552 = vmatmul.mubr.bf16.gmra.mxu0 %v7191
        %v8553 = vpop.f32.mrf.mxu0
        %v8554 = vadd.f32 %v8393, %v8553
        %v8555 = vpop.f32.mrf.mxu0
        %v8556 = vpop.f32.mrf.mxu0
        %v8557 = vadd.f32 %v8396, %v8556
        %v8558 = vpop.f32.mrf.mxu0
        %8559 = vmatprep.mubr.bf16.mxu0 %v7231
        %8560 = vmatmul.mubr.bf16.gmra.mxu0 %v7223
        %v8561 = vpop.f32.mrf.mxu0
        %v8562 = vadd.f32 %v8401, %v8561
        %v8563 = vpop.f32.mrf.mxu0
        %v8564 = vpop.f32.mrf.mxu0
        %v8565 = vadd.f32 %v8404, %v8564
        %v8566 = vpop.f32.mrf.mxu0
        %8567 = vmatprep.mubr.bf16.mxu0 %v7263
        %8568 = vmatmul.mubr.bf16.gmra.mxu0 %v7255
        %v8569 = vpop.f32.mrf.mxu0
        %v8570 = vadd.f32 %v8409, %v8569
        %v8571 = vpop.f32.mrf.mxu0
        %v8572 = vpop.f32.mrf.mxu0
        %v8573 = vadd.f32 %v8412, %v8572
        %v8574 = vpop.f32.mrf.mxu0
        %8575 = vmatprep.mubr.bf16.mxu0 %v7295
        %8576 = vmatmul.mubr.bf16.gmra.mxu0 %v7287
        %v8577 = vpop.f32.mrf.mxu0
        %v8578 = vadd.f32 %v8417, %v8577
        %v8579 = vpop.f32.mrf.mxu0
        %v8580 = vpop.f32.mrf.mxu0
        %v8581 = vadd.f32 %v8420, %v8580
        %v8582 = vpop.f32.mrf.mxu0
        %8583 = vmatprep.mubr.bf16.mxu0 %v7307
        %8584 = vmatmul.mubr.bf16.gmra.mxu0 %v7304
        %v8585 = vpop.f32.mrf.mxu0
        %v8586 = vadd.f32 %v8425, %v8585
        %v8587 = vpop.f32.mrf.mxu0
        %v8588 = vpop.f32.mrf.mxu0
        %v8589 = vadd.f32 %v8428, %v8588
        %v8590 = vpop.f32.mrf.mxu0
        %8591 = vdwg.mxu0
        %v8720 = vunpack.c.l.b16 %v6543
        %v8721 = vunpack.c.h.b16 %v6543
        %v8722 = vunpack.c.l.b16 %v6544
        %v8723 = vunpack.c.l.b16 %v6545
        %v8724 = vunpack.c.h.b16 %v6545
        %v8725 = vunpack.c.l.b16 %v6546
        %v8726 = vunpack.c.l.b16 %v6547
        %v8727 = vunpack.c.h.b16 %v6547
        %v8728 = vunpack.c.l.b16 %v6548
        %v8729 = vunpack.c.l.b16 %v6549
        %v8730 = vunpack.c.h.b16 %v6549
        %v8731 = vunpack.c.l.b16 %v6550
        %v8732 = vunpack.c.l.b16 %v6551
        %v8733 = vunpack.c.h.b16 %v6551
        %v8734 = vunpack.c.l.b16 %v6552
        %v8735 = vunpack.c.l.b16 %v6553
        %v8736 = vunpack.c.h.b16 %v6553
        %v8737 = vunpack.c.l.b16 %v6554
        %v8738 = vunpack.c.l.b16 %v6555
        %v8739 = vunpack.c.h.b16 %v6555
        %v8740 = vunpack.c.l.b16 %v6556
        %v8741 = vunpack.c.l.b16 %v6557
        %v8742 = vunpack.c.h.b16 %v6557
        %v8743 = vunpack.c.l.b16 %v6558
        %v8744 = vunpack.c.l.b16 %v6559
        %v8745 = vunpack.c.h.b16 %v6559
        %v8746 = vunpack.c.l.b16 %v6560
        %v8747 = vunpack.c.l.b16 %v6561
        %v8748 = vunpack.c.h.b16 %v6561
        %v8749 = vunpack.c.l.b16 %v6562
        %v8750 = vunpack.c.l.b16 %v6563
        %v8751 = vunpack.c.h.b16 %v6563
        %v8752 = vunpack.c.l.b16 %v6564
        %v8753 = vunpack.c.l.b16 %v6565
        %v8754 = vunpack.c.h.b16 %v6565
        %v8755 = vunpack.c.l.b16 %v6566
        %v8756 = vunpack.c.l.b16 %v6567
        %v8757 = vunpack.c.h.b16 %v6567
        %v8758 = vunpack.c.l.b16 %v6568
        %v8759 = vunpack.c.l.b16 %v6569
        %v8760 = vunpack.c.h.b16 %v6569
        %v8761 = vunpack.c.l.b16 %v6570
        %v8762 = vunpack.c.l.b16 %v6571
        %v8763 = vunpack.c.h.b16 %v6571
        %v8764 = vunpack.c.l.b16 %v6572
        %v8765 = vunpack.c.l.b16 %v6573
        %v8766 = vunpack.c.h.b16 %v6573
        %v8767 = vunpack.c.l.b16 %v6574
        %v8768 = vunpack.c.l.b16 %v6575
        %v8769 = vunpack.c.h.b16 %v6575
        %v8770 = vunpack.c.l.b16 %v6576
        %v8771 = vunpack.c.l.b16 %v6577
        %v8772 = vunpack.c.h.b16 %v6577
        %v8773 = vunpack.c.l.b16 %v6578
        %v8774 = vunpack.c.l.b16 %v6579
        %v8775 = vunpack.c.h.b16 %v6579
        %v8776 = vunpack.c.l.b16 %v6580
        %v8777 = vunpack.c.l.b16 %v6581
        %v8778 = vunpack.c.h.b16 %v6581
        %v8779 = vunpack.c.l.b16 %v6582
        %v8780 = vunpack.c.l.b16 %v6583
        %v8781 = vunpack.c.h.b16 %v6583
        %v8782 = vunpack.c.l.b16 %v6584
        %v8783 = vunpack.c.l.b16 %v6585
        %v8784 = vunpack.c.h.b16 %v6585
        %v8785 = vunpack.c.l.b16 %v6586
        %v8786 = vunpack.c.l.b16 %v6587
        %v8787 = vunpack.c.h.b16 %v6587
        %v8788 = vunpack.c.l.b16 %v6588
        %v8789 = vunpack.c.l.b16 %v6589
        %v8790 = vunpack.c.h.b16 %v6589
        %v8791 = vunpack.c.l.b16 %v6590
        %v8792 = vunpack.c.l.b16 %v6591
        %v8793 = vunpack.c.h.b16 %v6591
        %v8794 = vunpack.c.l.b16 %v6592
        %v8795 = vunpack.c.l.b16 %v6593
        %v8796 = vunpack.c.h.b16 %v6593
        %v8797 = vunpack.c.l.b16 %v6594
        %v8798 = vunpack.c.l.b16 %v6595
        %v8799 = vunpack.c.h.b16 %v6595
        %v8800 = vunpack.c.l.b16 %v6596
        %v8801 = vunpack.c.l.b16 %v6597
        %v8802 = vunpack.c.h.b16 %v6597
        %v8803 = vunpack.c.l.b16 %v6598
        %v8804 = vunpack.c.l.b16 %v6599
        %v8805 = vunpack.c.h.b16 %v6599
        %v8806 = vunpack.c.l.b16 %v6600
        %v8807 = vunpack.c.l.b16 %v6601
        %v8808 = vunpack.c.h.b16 %v6601
        %v8809 = vunpack.c.l.b16 %v6602
        %v8810 = vunpack.c.l.b16 %v6603
        %v8811 = vunpack.c.h.b16 %v6603
        %v8812 = vunpack.c.l.b16 %v6604
        %v8813 = vunpack.c.l.b16 %v6605
        %v8814 = vunpack.c.h.b16 %v6605
        %v8815 = vunpack.c.l.b16 %v6606
        %v8816 = vunpack.c.l.b16 %v6607
        %v8817 = vunpack.c.h.b16 %v6607
        %v8818 = vunpack.c.l.b16 %v6608
        %v8819 = vunpack.c.l.b16 %v6609
        %v8820 = vunpack.c.h.b16 %v6609
        %v8821 = vunpack.c.l.b16 %v6610
        %v8822 = vunpack.c.l.b16 %v6611
        %v8823 = vunpack.c.h.b16 %v6611
        %v8824 = vunpack.c.l.b16 %v6612
        %v8825 = vunpack.c.l.b16 %v6613
        %v8826 = vunpack.c.h.b16 %v6613
        %v8827 = vunpack.c.l.b16 %v6614
        %v8828 = vunpack.c.l.b16 %v6615
        %v8829 = vunpack.c.h.b16 %v6615
        %v8830 = vunpack.c.l.b16 %v6616
        %v8831 = vunpack.c.l.b16 %v6617
        %v8832 = vunpack.c.h.b16 %v6617
        %v8833 = vunpack.c.l.b16 %v6618
        %v8834 = vunpack.c.l.b16 %v6619
        %v8835 = vunpack.c.h.b16 %v6619
        %v8836 = vunpack.c.l.b16 %v6620
        %v8837 = vunpack.c.l.b16 %v6621
        %v8838 = vunpack.c.h.b16 %v6621
        %v8839 = vunpack.c.l.b16 %v6622
        %v8840 = vunpack.c.l.b16 %v6623
        %v8841 = vunpack.c.h.b16 %v6623
        %v8842 = vunpack.c.l.b16 %v6624
        %v8843 = vunpack.c.l.b16 %v6625
        %v8844 = vunpack.c.h.b16 %v6625
        %v8845 = vunpack.c.l.b16 %v6626
        %v8846 = vunpack.c.l.b16 %v6627
        %v8847 = vunpack.c.h.b16 %v6627
        %v8848 = vunpack.c.l.b16 %v6628
        %v8849 = vunpack.c.l.b16 %v6629
        %v8850 = vunpack.c.h.b16 %v6629
        %v8851 = vunpack.c.l.b16 %v6630
        %v8852 = vunpack.c.l.b16 %v6631
        %v8853 = vunpack.c.h.b16 %v6631
        %v8854 = vunpack.c.l.b16 %v6632
        %v8855 = vunpack.c.l.b16 %v6633
        %v8856 = vunpack.c.h.b16 %v6633
        %v8857 = vunpack.c.l.b16 %v6634
        %v8858 = vunpack.c.l.b16 %v6635
        %v8859 = vunpack.c.h.b16 %v6635
        %v8860 = vunpack.c.l.b16 %v6636
        %v8861 = vunpack.c.l.b16 %v6637
        %v8862 = vunpack.c.h.b16 %v6637
        %v8863 = vunpack.c.l.b16 %v6638
        %v8864 = vunpack.c.l.b16 %v6639
        %v8865 = vunpack.c.h.b16 %v6639
        %v8866 = vunpack.c.l.b16 %v6640
        %v8867 = vunpack.c.l.b16 %v6641
        %v8868 = vunpack.c.h.b16 %v6641
        %v8869 = vunpack.c.l.b16 %v6642
        %v8870 = vunpack.c.l.b16 %v6643
        %v8871 = vunpack.c.h.b16 %v6643
        %v8872 = vunpack.c.l.b16 %v6644
        %v8873 = vunpack.c.l.b16 %v6645
        %v8874 = vunpack.c.h.b16 %v6645
        %v8875 = vunpack.c.l.b16 %v6646
        %v8876 = vunpack.c.l.b16 %v6647
        %v8877 = vunpack.c.h.b16 %v6647
        %v8878 = vunpack.c.l.b16 %v6648
        %v8879 = vunpack.c.l.b16 %v6649
        %v8880 = vunpack.c.h.b16 %v6649
        %v8881 = vunpack.c.l.b16 %v6650
        %v8882 = vunpack.c.l.b16 %v6651
        %v8883 = vunpack.c.h.b16 %v6651
        %v8884 = vunpack.c.l.b16 %v6652
        %v8885 = vunpack.c.l.b16 %v6653
        %v8886 = vunpack.c.h.b16 %v6653
        %v8887 = vunpack.c.l.b16 %v6654
        %v8888 = vunpack.c.l.b16 %v6655
        %v8889 = vunpack.c.h.b16 %v6655
        %v8890 = vunpack.c.l.b16 %v6656
        %v8891 = vunpack.c.l.b16 %v6657
        %v8892 = vunpack.c.h.b16 %v6657
        %v8893 = vunpack.c.l.b16 %v6658
        %v8894 = vunpack.c.l.b16 %v6659
        %v8895 = vunpack.c.h.b16 %v6659
        %v8896 = vunpack.c.l.b16 %v6660
        %v8897 = vunpack.c.l.b16 %v6661
        %v8898 = vunpack.c.h.b16 %v6661
        %v8899 = vunpack.c.l.b16 %v6662
        %v8900 = vunpack.c.l.b16 %v6663
        %v8901 = vunpack.c.h.b16 %v6663
        %v8902 = vunpack.c.l.b16 %v6664
        %v8903 = vunpack.c.l.b16 %v6665
        %v8904 = vunpack.c.h.b16 %v6665
        %v8905 = vunpack.c.l.b16 %v6666
        %v8906 = vunpack.c.l.b16 %v6667
        %v8907 = vunpack.c.h.b16 %v6667
        %v8908 = vunpack.c.l.b16 %v6668
        %v8909 = vunpack.c.l.b16 %v6669
        %v8910 = vunpack.c.h.b16 %v6669
        %v8911 = vunpack.c.l.b16 %v6670
        %v8912 = vpack.c.b16 %v8723, %v8720
        %v8913 = vpack.c.b16 %v8724, %v8721
        %v8914 = vpack.c.b16 %v8725, %v8722
        %v8915 = vpack.c.b16 %v8729, %v8726
        %v8916 = vpack.c.b16 %v8730, %v8727
        %v8917 = vpack.c.b16 %v8731, %v8728
        %v8918 = vpack.c.b16 %v8735, %v8732
        %v8919 = vpack.c.b16 %v8736, %v8733
        %v8920 = vpack.c.b16 %v8737, %v8734
        %v8921 = vpack.c.b16 %v8741, %v8738
        %v8922 = vpack.c.b16 %v8742, %v8739
        %v8923 = vpack.c.b16 %v8743, %v8740
        %v8924 = vpack.c.b16 %v8747, %v8744
        %v8925 = vpack.c.b16 %v8748, %v8745
        %v8926 = vpack.c.b16 %v8749, %v8746
        %v8927 = vpack.c.b16 %v8753, %v8750
        %v8928 = vpack.c.b16 %v8754, %v8751
        %v8929 = vpack.c.b16 %v8755, %v8752
        %v8930 = vpack.c.b16 %v8759, %v8756
        %v8931 = vpack.c.b16 %v8760, %v8757
        %v8932 = vpack.c.b16 %v8761, %v8758
        %v8933 = vpack.c.b16 %v8765, %v8762
        %v8934 = vpack.c.b16 %v8766, %v8763
        %v8935 = vpack.c.b16 %v8767, %v8764
        %v8936 = vpack.c.b16 %v8771, %v8768
        %v8937 = vpack.c.b16 %v8772, %v8769
        %v8938 = vpack.c.b16 %v8773, %v8770
        %v8939 = vpack.c.b16 %v8777, %v8774
        %v8940 = vpack.c.b16 %v8778, %v8775
        %v8941 = vpack.c.b16 %v8779, %v8776
        %v8942 = vpack.c.b16 %v8783, %v8780
        %v8943 = vpack.c.b16 %v8784, %v8781
        %v8944 = vpack.c.b16 %v8785, %v8782
        %v8945 = vpack.c.b16 %v8789, %v8786
        %v8946 = vpack.c.b16 %v8790, %v8787
        %v8947 = vpack.c.b16 %v8791, %v8788
        %v8948 = vpack.c.b16 %v8795, %v8792
        %v8949 = vpack.c.b16 %v8796, %v8793
        %v8950 = vpack.c.b16 %v8797, %v8794
        %v8951 = vpack.c.b16 %v8801, %v8798
        %v8952 = vpack.c.b16 %v8802, %v8799
        %v8953 = vpack.c.b16 %v8803, %v8800
        %v8954 = vpack.c.b16 %v8807, %v8804
        %v8955 = vpack.c.b16 %v8808, %v8805
        %v8956 = vpack.c.b16 %v8809, %v8806
        %v8957 = vpack.c.b16 %v8813, %v8810
        %v8958 = vpack.c.b16 %v8814, %v8811
        %v8959 = vpack.c.b16 %v8815, %v8812
        %v8960 = vpack.c.b16 %v8819, %v8816
        %v8961 = vpack.c.b16 %v8820, %v8817
        %v8962 = vpack.c.b16 %v8821, %v8818
        %v8963 = vpack.c.b16 %v8825, %v8822
        %v8964 = vpack.c.b16 %v8826, %v8823
        %v8965 = vpack.c.b16 %v8827, %v8824
        %v8966 = vpack.c.b16 %v8831, %v8828
        %v8967 = vpack.c.b16 %v8832, %v8829
        %v8968 = vpack.c.b16 %v8833, %v8830
        %v8969 = vpack.c.b16 %v8837, %v8834
        %v8970 = vpack.c.b16 %v8838, %v8835
        %v8971 = vpack.c.b16 %v8839, %v8836
        %v8972 = vpack.c.b16 %v8843, %v8840
        %v8973 = vpack.c.b16 %v8844, %v8841
        %v8974 = vpack.c.b16 %v8845, %v8842
        %v8975 = vpack.c.b16 %v8849, %v8846
        %v8976 = vpack.c.b16 %v8850, %v8847
        %v8977 = vpack.c.b16 %v8851, %v8848
        %v8978 = vpack.c.b16 %v8855, %v8852
        %v8979 = vpack.c.b16 %v8856, %v8853
        %v8980 = vpack.c.b16 %v8857, %v8854
        %v8981 = vpack.c.b16 %v8861, %v8858
        %v8982 = vpack.c.b16 %v8862, %v8859
        %v8983 = vpack.c.b16 %v8863, %v8860
        %v8984 = vpack.c.b16 %v8867, %v8864
        %v8985 = vpack.c.b16 %v8868, %v8865
        %v8986 = vpack.c.b16 %v8869, %v8866
        %v8987 = vpack.c.b16 %v8873, %v8870
        %v8988 = vpack.c.b16 %v8874, %v8871
        %v8989 = vpack.c.b16 %v8875, %v8872
        %v8990 = vpack.c.b16 %v8879, %v8876
        %v8991 = vpack.c.b16 %v8880, %v8877
        %v8992 = vpack.c.b16 %v8881, %v8878
        %v8993 = vpack.c.b16 %v8885, %v8882
        %v8994 = vpack.c.b16 %v8886, %v8883
        %v8995 = vpack.c.b16 %v8887, %v8884
        %v8996 = vpack.c.b16 %v8891, %v8888
        %v8997 = vpack.c.b16 %v8892, %v8889
        %v8998 = vpack.c.b16 %v8893, %v8890
        %v8999 = vpack.c.b16 %v8897, %v8894
        %v9000 = vpack.c.b16 %v8898, %v8895
        %v9001 = vpack.c.b16 %v8899, %v8896
        %v9002 = vpack.c.b16 %v8903, %v8900
        %v9003 = vpack.c.b16 %v8904, %v8901
        %v9004 = vpack.c.b16 %v8905, %v8902
        %v9005 = vpack.c.b16 %v8909, %v8906
        %v9006 = vpack.c.b16 %v8910, %v8907
        %v9007 = vpack.c.b16 %v8911, %v8908
        %9104 = vmatprep.subr.bf16.mxu0 %v8934
        %9105 = vmatpush1.bf16.msra.mxu0 %v8933
        %9106 = vmatprep.subr.bf16.mxu0 %v8931
        %9107 = vmatpush1.bf16.msra.mxu0 %v8930
        %9108 = vmatprep.subr.bf16.mxu0 %v8928
        %9109 = vmatpush1.bf16.msra.mxu0 %v8927
        %9110 = vmatprep.subr.bf16.mxu0 %v8925
        %9111 = vmatpush1.bf16.msra.mxu0 %v8924
        %9112 = vmatprep.subr.bf16.mxu0 %v8922
        %9113 = vmatpush1.bf16.msra.mxu0 %v8921
        %9114 = vmatprep.subr.bf16.mxu0 %v8919
        %9115 = vmatpush1.bf16.msra.mxu0 %v8918
        %9116 = vmatprep.subr.bf16.mxu0 %v8916
        %9117 = vmatpush1.bf16.msra.mxu0 %v8915
        %9118 = vmatprep.subr.bf16.mxu0 %v8913
        %9119 = vmatpush1.bf16.msra.mxu0 %v8912
        %9120 = vmatprep.subr.bf16.mxu0 %v8958
        %9121 = vmatpush2.bf16.msra.mxu0 %v8957
        %9122 = vmatprep.subr.bf16.mxu0 %v8955
        %9123 = vmatpush2.bf16.msra.mxu0 %v8954
        %9124 = vmatprep.subr.bf16.mxu0 %v8952
        %9125 = vmatpush2.bf16.msra.mxu0 %v8951
        %9126 = vmatprep.subr.bf16.mxu0 %v8949
        %9127 = vmatpush2.bf16.msra.mxu0 %v8948
        %9128 = vmatprep.subr.bf16.mxu0 %v8946
        %9129 = vmatpush2.bf16.msra.mxu0 %v8945
        %9130 = vmatprep.subr.bf16.mxu0 %v8943
        %9131 = vmatpush2.bf16.msra.mxu0 %v8942
        %9132 = vmatprep.subr.bf16.mxu0 %v8940
        %9133 = vmatpush2.bf16.msra.mxu0 %v8939
        %9134 = vmatprep.subr.bf16.mxu0 %v8937
        %9135 = vmatpush2.bf16.msra.mxu0 %v8936
        %9136 = vmatprep.mubr.bf16.mxu0 %v6480
        %9137 = vmatmul.mubr.bf16.gmra.mxu0 %v6479
        %v9138 = vpop.f32.mrf.mxu0
        %v9139 = vadd.f32 %v8112, %v9138
        %v9140 = vpop.f32.mrf.mxu0
        %v9141 = vadd.f32 %v8114, %v9140
        %v9142 = vpop.f32.mrf.mxu0
        %v9143 = vadd.f32 %v8116, %v9142
        %v9144 = vpop.f32.mrf.mxu0
        %v9145 = vadd.f32 %v8118, %v9144
        %9146 = vmatprep.mubr.bf16.mxu0 %v6484
        %9147 = vmatmul.mubr.bf16.gmra.mxu0 %v6483
        %v9148 = vpop.f32.mrf.mxu0
        %v9149 = vadd.f32 %v8122, %v9148
        %v9150 = vpop.f32.mrf.mxu0
        %v9151 = vadd.f32 %v8124, %v9150
        %v9152 = vpop.f32.mrf.mxu0
        %v9153 = vadd.f32 %v8126, %v9152
        %v9154 = vpop.f32.mrf.mxu0
        %v9155 = vadd.f32 %v8128, %v9154
        %9156 = vmatprep.mubr.bf16.mxu0 %v6488
        %9157 = vmatmul.mubr.bf16.gmra.mxu0 %v6487
        %v9158 = vpop.f32.mrf.mxu0
        %v9159 = vadd.f32 %v8132, %v9158
        %v9160 = vpop.f32.mrf.mxu0
        %v9161 = vadd.f32 %v8134, %v9160
        %v9162 = vpop.f32.mrf.mxu0
        %v9163 = vadd.f32 %v8136, %v9162
        %v9164 = vpop.f32.mrf.mxu0
        %v9165 = vadd.f32 %v8138, %v9164
        %9166 = vmatprep.mubr.bf16.mxu0 %v6492
        %9167 = vmatmul.mubr.bf16.gmra.mxu0 %v6491
        %v9168 = vpop.f32.mrf.mxu0
        %v9169 = vadd.f32 %v8142, %v9168
        %v9170 = vpop.f32.mrf.mxu0
        %v9171 = vadd.f32 %v8144, %v9170
        %v9172 = vpop.f32.mrf.mxu0
        %v9173 = vadd.f32 %v8146, %v9172
        %v9174 = vpop.f32.mrf.mxu0
        %v9175 = vadd.f32 %v8148, %v9174
        %9176 = vmatprep.mubr.bf16.mxu0 %v6496
        %9177 = vmatmul.mubr.bf16.gmra.mxu0 %v6495
        %v9178 = vpop.f32.mrf.mxu0
        %v9179 = vadd.f32 %v8152, %v9178
        %v9180 = vpop.f32.mrf.mxu0
        %v9181 = vadd.f32 %v8154, %v9180
        %v9182 = vpop.f32.mrf.mxu0
        %v9183 = vadd.f32 %v8156, %v9182
        %v9184 = vpop.f32.mrf.mxu0
        %v9185 = vadd.f32 %v8158, %v9184
        %9186 = vmatprep.mubr.bf16.mxu0 %v6500
        %9187 = vmatmul.mubr.bf16.gmra.mxu0 %v6499
        %v9188 = vpop.f32.mrf.mxu0
        %v9189 = vadd.f32 %v8162, %v9188
        %v9190 = vpop.f32.mrf.mxu0
        %v9191 = vadd.f32 %v8164, %v9190
        %v9192 = vpop.f32.mrf.mxu0
        %v9193 = vadd.f32 %v8166, %v9192
        %v9194 = vpop.f32.mrf.mxu0
        %v9195 = vadd.f32 %v8168, %v9194
        %9196 = vmatprep.mubr.bf16.mxu0 %v6504
        %9197 = vmatmul.mubr.bf16.gmra.mxu0 %v6503
        %v9198 = vpop.f32.mrf.mxu0
        %v9199 = vadd.f32 %v8172, %v9198
        %v9200 = vpop.f32.mrf.mxu0
        %v9201 = vadd.f32 %v8174, %v9200
        %v9202 = vpop.f32.mrf.mxu0
        %v9203 = vadd.f32 %v8176, %v9202
        %v9204 = vpop.f32.mrf.mxu0
        %v9205 = vadd.f32 %v8178, %v9204
        %9206 = vmatprep.mubr.bf16.mxu0 %v6508
        %9207 = vmatmul.mubr.bf16.gmra.mxu0 %v6507
        %v9208 = vpop.f32.mrf.mxu0
        %v9209 = vadd.f32 %v8182, %v9208
        %v9210 = vpop.f32.mrf.mxu0
        %v9211 = vadd.f32 %v8184, %v9210
        %v9212 = vpop.f32.mrf.mxu0
        %v9213 = vadd.f32 %v8186, %v9212
        %v9214 = vpop.f32.mrf.mxu0
        %v9215 = vadd.f32 %v8188, %v9214
        %9216 = vmatprep.mubr.bf16.mxu0 %v6512
        %9217 = vmatmul.mubr.bf16.gmra.mxu0 %v6511
        %v9218 = vpop.f32.mrf.mxu0
        %v9219 = vadd.f32 %v8192, %v9218
        %v9220 = vpop.f32.mrf.mxu0
        %v9221 = vadd.f32 %v8194, %v9220
        %v9222 = vpop.f32.mrf.mxu0
        %v9223 = vadd.f32 %v8196, %v9222
        %v9224 = vpop.f32.mrf.mxu0
        %v9225 = vadd.f32 %v8198, %v9224
        %9226 = vmatprep.mubr.bf16.mxu0 %v6516
        %9227 = vmatmul.mubr.bf16.gmra.mxu0 %v6515
        %v9228 = vpop.f32.mrf.mxu0
        %v9229 = vadd.f32 %v8202, %v9228
        %v9230 = vpop.f32.mrf.mxu0
        %v9231 = vadd.f32 %v8204, %v9230
        %v9232 = vpop.f32.mrf.mxu0
        %v9233 = vadd.f32 %v8206, %v9232
        %v9234 = vpop.f32.mrf.mxu0
        %v9235 = vadd.f32 %v8208, %v9234
        %9236 = vmatprep.mubr.bf16.mxu0 %v6520
        %9237 = vmatmul.mubr.bf16.gmra.mxu0 %v6519
        %v9238 = vpop.f32.mrf.mxu0
        %v9239 = vadd.f32 %v8212, %v9238
        %v9240 = vpop.f32.mrf.mxu0
        %v9241 = vadd.f32 %v8214, %v9240
        %v9242 = vpop.f32.mrf.mxu0
        %v9243 = vadd.f32 %v8216, %v9242
        %v9244 = vpop.f32.mrf.mxu0
        %v9245 = vadd.f32 %v8218, %v9244
        %9246 = vmatprep.mubr.bf16.mxu0 %v6524
        %9247 = vmatmul.mubr.bf16.gmra.mxu0 %v6523
        %v9248 = vpop.f32.mrf.mxu0
        %v9249 = vadd.f32 %v8222, %v9248
        %v9250 = vpop.f32.mrf.mxu0
        %v9251 = vadd.f32 %v8224, %v9250
        %v9252 = vpop.f32.mrf.mxu0
        %v9253 = vadd.f32 %v8226, %v9252
        %v9254 = vpop.f32.mrf.mxu0
        %v9255 = vadd.f32 %v8228, %v9254
        %9256 = vmatprep.mubr.bf16.mxu0 %v6528
        %9257 = vmatmul.mubr.bf16.gmra.mxu0 %v6527
        %v9258 = vpop.f32.mrf.mxu0
        %v9259 = vadd.f32 %v8232, %v9258
        %v9260 = vpop.f32.mrf.mxu0
        %v9261 = vadd.f32 %v8234, %v9260
        %v9262 = vpop.f32.mrf.mxu0
        %v9263 = vadd.f32 %v8236, %v9262
        %v9264 = vpop.f32.mrf.mxu0
        %v9265 = vadd.f32 %v8238, %v9264
        %9266 = vmatprep.mubr.bf16.mxu0 %v6532
        %9267 = vmatmul.mubr.bf16.gmra.mxu0 %v6531
        %v9268 = vpop.f32.mrf.mxu0
        %v9269 = vadd.f32 %v8242, %v9268
        %v9270 = vpop.f32.mrf.mxu0
        %v9271 = vadd.f32 %v8244, %v9270
        %v9272 = vpop.f32.mrf.mxu0
        %v9273 = vadd.f32 %v8246, %v9272
        %v9274 = vpop.f32.mrf.mxu0
        %v9275 = vadd.f32 %v8248, %v9274
        %9276 = vmatprep.mubr.bf16.mxu0 %v6536
        %9277 = vmatmul.mubr.bf16.gmra.mxu0 %v6535
        %v9278 = vpop.f32.mrf.mxu0
        %v9279 = vadd.f32 %v8252, %v9278
        %v9280 = vpop.f32.mrf.mxu0
        %v9281 = vadd.f32 %v8254, %v9280
        %v9282 = vpop.f32.mrf.mxu0
        %v9283 = vadd.f32 %v8256, %v9282
        %v9284 = vpop.f32.mrf.mxu0
        %v9285 = vadd.f32 %v8258, %v9284
        %9286 = vmatprep.mubr.bf16.mxu0 %v6540
        %9287 = vmatmul.mubr.bf16.gmra.mxu0 %v6539
        %v9288 = vpop.f32.mrf.mxu0
        %v9289 = vadd.f32 %v8262, %v9288
        %v9290 = vpop.f32.mrf.mxu0
        %v9291 = vadd.f32 %v8264, %v9290
        %v9292 = vpop.f32.mrf.mxu0
        %v9293 = vadd.f32 %v8266, %v9292
        %v9294 = vpop.f32.mrf.mxu0
        %v9295 = vadd.f32 %v8268, %v9294
        %9296 = vdwg.mxu0
        %9297 = vmatprep.subr.bf16.mxu0 %v8982
        %9298 = vmatpush1.bf16.msra.mxu0 %v8981
        %9299 = vmatprep.subr.bf16.mxu0 %v8979
        %9300 = vmatpush1.bf16.msra.mxu0 %v8978
        %9301 = vmatprep.subr.bf16.mxu0 %v8976
        %9302 = vmatpush1.bf16.msra.mxu0 %v8975
        %9303 = vmatprep.subr.bf16.mxu0 %v8973
        %9304 = vmatpush1.bf16.msra.mxu0 %v8972
        %9305 = vmatprep.subr.bf16.mxu0 %v8970
        %9306 = vmatpush1.bf16.msra.mxu0 %v8969
        %9307 = vmatprep.subr.bf16.mxu0 %v8967
        %9308 = vmatpush1.bf16.msra.mxu0 %v8966
        %9309 = vmatprep.subr.bf16.mxu0 %v8964
        %9310 = vmatpush1.bf16.msra.mxu0 %v8963
        %9311 = vmatprep.subr.bf16.mxu0 %v8961
        %9312 = vmatpush1.bf16.msra.mxu0 %v8960
        %9313 = vmatprep.subr.bf16.mxu0 %v9006
        %9314 = vmatpush2.bf16.msra.mxu0 %v9005
        %9315 = vmatprep.subr.bf16.mxu0 %v9003
        %9316 = vmatpush2.bf16.msra.mxu0 %v9002
        %9317 = vmatprep.subr.bf16.mxu0 %v9000
        %9318 = vmatpush2.bf16.msra.mxu0 %v8999
        %9319 = vmatprep.subr.bf16.mxu0 %v8997
        %9320 = vmatpush2.bf16.msra.mxu0 %v8996
        %9321 = vmatprep.subr.bf16.mxu0 %v8994
        %9322 = vmatpush2.bf16.msra.mxu0 %v8993
        %9323 = vmatprep.subr.bf16.mxu0 %v8991
        %9324 = vmatpush2.bf16.msra.mxu0 %v8990
        %9325 = vmatprep.subr.bf16.mxu0 %v8988
        %9326 = vmatpush2.bf16.msra.mxu0 %v8987
        %9327 = vmatprep.subr.bf16.mxu0 %v8985
        %9328 = vmatpush2.bf16.msra.mxu0 %v8984
        %9329 = vmatprep.mubr.bf16.mxu0 %v6482
        %9330 = vmatmul.mubr.bf16.gmra.mxu0 %v6481
        %v9331 = vpop.f32.mrf.mxu0
        %v9332 = vadd.f32 %v9139, %v9331
        %v9333 = vpop.f32.mrf.mxu0
        %v9334 = vadd.f32 %v9141, %v9333
        %v9335 = vpop.f32.mrf.mxu0
        %v9336 = vadd.f32 %v9143, %v9335
        %v9337 = vpop.f32.mrf.mxu0
        %v9338 = vadd.f32 %v9145, %v9337
        %9339 = vmatprep.mubr.bf16.mxu0 %v6486
        %9340 = vmatmul.mubr.bf16.gmra.mxu0 %v6485
        %v9341 = vpop.f32.mrf.mxu0
        %v9342 = vadd.f32 %v9149, %v9341
        %v9343 = vpop.f32.mrf.mxu0
        %v9344 = vadd.f32 %v9151, %v9343
        %v9345 = vpop.f32.mrf.mxu0
        %v9346 = vadd.f32 %v9153, %v9345
        %v9347 = vpop.f32.mrf.mxu0
        %v9348 = vadd.f32 %v9155, %v9347
        %9349 = vmatprep.mubr.bf16.mxu0 %v6490
        %9350 = vmatmul.mubr.bf16.gmra.mxu0 %v6489
        %v9351 = vpop.f32.mrf.mxu0
        %v9352 = vadd.f32 %v9159, %v9351
        %v9353 = vpop.f32.mrf.mxu0
        %v9354 = vadd.f32 %v9161, %v9353
        %v9355 = vpop.f32.mrf.mxu0
        %v9356 = vadd.f32 %v9163, %v9355
        %v9357 = vpop.f32.mrf.mxu0
        %v9358 = vadd.f32 %v9165, %v9357
        %9359 = vmatprep.mubr.bf16.mxu0 %v6494
        %9360 = vmatmul.mubr.bf16.gmra.mxu0 %v6493
        %v9361 = vpop.f32.mrf.mxu0
        %v9362 = vadd.f32 %v9169, %v9361
        %v9363 = vpop.f32.mrf.mxu0
        %v9364 = vadd.f32 %v9171, %v9363
        %v9365 = vpop.f32.mrf.mxu0
        %v9366 = vadd.f32 %v9173, %v9365
        %v9367 = vpop.f32.mrf.mxu0
        %v9368 = vadd.f32 %v9175, %v9367
        %9369 = vmatprep.mubr.bf16.mxu0 %v6498
        %9370 = vmatmul.mubr.bf16.gmra.mxu0 %v6497
        %v9371 = vpop.f32.mrf.mxu0
        %v9372 = vadd.f32 %v9179, %v9371
        %v9373 = vpop.f32.mrf.mxu0
        %v9374 = vadd.f32 %v9181, %v9373
        %v9375 = vpop.f32.mrf.mxu0
        %v9376 = vadd.f32 %v9183, %v9375
        %v9377 = vpop.f32.mrf.mxu0
        %v9378 = vadd.f32 %v9185, %v9377
        %9379 = vmatprep.mubr.bf16.mxu0 %v6502
        %9380 = vmatmul.mubr.bf16.gmra.mxu0 %v6501
        %v9381 = vpop.f32.mrf.mxu0
        %v9382 = vadd.f32 %v9189, %v9381
        %v9383 = vpop.f32.mrf.mxu0
        %v9384 = vadd.f32 %v9191, %v9383
        %v9385 = vpop.f32.mrf.mxu0
        %v9386 = vadd.f32 %v9193, %v9385
        %v9387 = vpop.f32.mrf.mxu0
        %v9388 = vadd.f32 %v9195, %v9387
        %9389 = vmatprep.mubr.bf16.mxu0 %v6506
        %9390 = vmatmul.mubr.bf16.gmra.mxu0 %v6505
        %v9391 = vpop.f32.mrf.mxu0
        %v9392 = vadd.f32 %v9199, %v9391
        %v9393 = vpop.f32.mrf.mxu0
        %v9394 = vadd.f32 %v9201, %v9393
        %v9395 = vpop.f32.mrf.mxu0
        %v9396 = vadd.f32 %v9203, %v9395
        %v9397 = vpop.f32.mrf.mxu0
        %v9398 = vadd.f32 %v9205, %v9397
        %9399 = vmatprep.mubr.bf16.mxu0 %v6510
        %9400 = vmatmul.mubr.bf16.gmra.mxu0 %v6509
        %v9401 = vpop.f32.mrf.mxu0
        %v9402 = vadd.f32 %v9209, %v9401
        %v9403 = vpop.f32.mrf.mxu0
        %v9404 = vadd.f32 %v9211, %v9403
        %v9405 = vpop.f32.mrf.mxu0
        %v9406 = vadd.f32 %v9213, %v9405
        %v9407 = vpop.f32.mrf.mxu0
        %v9408 = vadd.f32 %v9215, %v9407
        %9409 = vmatprep.mubr.bf16.mxu0 %v6514
        %9410 = vmatmul.mubr.bf16.gmra.mxu0 %v6513
        %v9411 = vpop.f32.mrf.mxu0
        %v9412 = vadd.f32 %v9219, %v9411
        %v9413 = vpop.f32.mrf.mxu0
        %v9414 = vadd.f32 %v9221, %v9413
        %v9415 = vpop.f32.mrf.mxu0
        %v9416 = vadd.f32 %v9223, %v9415
        %v9417 = vpop.f32.mrf.mxu0
        %v9418 = vadd.f32 %v9225, %v9417
        %9419 = vmatprep.mubr.bf16.mxu0 %v6518
        %9420 = vmatmul.mubr.bf16.gmra.mxu0 %v6517
        %v9421 = vpop.f32.mrf.mxu0
        %v9422 = vadd.f32 %v9229, %v9421
        %v9423 = vpop.f32.mrf.mxu0
        %v9424 = vadd.f32 %v9231, %v9423
        %v9425 = vpop.f32.mrf.mxu0
        %v9426 = vadd.f32 %v9233, %v9425
        %v9427 = vpop.f32.mrf.mxu0
        %v9428 = vadd.f32 %v9235, %v9427
        %9429 = vmatprep.mubr.bf16.mxu0 %v6522
        %9430 = vmatmul.mubr.bf16.gmra.mxu0 %v6521
        %v9431 = vpop.f32.mrf.mxu0
        %v9432 = vadd.f32 %v9239, %v9431
        %v9433 = vpop.f32.mrf.mxu0
        %v9434 = vadd.f32 %v9241, %v9433
        %v9435 = vpop.f32.mrf.mxu0
        %v9436 = vadd.f32 %v9243, %v9435
        %v9437 = vpop.f32.mrf.mxu0
        %v9438 = vadd.f32 %v9245, %v9437
        %9439 = vmatprep.mubr.bf16.mxu0 %v6526
        %9440 = vmatmul.mubr.bf16.gmra.mxu0 %v6525
        %v9441 = vpop.f32.mrf.mxu0
        %v9442 = vadd.f32 %v9249, %v9441
        %v9443 = vpop.f32.mrf.mxu0
        %v9444 = vadd.f32 %v9251, %v9443
        %v9445 = vpop.f32.mrf.mxu0
        %v9446 = vadd.f32 %v9253, %v9445
        %v9447 = vpop.f32.mrf.mxu0
        %v9448 = vadd.f32 %v9255, %v9447
        %9449 = vmatprep.mubr.bf16.mxu0 %v6530
        %9450 = vmatmul.mubr.bf16.gmra.mxu0 %v6529
        %v9451 = vpop.f32.mrf.mxu0
        %v9452 = vadd.f32 %v9259, %v9451
        %v9453 = vpop.f32.mrf.mxu0
        %v9454 = vadd.f32 %v9261, %v9453
        %v9455 = vpop.f32.mrf.mxu0
        %v9456 = vadd.f32 %v9263, %v9455
        %v9457 = vpop.f32.mrf.mxu0
        %v9458 = vadd.f32 %v9265, %v9457
        %9459 = vmatprep.mubr.bf16.mxu0 %v6534
        %9460 = vmatmul.mubr.bf16.gmra.mxu0 %v6533
        %v9461 = vpop.f32.mrf.mxu0
        %v9462 = vadd.f32 %v9269, %v9461
        %v9463 = vpop.f32.mrf.mxu0
        %v9464 = vadd.f32 %v9271, %v9463
        %v9465 = vpop.f32.mrf.mxu0
        %v9466 = vadd.f32 %v9273, %v9465
        %v9467 = vpop.f32.mrf.mxu0
        %v9468 = vadd.f32 %v9275, %v9467
        %9469 = vmatprep.mubr.bf16.mxu0 %v6538
        %9470 = vmatmul.mubr.bf16.gmra.mxu0 %v6537
        %v9471 = vpop.f32.mrf.mxu0
        %v9472 = vadd.f32 %v9279, %v9471
        %v9473 = vpop.f32.mrf.mxu0
        %v9474 = vadd.f32 %v9281, %v9473
        %v9475 = vpop.f32.mrf.mxu0
        %v9476 = vadd.f32 %v9283, %v9475
        %v9477 = vpop.f32.mrf.mxu0
        %v9478 = vadd.f32 %v9285, %v9477
        %9479 = vmatprep.mubr.bf16.mxu0 %v6542
        %9480 = vmatmul.mubr.bf16.gmra.mxu0 %v6541
        %v9481 = vpop.f32.mrf.mxu0
        %v9482 = vadd.f32 %v9289, %v9481
        %v9483 = vpop.f32.mrf.mxu0
        %v9484 = vadd.f32 %v9291, %v9483
        %v9485 = vpop.f32.mrf.mxu0
        %v9486 = vadd.f32 %v9293, %v9485
        %v9487 = vpop.f32.mrf.mxu0
        %v9488 = vadd.f32 %v9295, %v9487
        %9489 = vdwg.mxu0
        %9490 = vmatprep.subr.bf16.mxu0 0
        %9491 = vmatpush1.bf16.msra.mxu0 %v8935
        %9492 = vmatprep.subr.bf16.mxu0 0
        %9493 = vmatpush1.bf16.msra.mxu0 %v8932
        %9494 = vmatprep.subr.bf16.mxu0 0
        %9495 = vmatpush1.bf16.msra.mxu0 %v8929
        %9496 = vmatprep.subr.bf16.mxu0 0
        %9497 = vmatpush1.bf16.msra.mxu0 %v8926
        %9498 = vmatprep.subr.bf16.mxu0 0
        %9499 = vmatpush1.bf16.msra.mxu0 %v8923
        %9500 = vmatprep.subr.bf16.mxu0 0
        %9501 = vmatpush1.bf16.msra.mxu0 %v8920
        %9502 = vmatprep.subr.bf16.mxu0 0
        %9503 = vmatpush1.bf16.msra.mxu0 %v8917
        %9504 = vmatprep.subr.bf16.mxu0 0
        %9505 = vmatpush1.bf16.msra.mxu0 %v8914
        %9506 = vmatprep.subr.bf16.mxu0 0
        %9507 = vmatpush2.bf16.msra.mxu0 %v8959
        %9508 = vmatprep.subr.bf16.mxu0 0
        %9509 = vmatpush2.bf16.msra.mxu0 %v8956
        %9510 = vmatprep.subr.bf16.mxu0 0
        %9511 = vmatpush2.bf16.msra.mxu0 %v8953
        %9512 = vmatprep.subr.bf16.mxu0 0
        %9513 = vmatpush2.bf16.msra.mxu0 %v8950
        %9514 = vmatprep.subr.bf16.mxu0 0
        %9515 = vmatpush2.bf16.msra.mxu0 %v8947
        %9516 = vmatprep.subr.bf16.mxu0 0
        %9517 = vmatpush2.bf16.msra.mxu0 %v8944
        %9518 = vmatprep.subr.bf16.mxu0 0
        %9519 = vmatpush2.bf16.msra.mxu0 %v8941
        %9520 = vmatprep.subr.bf16.mxu0 0
        %9521 = vmatpush2.bf16.msra.mxu0 %v8938
        %9522 = vmatprep.mubr.bf16.mxu0 %v6480
        %9523 = vmatmul.mubr.bf16.gmra.mxu0 %v6479
        %v9524 = vpop.f32.mrf.mxu0
        %v9525 = vadd.f32 %v8466, %v9524
        %v9526 = vpop.f32.mrf.mxu0
        %v9527 = vpop.f32.mrf.mxu0
        %v9528 = vadd.f32 %v8469, %v9527
        %v9529 = vpop.f32.mrf.mxu0
        %9530 = vmatprep.mubr.bf16.mxu0 %v6484
        %9531 = vmatmul.mubr.bf16.gmra.mxu0 %v6483
        %v9532 = vpop.f32.mrf.mxu0
        %v9533 = vadd.f32 %v8474, %v9532
        %v9534 = vpop.f32.mrf.mxu0
        %v9535 = vpop.f32.mrf.mxu0
        %v9536 = vadd.f32 %v8477, %v9535
        %v9537 = vpop.f32.mrf.mxu0
        %9538 = vmatprep.mubr.bf16.mxu0 %v6488
        %9539 = vmatmul.mubr.bf16.gmra.mxu0 %v6487
        %v9540 = vpop.f32.mrf.mxu0
        %v9541 = vadd.f32 %v8482, %v9540
        %v9542 = vpop.f32.mrf.mxu0
        %v9543 = vpop.f32.mrf.mxu0
        %v9544 = vadd.f32 %v8485, %v9543
        %v9545 = vpop.f32.mrf.mxu0
        %9546 = vmatprep.mubr.bf16.mxu0 %v6492
        %9547 = vmatmul.mubr.bf16.gmra.mxu0 %v6491
        %v9548 = vpop.f32.mrf.mxu0
        %v9549 = vadd.f32 %v8490, %v9548
        %v9550 = vpop.f32.mrf.mxu0
        %v9551 = vpop.f32.mrf.mxu0
        %v9552 = vadd.f32 %v8493, %v9551
        %v9553 = vpop.f32.mrf.mxu0
        %9554 = vmatprep.mubr.bf16.mxu0 %v6496
        %9555 = vmatmul.mubr.bf16.gmra.mxu0 %v6495
        %v9556 = vpop.f32.mrf.mxu0
        %v9557 = vadd.f32 %v8498, %v9556
        %v9558 = vpop.f32.mrf.mxu0
        %v9559 = vpop.f32.mrf.mxu0
        %v9560 = vadd.f32 %v8501, %v9559
        %v9561 = vpop.f32.mrf.mxu0
        %9562 = vmatprep.mubr.bf16.mxu0 %v6500
        %9563 = vmatmul.mubr.bf16.gmra.mxu0 %v6499
        %v9564 = vpop.f32.mrf.mxu0
        %v9565 = vadd.f32 %v8506, %v9564
        %v9566 = vpop.f32.mrf.mxu0
        %v9567 = vpop.f32.mrf.mxu0
        %v9568 = vadd.f32 %v8509, %v9567
        %v9569 = vpop.f32.mrf.mxu0
        %9570 = vmatprep.mubr.bf16.mxu0 %v6504
        %9571 = vmatmul.mubr.bf16.gmra.mxu0 %v6503
        %v9572 = vpop.f32.mrf.mxu0
        %v9573 = vadd.f32 %v8514, %v9572
        %v9574 = vpop.f32.mrf.mxu0
        %v9575 = vpop.f32.mrf.mxu0
        %v9576 = vadd.f32 %v8517, %v9575
        %v9577 = vpop.f32.mrf.mxu0
        %9578 = vmatprep.mubr.bf16.mxu0 %v6508
        %9579 = vmatmul.mubr.bf16.gmra.mxu0 %v6507
        %v9580 = vpop.f32.mrf.mxu0
        %v9581 = vadd.f32 %v8522, %v9580
        %v9582 = vpop.f32.mrf.mxu0
        %v9583 = vpop.f32.mrf.mxu0
        %v9584 = vadd.f32 %v8525, %v9583
        %v9585 = vpop.f32.mrf.mxu0
        %9586 = vmatprep.mubr.bf16.mxu0 %v6512
        %9587 = vmatmul.mubr.bf16.gmra.mxu0 %v6511
        %v9588 = vpop.f32.mrf.mxu0
        %v9589 = vadd.f32 %v8530, %v9588
        %v9590 = vpop.f32.mrf.mxu0
        %v9591 = vpop.f32.mrf.mxu0
        %v9592 = vadd.f32 %v8533, %v9591
        %v9593 = vpop.f32.mrf.mxu0
        %9594 = vmatprep.mubr.bf16.mxu0 %v6516
        %9595 = vmatmul.mubr.bf16.gmra.mxu0 %v6515
        %v9596 = vpop.f32.mrf.mxu0
        %v9597 = vadd.f32 %v8538, %v9596
        %v9598 = vpop.f32.mrf.mxu0
        %v9599 = vpop.f32.mrf.mxu0
        %v9600 = vadd.f32 %v8541, %v9599
        %v9601 = vpop.f32.mrf.mxu0
        %9602 = vmatprep.mubr.bf16.mxu0 %v6520
        %9603 = vmatmul.mubr.bf16.gmra.mxu0 %v6519
        %v9604 = vpop.f32.mrf.mxu0
        %v9605 = vadd.f32 %v8546, %v9604
        %v9606 = vpop.f32.mrf.mxu0
        %v9607 = vpop.f32.mrf.mxu0
        %v9608 = vadd.f32 %v8549, %v9607
        %v9609 = vpop.f32.mrf.mxu0
        %9610 = vmatprep.mubr.bf16.mxu0 %v6524
        %9611 = vmatmul.mubr.bf16.gmra.mxu0 %v6523
        %v9612 = vpop.f32.mrf.mxu0
        %v9613 = vadd.f32 %v8554, %v9612
        %v9614 = vpop.f32.mrf.mxu0
        %v9615 = vpop.f32.mrf.mxu0
        %v9616 = vadd.f32 %v8557, %v9615
        %v9617 = vpop.f32.mrf.mxu0
        %9618 = vmatprep.mubr.bf16.mxu0 %v6528
        %9619 = vmatmul.mubr.bf16.gmra.mxu0 %v6527
        %v9620 = vpop.f32.mrf.mxu0
        %v9621 = vadd.f32 %v8562, %v9620
        %v9622 = vpop.f32.mrf.mxu0
        %v9623 = vpop.f32.mrf.mxu0
        %v9624 = vadd.f32 %v8565, %v9623
        %v9625 = vpop.f32.mrf.mxu0
        %9626 = vmatprep.mubr.bf16.mxu0 %v6532
        %9627 = vmatmul.mubr.bf16.gmra.mxu0 %v6531
        %v9628 = vpop.f32.mrf.mxu0
        %v9629 = vadd.f32 %v8570, %v9628
        %v9630 = vpop.f32.mrf.mxu0
        %v9631 = vpop.f32.mrf.mxu0
        %v9632 = vadd.f32 %v8573, %v9631
        %v9633 = vpop.f32.mrf.mxu0
        %9634 = vmatprep.mubr.bf16.mxu0 %v6536
        %9635 = vmatmul.mubr.bf16.gmra.mxu0 %v6535
        %v9636 = vpop.f32.mrf.mxu0
        %v9637 = vadd.f32 %v8578, %v9636
        %v9638 = vpop.f32.mrf.mxu0
        %v9639 = vpop.f32.mrf.mxu0
        %v9640 = vadd.f32 %v8581, %v9639
        %v9641 = vpop.f32.mrf.mxu0
        %9642 = vmatprep.mubr.bf16.mxu0 %v6540
        %9643 = vmatmul.mubr.bf16.gmra.mxu0 %v6539
        %v9644 = vpop.f32.mrf.mxu0
        %v9645 = vadd.f32 %v8586, %v9644
        %v9646 = vpop.f32.mrf.mxu0
        %v9647 = vpop.f32.mrf.mxu0
        %v9648 = vadd.f32 %v8589, %v9647
        %v9649 = vpop.f32.mrf.mxu0
        %9650 = vdwg.mxu0
        %9651 = vmatprep.subr.bf16.mxu0 0
        %9652 = vmatpush1.bf16.msra.mxu0 %v8983
        %9653 = vmatprep.subr.bf16.mxu0 0
        %9654 = vmatpush1.bf16.msra.mxu0 %v8980
        %9655 = vmatprep.subr.bf16.mxu0 0
        %9656 = vmatpush1.bf16.msra.mxu0 %v8977
        %9657 = vmatprep.subr.bf16.mxu0 0
        %9658 = vmatpush1.bf16.msra.mxu0 %v8974
        %9659 = vmatprep.subr.bf16.mxu0 0
        %9660 = vmatpush1.bf16.msra.mxu0 %v8971
        %9661 = vmatprep.subr.bf16.mxu0 0
        %9662 = vmatpush1.bf16.msra.mxu0 %v8968
        %9663 = vmatprep.subr.bf16.mxu0 0
        %9664 = vmatpush1.bf16.msra.mxu0 %v8965
        %9665 = vmatprep.subr.bf16.mxu0 0
        %9666 = vmatpush1.bf16.msra.mxu0 %v8962
        %9667 = vmatprep.subr.bf16.mxu0 0
        %9668 = vmatpush2.bf16.msra.mxu0 %v9007
        %9669 = vmatprep.subr.bf16.mxu0 0
        %9670 = vmatpush2.bf16.msra.mxu0 %v9004
        %9671 = vmatprep.subr.bf16.mxu0 0
        %9672 = vmatpush2.bf16.msra.mxu0 %v9001
        %9673 = vmatprep.subr.bf16.mxu0 0
        %9674 = vmatpush2.bf16.msra.mxu0 %v8998
        %9675 = vmatprep.subr.bf16.mxu0 0
        %9676 = vmatpush2.bf16.msra.mxu0 %v8995
        %9677 = vmatprep.subr.bf16.mxu0 0
        %9678 = vmatpush2.bf16.msra.mxu0 %v8992
        %9679 = vmatprep.subr.bf16.mxu0 0
        %9680 = vmatpush2.bf16.msra.mxu0 %v8989
        %9681 = vmatprep.subr.bf16.mxu0 0
        %9682 = vmatpush2.bf16.msra.mxu0 %v8986
        %9683 = vmatprep.mubr.bf16.mxu0 %v6482
        %9684 = vmatmul.mubr.bf16.gmra.mxu0 %v6481
        %v9685 = vpop.f32.mrf.mxu0
        %v9686 = vadd.f32 %v9525, %v9685
        %v9687 = vpop.f32.mrf.mxu0
        %v9688 = vpop.f32.mrf.mxu0
        %v9689 = vadd.f32 %v9528, %v9688
        %v9690 = vpop.f32.mrf.mxu0
        %9691 = vmatprep.mubr.bf16.mxu0 %v6486
        %9692 = vmatmul.mubr.bf16.gmra.mxu0 %v6485
        %v9693 = vpop.f32.mrf.mxu0
        %v9694 = vadd.f32 %v9533, %v9693
        %v9695 = vpop.f32.mrf.mxu0
        %v9696 = vpop.f32.mrf.mxu0
        %v9697 = vadd.f32 %v9536, %v9696
        %v9698 = vpop.f32.mrf.mxu0
        %9699 = vmatprep.mubr.bf16.mxu0 %v6490
        %9700 = vmatmul.mubr.bf16.gmra.mxu0 %v6489
        %v9701 = vpop.f32.mrf.mxu0
        %v9702 = vadd.f32 %v9541, %v9701
        %v9703 = vpop.f32.mrf.mxu0
        %v9704 = vpop.f32.mrf.mxu0
        %v9705 = vadd.f32 %v9544, %v9704
        %v9706 = vpop.f32.mrf.mxu0
        %9707 = vmatprep.mubr.bf16.mxu0 %v6494
        %9708 = vmatmul.mubr.bf16.gmra.mxu0 %v6493
        %v9709 = vpop.f32.mrf.mxu0
        %v9710 = vadd.f32 %v9549, %v9709
        %v9711 = vpop.f32.mrf.mxu0
        %v9712 = vpop.f32.mrf.mxu0
        %v9713 = vadd.f32 %v9552, %v9712
        %v9714 = vpop.f32.mrf.mxu0
        %9715 = vmatprep.mubr.bf16.mxu0 %v6498
        %9716 = vmatmul.mubr.bf16.gmra.mxu0 %v6497
        %v9717 = vpop.f32.mrf.mxu0
        %v9718 = vadd.f32 %v9557, %v9717
        %v9719 = vpop.f32.mrf.mxu0
        %v9720 = vpop.f32.mrf.mxu0
        %v9721 = vadd.f32 %v9560, %v9720
        %v9722 = vpop.f32.mrf.mxu0
        %9723 = vmatprep.mubr.bf16.mxu0 %v6502
        %9724 = vmatmul.mubr.bf16.gmra.mxu0 %v6501
        %v9725 = vpop.f32.mrf.mxu0
        %v9726 = vadd.f32 %v9565, %v9725
        %v9727 = vpop.f32.mrf.mxu0
        %v9728 = vpop.f32.mrf.mxu0
        %v9729 = vadd.f32 %v9568, %v9728
        %v9730 = vpop.f32.mrf.mxu0
        %9731 = vmatprep.mubr.bf16.mxu0 %v6506
        %9732 = vmatmul.mubr.bf16.gmra.mxu0 %v6505
        %v9733 = vpop.f32.mrf.mxu0
        %v9734 = vadd.f32 %v9573, %v9733
        %v9735 = vpop.f32.mrf.mxu0
        %v9736 = vpop.f32.mrf.mxu0
        %v9737 = vadd.f32 %v9576, %v9736
        %v9738 = vpop.f32.mrf.mxu0
        %9739 = vmatprep.mubr.bf16.mxu0 %v6510
        %9740 = vmatmul.mubr.bf16.gmra.mxu0 %v6509
        %v9741 = vpop.f32.mrf.mxu0
        %v9742 = vadd.f32 %v9581, %v9741
        %v9743 = vpop.f32.mrf.mxu0
        %v9744 = vpop.f32.mrf.mxu0
        %v9745 = vadd.f32 %v9584, %v9744
        %v9746 = vpop.f32.mrf.mxu0
        %9747 = vmatprep.mubr.bf16.mxu0 %v6514
        %9748 = vmatmul.mubr.bf16.gmra.mxu0 %v6513
        %v9749 = vpop.f32.mrf.mxu0
        %v9750 = vadd.f32 %v9589, %v9749
        %v9751 = vpop.f32.mrf.mxu0
        %v9752 = vpop.f32.mrf.mxu0
        %v9753 = vadd.f32 %v9592, %v9752
        %v9754 = vpop.f32.mrf.mxu0
        %9755 = vmatprep.mubr.bf16.mxu0 %v6518
        %9756 = vmatmul.mubr.bf16.gmra.mxu0 %v6517
        %v9757 = vpop.f32.mrf.mxu0
        %v9758 = vadd.f32 %v9597, %v9757
        %v9759 = vpop.f32.mrf.mxu0
        %v9760 = vpop.f32.mrf.mxu0
        %v9761 = vadd.f32 %v9600, %v9760
        %v9762 = vpop.f32.mrf.mxu0
        %9763 = vmatprep.mubr.bf16.mxu0 %v6522
        %9764 = vmatmul.mubr.bf16.gmra.mxu0 %v6521
        %v9765 = vpop.f32.mrf.mxu0
        %v9766 = vadd.f32 %v9605, %v9765
        %v9767 = vpop.f32.mrf.mxu0
        %v9768 = vpop.f32.mrf.mxu0
        %v9769 = vadd.f32 %v9608, %v9768
        %v9770 = vpop.f32.mrf.mxu0
        %9771 = vmatprep.mubr.bf16.mxu0 %v6526
        %9772 = vmatmul.mubr.bf16.gmra.mxu0 %v6525
        %v9773 = vpop.f32.mrf.mxu0
        %v9774 = vadd.f32 %v9613, %v9773
        %v9775 = vpop.f32.mrf.mxu0
        %v9776 = vpop.f32.mrf.mxu0
        %v9777 = vadd.f32 %v9616, %v9776
        %v9778 = vpop.f32.mrf.mxu0
        %9779 = vmatprep.mubr.bf16.mxu0 %v6530
        %9780 = vmatmul.mubr.bf16.gmra.mxu0 %v6529
        %v9781 = vpop.f32.mrf.mxu0
        %v9782 = vadd.f32 %v9621, %v9781
        %v9783 = vpop.f32.mrf.mxu0
        %v9784 = vpop.f32.mrf.mxu0
        %v9785 = vadd.f32 %v9624, %v9784
        %v9786 = vpop.f32.mrf.mxu0
        %9787 = vmatprep.mubr.bf16.mxu0 %v6534
        %9788 = vmatmul.mubr.bf16.gmra.mxu0 %v6533
        %v9789 = vpop.f32.mrf.mxu0
        %v9790 = vadd.f32 %v9629, %v9789
        %v9791 = vpop.f32.mrf.mxu0
        %v9792 = vpop.f32.mrf.mxu0
        %v9793 = vadd.f32 %v9632, %v9792
        %v9794 = vpop.f32.mrf.mxu0
        %9795 = vmatprep.mubr.bf16.mxu0 %v6538
        %9796 = vmatmul.mubr.bf16.gmra.mxu0 %v6537
        %v9797 = vpop.f32.mrf.mxu0
        %v9798 = vadd.f32 %v9637, %v9797
        %v9799 = vpop.f32.mrf.mxu0
        %v9800 = vpop.f32.mrf.mxu0
        %v9801 = vadd.f32 %v9640, %v9800
        %v9802 = vpop.f32.mrf.mxu0
        %9803 = vmatprep.mubr.bf16.mxu0 %v6542
        %9804 = vmatmul.mubr.bf16.gmra.mxu0 %v6541
        %v9805 = vpop.f32.mrf.mxu0
        %v9806 = vadd.f32 %v9645, %v9805
        %v9807 = vpop.f32.mrf.mxu0
        %v9808 = vpop.f32.mrf.mxu0
        %v9809 = vadd.f32 %v9648, %v9808
        %v9810 = vpop.f32.mrf.mxu0
        %9811 = vdwg.mxu0
        %s9812 = scalar_lea.vmem [#allocation6], 1536
        %v9813 = vld [vmem:[%s9812] sm:$0xff]
        %v9814 = vld [vmem:[%s9812 + $0x8] sm:$0xf]
        %v9815 = vld [vmem:[%s9812 + $0xc] sm:$0xff]
        %v9816 = vld [vmem:[%s9812 + $0x14] sm:$0xf]
        %v9817 = vld [vmem:[%s9812 + $0x18] sm:$0xff]
        %v9818 = vld [vmem:[%s9812 + $0x20] sm:$0xf]
        %v9819 = vld [vmem:[%s9812 + $0x24] sm:$0xff]
        %v9820 = vld [vmem:[%s9812 + $0x2c] sm:$0xf]
        %v9821 = vld [vmem:[%s9812 + $0x30] sm:$0xff]
        %v9822 = vld [vmem:[%s9812 + $0x38] sm:$0xf]
        %v9823 = vld [vmem:[%s9812 + $0x3c] sm:$0xff]
        %v9824 = vld [vmem:[%s9812 + $0x44] sm:$0xf]
        %v9825 = vld [vmem:[%s9812 + $0x48] sm:$0xff]
        %v9826 = vld [vmem:[%s9812 + $0x50] sm:$0xf]
        %v9827 = vld [vmem:[%s9812 + $0x54] sm:$0xff]
        %v9828 = vld [vmem:[%s9812 + $0x5c] sm:$0xf]
        %v9829 = vld [vmem:[%s9812 + $0x60] sm:$0xff]
        %v9830 = vld [vmem:[%s9812 + $0x68] sm:$0xf]
        %v9831 = vld [vmem:[%s9812 + $0x6c] sm:$0xff]
        %v9832 = vld [vmem:[%s9812 + $0x74] sm:$0xf]
        %v9833 = vld [vmem:[%s9812 + $0x78] sm:$0xff]
        %v9834 = vld [vmem:[%s9812 + $0x80] sm:$0xf]
        %v9835 = vld [vmem:[%s9812 + $0x84] sm:$0xff]
        %v9836 = vld [vmem:[%s9812 + $0x8c] sm:$0xf]
        %v9837 = vld [vmem:[%s9812 + $0x90] sm:$0xff]
        %v9838 = vld [vmem:[%s9812 + $0x98] sm:$0xf]
        %v9839 = vld [vmem:[%s9812 + $0x9c] sm:$0xff]
        %v9840 = vld [vmem:[%s9812 + $0xa4] sm:$0xf]
        %v9841 = vld [vmem:[%s9812 + $0xa8] sm:$0xff]
        %v9842 = vld [vmem:[%s9812 + $0xb0] sm:$0xf]
        %v9843 = vld [vmem:[%s9812 + $0xb4] sm:$0xff]
        %v9844 = vld [vmem:[%s9812 + $0xbc] sm:$0xf]
        %v9845 = vld [vmem:[%s9812 + $0xc0] sm:$0xff]
        %v9846 = vld [vmem:[%s9812 + $0xc8] sm:$0xf]
        %v9847 = vld [vmem:[%s9812 + $0xcc] sm:$0xff]
        %v9848 = vld [vmem:[%s9812 + $0xd4] sm:$0xf]
        %v9849 = vld [vmem:[%s9812 + $0xd8] sm:$0xff]
        %v9850 = vld [vmem:[%s9812 + $0xe0] sm:$0xf]
        %v9851 = vld [vmem:[%s9812 + $0xe4] sm:$0xff]
        %v9852 = vld [vmem:[%s9812 + $0xec] sm:$0xf]
        %v9853 = vld [vmem:[%s9812 + $0xf0] sm:$0xff]
        %v9854 = vld [vmem:[%s9812 + $0xf8] sm:$0xf]
        %v9855 = vld [vmem:[%s9812 + $0xfc] sm:$0xff]
        %v9856 = vld [vmem:[%s9812 + $0x104] sm:$0xf]
        %v9857 = vld [vmem:[%s9812 + $0x108] sm:$0xff]
        %v9858 = vld [vmem:[%s9812 + $0x110] sm:$0xf]
        %v9859 = vld [vmem:[%s9812 + $0x114] sm:$0xff]
        %v9860 = vld [vmem:[%s9812 + $0x11c] sm:$0xf]
        %v9861 = vld [vmem:[%s9812 + $0x120] sm:$0xff]
        %v9862 = vld [vmem:[%s9812 + $0x128] sm:$0xf]
        %v9863 = vld [vmem:[%s9812 + $0x12c] sm:$0xff]
        %v9864 = vld [vmem:[%s9812 + $0x134] sm:$0xf]
        %v9865 = vld [vmem:[%s9812 + $0x138] sm:$0xff]
        %v9866 = vld [vmem:[%s9812 + $0x140] sm:$0xf]
        %v9867 = vld [vmem:[%s9812 + $0x144] sm:$0xff]
        %v9868 = vld [vmem:[%s9812 + $0x14c] sm:$0xf]
        %v9869 = vld [vmem:[%s9812 + $0x150] sm:$0xff]
        %v9870 = vld [vmem:[%s9812 + $0x158] sm:$0xf]
        %v9871 = vld [vmem:[%s9812 + $0x15c] sm:$0xff]
        %v9872 = vld [vmem:[%s9812 + $0x164] sm:$0xf]
        %v9873 = vld [vmem:[%s9812 + $0x168] sm:$0xff]
        %v9874 = vld [vmem:[%s9812 + $0x170] sm:$0xf]
        %v9875 = vld [vmem:[%s9812 + $0x174] sm:$0xff]
        %v9876 = vld [vmem:[%s9812 + $0x17c] sm:$0xf]
        %v9877 = vld [vmem:[%s9812 + $0x180] sm:$0xff]
        %v9878 = vld [vmem:[%s9812 + $0x188] sm:$0xf]
        %v9879 = vld [vmem:[%s9812 + $0x18c] sm:$0xff]
        %v9880 = vld [vmem:[%s9812 + $0x194] sm:$0xf]
        %v9881 = vld [vmem:[%s9812 + $0x198] sm:$0xff]
        %v9882 = vld [vmem:[%s9812 + $0x1a0] sm:$0xf]
        %v9883 = vld [vmem:[%s9812 + $0x1a4] sm:$0xff]
        %v9884 = vld [vmem:[%s9812 + $0x1ac] sm:$0xf]
        %v9885 = vld [vmem:[%s9812 + $0x1b0] sm:$0xff]
        %v9886 = vld [vmem:[%s9812 + $0x1b8] sm:$0xf]
        %v9887 = vld [vmem:[%s9812 + $0x1bc] sm:$0xff]
        %v9888 = vld [vmem:[%s9812 + $0x1c4] sm:$0xf]
        %v9889 = vld [vmem:[%s9812 + $0x1c8] sm:$0xff]
        %v9890 = vld [vmem:[%s9812 + $0x1d0] sm:$0xf]
        %v9891 = vld [vmem:[%s9812 + $0x1d4] sm:$0xff]
        %v9892 = vld [vmem:[%s9812 + $0x1dc] sm:$0xf]
        %v9893 = vld [vmem:[%s9812 + $0x1e0] sm:$0xff]
        %v9894 = vld [vmem:[%s9812 + $0x1e8] sm:$0xf]
        %v9895 = vld [vmem:[%s9812 + $0x1ec] sm:$0xff]
        %v9896 = vld [vmem:[%s9812 + $0x1f4] sm:$0xf]
        %v9897 = vld [vmem:[%s9812 + $0x1f8] sm:$0xff]
        %v9898 = vld [vmem:[%s9812 + $0x200] sm:$0xf]
        %v9899 = vld [vmem:[%s9812 + $0x204] sm:$0xff]
        %v9900 = vld [vmem:[%s9812 + $0x20c] sm:$0xf]
        %v9901 = vld [vmem:[%s9812 + $0x210] sm:$0xff]
        %v9902 = vld [vmem:[%s9812 + $0x218] sm:$0xf]
        %v9903 = vld [vmem:[%s9812 + $0x21c] sm:$0xff]
        %v9904 = vld [vmem:[%s9812 + $0x224] sm:$0xf]
        %v9905 = vld [vmem:[%s9812 + $0x228] sm:$0xff]
        %v9906 = vld [vmem:[%s9812 + $0x230] sm:$0xf]
        %v9907 = vld [vmem:[%s9812 + $0x234] sm:$0xff]
        %v9908 = vld [vmem:[%s9812 + $0x23c] sm:$0xf]
        %v9909 = vld [vmem:[%s9812 + $0x240] sm:$0xff]
        %v9910 = vld [vmem:[%s9812 + $0x248] sm:$0xf]
        %v9911 = vld [vmem:[%s9812 + $0x24c] sm:$0xff]
        %v9912 = vld [vmem:[%s9812 + $0x254] sm:$0xf]
        %v9913 = vld [vmem:[%s9812 + $0x258] sm:$0xff]
        %v9914 = vld [vmem:[%s9812 + $0x260] sm:$0xf]
        %v9915 = vld [vmem:[%s9812 + $0x264] sm:$0xff]
        %v9916 = vld [vmem:[%s9812 + $0x26c] sm:$0xf]
        %v9917 = vld [vmem:[%s9812 + $0x270] sm:$0xff]
        %v9918 = vld [vmem:[%s9812 + $0x278] sm:$0xf]
        %v9919 = vld [vmem:[%s9812 + $0x27c] sm:$0xff]
        %v9920 = vld [vmem:[%s9812 + $0x284] sm:$0xf]
        %v9921 = vld [vmem:[%s9812 + $0x288] sm:$0xff]
        %v9922 = vld [vmem:[%s9812 + $0x290] sm:$0xf]
        %v9923 = vld [vmem:[%s9812 + $0x294] sm:$0xff]
        %v9924 = vld [vmem:[%s9812 + $0x29c] sm:$0xf]
        %v9925 = vld [vmem:[%s9812 + $0x2a0] sm:$0xff]
        %v9926 = vld [vmem:[%s9812 + $0x2a8] sm:$0xf]
        %v9927 = vld [vmem:[%s9812 + $0x2ac] sm:$0xff]
        %v9928 = vld [vmem:[%s9812 + $0x2b4] sm:$0xf]
        %v9929 = vld [vmem:[%s9812 + $0x2b8] sm:$0xff]
        %v9930 = vld [vmem:[%s9812 + $0x2c0] sm:$0xf]
        %v9931 = vld [vmem:[%s9812 + $0x2c4] sm:$0xff]
        %v9932 = vld [vmem:[%s9812 + $0x2cc] sm:$0xf]
        %v9933 = vld [vmem:[%s9812 + $0x2d0] sm:$0xff]
        %v9934 = vld [vmem:[%s9812 + $0x2d8] sm:$0xf]
        %v9935 = vld [vmem:[%s9812 + $0x2dc] sm:$0xff]
        %v9936 = vld [vmem:[%s9812 + $0x2e4] sm:$0xf]
        %v9937 = vld [vmem:[%s9812 + $0x2e8] sm:$0xff]
        %v9938 = vld [vmem:[%s9812 + $0x2f0] sm:$0xf]
        %v9939 = vld [vmem:[%s9812 + $0x2f4] sm:$0xff]
        %v9940 = vld [vmem:[%s9812 + $0x2fc] sm:$0xf]
        %v10005 = vrot.slane %v6479, 1
        %v10006 = vrot.slane %v6483, 1
        %v10007 = vsel %vm4536, %v10005, %v10006
        %v10008 = vrot.slane %v6480, 1
        %v10009 = vrot.slane %v6484, 1
        %v10010 = vsel %vm4536, %v10008, %v10009
        %v10011 = vrot.slane %v6481, 1
        %v10012 = vrot.slane %v6485, 1
        %v10013 = vsel %vm4536, %v10011, %v10012
        %v10014 = vrot.slane %v6482, 1
        %v10015 = vrot.slane %v6486, 1
        %v10016 = vsel %vm4536, %v10014, %v10015
        %v10017 = vrot.slane %v6487, 1
        %v10018 = vsel %vm4536, %v10006, %v10017
        %v10019 = vrot.slane %v6488, 1
        %v10020 = vsel %vm4536, %v10009, %v10019
        %v10021 = vrot.slane %v6489, 1
        %v10022 = vsel %vm4536, %v10012, %v10021
        %v10023 = vrot.slane %v6490, 1
        %v10024 = vsel %vm4536, %v10015, %v10023
        %v10025 = vrot.slane %v6491, 1
        %v10026 = vsel %vm4536, %v10017, %v10025
        %v10027 = vrot.slane %v6492, 1
        %v10028 = vsel %vm4536, %v10019, %v10027
        %v10029 = vrot.slane %v6493, 1
        %v10030 = vsel %vm4536, %v10021, %v10029
        %v10031 = vrot.slane %v6494, 1
        %v10032 = vsel %vm4536, %v10023, %v10031
        %v10033 = vrot.slane %v6495, 1
        %v10034 = vsel %vm4536, %v10025, %v10033
        %v10035 = vrot.slane %v6496, 1
        %v10036 = vsel %vm4536, %v10027, %v10035
        %v10037 = vrot.slane %v6497, 1
        %v10038 = vsel %vm4536, %v10029, %v10037
        %v10039 = vrot.slane %v6498, 1
        %v10040 = vsel %vm4536, %v10031, %v10039
        %v10041 = vrot.slane %v6499, 1
        %v10042 = vsel %vm4536, %v10033, %v10041
        %v10043 = vrot.slane %v6500, 1
        %v10044 = vsel %vm4536, %v10035, %v10043
        %v10045 = vrot.slane %v6501, 1
        %v10046 = vsel %vm4536, %v10037, %v10045
        %v10047 = vrot.slane %v6502, 1
        %v10048 = vsel %vm4536, %v10039, %v10047
        %v10049 = vrot.slane %v6503, 1
        %v10050 = vsel %vm4536, %v10041, %v10049
        %v10051 = vrot.slane %v6504, 1
        %v10052 = vsel %vm4536, %v10043, %v10051
        %v10053 = vrot.slane %v6505, 1
        %v10054 = vsel %vm4536, %v10045, %v10053
        %v10055 = vrot.slane %v6506, 1
        %v10056 = vsel %vm4536, %v10047, %v10055
        %v10057 = vrot.slane %v6507, 1
        %v10058 = vsel %vm4536, %v10049, %v10057
        %v10059 = vrot.slane %v6508, 1
        %v10060 = vsel %vm4536, %v10051, %v10059
        %v10061 = vrot.slane %v6509, 1
        %v10062 = vsel %vm4536, %v10053, %v10061
        %v10063 = vrot.slane %v6510, 1
        %v10064 = vsel %vm4536, %v10055, %v10063
        %v10065 = vrot.slane %v6511, 1
        %v10066 = vsel %vm4536, %v10057, %v10065
        %v10067 = vrot.slane %v6512, 1
        %v10068 = vsel %vm4536, %v10059, %v10067
        %v10069 = vrot.slane %v6513, 1
        %v10070 = vsel %vm4536, %v10061, %v10069
        %v10071 = vrot.slane %v6514, 1
        %v10072 = vsel %vm4536, %v10063, %v10071
        %v10073 = vrot.slane %v6515, 1
        %v10074 = vsel %vm4536, %v10065, %v10073
        %v10075 = vrot.slane %v6516, 1
        %v10076 = vsel %vm4536, %v10067, %v10075
        %v10077 = vrot.slane %v6517, 1
        %v10078 = vsel %vm4536, %v10069, %v10077
        %v10079 = vrot.slane %v6518, 1
        %v10080 = vsel %vm4536, %v10071, %v10079
        %v10081 = vrot.slane %v6519, 1
        %v10082 = vsel %vm4536, %v10073, %v10081
        %v10083 = vrot.slane %v6520, 1
        %v10084 = vsel %vm4536, %v10075, %v10083
        %v10085 = vrot.slane %v6521, 1
        %v10086 = vsel %vm4536, %v10077, %v10085
        %v10087 = vrot.slane %v6522, 1
        %v10088 = vsel %vm4536, %v10079, %v10087
        %v10089 = vrot.slane %v6523, 1
        %v10090 = vsel %vm4536, %v10081, %v10089
        %v10091 = vrot.slane %v6524, 1
        %v10092 = vsel %vm4536, %v10083, %v10091
        %v10093 = vrot.slane %v6525, 1
        %v10094 = vsel %vm4536, %v10085, %v10093
        %v10095 = vrot.slane %v6526, 1
        %v10096 = vsel %vm4536, %v10087, %v10095
        %v10097 = vrot.slane %v6527, 1
        %v10098 = vsel %vm4536, %v10089, %v10097
        %v10099 = vrot.slane %v6528, 1
        %v10100 = vsel %vm4536, %v10091, %v10099
        %v10101 = vrot.slane %v6529, 1
        %v10102 = vsel %vm4536, %v10093, %v10101
        %v10103 = vrot.slane %v6530, 1
        %v10104 = vsel %vm4536, %v10095, %v10103
        %v10105 = vrot.slane %v6531, 1
        %v10106 = vsel %vm4536, %v10097, %v10105
        %v10107 = vrot.slane %v6532, 1
        %v10108 = vsel %vm4536, %v10099, %v10107
        %v10109 = vrot.slane %v6533, 1
        %v10110 = vsel %vm4536, %v10101, %v10109
        %v10111 = vrot.slane %v6534, 1
        %v10112 = vsel %vm4536, %v10103, %v10111
        %v10113 = vrot.slane %v6535, 1
        %v10114 = vsel %vm4536, %v10105, %v10113
        %v10115 = vrot.slane %v6536, 1
        %v10116 = vsel %vm4536, %v10107, %v10115
        %v10117 = vrot.slane %v6537, 1
        %v10118 = vsel %vm4536, %v10109, %v10117
        %v10119 = vrot.slane %v6538, 1
        %v10120 = vsel %vm4536, %v10111, %v10119
        %v10121 = vrot.slane %v6539, 1
        %v10122 = vsel %vm4536, %v10113, %v10121
        %v10123 = vrot.slane %v6540, 1
        %v10124 = vsel %vm4536, %v10115, %v10123
        %v10125 = vrot.slane %v6541, 1
        %v10126 = vsel %vm4536, %v10117, %v10125
        %v10127 = vrot.slane %v6542, 1
        %v10128 = vsel %vm4536, %v10119, %v10127
        %v10321 = vunpack.c.l.b16 %v9813
        %v10322 = vunpack.c.h.b16 %v9813
        %v10323 = vunpack.c.l.b16 %v9814
        %v10324 = vunpack.c.l.b16 %v9815
        %v10325 = vunpack.c.h.b16 %v9815
        %v10326 = vunpack.c.l.b16 %v9816
        %v10327 = vunpack.c.l.b16 %v9817
        %v10328 = vunpack.c.h.b16 %v9817
        %v10329 = vunpack.c.l.b16 %v9818
        %v10330 = vunpack.c.l.b16 %v9819
        %v10331 = vunpack.c.h.b16 %v9819
        %v10332 = vunpack.c.l.b16 %v9820
        %v10333 = vunpack.c.l.b16 %v9821
        %v10334 = vunpack.c.h.b16 %v9821
        %v10335 = vunpack.c.l.b16 %v9822
        %v10336 = vunpack.c.l.b16 %v9823
        %v10337 = vunpack.c.h.b16 %v9823
        %v10338 = vunpack.c.l.b16 %v9824
        %v10339 = vunpack.c.l.b16 %v9825
        %v10340 = vunpack.c.h.b16 %v9825
        %v10341 = vunpack.c.l.b16 %v9826
        %v10342 = vunpack.c.l.b16 %v9827
        %v10343 = vunpack.c.h.b16 %v9827
        %v10344 = vunpack.c.l.b16 %v9828
        %v10345 = vunpack.c.l.b16 %v9829
        %v10346 = vunpack.c.h.b16 %v9829
        %v10347 = vunpack.c.l.b16 %v9830
        %v10348 = vunpack.c.l.b16 %v9831
        %v10349 = vunpack.c.h.b16 %v9831
        %v10350 = vunpack.c.l.b16 %v9832
        %v10351 = vunpack.c.l.b16 %v9833
        %v10352 = vunpack.c.h.b16 %v9833
        %v10353 = vunpack.c.l.b16 %v9834
        %v10354 = vunpack.c.l.b16 %v9835
        %v10355 = vunpack.c.h.b16 %v9835
        %v10356 = vunpack.c.l.b16 %v9836
        %v10357 = vunpack.c.l.b16 %v9837
        %v10358 = vunpack.c.h.b16 %v9837
        %v10359 = vunpack.c.l.b16 %v9838
        %v10360 = vunpack.c.l.b16 %v9839
        %v10361 = vunpack.c.h.b16 %v9839
        %v10362 = vunpack.c.l.b16 %v9840
        %v10363 = vunpack.c.l.b16 %v9841
        %v10364 = vunpack.c.h.b16 %v9841
        %v10365 = vunpack.c.l.b16 %v9842
        %v10366 = vunpack.c.l.b16 %v9843
        %v10367 = vunpack.c.h.b16 %v9843
        %v10368 = vunpack.c.l.b16 %v9844
        %v10369 = vunpack.c.l.b16 %v9845
        %v10370 = vunpack.c.h.b16 %v9845
        %v10371 = vunpack.c.l.b16 %v9846
        %v10372 = vunpack.c.l.b16 %v9847
        %v10373 = vunpack.c.h.b16 %v9847
        %v10374 = vunpack.c.l.b16 %v9848
        %v10375 = vunpack.c.l.b16 %v9849
        %v10376 = vunpack.c.h.b16 %v9849
        %v10377 = vunpack.c.l.b16 %v9850
        %v10378 = vunpack.c.l.b16 %v9851
        %v10379 = vunpack.c.h.b16 %v9851
        %v10380 = vunpack.c.l.b16 %v9852
        %v10381 = vunpack.c.l.b16 %v9853
        %v10382 = vunpack.c.h.b16 %v9853
        %v10383 = vunpack.c.l.b16 %v9854
        %v10384 = vunpack.c.l.b16 %v9855
        %v10385 = vunpack.c.h.b16 %v9855
        %v10386 = vunpack.c.l.b16 %v9856
        %v10387 = vunpack.c.l.b16 %v9857
        %v10388 = vunpack.c.h.b16 %v9857
        %v10389 = vunpack.c.l.b16 %v9858
        %v10390 = vunpack.c.l.b16 %v9859
        %v10391 = vunpack.c.h.b16 %v9859
        %v10392 = vunpack.c.l.b16 %v9860
        %v10393 = vunpack.c.l.b16 %v9861
        %v10394 = vunpack.c.h.b16 %v9861
        %v10395 = vunpack.c.l.b16 %v9862
        %v10396 = vunpack.c.l.b16 %v9863
        %v10397 = vunpack.c.h.b16 %v9863
        %v10398 = vunpack.c.l.b16 %v9864
        %v10399 = vunpack.c.l.b16 %v9865
        %v10400 = vunpack.c.h.b16 %v9865
        %v10401 = vunpack.c.l.b16 %v9866
        %v10402 = vunpack.c.l.b16 %v9867
        %v10403 = vunpack.c.h.b16 %v9867
        %v10404 = vunpack.c.l.b16 %v9868
        %v10405 = vunpack.c.l.b16 %v9869
        %v10406 = vunpack.c.h.b16 %v9869
        %v10407 = vunpack.c.l.b16 %v9870
        %v10408 = vunpack.c.l.b16 %v9871
        %v10409 = vunpack.c.h.b16 %v9871
        %v10410 = vunpack.c.l.b16 %v9872
        %v10411 = vunpack.c.l.b16 %v9873
        %v10412 = vunpack.c.h.b16 %v9873
        %v10413 = vunpack.c.l.b16 %v9874
        %v10414 = vunpack.c.l.b16 %v9875
        %v10415 = vunpack.c.h.b16 %v9875
        %v10416 = vunpack.c.l.b16 %v9876
        %v10417 = vunpack.c.l.b16 %v9877
        %v10418 = vunpack.c.h.b16 %v9877
        %v10419 = vunpack.c.l.b16 %v9878
        %v10420 = vunpack.c.l.b16 %v9879
        %v10421 = vunpack.c.h.b16 %v9879
        %v10422 = vunpack.c.l.b16 %v9880
        %v10423 = vunpack.c.l.b16 %v9881
        %v10424 = vunpack.c.h.b16 %v9881
        %v10425 = vunpack.c.l.b16 %v9882
        %v10426 = vunpack.c.l.b16 %v9883
        %v10427 = vunpack.c.h.b16 %v9883
        %v10428 = vunpack.c.l.b16 %v9884
        %v10429 = vunpack.c.l.b16 %v9885
        %v10430 = vunpack.c.h.b16 %v9885
        %v10431 = vunpack.c.l.b16 %v9886
        %v10432 = vunpack.c.l.b16 %v9887
        %v10433 = vunpack.c.h.b16 %v9887
        %v10434 = vunpack.c.l.b16 %v9888
        %v10435 = vunpack.c.l.b16 %v9889
        %v10436 = vunpack.c.h.b16 %v9889
        %v10437 = vunpack.c.l.b16 %v9890
        %v10438 = vunpack.c.l.b16 %v9891
        %v10439 = vunpack.c.h.b16 %v9891
        %v10440 = vunpack.c.l.b16 %v9892
        %v10441 = vunpack.c.l.b16 %v9893
        %v10442 = vunpack.c.h.b16 %v9893
        %v10443 = vunpack.c.l.b16 %v9894
        %v10444 = vunpack.c.l.b16 %v9895
        %v10445 = vunpack.c.h.b16 %v9895
        %v10446 = vunpack.c.l.b16 %v9896
        %v10447 = vunpack.c.l.b16 %v9897
        %v10448 = vunpack.c.h.b16 %v9897
        %v10449 = vunpack.c.l.b16 %v9898
        %v10450 = vunpack.c.l.b16 %v9899
        %v10451 = vunpack.c.h.b16 %v9899
        %v10452 = vunpack.c.l.b16 %v9900
        %v10453 = vunpack.c.l.b16 %v9901
        %v10454 = vunpack.c.h.b16 %v9901
        %v10455 = vunpack.c.l.b16 %v9902
        %v10456 = vunpack.c.l.b16 %v9903
        %v10457 = vunpack.c.h.b16 %v9903
        %v10458 = vunpack.c.l.b16 %v9904
        %v10459 = vunpack.c.l.b16 %v9905
        %v10460 = vunpack.c.h.b16 %v9905
        %v10461 = vunpack.c.l.b16 %v9906
        %v10462 = vunpack.c.l.b16 %v9907
        %v10463 = vunpack.c.h.b16 %v9907
        %v10464 = vunpack.c.l.b16 %v9908
        %v10465 = vunpack.c.l.b16 %v9909
        %v10466 = vunpack.c.h.b16 %v9909
        %v10467 = vunpack.c.l.b16 %v9910
        %v10468 = vunpack.c.l.b16 %v9911
        %v10469 = vunpack.c.h.b16 %v9911
        %v10470 = vunpack.c.l.b16 %v9912
        %v10471 = vunpack.c.l.b16 %v9913
        %v10472 = vunpack.c.h.b16 %v9913
        %v10473 = vunpack.c.l.b16 %v9914
        %v10474 = vunpack.c.l.b16 %v9915
        %v10475 = vunpack.c.h.b16 %v9915
        %v10476 = vunpack.c.l.b16 %v9916
        %v10477 = vunpack.c.l.b16 %v9917
        %v10478 = vunpack.c.h.b16 %v9917
        %v10479 = vunpack.c.l.b16 %v9918
        %v10480 = vunpack.c.l.b16 %v9919
        %v10481 = vunpack.c.h.b16 %v9919
        %v10482 = vunpack.c.l.b16 %v9920
        %v10483 = vunpack.c.l.b16 %v9921
        %v10484 = vunpack.c.h.b16 %v9921
        %v10485 = vunpack.c.l.b16 %v9922
        %v10486 = vunpack.c.l.b16 %v9923
        %v10487 = vunpack.c.h.b16 %v9923
        %v10488 = vunpack.c.l.b16 %v9924
        %v10489 = vunpack.c.l.b16 %v9925
        %v10490 = vunpack.c.h.b16 %v9925
        %v10491 = vunpack.c.l.b16 %v9926
        %v10492 = vunpack.c.l.b16 %v9927
        %v10493 = vunpack.c.h.b16 %v9927
        %v10494 = vunpack.c.l.b16 %v9928
        %v10495 = vunpack.c.l.b16 %v9929
        %v10496 = vunpack.c.h.b16 %v9929
        %v10497 = vunpack.c.l.b16 %v9930
        %v10498 = vunpack.c.l.b16 %v9931
        %v10499 = vunpack.c.h.b16 %v9931
        %v10500 = vunpack.c.l.b16 %v9932
        %v10501 = vunpack.c.l.b16 %v9933
        %v10502 = vunpack.c.h.b16 %v9933
        %v10503 = vunpack.c.l.b16 %v9934
        %v10504 = vunpack.c.l.b16 %v9935
        %v10505 = vunpack.c.h.b16 %v9935
        %v10506 = vunpack.c.l.b16 %v9936
        %v10507 = vunpack.c.l.b16 %v9937
        %v10508 = vunpack.c.h.b16 %v9937
        %v10509 = vunpack.c.l.b16 %v9938
        %v10510 = vunpack.c.l.b16 %v9939
        %v10511 = vunpack.c.h.b16 %v9939
        %v10512 = vunpack.c.l.b16 %v9940
        %v10513 = vpack.c.b16 %v10324, %v10321
        %v10514 = vpack.c.b16 %v10325, %v10322
        %v10515 = vpack.c.b16 %v10326, %v10323
        %v10516 = vpack.c.b16 %v10330, %v10327
        %v10517 = vpack.c.b16 %v10331, %v10328
        %v10518 = vpack.c.b16 %v10332, %v10329
        %v10519 = vpack.c.b16 %v10336, %v10333
        %v10520 = vpack.c.b16 %v10337, %v10334
        %v10521 = vpack.c.b16 %v10338, %v10335
        %v10522 = vpack.c.b16 %v10342, %v10339
        %v10523 = vpack.c.b16 %v10343, %v10340
        %v10524 = vpack.c.b16 %v10344, %v10341
        %v10525 = vpack.c.b16 %v10348, %v10345
        %v10526 = vpack.c.b16 %v10349, %v10346
        %v10527 = vpack.c.b16 %v10350, %v10347
        %v10528 = vpack.c.b16 %v10354, %v10351
        %v10529 = vpack.c.b16 %v10355, %v10352
        %v10530 = vpack.c.b16 %v10356, %v10353
        %v10531 = vpack.c.b16 %v10360, %v10357
        %v10532 = vpack.c.b16 %v10361, %v10358
        %v10533 = vpack.c.b16 %v10362, %v10359
        %v10534 = vpack.c.b16 %v10366, %v10363
        %v10535 = vpack.c.b16 %v10367, %v10364
        %v10536 = vpack.c.b16 %v10368, %v10365
        %v10537 = vpack.c.b16 %v10372, %v10369
        %v10538 = vpack.c.b16 %v10373, %v10370
        %v10539 = vpack.c.b16 %v10374, %v10371
        %v10540 = vpack.c.b16 %v10378, %v10375
        %v10541 = vpack.c.b16 %v10379, %v10376
        %v10542 = vpack.c.b16 %v10380, %v10377
        %v10543 = vpack.c.b16 %v10384, %v10381
        %v10544 = vpack.c.b16 %v10385, %v10382
        %v10545 = vpack.c.b16 %v10386, %v10383
        %v10546 = vpack.c.b16 %v10390, %v10387
        %v10547 = vpack.c.b16 %v10391, %v10388
        %v10548 = vpack.c.b16 %v10392, %v10389
        %v10549 = vpack.c.b16 %v10396, %v10393
        %v10550 = vpack.c.b16 %v10397, %v10394
        %v10551 = vpack.c.b16 %v10398, %v10395
        %v10552 = vpack.c.b16 %v10402, %v10399
        %v10553 = vpack.c.b16 %v10403, %v10400
        %v10554 = vpack.c.b16 %v10404, %v10401
        %v10555 = vpack.c.b16 %v10408, %v10405
        %v10556 = vpack.c.b16 %v10409, %v10406
        %v10557 = vpack.c.b16 %v10410, %v10407
        %v10558 = vpack.c.b16 %v10414, %v10411
        %v10559 = vpack.c.b16 %v10415, %v10412
        %v10560 = vpack.c.b16 %v10416, %v10413
        %v10561 = vpack.c.b16 %v10420, %v10417
        %v10562 = vpack.c.b16 %v10421, %v10418
        %v10563 = vpack.c.b16 %v10422, %v10419
        %v10564 = vpack.c.b16 %v10426, %v10423
        %v10565 = vpack.c.b16 %v10427, %v10424
        %v10566 = vpack.c.b16 %v10428, %v10425
        %v10567 = vpack.c.b16 %v10432, %v10429
        %v10568 = vpack.c.b16 %v10433, %v10430
        %v10569 = vpack.c.b16 %v10434, %v10431
        %v10570 = vpack.c.b16 %v10438, %v10435
        %v10571 = vpack.c.b16 %v10439, %v10436
        %v10572 = vpack.c.b16 %v10440, %v10437
        %v10573 = vpack.c.b16 %v10444, %v10441
        %v10574 = vpack.c.b16 %v10445, %v10442
        %v10575 = vpack.c.b16 %v10446, %v10443
        %v10576 = vpack.c.b16 %v10450, %v10447
        %v10577 = vpack.c.b16 %v10451, %v10448
        %v10578 = vpack.c.b16 %v10452, %v10449
        %v10579 = vpack.c.b16 %v10456, %v10453
        %v10580 = vpack.c.b16 %v10457, %v10454
        %v10581 = vpack.c.b16 %v10458, %v10455
        %v10582 = vpack.c.b16 %v10462, %v10459
        %v10583 = vpack.c.b16 %v10463, %v10460
        %v10584 = vpack.c.b16 %v10464, %v10461
        %v10585 = vpack.c.b16 %v10468, %v10465
        %v10586 = vpack.c.b16 %v10469, %v10466
        %v10587 = vpack.c.b16 %v10470, %v10467
        %v10588 = vpack.c.b16 %v10474, %v10471
        %v10589 = vpack.c.b16 %v10475, %v10472
        %v10590 = vpack.c.b16 %v10476, %v10473
        %v10591 = vpack.c.b16 %v10480, %v10477
        %v10592 = vpack.c.b16 %v10481, %v10478
        %v10593 = vpack.c.b16 %v10482, %v10479
        %v10594 = vpack.c.b16 %v10486, %v10483
        %v10595 = vpack.c.b16 %v10487, %v10484
        %v10596 = vpack.c.b16 %v10488, %v10485
        %v10597 = vpack.c.b16 %v10492, %v10489
        %v10598 = vpack.c.b16 %v10493, %v10490
        %v10599 = vpack.c.b16 %v10494, %v10491
        %v10600 = vpack.c.b16 %v10498, %v10495
        %v10601 = vpack.c.b16 %v10499, %v10496
        %v10602 = vpack.c.b16 %v10500, %v10497
        %v10603 = vpack.c.b16 %v10504, %v10501
        %v10604 = vpack.c.b16 %v10505, %v10502
        %v10605 = vpack.c.b16 %v10506, %v10503
        %v10606 = vpack.c.b16 %v10510, %v10507
        %v10607 = vpack.c.b16 %v10511, %v10508
        %v10608 = vpack.c.b16 %v10512, %v10509
        %10705 = vmatprep.subr.bf16.mxu0 %v10535
        %10706 = vmatpush1.bf16.msra.mxu0 %v10534
        %10707 = vmatprep.subr.bf16.mxu0 %v10532
        %10708 = vmatpush1.bf16.msra.mxu0 %v10531
        %10709 = vmatprep.subr.bf16.mxu0 %v10529
        %10710 = vmatpush1.bf16.msra.mxu0 %v10528
        %10711 = vmatprep.subr.bf16.mxu0 %v10526
        %10712 = vmatpush1.bf16.msra.mxu0 %v10525
        %10713 = vmatprep.subr.bf16.mxu0 %v10523
        %10714 = vmatpush1.bf16.msra.mxu0 %v10522
        %10715 = vmatprep.subr.bf16.mxu0 %v10520
        %10716 = vmatpush1.bf16.msra.mxu0 %v10519
        %10717 = vmatprep.subr.bf16.mxu0 %v10517
        %10718 = vmatpush1.bf16.msra.mxu0 %v10516
        %10719 = vmatprep.subr.bf16.mxu0 %v10514
        %10720 = vmatpush1.bf16.msra.mxu0 %v10513
        %10721 = vmatprep.subr.bf16.mxu0 %v10559
        %10722 = vmatpush2.bf16.msra.mxu0 %v10558
        %10723 = vmatprep.subr.bf16.mxu0 %v10556
        %10724 = vmatpush2.bf16.msra.mxu0 %v10555
        %10725 = vmatprep.subr.bf16.mxu0 %v10553
        %10726 = vmatpush2.bf16.msra.mxu0 %v10552
        %10727 = vmatprep.subr.bf16.mxu0 %v10550
        %10728 = vmatpush2.bf16.msra.mxu0 %v10549
        %10729 = vmatprep.subr.bf16.mxu0 %v10547
        %10730 = vmatpush2.bf16.msra.mxu0 %v10546
        %10731 = vmatprep.subr.bf16.mxu0 %v10544
        %10732 = vmatpush2.bf16.msra.mxu0 %v10543
        %10733 = vmatprep.subr.bf16.mxu0 %v10541
        %10734 = vmatpush2.bf16.msra.mxu0 %v10540
        %10735 = vmatprep.subr.bf16.mxu0 %v10538
        %10736 = vmatpush2.bf16.msra.mxu0 %v10537
        %10737 = vmatprep.mubr.bf16.mxu0 %v10010
        %10738 = vmatmul.mubr.bf16.gmra.mxu0 %v10007
        %v10739 = vpop.f32.mrf.mxu0
        %v10740 = vadd.f32 0.0, %v10739
        %v10741 = vpop.f32.mrf.mxu0
        %v10742 = vadd.f32 0.0, %v10741
        %v10743 = vpop.f32.mrf.mxu0
        %v10744 = vadd.f32 0.0, %v10743
        %v10745 = vpop.f32.mrf.mxu0
        %v10746 = vadd.f32 0.0, %v10745
        %10747 = vmatprep.mubr.bf16.mxu0 %v10020
        %10748 = vmatmul.mubr.bf16.gmra.mxu0 %v10018
        %v10749 = vpop.f32.mrf.mxu0
        %v10750 = vadd.f32 0.0, %v10749
        %v10751 = vpop.f32.mrf.mxu0
        %v10752 = vadd.f32 0.0, %v10751
        %v10753 = vpop.f32.mrf.mxu0
        %v10754 = vadd.f32 0.0, %v10753
        %v10755 = vpop.f32.mrf.mxu0
        %v10756 = vadd.f32 0.0, %v10755
        %10757 = vmatprep.mubr.bf16.mxu0 %v10028
        %10758 = vmatmul.mubr.bf16.gmra.mxu0 %v10026
        %v10759 = vpop.f32.mrf.mxu0
        %v10760 = vadd.f32 0.0, %v10759
        %v10761 = vpop.f32.mrf.mxu0
        %v10762 = vadd.f32 0.0, %v10761
        %v10763 = vpop.f32.mrf.mxu0
        %v10764 = vadd.f32 0.0, %v10763
        %v10765 = vpop.f32.mrf.mxu0
        %v10766 = vadd.f32 0.0, %v10765
        %10767 = vmatprep.mubr.bf16.mxu0 %v10036
        %10768 = vmatmul.mubr.bf16.gmra.mxu0 %v10034
        %v10769 = vpop.f32.mrf.mxu0
        %v10770 = vadd.f32 0.0, %v10769
        %v10771 = vpop.f32.mrf.mxu0
        %v10772 = vadd.f32 0.0, %v10771
        %v10773 = vpop.f32.mrf.mxu0
        %v10774 = vadd.f32 0.0, %v10773
        %v10775 = vpop.f32.mrf.mxu0
        %v10776 = vadd.f32 0.0, %v10775
        %10777 = vmatprep.mubr.bf16.mxu0 %v10044
        %10778 = vmatmul.mubr.bf16.gmra.mxu0 %v10042
        %v10779 = vpop.f32.mrf.mxu0
        %v10780 = vadd.f32 0.0, %v10779
        %v10781 = vpop.f32.mrf.mxu0
        %v10782 = vadd.f32 0.0, %v10781
        %v10783 = vpop.f32.mrf.mxu0
        %v10784 = vadd.f32 0.0, %v10783
        %v10785 = vpop.f32.mrf.mxu0
        %v10786 = vadd.f32 0.0, %v10785
        %10787 = vmatprep.mubr.bf16.mxu0 %v10052
        %10788 = vmatmul.mubr.bf16.gmra.mxu0 %v10050
        %v10789 = vpop.f32.mrf.mxu0
        %v10790 = vadd.f32 0.0, %v10789
        %v10791 = vpop.f32.mrf.mxu0
        %v10792 = vadd.f32 0.0, %v10791
        %v10793 = vpop.f32.mrf.mxu0
        %v10794 = vadd.f32 0.0, %v10793
        %v10795 = vpop.f32.mrf.mxu0
        %v10796 = vadd.f32 0.0, %v10795
        %10797 = vmatprep.mubr.bf16.mxu0 %v10060
        %10798 = vmatmul.mubr.bf16.gmra.mxu0 %v10058
        %v10799 = vpop.f32.mrf.mxu0
        %v10800 = vadd.f32 0.0, %v10799
        %v10801 = vpop.f32.mrf.mxu0
        %v10802 = vadd.f32 0.0, %v10801
        %v10803 = vpop.f32.mrf.mxu0
        %v10804 = vadd.f32 0.0, %v10803
        %v10805 = vpop.f32.mrf.mxu0
        %v10806 = vadd.f32 0.0, %v10805
        %10807 = vmatprep.mubr.bf16.mxu0 %v10068
        %10808 = vmatmul.mubr.bf16.gmra.mxu0 %v10066
        %v10809 = vpop.f32.mrf.mxu0
        %v10810 = vadd.f32 0.0, %v10809
        %v10811 = vpop.f32.mrf.mxu0
        %v10812 = vadd.f32 0.0, %v10811
        %v10813 = vpop.f32.mrf.mxu0
        %v10814 = vadd.f32 0.0, %v10813
        %v10815 = vpop.f32.mrf.mxu0
        %v10816 = vadd.f32 0.0, %v10815
        %10817 = vmatprep.mubr.bf16.mxu0 %v10076
        %10818 = vmatmul.mubr.bf16.gmra.mxu0 %v10074
        %v10819 = vpop.f32.mrf.mxu0
        %v10820 = vadd.f32 0.0, %v10819
        %v10821 = vpop.f32.mrf.mxu0
        %v10822 = vadd.f32 0.0, %v10821
        %v10823 = vpop.f32.mrf.mxu0
        %v10824 = vadd.f32 0.0, %v10823
        %v10825 = vpop.f32.mrf.mxu0
        %v10826 = vadd.f32 0.0, %v10825
        %10827 = vmatprep.mubr.bf16.mxu0 %v10084
        %10828 = vmatmul.mubr.bf16.gmra.mxu0 %v10082
        %v10829 = vpop.f32.mrf.mxu0
        %v10830 = vadd.f32 0.0, %v10829
        %v10831 = vpop.f32.mrf.mxu0
        %v10832 = vadd.f32 0.0, %v10831
        %v10833 = vpop.f32.mrf.mxu0
        %v10834 = vadd.f32 0.0, %v10833
        %v10835 = vpop.f32.mrf.mxu0
        %v10836 = vadd.f32 0.0, %v10835
        %10837 = vmatprep.mubr.bf16.mxu0 %v10092
        %10838 = vmatmul.mubr.bf16.gmra.mxu0 %v10090
        %v10839 = vpop.f32.mrf.mxu0
        %v10840 = vadd.f32 0.0, %v10839
        %v10841 = vpop.f32.mrf.mxu0
        %v10842 = vadd.f32 0.0, %v10841
        %v10843 = vpop.f32.mrf.mxu0
        %v10844 = vadd.f32 0.0, %v10843
        %v10845 = vpop.f32.mrf.mxu0
        %v10846 = vadd.f32 0.0, %v10845
        %10847 = vmatprep.mubr.bf16.mxu0 %v10100
        %10848 = vmatmul.mubr.bf16.gmra.mxu0 %v10098
        %v10849 = vpop.f32.mrf.mxu0
        %v10850 = vadd.f32 0.0, %v10849
        %v10851 = vpop.f32.mrf.mxu0
        %v10852 = vadd.f32 0.0, %v10851
        %v10853 = vpop.f32.mrf.mxu0
        %v10854 = vadd.f32 0.0, %v10853
        %v10855 = vpop.f32.mrf.mxu0
        %v10856 = vadd.f32 0.0, %v10855
        %10857 = vmatprep.mubr.bf16.mxu0 %v10108
        %10858 = vmatmul.mubr.bf16.gmra.mxu0 %v10106
        %v10859 = vpop.f32.mrf.mxu0
        %v10860 = vadd.f32 0.0, %v10859
        %v10861 = vpop.f32.mrf.mxu0
        %v10862 = vadd.f32 0.0, %v10861
        %v10863 = vpop.f32.mrf.mxu0
        %v10864 = vadd.f32 0.0, %v10863
        %v10865 = vpop.f32.mrf.mxu0
        %v10866 = vadd.f32 0.0, %v10865
        %10867 = vmatprep.mubr.bf16.mxu0 %v10116
        %10868 = vmatmul.mubr.bf16.gmra.mxu0 %v10114
        %v10869 = vpop.f32.mrf.mxu0
        %v10870 = vadd.f32 0.0, %v10869
        %v10871 = vpop.f32.mrf.mxu0
        %v10872 = vadd.f32 0.0, %v10871
        %v10873 = vpop.f32.mrf.mxu0
        %v10874 = vadd.f32 0.0, %v10873
        %v10875 = vpop.f32.mrf.mxu0
        %v10876 = vadd.f32 0.0, %v10875
        %10877 = vmatprep.mubr.bf16.mxu0 %v10124
        %10878 = vmatmul.mubr.bf16.gmra.mxu0 %v10122
        %v10879 = vpop.f32.mrf.mxu0
        %v10880 = vadd.f32 0.0, %v10879
        %v10881 = vpop.f32.mrf.mxu0
        %v10882 = vadd.f32 0.0, %v10881
        %v10883 = vpop.f32.mrf.mxu0
        %v10884 = vadd.f32 0.0, %v10883
        %v10885 = vpop.f32.mrf.mxu0
        %v10886 = vadd.f32 0.0, %v10885
        %10887 = vmatprep.mubr.bf16.mxu0 %v10123
        %10888 = vmatmul.mubr.bf16.gmra.mxu0 %v10121
        %v10889 = vpop.f32.mrf.mxu0
        %v10890 = vadd.f32 0.0, %v10889
        %v10891 = vpop.f32.mrf.mxu0
        %v10892 = vadd.f32 0.0, %v10891
        %v10893 = vpop.f32.mrf.mxu0
        %v10894 = vadd.f32 0.0, %v10893
        %v10895 = vpop.f32.mrf.mxu0
        %v10896 = vadd.f32 0.0, %v10895
        %10897 = vdwg.mxu0
        %10898 = vmatprep.subr.bf16.mxu0 %v10583
        %10899 = vmatpush1.bf16.msra.mxu0 %v10582
        %10900 = vmatprep.subr.bf16.mxu0 %v10580
        %10901 = vmatpush1.bf16.msra.mxu0 %v10579
        %10902 = vmatprep.subr.bf16.mxu0 %v10577
        %10903 = vmatpush1.bf16.msra.mxu0 %v10576
        %10904 = vmatprep.subr.bf16.mxu0 %v10574
        %10905 = vmatpush1.bf16.msra.mxu0 %v10573
        %10906 = vmatprep.subr.bf16.mxu0 %v10571
        %10907 = vmatpush1.bf16.msra.mxu0 %v10570
        %10908 = vmatprep.subr.bf16.mxu0 %v10568
        %10909 = vmatpush1.bf16.msra.mxu0 %v10567
        %10910 = vmatprep.subr.bf16.mxu0 %v10565
        %10911 = vmatpush1.bf16.msra.mxu0 %v10564
        %10912 = vmatprep.subr.bf16.mxu0 %v10562
        %10913 = vmatpush1.bf16.msra.mxu0 %v10561
        %10914 = vmatprep.subr.bf16.mxu0 %v10607
        %10915 = vmatpush2.bf16.msra.mxu0 %v10606
        %10916 = vmatprep.subr.bf16.mxu0 %v10604
        %10917 = vmatpush2.bf16.msra.mxu0 %v10603
        %10918 = vmatprep.subr.bf16.mxu0 %v10601
        %10919 = vmatpush2.bf16.msra.mxu0 %v10600
        %10920 = vmatprep.subr.bf16.mxu0 %v10598
        %10921 = vmatpush2.bf16.msra.mxu0 %v10597
        %10922 = vmatprep.subr.bf16.mxu0 %v10595
        %10923 = vmatpush2.bf16.msra.mxu0 %v10594
        %10924 = vmatprep.subr.bf16.mxu0 %v10592
        %10925 = vmatpush2.bf16.msra.mxu0 %v10591
        %10926 = vmatprep.subr.bf16.mxu0 %v10589
        %10927 = vmatpush2.bf16.msra.mxu0 %v10588
        %10928 = vmatprep.subr.bf16.mxu0 %v10586
        %10929 = vmatpush2.bf16.msra.mxu0 %v10585
        %10930 = vmatprep.mubr.bf16.mxu0 %v10016
        %10931 = vmatmul.mubr.bf16.gmra.mxu0 %v10013
        %v10932 = vpop.f32.mrf.mxu0
        %v10933 = vadd.f32 %v10740, %v10932
        %v10934 = vpop.f32.mrf.mxu0
        %v10935 = vadd.f32 %v10742, %v10934
        %v10936 = vpop.f32.mrf.mxu0
        %v10937 = vadd.f32 %v10744, %v10936
        %v10938 = vpop.f32.mrf.mxu0
        %v10939 = vadd.f32 %v10746, %v10938
        %10940 = vmatprep.mubr.bf16.mxu0 %v10024
        %10941 = vmatmul.mubr.bf16.gmra.mxu0 %v10022
        %v10942 = vpop.f32.mrf.mxu0
        %v10943 = vadd.f32 %v10750, %v10942
        %v10944 = vpop.f32.mrf.mxu0
        %v10945 = vadd.f32 %v10752, %v10944
        %v10946 = vpop.f32.mrf.mxu0
        %v10947 = vadd.f32 %v10754, %v10946
        %v10948 = vpop.f32.mrf.mxu0
        %v10949 = vadd.f32 %v10756, %v10948
        %10950 = vmatprep.mubr.bf16.mxu0 %v10032
        %10951 = vmatmul.mubr.bf16.gmra.mxu0 %v10030
        %v10952 = vpop.f32.mrf.mxu0
        %v10953 = vadd.f32 %v10760, %v10952
        %v10954 = vpop.f32.mrf.mxu0
        %v10955 = vadd.f32 %v10762, %v10954
        %v10956 = vpop.f32.mrf.mxu0
        %v10957 = vadd.f32 %v10764, %v10956
        %v10958 = vpop.f32.mrf.mxu0
        %v10959 = vadd.f32 %v10766, %v10958
        %10960 = vmatprep.mubr.bf16.mxu0 %v10040
        %10961 = vmatmul.mubr.bf16.gmra.mxu0 %v10038
        %v10962 = vpop.f32.mrf.mxu0
        %v10963 = vadd.f32 %v10770, %v10962
        %v10964 = vpop.f32.mrf.mxu0
        %v10965 = vadd.f32 %v10772, %v10964
        %v10966 = vpop.f32.mrf.mxu0
        %v10967 = vadd.f32 %v10774, %v10966
        %v10968 = vpop.f32.mrf.mxu0
        %v10969 = vadd.f32 %v10776, %v10968
        %10970 = vmatprep.mubr.bf16.mxu0 %v10048
        %10971 = vmatmul.mubr.bf16.gmra.mxu0 %v10046
        %v10972 = vpop.f32.mrf.mxu0
        %v10973 = vadd.f32 %v10780, %v10972
        %v10974 = vpop.f32.mrf.mxu0
        %v10975 = vadd.f32 %v10782, %v10974
        %v10976 = vpop.f32.mrf.mxu0
        %v10977 = vadd.f32 %v10784, %v10976
        %v10978 = vpop.f32.mrf.mxu0
        %v10979 = vadd.f32 %v10786, %v10978
        %10980 = vmatprep.mubr.bf16.mxu0 %v10056
        %10981 = vmatmul.mubr.bf16.gmra.mxu0 %v10054
        %v10982 = vpop.f32.mrf.mxu0
        %v10983 = vadd.f32 %v10790, %v10982
        %v10984 = vpop.f32.mrf.mxu0
        %v10985 = vadd.f32 %v10792, %v10984
        %v10986 = vpop.f32.mrf.mxu0
        %v10987 = vadd.f32 %v10794, %v10986
        %v10988 = vpop.f32.mrf.mxu0
        %v10989 = vadd.f32 %v10796, %v10988
        %10990 = vmatprep.mubr.bf16.mxu0 %v10064
        %10991 = vmatmul.mubr.bf16.gmra.mxu0 %v10062
        %v10992 = vpop.f32.mrf.mxu0
        %v10993 = vadd.f32 %v10800, %v10992
        %v10994 = vpop.f32.mrf.mxu0
        %v10995 = vadd.f32 %v10802, %v10994
        %v10996 = vpop.f32.mrf.mxu0
        %v10997 = vadd.f32 %v10804, %v10996
        %v10998 = vpop.f32.mrf.mxu0
        %v10999 = vadd.f32 %v10806, %v10998
        %11000 = vmatprep.mubr.bf16.mxu0 %v10072
        %11001 = vmatmul.mubr.bf16.gmra.mxu0 %v10070
        %v11002 = vpop.f32.mrf.mxu0
        %v11003 = vadd.f32 %v10810, %v11002
        %v11004 = vpop.f32.mrf.mxu0
        %v11005 = vadd.f32 %v10812, %v11004
        %v11006 = vpop.f32.mrf.mxu0
        %v11007 = vadd.f32 %v10814, %v11006
        %v11008 = vpop.f32.mrf.mxu0
        %v11009 = vadd.f32 %v10816, %v11008
        %11010 = vmatprep.mubr.bf16.mxu0 %v10080
        %11011 = vmatmul.mubr.bf16.gmra.mxu0 %v10078
        %v11012 = vpop.f32.mrf.mxu0
        %v11013 = vadd.f32 %v10820, %v11012
        %v11014 = vpop.f32.mrf.mxu0
        %v11015 = vadd.f32 %v10822, %v11014
        %v11016 = vpop.f32.mrf.mxu0
        %v11017 = vadd.f32 %v10824, %v11016
        %v11018 = vpop.f32.mrf.mxu0
        %v11019 = vadd.f32 %v10826, %v11018
        %11020 = vmatprep.mubr.bf16.mxu0 %v10088
        %11021 = vmatmul.mubr.bf16.gmra.mxu0 %v10086
        %v11022 = vpop.f32.mrf.mxu0
        %v11023 = vadd.f32 %v10830, %v11022
        %v11024 = vpop.f32.mrf.mxu0
        %v11025 = vadd.f32 %v10832, %v11024
        %v11026 = vpop.f32.mrf.mxu0
        %v11027 = vadd.f32 %v10834, %v11026
        %v11028 = vpop.f32.mrf.mxu0
        %v11029 = vadd.f32 %v10836, %v11028
        %11030 = vmatprep.mubr.bf16.mxu0 %v10096
        %11031 = vmatmul.mubr.bf16.gmra.mxu0 %v10094
        %v11032 = vpop.f32.mrf.mxu0
        %v11033 = vadd.f32 %v10840, %v11032
        %v11034 = vpop.f32.mrf.mxu0
        %v11035 = vadd.f32 %v10842, %v11034
        %v11036 = vpop.f32.mrf.mxu0
        %v11037 = vadd.f32 %v10844, %v11036
        %v11038 = vpop.f32.mrf.mxu0
        %v11039 = vadd.f32 %v10846, %v11038
        %11040 = vmatprep.mubr.bf16.mxu0 %v10104
        %11041 = vmatmul.mubr.bf16.gmra.mxu0 %v10102
        %v11042 = vpop.f32.mrf.mxu0
        %v11043 = vadd.f32 %v10850, %v11042
        %v11044 = vpop.f32.mrf.mxu0
        %v11045 = vadd.f32 %v10852, %v11044
        %v11046 = vpop.f32.mrf.mxu0
        %v11047 = vadd.f32 %v10854, %v11046
        %v11048 = vpop.f32.mrf.mxu0
        %v11049 = vadd.f32 %v10856, %v11048
        %11050 = vmatprep.mubr.bf16.mxu0 %v10112
        %11051 = vmatmul.mubr.bf16.gmra.mxu0 %v10110
        %v11052 = vpop.f32.mrf.mxu0
        %v11053 = vadd.f32 %v10860, %v11052
        %v11054 = vpop.f32.mrf.mxu0
        %v11055 = vadd.f32 %v10862, %v11054
        %v11056 = vpop.f32.mrf.mxu0
        %v11057 = vadd.f32 %v10864, %v11056
        %v11058 = vpop.f32.mrf.mxu0
        %v11059 = vadd.f32 %v10866, %v11058
        %11060 = vmatprep.mubr.bf16.mxu0 %v10120
        %11061 = vmatmul.mubr.bf16.gmra.mxu0 %v10118
        %v11062 = vpop.f32.mrf.mxu0
        %v11063 = vadd.f32 %v10870, %v11062
        %v11064 = vpop.f32.mrf.mxu0
        %v11065 = vadd.f32 %v10872, %v11064
        %v11066 = vpop.f32.mrf.mxu0
        %v11067 = vadd.f32 %v10874, %v11066
        %v11068 = vpop.f32.mrf.mxu0
        %v11069 = vadd.f32 %v10876, %v11068
        %11070 = vmatprep.mubr.bf16.mxu0 %v10128
        %11071 = vmatmul.mubr.bf16.gmra.mxu0 %v10126
        %v11072 = vpop.f32.mrf.mxu0
        %v11073 = vadd.f32 %v10880, %v11072
        %v11074 = vpop.f32.mrf.mxu0
        %v11075 = vadd.f32 %v10882, %v11074
        %v11076 = vpop.f32.mrf.mxu0
        %v11077 = vadd.f32 %v10884, %v11076
        %v11078 = vpop.f32.mrf.mxu0
        %v11079 = vadd.f32 %v10886, %v11078
        %11080 = vmatprep.mubr.bf16.mxu0 %v10127
        %11081 = vmatmul.mubr.bf16.gmra.mxu0 %v10125
        %v11082 = vpop.f32.mrf.mxu0
        %v11083 = vadd.f32 %v10890, %v11082
        %v11084 = vpop.f32.mrf.mxu0
        %v11085 = vadd.f32 %v10892, %v11084
        %v11086 = vpop.f32.mrf.mxu0
        %v11087 = vadd.f32 %v10894, %v11086
        %v11088 = vpop.f32.mrf.mxu0
        %v11089 = vadd.f32 %v10896, %v11088
        %11090 = vdwg.mxu0
        %11091 = vmatprep.subr.bf16.mxu0 0
        %11092 = vmatpush1.bf16.msra.mxu0 %v10536
        %11093 = vmatprep.subr.bf16.mxu0 0
        %11094 = vmatpush1.bf16.msra.mxu0 %v10533
        %11095 = vmatprep.subr.bf16.mxu0 0
        %11096 = vmatpush1.bf16.msra.mxu0 %v10530
        %11097 = vmatprep.subr.bf16.mxu0 0
        %11098 = vmatpush1.bf16.msra.mxu0 %v10527
        %11099 = vmatprep.subr.bf16.mxu0 0
        %11100 = vmatpush1.bf16.msra.mxu0 %v10524
        %11101 = vmatprep.subr.bf16.mxu0 0
        %11102 = vmatpush1.bf16.msra.mxu0 %v10521
        %11103 = vmatprep.subr.bf16.mxu0 0
        %11104 = vmatpush1.bf16.msra.mxu0 %v10518
        %11105 = vmatprep.subr.bf16.mxu0 0
        %11106 = vmatpush1.bf16.msra.mxu0 %v10515
        %11107 = vmatprep.subr.bf16.mxu0 0
        %11108 = vmatpush2.bf16.msra.mxu0 %v10560
        %11109 = vmatprep.subr.bf16.mxu0 0
        %11110 = vmatpush2.bf16.msra.mxu0 %v10557
        %11111 = vmatprep.subr.bf16.mxu0 0
        %11112 = vmatpush2.bf16.msra.mxu0 %v10554
        %11113 = vmatprep.subr.bf16.mxu0 0
        %11114 = vmatpush2.bf16.msra.mxu0 %v10551
        %11115 = vmatprep.subr.bf16.mxu0 0
        %11116 = vmatpush2.bf16.msra.mxu0 %v10548
        %11117 = vmatprep.subr.bf16.mxu0 0
        %11118 = vmatpush2.bf16.msra.mxu0 %v10545
        %11119 = vmatprep.subr.bf16.mxu0 0
        %11120 = vmatpush2.bf16.msra.mxu0 %v10542
        %11121 = vmatprep.subr.bf16.mxu0 0
        %11122 = vmatpush2.bf16.msra.mxu0 %v10539
        %11123 = vmatprep.mubr.bf16.mxu0 %v10010
        %11124 = vmatmul.mubr.bf16.gmra.mxu0 %v10007
        %v11125 = vpop.f32.mrf.mxu0
        %v11126 = vadd.f32 0.0, %v11125
        %v11127 = vpop.f32.mrf.mxu0
        %v11128 = vpop.f32.mrf.mxu0
        %v11129 = vadd.f32 0.0, %v11128
        %v11130 = vpop.f32.mrf.mxu0
        %11131 = vmatprep.mubr.bf16.mxu0 %v10020
        %11132 = vmatmul.mubr.bf16.gmra.mxu0 %v10018
        %v11133 = vpop.f32.mrf.mxu0
        %v11134 = vadd.f32 0.0, %v11133
        %v11135 = vpop.f32.mrf.mxu0
        %v11136 = vpop.f32.mrf.mxu0
        %v11137 = vadd.f32 0.0, %v11136
        %v11138 = vpop.f32.mrf.mxu0
        %11139 = vmatprep.mubr.bf16.mxu0 %v10028
        %11140 = vmatmul.mubr.bf16.gmra.mxu0 %v10026
        %v11141 = vpop.f32.mrf.mxu0
        %v11142 = vadd.f32 0.0, %v11141
        %v11143 = vpop.f32.mrf.mxu0
        %v11144 = vpop.f32.mrf.mxu0
        %v11145 = vadd.f32 0.0, %v11144
        %v11146 = vpop.f32.mrf.mxu0
        %11147 = vmatprep.mubr.bf16.mxu0 %v10036
        %11148 = vmatmul.mubr.bf16.gmra.mxu0 %v10034
        %v11149 = vpop.f32.mrf.mxu0
        %v11150 = vadd.f32 0.0, %v11149
        %v11151 = vpop.f32.mrf.mxu0
        %v11152 = vpop.f32.mrf.mxu0
        %v11153 = vadd.f32 0.0, %v11152
        %v11154 = vpop.f32.mrf.mxu0
        %11155 = vmatprep.mubr.bf16.mxu0 %v10044
        %11156 = vmatmul.mubr.bf16.gmra.mxu0 %v10042
        %v11157 = vpop.f32.mrf.mxu0
        %v11158 = vadd.f32 0.0, %v11157
        %v11159 = vpop.f32.mrf.mxu0
        %v11160 = vpop.f32.mrf.mxu0
        %v11161 = vadd.f32 0.0, %v11160
        %v11162 = vpop.f32.mrf.mxu0
        %11163 = vmatprep.mubr.bf16.mxu0 %v10052
        %11164 = vmatmul.mubr.bf16.gmra.mxu0 %v10050
        %v11165 = vpop.f32.mrf.mxu0
        %v11166 = vadd.f32 0.0, %v11165
        %v11167 = vpop.f32.mrf.mxu0
        %v11168 = vpop.f32.mrf.mxu0
        %v11169 = vadd.f32 0.0, %v11168
        %v11170 = vpop.f32.mrf.mxu0
        %11171 = vmatprep.mubr.bf16.mxu0 %v10060
        %11172 = vmatmul.mubr.bf16.gmra.mxu0 %v10058
        %v11173 = vpop.f32.mrf.mxu0
        %v11174 = vadd.f32 0.0, %v11173
        %v11175 = vpop.f32.mrf.mxu0
        %v11176 = vpop.f32.mrf.mxu0
        %v11177 = vadd.f32 0.0, %v11176
        %v11178 = vpop.f32.mrf.mxu0
        %11179 = vmatprep.mubr.bf16.mxu0 %v10068
        %11180 = vmatmul.mubr.bf16.gmra.mxu0 %v10066
        %v11181 = vpop.f32.mrf.mxu0
        %v11182 = vadd.f32 0.0, %v11181
        %v11183 = vpop.f32.mrf.mxu0
        %v11184 = vpop.f32.mrf.mxu0
        %v11185 = vadd.f32 0.0, %v11184
        %v11186 = vpop.f32.mrf.mxu0
        %11187 = vmatprep.mubr.bf16.mxu0 %v10076
        %11188 = vmatmul.mubr.bf16.gmra.mxu0 %v10074
        %v11189 = vpop.f32.mrf.mxu0
        %v11190 = vadd.f32 0.0, %v11189
        %v11191 = vpop.f32.mrf.mxu0
        %v11192 = vpop.f32.mrf.mxu0
        %v11193 = vadd.f32 0.0, %v11192
        %v11194 = vpop.f32.mrf.mxu0
        %11195 = vmatprep.mubr.bf16.mxu0 %v10084
        %11196 = vmatmul.mubr.bf16.gmra.mxu0 %v10082
        %v11197 = vpop.f32.mrf.mxu0
        %v11198 = vadd.f32 0.0, %v11197
        %v11199 = vpop.f32.mrf.mxu0
        %v11200 = vpop.f32.mrf.mxu0
        %v11201 = vadd.f32 0.0, %v11200
        %v11202 = vpop.f32.mrf.mxu0
        %11203 = vmatprep.mubr.bf16.mxu0 %v10092
        %11204 = vmatmul.mubr.bf16.gmra.mxu0 %v10090
        %v11205 = vpop.f32.mrf.mxu0
        %v11206 = vadd.f32 0.0, %v11205
        %v11207 = vpop.f32.mrf.mxu0
        %v11208 = vpop.f32.mrf.mxu0
        %v11209 = vadd.f32 0.0, %v11208
        %v11210 = vpop.f32.mrf.mxu0
        %11211 = vmatprep.mubr.bf16.mxu0 %v10100
        %11212 = vmatmul.mubr.bf16.gmra.mxu0 %v10098
        %v11213 = vpop.f32.mrf.mxu0
        %v11214 = vadd.f32 0.0, %v11213
        %v11215 = vpop.f32.mrf.mxu0
        %v11216 = vpop.f32.mrf.mxu0
        %v11217 = vadd.f32 0.0, %v11216
        %v11218 = vpop.f32.mrf.mxu0
        %11219 = vmatprep.mubr.bf16.mxu0 %v10108
        %11220 = vmatmul.mubr.bf16.gmra.mxu0 %v10106
        %v11221 = vpop.f32.mrf.mxu0
        %v11222 = vadd.f32 0.0, %v11221
        %v11223 = vpop.f32.mrf.mxu0
        %v11224 = vpop.f32.mrf.mxu0
        %v11225 = vadd.f32 0.0, %v11224
        %v11226 = vpop.f32.mrf.mxu0
        %11227 = vmatprep.mubr.bf16.mxu0 %v10116
        %11228 = vmatmul.mubr.bf16.gmra.mxu0 %v10114
        %v11229 = vpop.f32.mrf.mxu0
        %v11230 = vadd.f32 0.0, %v11229
        %v11231 = vpop.f32.mrf.mxu0
        %v11232 = vpop.f32.mrf.mxu0
        %v11233 = vadd.f32 0.0, %v11232
        %v11234 = vpop.f32.mrf.mxu0
        %11235 = vmatprep.mubr.bf16.mxu0 %v10124
        %11236 = vmatmul.mubr.bf16.gmra.mxu0 %v10122
        %v11237 = vpop.f32.mrf.mxu0
        %v11238 = vadd.f32 0.0, %v11237
        %v11239 = vpop.f32.mrf.mxu0
        %v11240 = vpop.f32.mrf.mxu0
        %v11241 = vadd.f32 0.0, %v11240
        %v11242 = vpop.f32.mrf.mxu0
        %11243 = vmatprep.mubr.bf16.mxu0 %v10123
        %11244 = vmatmul.mubr.bf16.gmra.mxu0 %v10121
        %v11245 = vpop.f32.mrf.mxu0
        %v11246 = vadd.f32 0.0, %v11245
        %v11247 = vpop.f32.mrf.mxu0
        %v11248 = vpop.f32.mrf.mxu0
        %v11249 = vadd.f32 0.0, %v11248
        %v11250 = vpop.f32.mrf.mxu0
        %11251 = vdwg.mxu0
        %11252 = vmatprep.subr.bf16.mxu0 0
        %11253 = vmatpush1.bf16.msra.mxu0 %v10584
        %11254 = vmatprep.subr.bf16.mxu0 0
        %11255 = vmatpush1.bf16.msra.mxu0 %v10581
        %11256 = vmatprep.subr.bf16.mxu0 0
        %11257 = vmatpush1.bf16.msra.mxu0 %v10578
        %11258 = vmatprep.subr.bf16.mxu0 0
        %11259 = vmatpush1.bf16.msra.mxu0 %v10575
        %11260 = vmatprep.subr.bf16.mxu0 0
        %11261 = vmatpush1.bf16.msra.mxu0 %v10572
        %11262 = vmatprep.subr.bf16.mxu0 0
        %11263 = vmatpush1.bf16.msra.mxu0 %v10569
        %11264 = vmatprep.subr.bf16.mxu0 0
        %11265 = vmatpush1.bf16.msra.mxu0 %v10566
        %11266 = vmatprep.subr.bf16.mxu0 0
        %11267 = vmatpush1.bf16.msra.mxu0 %v10563
        %11268 = vmatprep.subr.bf16.mxu0 0
        %11269 = vmatpush2.bf16.msra.mxu0 %v10608
        %11270 = vmatprep.subr.bf16.mxu0 0
        %11271 = vmatpush2.bf16.msra.mxu0 %v10605
        %11272 = vmatprep.subr.bf16.mxu0 0
        %11273 = vmatpush2.bf16.msra.mxu0 %v10602
        %11274 = vmatprep.subr.bf16.mxu0 0
        %11275 = vmatpush2.bf16.msra.mxu0 %v10599
        %11276 = vmatprep.subr.bf16.mxu0 0
        %11277 = vmatpush2.bf16.msra.mxu0 %v10596
        %11278 = vmatprep.subr.bf16.mxu0 0
        %11279 = vmatpush2.bf16.msra.mxu0 %v10593
        %11280 = vmatprep.subr.bf16.mxu0 0
        %11281 = vmatpush2.bf16.msra.mxu0 %v10590
        %11282 = vmatprep.subr.bf16.mxu0 0
        %11283 = vmatpush2.bf16.msra.mxu0 %v10587
        %11284 = vmatprep.mubr.bf16.mxu0 %v10016
        %11285 = vmatmul.mubr.bf16.gmra.mxu0 %v10013
        %v11286 = vpop.f32.mrf.mxu0
        %v11287 = vadd.f32 %v11126, %v11286
        %v11288 = vpop.f32.mrf.mxu0
        %v11289 = vpop.f32.mrf.mxu0
        %v11290 = vadd.f32 %v11129, %v11289
        %v11291 = vpop.f32.mrf.mxu0
        %11292 = vmatprep.mubr.bf16.mxu0 %v10024
        %11293 = vmatmul.mubr.bf16.gmra.mxu0 %v10022
        %v11294 = vpop.f32.mrf.mxu0
        %v11295 = vadd.f32 %v11134, %v11294
        %v11296 = vpop.f32.mrf.mxu0
        %v11297 = vpop.f32.mrf.mxu0
        %v11298 = vadd.f32 %v11137, %v11297
        %v11299 = vpop.f32.mrf.mxu0
        %11300 = vmatprep.mubr.bf16.mxu0 %v10032
        %11301 = vmatmul.mubr.bf16.gmra.mxu0 %v10030
        %v11302 = vpop.f32.mrf.mxu0
        %v11303 = vadd.f32 %v11142, %v11302
        %v11304 = vpop.f32.mrf.mxu0
        %v11305 = vpop.f32.mrf.mxu0
        %v11306 = vadd.f32 %v11145, %v11305
        %v11307 = vpop.f32.mrf.mxu0
        %11308 = vmatprep.mubr.bf16.mxu0 %v10040
        %11309 = vmatmul.mubr.bf16.gmra.mxu0 %v10038
        %v11310 = vpop.f32.mrf.mxu0
        %v11311 = vadd.f32 %v11150, %v11310
        %v11312 = vpop.f32.mrf.mxu0
        %v11313 = vpop.f32.mrf.mxu0
        %v11314 = vadd.f32 %v11153, %v11313
        %v11315 = vpop.f32.mrf.mxu0
        %11316 = vmatprep.mubr.bf16.mxu0 %v10048
        %11317 = vmatmul.mubr.bf16.gmra.mxu0 %v10046
        %v11318 = vpop.f32.mrf.mxu0
        %v11319 = vadd.f32 %v11158, %v11318
        %v11320 = vpop.f32.mrf.mxu0
        %v11321 = vpop.f32.mrf.mxu0
        %v11322 = vadd.f32 %v11161, %v11321
        %v11323 = vpop.f32.mrf.mxu0
        %11324 = vmatprep.mubr.bf16.mxu0 %v10056
        %11325 = vmatmul.mubr.bf16.gmra.mxu0 %v10054
        %v11326 = vpop.f32.mrf.mxu0
        %v11327 = vadd.f32 %v11166, %v11326
        %v11328 = vpop.f32.mrf.mxu0
        %v11329 = vpop.f32.mrf.mxu0
        %v11330 = vadd.f32 %v11169, %v11329
        %v11331 = vpop.f32.mrf.mxu0
        %11332 = vmatprep.mubr.bf16.mxu0 %v10064
        %11333 = vmatmul.mubr.bf16.gmra.mxu0 %v10062
        %v11334 = vpop.f32.mrf.mxu0
        %v11335 = vadd.f32 %v11174, %v11334
        %v11336 = vpop.f32.mrf.mxu0
        %v11337 = vpop.f32.mrf.mxu0
        %v11338 = vadd.f32 %v11177, %v11337
        %v11339 = vpop.f32.mrf.mxu0
        %11340 = vmatprep.mubr.bf16.mxu0 %v10072
        %11341 = vmatmul.mubr.bf16.gmra.mxu0 %v10070
        %v11342 = vpop.f32.mrf.mxu0
        %v11343 = vadd.f32 %v11182, %v11342
        %v11344 = vpop.f32.mrf.mxu0
        %v11345 = vpop.f32.mrf.mxu0
        %v11346 = vadd.f32 %v11185, %v11345
        %v11347 = vpop.f32.mrf.mxu0
        %11348 = vmatprep.mubr.bf16.mxu0 %v10080
        %11349 = vmatmul.mubr.bf16.gmra.mxu0 %v10078
        %v11350 = vpop.f32.mrf.mxu0
        %v11351 = vadd.f32 %v11190, %v11350
        %v11352 = vpop.f32.mrf.mxu0
        %v11353 = vpop.f32.mrf.mxu0
        %v11354 = vadd.f32 %v11193, %v11353
        %v11355 = vpop.f32.mrf.mxu0
        %11356 = vmatprep.mubr.bf16.mxu0 %v10088
        %11357 = vmatmul.mubr.bf16.gmra.mxu0 %v10086
        %v11358 = vpop.f32.mrf.mxu0
        %v11359 = vadd.f32 %v11198, %v11358
        %v11360 = vpop.f32.mrf.mxu0
        %v11361 = vpop.f32.mrf.mxu0
        %v11362 = vadd.f32 %v11201, %v11361
        %v11363 = vpop.f32.mrf.mxu0
        %11364 = vmatprep.mubr.bf16.mxu0 %v10096
        %11365 = vmatmul.mubr.bf16.gmra.mxu0 %v10094
        %v11366 = vpop.f32.mrf.mxu0
        %v11367 = vadd.f32 %v11206, %v11366
        %v11368 = vpop.f32.mrf.mxu0
        %v11369 = vpop.f32.mrf.mxu0
        %v11370 = vadd.f32 %v11209, %v11369
        %v11371 = vpop.f32.mrf.mxu0
        %11372 = vmatprep.mubr.bf16.mxu0 %v10104
        %11373 = vmatmul.mubr.bf16.gmra.mxu0 %v10102
        %v11374 = vpop.f32.mrf.mxu0
        %v11375 = vadd.f32 %v11214, %v11374
        %v11376 = vpop.f32.mrf.mxu0
        %v11377 = vpop.f32.mrf.mxu0
        %v11378 = vadd.f32 %v11217, %v11377
        %v11379 = vpop.f32.mrf.mxu0
        %11380 = vmatprep.mubr.bf16.mxu0 %v10112
        %11381 = vmatmul.mubr.bf16.gmra.mxu0 %v10110
        %v11382 = vpop.f32.mrf.mxu0
        %v11383 = vadd.f32 %v11222, %v11382
        %v11384 = vpop.f32.mrf.mxu0
        %v11385 = vpop.f32.mrf.mxu0
        %v11386 = vadd.f32 %v11225, %v11385
        %v11387 = vpop.f32.mrf.mxu0
        %11388 = vmatprep.mubr.bf16.mxu0 %v10120
        %11389 = vmatmul.mubr.bf16.gmra.mxu0 %v10118
        %v11390 = vpop.f32.mrf.mxu0
        %v11391 = vadd.f32 %v11230, %v11390
        %v11392 = vpop.f32.mrf.mxu0
        %v11393 = vpop.f32.mrf.mxu0
        %v11394 = vadd.f32 %v11233, %v11393
        %v11395 = vpop.f32.mrf.mxu0
        %11396 = vmatprep.mubr.bf16.mxu0 %v10128
        %11397 = vmatmul.mubr.bf16.gmra.mxu0 %v10126
        %v11398 = vpop.f32.mrf.mxu0
        %v11399 = vadd.f32 %v11238, %v11398
        %v11400 = vpop.f32.mrf.mxu0
        %v11401 = vpop.f32.mrf.mxu0
        %v11402 = vadd.f32 %v11241, %v11401
        %v11403 = vpop.f32.mrf.mxu0
        %11404 = vmatprep.mubr.bf16.mxu0 %v10127
        %11405 = vmatmul.mubr.bf16.gmra.mxu0 %v10125
        %v11406 = vpop.f32.mrf.mxu0
        %v11407 = vadd.f32 %v11246, %v11406
        %v11408 = vpop.f32.mrf.mxu0
        %v11409 = vpop.f32.mrf.mxu0
        %v11410 = vadd.f32 %v11249, %v11409
        %v11411 = vpop.f32.mrf.mxu0
        %11412 = vdwg.mxu0
        %v11413 = vadd.f32 %v9332, %v10933
        %v11414 = vadd.f32 %v9334, %v10935
        %v11415 = vadd.f32 %v9686, %v11287
        %v11416 = vadd.f32 %v9336, %v10937
        %v11417 = vadd.f32 %v9338, %v10939
        %v11418 = vadd.f32 %v9689, %v11290
        %v11419 = vadd.f32 %v9342, %v10943
        %v11420 = vadd.f32 %v9344, %v10945
        %v11421 = vadd.f32 %v9694, %v11295
        %v11422 = vadd.f32 %v9346, %v10947
        %v11423 = vadd.f32 %v9348, %v10949
        %v11424 = vadd.f32 %v9697, %v11298
        %v11425 = vadd.f32 %v9352, %v10953
        %v11426 = vadd.f32 %v9354, %v10955
        %v11427 = vadd.f32 %v9702, %v11303
        %v11428 = vadd.f32 %v9356, %v10957
        %v11429 = vadd.f32 %v9358, %v10959
        %v11430 = vadd.f32 %v9705, %v11306
        %v11431 = vadd.f32 %v9362, %v10963
        %v11432 = vadd.f32 %v9364, %v10965
        %v11433 = vadd.f32 %v9710, %v11311
        %v11434 = vadd.f32 %v9366, %v10967
        %v11435 = vadd.f32 %v9368, %v10969
        %v11436 = vadd.f32 %v9713, %v11314
        %v11437 = vadd.f32 %v9372, %v10973
        %v11438 = vadd.f32 %v9374, %v10975
        %v11439 = vadd.f32 %v9718, %v11319
        %v11440 = vadd.f32 %v9376, %v10977
        %v11441 = vadd.f32 %v9378, %v10979
        %v11442 = vadd.f32 %v9721, %v11322
        %v11443 = vadd.f32 %v9382, %v10983
        %v11444 = vadd.f32 %v9384, %v10985
        %v11445 = vadd.f32 %v9726, %v11327
        %v11446 = vadd.f32 %v9386, %v10987
        %v11447 = vadd.f32 %v9388, %v10989
        %v11448 = vadd.f32 %v9729, %v11330
        %v11449 = vadd.f32 %v9392, %v10993
        %v11450 = vadd.f32 %v9394, %v10995
        %v11451 = vadd.f32 %v9734, %v11335
        %v11452 = vadd.f32 %v9396, %v10997
        %v11453 = vadd.f32 %v9398, %v10999
        %v11454 = vadd.f32 %v9737, %v11338
        %v11455 = vadd.f32 %v9402, %v11003
        %v11456 = vadd.f32 %v9404, %v11005
        %v11457 = vadd.f32 %v9742, %v11343
        %v11458 = vadd.f32 %v9406, %v11007
        %v11459 = vadd.f32 %v9408, %v11009
        %v11460 = vadd.f32 %v9745, %v11346
        %v11461 = vadd.f32 %v9412, %v11013
        %v11462 = vadd.f32 %v9414, %v11015
        %v11463 = vadd.f32 %v9750, %v11351
        %v11464 = vadd.f32 %v9416, %v11017
        %v11465 = vadd.f32 %v9418, %v11019
        %v11466 = vadd.f32 %v9753, %v11354
        %v11467 = vadd.f32 %v9422, %v11023
        %v11468 = vadd.f32 %v9424, %v11025
        %v11469 = vadd.f32 %v9758, %v11359
        %v11470 = vadd.f32 %v9426, %v11027
        %v11471 = vadd.f32 %v9428, %v11029
        %v11472 = vadd.f32 %v9761, %v11362
        %v11473 = vadd.f32 %v9432, %v11033
        %v11474 = vadd.f32 %v9434, %v11035
        %v11475 = vadd.f32 %v9766, %v11367
        %v11476 = vadd.f32 %v9436, %v11037
        %v11477 = vadd.f32 %v9438, %v11039
        %v11478 = vadd.f32 %v9769, %v11370
        %v11479 = vadd.f32 %v9442, %v11043
        %v11480 = vadd.f32 %v9444, %v11045
        %v11481 = vadd.f32 %v9774, %v11375
        %v11482 = vadd.f32 %v9446, %v11047
        %v11483 = vadd.f32 %v9448, %v11049
        %v11484 = vadd.f32 %v9777, %v11378
        %v11485 = vadd.f32 %v9452, %v11053
        %v11486 = vadd.f32 %v9454, %v11055
        %v11487 = vadd.f32 %v9782, %v11383
        %v11488 = vadd.f32 %v9456, %v11057
        %v11489 = vadd.f32 %v9458, %v11059
        %v11490 = vadd.f32 %v9785, %v11386
        %v11491 = vadd.f32 %v9462, %v11063
        %v11492 = vadd.f32 %v9464, %v11065
        %v11493 = vadd.f32 %v9790, %v11391
        %v11494 = vadd.f32 %v9466, %v11067
        %v11495 = vadd.f32 %v9468, %v11069
        %v11496 = vadd.f32 %v9793, %v11394
        %v11497 = vadd.f32 %v9472, %v11073
        %v11498 = vadd.f32 %v9474, %v11075
        %v11499 = vadd.f32 %v9798, %v11399
        %v11500 = vadd.f32 %v9476, %v11077
        %v11501 = vadd.f32 %v9478, %v11079
        %v11502 = vadd.f32 %v9801, %v11402
        %v11503 = vadd.f32 %v9482, %v11083
        %v11504 = vadd.f32 %v9484, %v11085
        %v11505 = vadd.f32 %v9806, %v11407
        %v11506 = vadd.f32 %v9486, %v11087
        %v11507 = vadd.f32 %v9488, %v11089
        %v11508 = vadd.f32 %v9809, %v11410
        %v11509 = vld [vmem:[#allocation9] sm:$0x7]
        %v11511 = vlaneseq
        %v11512 = vshrl.u32 %v11511, 7
        %v11513 = vsub.s32 0, %v11512
        %v11514 = vrot.slane %v11509, %v11513
        %v11515 = vlaneseq
        %v11516 = vshrl.u32 %v11515, 7
        %v11517 = vsub.s32 1, %v11516
        %v11518 = vrot.slane %v11509, %v11517
        %v11519 = vlaneseq
        %v11520 = vshrl.u32 %v11519, 7
        %v11521 = vsub.s32 2, %v11520
        %v11522 = vrot.slane %v11509, %v11521
        %v11526 = vadd.f32 %v11413, %v11514
        %v11527 = vadd.f32 %v11414, %v11518
        %v11528 = vadd.f32 %v11415, %v11522
        %v11529 = vadd.f32 %v11416, %v11514
        %v11530 = vadd.f32 %v11417, %v11518
        %v11531 = vadd.f32 %v11418, %v11522
        %v11532 = vadd.f32 %v11419, %v11514
        %v11533 = vadd.f32 %v11420, %v11518
        %v11534 = vadd.f32 %v11421, %v11522
        %v11535 = vadd.f32 %v11422, %v11514
        %v11536 = vadd.f32 %v11423, %v11518
        %v11537 = vadd.f32 %v11424, %v11522
        %v11538 = vadd.f32 %v11425, %v11514
        %v11539 = vadd.f32 %v11426, %v11518
        %v11540 = vadd.f32 %v11427, %v11522
        %v11541 = vadd.f32 %v11428, %v11514
        %v11542 = vadd.f32 %v11429, %v11518
        %v11543 = vadd.f32 %v11430, %v11522
        %v11544 = vadd.f32 %v11431, %v11514
        %v11545 = vadd.f32 %v11432, %v11518
        %v11546 = vadd.f32 %v11433, %v11522
        %v11547 = vadd.f32 %v11434, %v11514
        %v11548 = vadd.f32 %v11435, %v11518
        %v11549 = vadd.f32 %v11436, %v11522
        %v11550 = vadd.f32 %v11437, %v11514
        %v11551 = vadd.f32 %v11438, %v11518
        %v11552 = vadd.f32 %v11439, %v11522
        %v11553 = vadd.f32 %v11440, %v11514
        %v11554 = vadd.f32 %v11441, %v11518
        %v11555 = vadd.f32 %v11442, %v11522
        %v11556 = vadd.f32 %v11443, %v11514
        %v11557 = vadd.f32 %v11444, %v11518
        %v11558 = vadd.f32 %v11445, %v11522
        %v11559 = vadd.f32 %v11446, %v11514
        %v11560 = vadd.f32 %v11447, %v11518
        %v11561 = vadd.f32 %v11448, %v11522
        %v11562 = vadd.f32 %v11449, %v11514
        %v11563 = vadd.f32 %v11450, %v11518
        %v11564 = vadd.f32 %v11451, %v11522
        %v11565 = vadd.f32 %v11452, %v11514
        %v11566 = vadd.f32 %v11453, %v11518
        %v11567 = vadd.f32 %v11454, %v11522
        %v11568 = vadd.f32 %v11455, %v11514
        %v11569 = vadd.f32 %v11456, %v11518
        %v11570 = vadd.f32 %v11457, %v11522
        %v11571 = vadd.f32 %v11458, %v11514
        %v11572 = vadd.f32 %v11459, %v11518
        %v11573 = vadd.f32 %v11460, %v11522
        %v11574 = vadd.f32 %v11461, %v11514
        %v11575 = vadd.f32 %v11462, %v11518
        %v11576 = vadd.f32 %v11463, %v11522
        %v11577 = vadd.f32 %v11464, %v11514
        %v11578 = vadd.f32 %v11465, %v11518
        %v11579 = vadd.f32 %v11466, %v11522
        %v11580 = vadd.f32 %v11467, %v11514
        %v11581 = vadd.f32 %v11468, %v11518
        %v11582 = vadd.f32 %v11469, %v11522
        %v11583 = vadd.f32 %v11470, %v11514
        %v11584 = vadd.f32 %v11471, %v11518
        %v11585 = vadd.f32 %v11472, %v11522
        %v11586 = vadd.f32 %v11473, %v11514
        %v11587 = vadd.f32 %v11474, %v11518
        %v11588 = vadd.f32 %v11475, %v11522
        %v11589 = vadd.f32 %v11476, %v11514
        %v11590 = vadd.f32 %v11477, %v11518
        %v11591 = vadd.f32 %v11478, %v11522
        %v11592 = vadd.f32 %v11479, %v11514
        %v11593 = vadd.f32 %v11480, %v11518
        %v11594 = vadd.f32 %v11481, %v11522
        %v11595 = vadd.f32 %v11482, %v11514
        %v11596 = vadd.f32 %v11483, %v11518
        %v11597 = vadd.f32 %v11484, %v11522
        %v11598 = vadd.f32 %v11485, %v11514
        %v11599 = vadd.f32 %v11486, %v11518
        %v11600 = vadd.f32 %v11487, %v11522
        %v11601 = vadd.f32 %v11488, %v11514
        %v11602 = vadd.f32 %v11489, %v11518
        %v11603 = vadd.f32 %v11490, %v11522
        %v11604 = vadd.f32 %v11491, %v11514
        %v11605 = vadd.f32 %v11492, %v11518
        %v11606 = vadd.f32 %v11493, %v11522
        %v11607 = vadd.f32 %v11494, %v11514
        %v11608 = vadd.f32 %v11495, %v11518
        %v11609 = vadd.f32 %v11496, %v11522
        %v11610 = vadd.f32 %v11497, %v11514
        %v11611 = vadd.f32 %v11498, %v11518
        %v11612 = vadd.f32 %v11499, %v11522
        %v11613 = vadd.f32 %v11500, %v11514
        %v11614 = vadd.f32 %v11501, %v11518
        %v11615 = vadd.f32 %v11502, %v11522
        %v11616 = vadd.f32 %v11503, %v11514
        %v11617 = vadd.f32 %v11504, %v11518
        %v11618 = vadd.f32 %v11505, %v11522
        %v11619 = vadd.f32 %v11506, %v11514
        %v11620 = vadd.f32 %v11507, %v11518
        %v11621 = vadd.f32 %v11508, %v11522
        %11622 = vst [vmem:[%s302] sm:$0xff] %v11526
        %11623 = vst [vmem:[%s302 + $0x8] sm:$0xff] %v11527
        %11624 = vst [vmem:[%s302 + $0x10] sm:$0xff] %v11528
        %11625 = vst [vmem:[%s302 + $0x18] sm:$0xf] %v11529
        %11626 = vst [vmem:[%s302 + $0x20] sm:$0xf] %v11530
        %11627 = vst [vmem:[%s302 + $0x28] sm:$0xf] %v11531
        %s11628 = scalar_lea.vmem %s302, 48
        %11629 = vst [vmem:[%s11628] sm:$0xff] %v11532
        %11630 = vst [vmem:[%s11628 + $0x8] sm:$0xff] %v11533
        %11631 = vst [vmem:[%s11628 + $0x10] sm:$0xff] %v11534
        %11632 = vst [vmem:[%s11628 + $0x18] sm:$0xf] %v11535
        %11633 = vst [vmem:[%s11628 + $0x20] sm:$0xf] %v11536
        %11634 = vst [vmem:[%s11628 + $0x28] sm:$0xf] %v11537
        %s11635 = scalar_lea.vmem %s302, 96
        %11636 = vst [vmem:[%s11635] sm:$0xff] %v11538
        %11637 = vst [vmem:[%s11635 + $0x8] sm:$0xff] %v11539
        %11638 = vst [vmem:[%s11635 + $0x10] sm:$0xff] %v11540
        %11639 = vst [vmem:[%s11635 + $0x18] sm:$0xf] %v11541
        %11640 = vst [vmem:[%s11635 + $0x20] sm:$0xf] %v11542
        %11641 = vst [vmem:[%s11635 + $0x28] sm:$0xf] %v11543
        %s11642 = scalar_lea.vmem %s302, 144
        %11643 = vst [vmem:[%s11642] sm:$0xff] %v11544
        %11644 = vst [vmem:[%s11642 + $0x8] sm:$0xff] %v11545
        %11645 = vst [vmem:[%s11642 + $0x10] sm:$0xff] %v11546
        %11646 = vst [vmem:[%s11642 + $0x18] sm:$0xf] %v11547
        %11647 = vst [vmem:[%s11642 + $0x20] sm:$0xf] %v11548
        %11648 = vst [vmem:[%s11642 + $0x28] sm:$0xf] %v11549
        %s11649 = scalar_lea.vmem %s302, 192
        %11650 = vst [vmem:[%s11649] sm:$0xff] %v11550
        %11651 = vst [vmem:[%s11649 + $0x8] sm:$0xff] %v11551
        %11652 = vst [vmem:[%s11649 + $0x10] sm:$0xff] %v11552
        %11653 = vst [vmem:[%s11649 + $0x18] sm:$0xf] %v11553
        %11654 = vst [vmem:[%s11649 + $0x20] sm:$0xf] %v11554
        %11655 = vst [vmem:[%s11649 + $0x28] sm:$0xf] %v11555
        %s11656 = scalar_lea.vmem %s302, 240
        %11657 = vst [vmem:[%s11656] sm:$0xff] %v11556
        %11658 = vst [vmem:[%s11656 + $0x8] sm:$0xff] %v11557
        %11659 = vst [vmem:[%s11656 + $0x10] sm:$0xff] %v11558
        %11660 = vst [vmem:[%s11656 + $0x18] sm:$0xf] %v11559
        %11661 = vst [vmem:[%s11656 + $0x20] sm:$0xf] %v11560
        %11662 = vst [vmem:[%s11656 + $0x28] sm:$0xf] %v11561
        %s11663 = scalar_lea.vmem %s302, 288
        %11664 = vst [vmem:[%s11663] sm:$0xff] %v11562
        %11665 = vst [vmem:[%s11663 + $0x8] sm:$0xff] %v11563
        %11666 = vst [vmem:[%s11663 + $0x10] sm:$0xff] %v11564
        %11667 = vst [vmem:[%s11663 + $0x18] sm:$0xf] %v11565
        %11668 = vst [vmem:[%s11663 + $0x20] sm:$0xf] %v11566
        %11669 = vst [vmem:[%s11663 + $0x28] sm:$0xf] %v11567
        %s11670 = scalar_lea.vmem %s302, 336
        %11671 = vst [vmem:[%s11670] sm:$0xff] %v11568
        %11672 = vst [vmem:[%s11670 + $0x8] sm:$0xff] %v11569
        %11673 = vst [vmem:[%s11670 + $0x10] sm:$0xff] %v11570
        %11674 = vst [vmem:[%s11670 + $0x18] sm:$0xf] %v11571
        %11675 = vst [vmem:[%s11670 + $0x20] sm:$0xf] %v11572
        %11676 = vst [vmem:[%s11670 + $0x28] sm:$0xf] %v11573
        %s11677 = scalar_lea.vmem %s302, 384
        %11678 = vst [vmem:[%s11677] sm:$0xff] %v11574
        %11679 = vst [vmem:[%s11677 + $0x8] sm:$0xff] %v11575
        %11680 = vst [vmem:[%s11677 + $0x10] sm:$0xff] %v11576
        %11681 = vst [vmem:[%s11677 + $0x18] sm:$0xf] %v11577
        %11682 = vst [vmem:[%s11677 + $0x20] sm:$0xf] %v11578
        %11683 = vst [vmem:[%s11677 + $0x28] sm:$0xf] %v11579
        %s11684 = scalar_lea.vmem %s302, 432
        %11685 = vst [vmem:[%s11684] sm:$0xff] %v11580
        %11686 = vst [vmem:[%s11684 + $0x8] sm:$0xff] %v11581
        %11687 = vst [vmem:[%s11684 + $0x10] sm:$0xff] %v11582
        %11688 = vst [vmem:[%s11684 + $0x18] sm:$0xf] %v11583
        %11689 = vst [vmem:[%s11684 + $0x20] sm:$0xf] %v11584
        %11690 = vst [vmem:[%s11684 + $0x28] sm:$0xf] %v11585
        %s11691 = scalar_lea.vmem %s302, 480
        %11692 = vst [vmem:[%s11691] sm:$0xff] %v11586
        %11693 = vst [vmem:[%s11691 + $0x8] sm:$0xff] %v11587
        %11694 = vst [vmem:[%s11691 + $0x10] sm:$0xff] %v11588
        %11695 = vst [vmem:[%s11691 + $0x18] sm:$0xf] %v11589
        %11696 = vst [vmem:[%s11691 + $0x20] sm:$0xf] %v11590
        %11697 = vst [vmem:[%s11691 + $0x28] sm:$0xf] %v11591
        %s11698 = scalar_lea.vmem %s302, 528
        %11699 = vst [vmem:[%s11698] sm:$0xff] %v11592
        %11700 = vst [vmem:[%s11698 + $0x8] sm:$0xff] %v11593
        %11701 = vst [vmem:[%s11698 + $0x10] sm:$0xff] %v11594
        %11702 = vst [vmem:[%s11698 + $0x18] sm:$0xf] %v11595
        %11703 = vst [vmem:[%s11698 + $0x20] sm:$0xf] %v11596
        %11704 = vst [vmem:[%s11698 + $0x28] sm:$0xf] %v11597
        %s11705 = scalar_lea.vmem %s302, 576
        %11706 = vst [vmem:[%s11705] sm:$0xff] %v11598
        %11707 = vst [vmem:[%s11705 + $0x8] sm:$0xff] %v11599
        %11708 = vst [vmem:[%s11705 + $0x10] sm:$0xff] %v11600
        %11709 = vst [vmem:[%s11705 + $0x18] sm:$0xf] %v11601
        %11710 = vst [vmem:[%s11705 + $0x20] sm:$0xf] %v11602
        %11711 = vst [vmem:[%s11705 + $0x28] sm:$0xf] %v11603
        %s11712 = scalar_lea.vmem %s302, 624
        %11713 = vst [vmem:[%s11712] sm:$0xff] %v11604
        %11714 = vst [vmem:[%s11712 + $0x8] sm:$0xff] %v11605
        %11715 = vst [vmem:[%s11712 + $0x10] sm:$0xff] %v11606
        %11716 = vst [vmem:[%s11712 + $0x18] sm:$0xf] %v11607
        %11717 = vst [vmem:[%s11712 + $0x20] sm:$0xf] %v11608
        %11718 = vst [vmem:[%s11712 + $0x28] sm:$0xf] %v11609
        %s11719 = scalar_lea.vmem %s302, 672
        %11720 = vst [vmem:[%s11719] sm:$0xff] %v11610
        %11721 = vst [vmem:[%s11719 + $0x8] sm:$0xff] %v11611
        %11722 = vst [vmem:[%s11719 + $0x10] sm:$0xff] %v11612
        %11723 = vst [vmem:[%s11719 + $0x18] sm:$0xf] %v11613
        %11724 = vst [vmem:[%s11719 + $0x20] sm:$0xf] %v11614
        %11725 = vst [vmem:[%s11719 + $0x28] sm:$0xf] %v11615
        %s11726 = scalar_lea.vmem %s302, 720
        %11727 = vst [vmem:[%s11726] sm:$0xff] %v11616
        %11728 = vst [vmem:[%s11726 + $0x8] sm:$0xff] %v11617
        %11729 = vst [vmem:[%s11726 + $0x10] sm:$0xff] %v11618
        %11730 = vst [vmem:[%s11726 + $0x18] sm:$0xf] %v11619
        %11731 = vst [vmem:[%s11726 + $0x20] sm:$0xf] %v11620
        %11732 = vst [vmem:[%s11726 + $0x28] sm:$0xf] %v11621
        %s11733 = smul.u32 16, %s21
        %p11734 = scmp.lt.s32.totalorder %s11733, 31
        %s11735 = scalar_select %p11734, %s11733, 31
        %s11736 = smul.addr %s11735, 6
        %s11737 = smul.addr %s11736, 8
        %s11738 = scalar_lea.vmem %s5, %s11737
        // Predicated region
        $region61: #{tpu_custom_call.1} parent=39 // pred_check
          %p11739 = pneg %p149
        $region62: #{tpu_custom_call.1} parent=39 // pred_check_branch
          %11741 = sbr.rel (%p11739) target = $region64
        $region63: #{tpu_custom_call.1} parent=39 // pred_region
          %s11742 = smul.u32 16, %s21
        $region64: #{tpu_custom_call.1} parent=39 // pred_fallthru
          _
      $region40: #{tpu_custom_call.1} parent=5 // pred_fallthru
        _
      %p11743 = scmp.le.s32.totalorder 2, %s16
      // Predicated region
      $region65: #{tpu_custom_call.1} parent=5 // pred_check
        %p11744 = pneg %p11743
      $region66: #{tpu_custom_call.1} parent=5 // pred_check_branch
        %11746 = sbr.rel (%p11744) target = $region68
      $region67: #{tpu_custom_call.1} parent=5 // pred_region
        %s11747 = ssub.s32 %s16, 2
        // Predicated region
        $region69: #{tpu_custom_call.1} parent=67 // pred_check
          %p11748 = pneg %p155
        $region70: #{tpu_custom_call.1} parent=67 // pred_check_branch
          %11750 = sbr.rel (%p11748) target = $region72
        $region71: #{tpu_custom_call.1} parent=67 // pred_region
          %s11751 = smul.u32 16, %s22
          %p11752 = scmp.lt.s32.totalorder %s11751, 31
          %s11753 = scalar_select %p11752, %s11751, 31
          %s11754 = smul.addr %s11753, 6
          %s11755 = smul.addr %s11754, 8
          %s11756 = scalar_lea.vmem %s5, %s11755
        $region72: #{tpu_custom_call.1} parent=67 // pred_fallthru
          _
      $region68: #{tpu_custom_call.1} parent=5 // pred_fallthru
        _
    $region6: #{tpu_custom_call.1} parent=1 // loop_footer
      %s20 = sadd.s32 1, %s16
    $region7: #{tpu_custom_call.1} parent=1 // loop_footer_branch
      %15 = sbr.rel target = $region3
    $region8: #{tpu_custom_call.1} parent=1 // loop_exit
      _
    %11757 = vsyncpa [#allocation3], 1
    %s11758 = scalar_lea.sflag [#allocation3], 1
    %11759 = vsyncpa %s11758, 1
    %11760 = vsyncpa [#allocation5], 1
    %11761 = vsyncpa [#allocation8], 1

</llo_original>
